<compile_context>
chip_gen: v7x
topology: tpu7x:2x2x1
jax: 0.10.0
libtpu: 0.0.40
codegen_flags: <defaults>
</compile_context>

<pallas_src>
import functools
import numpy as np
import jax
import jax.numpy as jnp
from jax.experimental import pallas as pl
from jax.experimental.pallas import tpu as pltpu

FEATURE_DIM = 512


# ------------------------------ fused kernel --------------------------------

def _make_fused_kernel(H, W, C, A):
    """Builds the whole-network kernel for a (tile_n, H, W, C) NHWC input block."""
    H2, W2, H4, W4, H8, W8 = H // 2, W // 2, H // 4, W // 4, H // 8, W // 8
    F = FEATURE_DIM

    def _subsample_mats(stride, Wo, Win):
        # S_kw[wo, wi] = 1 iff wi == stride*wo + kw - 1 (pad=1 folded in; rows with
        # an out-of-range column are all-zero, which implements the zero padding).
        ri = jax.lax.broadcasted_iota(jnp.int32, (Wo, Win), 0)
        ci = jax.lax.broadcasted_iota(jnp.int32, (Wo, Win), 1)
        return [jnp.where(ci == stride * ri + (kw - 1), 1.0, 0.0).astype(jnp.bfloat16)
                for kw in range(3)]

    def _conv_rows(in_rows, Cin, w_ref, b_ref, *, stride, Ho, Wo, Cout):
        """3x3 conv (pad=1) + ReLU on a per-sample NHWC activation held as a
        Python list of (Win, Cin) bf16 row values.  Returns Ho rows (Wo, Cout)."""
        Hin, Win = len(in_rows), in_rows[0].shape[0]
        S = _subsample_mats(stride, Wo, Win)
        zero_row = jnp.zeros((Win, Cin), jnp.bfloat16)
        out_rows = []
        for ho in range(Ho):
            taps = []
            for kh in range(3):
                r = stride * ho + kh - 1                 # unpadded input row
                taps.append(in_rows[r] if 0 <= r < Hin else zero_row)
            R = jnp.concatenate(taps, axis=-1)           # (Win, 3*Cin) bf16
            acc = jnp.zeros((Wo, Cout), jnp.float32)
            for kw in range(3):
                # Subsample/shift columns on the MXU, then contract with the
                # (3*Cin, Cout) weight slab for this kw.  f32 accumulation.
                Xk = jnp.dot(S[kw], R,
                             preferred_element_type=jnp.float32).astype(jnp.bfloat16)
                acc = acc + jnp.dot(Xk, w_ref[kw],
                                    preferred_element_type=jnp.float32)
            out_rows.append(jnp.maximum(acc + b_ref[...], 0.0).astype(jnp.bfloat16))
        return out_rows

    def kernel(x_ref, c1w, c1b, c2w, c2b, c3w, c3b, c4w, c4b,
               fcw, fcb, cr1w, cr1b, ac1w, ac1b, cr2w, cr2b, hdw, hdb,
               v_ref, p_ref):
        tile_n = x_ref.shape[0]

        # ---- conv stack + fc contraction, per sample, entirely in VMEM ----
        feats = []
        for s in range(tile_n):
            rows0 = [x_ref[s, r] for r in range(H)]                        # (W, C)
            rows1 = _conv_rows(rows0, C,  c1w, c1b, stride=2, Ho=H2, Wo=W2, Cout=32)
            rows2 = _conv_rows(rows1, 32, c2w, c2b, stride=2, Ho=H4, Wo=W4, Cout=64)
            rows3 = _conv_rows(rows2, 64, c3w, c3b, stride=2, Ho=H8, Wo=W8, Cout=64)
            rows4 = _conv_rows(rows3, 64, c4w, c4b, stride=1, Ho=H8, Wo=W8, Cout=128)

            # fc (whole-K): contract conv4 output row-by-row against the
            # pre-permuted fc weight (torch's NCHW flatten folded at pack time).
            fvec = jnp.zeros((1, F), jnp.float32)
            for hf in range(H8):
                xrow = jnp.concatenate(
                    [rows4[hf][wf:wf + 1, :] for wf in range(W8)], axis=-1)  # (1, W8*128)
                fvec = fvec + jnp.dot(xrow, fcw[hf],
                                      preferred_element_type=jnp.float32)
            feats.append(fvec)
        feats = feats[0] if tile_n == 1 else jnp.concatenate(feats, axis=0)

        # ---- shared ReLU -> critic / actor hidden -> heads -> softmax ----
        f = jnp.maximum(feats + fcb[...], 0.0).astype(jnp.bfloat16)
        h_c = jnp.maximum(
            jnp.dot(f, cr1w[...], preferred_element_type=jnp.float32) + cr1b[...],
            0.0).astype(jnp.bfloat16)
        h_a = jnp.maximum(
            jnp.dot(f, ac1w[...], preferred_element_type=jnp.float32) + ac1b[...],
            0.0).astype(jnp.bfloat16)

        value = jnp.dot(h_c, cr2w[...], preferred_element_type=jnp.float32) + cr2b[...]
        logits = jnp.dot(h_a, hdw[...], preferred_element_type=jnp.float32) + hdb[...]

        m = jnp.max(logits, axis=-1, keepdims=True)
        e = jnp.exp(logits - m)
        probs = e / jnp.sum(e, axis=-1, keepdims=True)    # exact normalization

        v_ref[...] = value.reshape(tile_n, 1, 1)
        p_ref[...] = probs.reshape(tile_n, 1, A)

    return kernel


def fused_forward_nhwc(x, kp, action_dim):
    """x: (N, H, W, C) bf16 NHWC.  Returns (value (N,1) f32, probs (N,A) f32)."""
    N, H, W, C = x.shape
    A = action_dim
    tile_n = 1                      # grid over batch: >=2 parallel steps at N=2 (v7x)
    kernel = _make_fused_kernel(H, W, C, A)

    def full2(i):
        return (0, 0)

    def full3(i):
        return (0, 0, 0)

    w_names = ["c1_w", "c1_b", "c2_w", "c2_b", "c3_w", "c3_b", "c4_w", "c4_b",
               "fc_w", "fc_b", "cr1_w", "cr1_b", "ac1_w", "ac1_b",
               "cr2_w", "cr2_b", "hd_w", "hd_b"]
    w_specs = [pl.BlockSpec(kp[n].shape, full3 if kp[n].ndim == 3 else full2)
               for n in w_names]

    value, probs = pl.pallas_call(
        kernel,
        out_shape=(jax.ShapeDtypeStruct((N, 1, 1), jnp.float32),
                   jax.ShapeDtypeStruct((N, 1, A), jnp.float32)),
        grid_spec=pltpu.PrefetchScalarGridSpec(
            num_scalar_prefetch=0,
            grid=(N // tile_n,),
            in_specs=[pl.BlockSpec((tile_n, H, W, C), lambda i: (i, 0, 0, 0))] + w_specs,
            out_specs=(pl.BlockSpec((tile_n, 1, 1), lambda i: (i, 0, 0)),
                       pl.BlockSpec((tile_n, 1, A), lambda i: (i, 0, 0))),
        ),
        compiler_params=pltpu.CompilerParams(
            dimension_semantics=("parallel",),
            vmem_limit_bytes=32 * 1024 * 1024,   # safe on v5e/v6e/v7x; usage is ~MBs
        ),
    )(x, *[kp[n] for n in w_names])
    return value.reshape(N, 1), probs.reshape(N, A)


# -------------------------- parameters (init/pack) ---------------------------

def orthogonal(key, shape, gain):
    """Matches torch.nn.init.orthogonal_ semantics."""
    rows = shape[0]
    cols = int(np.prod(shape[1:]))
    n, m = max(rows, cols), min(rows, cols)
    a = jax.random.normal(key, (n, m), dtype=jnp.float32)
    q, r = jnp.linalg.qr(a)
    q = q * jnp.sign(jnp.diagonal(r))
    if rows < cols:
        q = q.T
    return (gain * q[:rows, :cols]).reshape(shape).astype(jnp.float32)


def make_params(input_shape, action_dim, key):
    """Torch-layout parameters (same shapes as the PyTorch module)."""
    C, H, W = input_shape
    fc_in = 128 * (W // 8) * (H // 8)
    ks = jax.random.split(key, 9)
    s2 = float(np.sqrt(2.0))
    return {
        "c1_w": orthogonal(ks[0], (32, C, 3, 3), s2), "c1_b": jnp.zeros((32,), jnp.float32),
        "c2_w": orthogonal(ks[1], (64, 32, 3, 3), s2), "c2_b": jnp.zeros((64,), jnp.float32),
        "c3_w": orthogonal(ks[2], (64, 64, 3, 3), s2), "c3_b": jnp.zeros((64,), jnp.float32),
        "c4_w": orthogonal(ks[3], (128, 64, 3, 3), s2), "c4_b": jnp.zeros((128,), jnp.float32),
        "fc_w": orthogonal(ks[4], (512, fc_in), s2), "fc_b": jnp.zeros((512,), jnp.float32),
        "cr1_w": orthogonal(ks[5], (512, 512), 0.1), "cr1_b": jnp.zeros((512,), jnp.float32),
        "cr2_w": orthogonal(ks[6], (1, 512), 0.01), "cr2_b": jnp.zeros((1,), jnp.float32),
        "ac1_w": orthogonal(ks[7], (512, 512), 0.01), "ac1_b": jnp.zeros((512,), jnp.float32),
        "hd_w": orthogonal(ks[8], (action_dim, 512), 0.01), "hd_b": jnp.zeros((action_dim,), jnp.float32),
    }


def pack_params(p, input_shape):
    """One-time conversion to kernel layout: pre-transposed, NHWC-permuted, bf16."""
    C, H, W = input_shape
    # TODO(synk): the torch module's fc_inputs_count (128*(W//8)*(H//8)) only matches
    # the conv stack when H, W are divisible by 8 (real Atari 84x84 gives 11x11);
    # this implementation requires divisibility by 8 like the test shapes do.
    assert H % 8 == 0 and W % 8 == 0, "H and W must be divisible by 8"
    Hf, Wf = H // 8, W // 8
    F = p["fc_b"].shape[0]

    def conv_pack(w):
        # (Cout, Cin, kh, kw) -> (kw, kh*Cin, Cout): one (3*Cin, Cout) slab per kw,
        # matching the in-kernel channel-concat order [row_kh0 | row_kh1 | row_kh2].
        cout, cin = w.shape[0], w.shape[1]
        return jnp.transpose(w, (3, 2, 1, 0)).reshape(3, 3 * cin, cout).astype(jnp.bfloat16)

    # Fold torch's NCHW flatten into fc_w and regroup one (Wf*128, F) slab per hf:
    # fc_w[f, ci*Hf*Wf + hf*Wf + wf] -> fck[hf, wf*128 + ci, f]
    fck = (p["fc_w"].reshape(F, 128, Hf, Wf)
           .transpose(2, 3, 1, 0)
           .reshape(Hf, Wf * 128, F))

    return {
        "c1_w": conv_pack(p["c1_w"]), "c1_b": p["c1_b"].reshape(1, -1),
        "c2_w": conv_pack(p["c2_w"]), "c2_b": p["c2_b"].reshape(1, -1),
        "c3_w": conv_pack(p["c3_w"]), "c3_b": p["c3_b"].reshape(1, -1),
        "c4_w": conv_pack(p["c4_w"]), "c4_b": p["c4_b"].reshape(1, -1),
        "fc_w": fck.astype(jnp.bfloat16), "fc_b": p["fc_b"].reshape(1, -1),
        "cr1_w": p["cr1_w"].T.astype(jnp.bfloat16), "cr1_b": p["cr1_b"].reshape(1, -1),
        "ac1_w": p["ac1_w"].T.astype(jnp.bfloat16), "ac1_b": p["ac1_b"].reshape(1, -1),
        "cr2_w": p["cr2_w"].T.astype(jnp.bfloat16), "cr2_b": p["cr2_b"].reshape(1, -1),
        "hd_w": p["hd_w"].T.astype(jnp.bfloat16), "hd_b": p["hd_b"].reshape(1, -1),
    }


# --------------------------------- forward -----------------------------------

def ppo_atari_forward(state, kp, action_dim):
    """state: NCHW float32. Returns (value [N,1], action one-hot [N,A], probs [N,A])."""
    # Cast to bf16 FIRST, then NCHW->NHWC (halves the layout-change HBM traffic).
    x = jnp.transpose(state.astype(jnp.bfloat16), (0, 2, 3, 1))
    value, probs = fused_forward_nhwc(x, kp, action_dim)
    # TODO(synk): torch Actor samples from Categorical(probs); deterministic argmax here.
    action = jax.nn.one_hot(jnp.argmax(probs, axis=-1), action_dim, dtype=jnp.float32)
    return value, action, probs


def ppo_atari_reference(state, p):
    """Pure-JAX f32 reference with torch-layout params (for correctness check)."""
    def conv(x, w, b, stride):
        y = jax.lax.conv_general_dilated(
            x, w, window_strides=(stride, stride), padding=((1, 1), (1, 1)),
            dimension_numbers=("NCHW", "OIHW", "NCHW"))
        return jax.nn.relu(y + b.reshape(1, -1, 1, 1))
    x = conv(state, p["c1_w"], p["c1_b"], 2)
    x = conv(x, p["c2_w"], p["c2_b"], 2)
    x = conv(x, p["c3_w"], p["c3_b"], 2)
    x = conv(x, p["c4_w"], p["c4_b"], 1)
    flat = x.reshape(x.shape[0], -1)
    features = flat @ p["fc_w"].T + p["fc_b"]
    f = jax.nn.relu(features)
    h_c = jax.nn.relu(f @ p["cr1_w"].T + p["cr1_b"])
    value = h_c @ p["cr2_w"].T + p["cr2_b"]
    h_a = jax.nn.relu(f @ p["ac1_w"].T + p["ac1_b"])
    logits = h_a @ p["hd_w"].T + p["hd_b"]
    return value, jax.nn.softmax(logits, axis=-1)


# ----------------------------------- main -------------------------------------

if __name__ == "__main__":
    input_shape = (4, 16, 16)     # (C, H, W), divisible by 8
    action_dim = 6
    batch = 2

    state = jax.random.normal(jax.random.PRNGKey(0), (batch,) + input_shape,
                              dtype=jnp.float32)
    torch_params = make_params(input_shape, action_dim, jax.random.PRNGKey(42))
    kparams = pack_params(torch_params, input_shape)     # one-time packing

    fwd = jax.jit(functools.partial(ppo_atari_forward, action_dim=action_dim))
    value, action, probs = fwd(state, kparams)
    jax.block_until_ready((value, action, probs))

    assert value.shape == (batch, 1)
    assert action.shape == (batch, action_dim)
    assert probs.shape == (batch, action_dim)
    assert np.allclose(np.asarray(probs).sum(axis=-1), 1.0, atol=1e-3)

    # Numerical check vs pure-JAX f32 reference (bf16 MXU path -> loose tol).
    v_ref, p_ref = ppo_atari_reference(state, torch_params)
    assert np.allclose(np.asarray(value), np.asarray(v_ref), atol=2e-2)
    assert np.allclose(np.asarray(probs), np.asarray(p_ref), atol=2e-2)

    print("KERNEL_OK")
</pallas_src>

<mosaic_0001>
module attributes {stable_mosaic.version = 11 : i64} {
  func.func @kernel(%arg0: i32, %arg1: memref<1x16x16x4xbf16, #tpu.memory_space<vmem>>, %arg2: memref<3x12x32xbf16, #tpu.memory_space<vmem>>, %arg3: memref<1x32xf32, #tpu.memory_space<vmem>>, %arg4: memref<3x96x64xbf16, #tpu.memory_space<vmem>>, %arg5: memref<1x64xf32, #tpu.memory_space<vmem>>, %arg6: memref<3x192x64xbf16, #tpu.memory_space<vmem>>, %arg7: memref<1x64xf32, #tpu.memory_space<vmem>>, %arg8: memref<3x192x128xbf16, #tpu.memory_space<vmem>>, %arg9: memref<1x128xf32, #tpu.memory_space<vmem>>, %arg10: memref<2x256x512xbf16, #tpu.memory_space<vmem>>, %arg11: memref<1x512xf32, #tpu.memory_space<vmem>>, %arg12: memref<512x512xbf16, #tpu.memory_space<vmem>>, %arg13: memref<1x512xf32, #tpu.memory_space<vmem>>, %arg14: memref<512x512xbf16, #tpu.memory_space<vmem>>, %arg15: memref<1x512xf32, #tpu.memory_space<vmem>>, %arg16: memref<512x1xbf16, #tpu.memory_space<vmem>>, %arg17: memref<1x1xf32, #tpu.memory_space<vmem>>, %arg18: memref<512x6xbf16, #tpu.memory_space<vmem>>, %arg19: memref<1x6xf32, #tpu.memory_space<vmem>>, %arg20: memref<1x1x1xf32, #tpu.memory_space<vmem>>, %arg21: memref<1x1x6xf32, #tpu.memory_space<vmem>>) attributes {dimension_semantics = [#tpu.dimension_semantics<parallel>], iteration_bounds = array<i64: 2>, scalar_prefetch = 0 : i64, scratch_operands = 0 : i64, tpu.core_type = #tpu.core_type<tc>, window_params = [{transform_indices = @transform_0, window_bounds = array<i64: 1, 16, 16, 4>}, {pipeline_mode = #tpu.pipeline_mode<synchronous>, transform_indices = @transform_1, window_bounds = array<i64: 3, 12, 32>}, {pipeline_mode = #tpu.pipeline_mode<synchronous>, transform_indices = @transform_2, window_bounds = array<i64: 1, 32>}, {pipeline_mode = #tpu.pipeline_mode<synchronous>, transform_indices = @transform_3, window_bounds = array<i64: 3, 96, 64>}, {pipeline_mode = #tpu.pipeline_mode<synchronous>, transform_indices = @transform_4, window_bounds = array<i64: 1, 64>}, {pipeline_mode = #tpu.pipeline_mode<synchronous>, transform_indices = @transform_5, window_bounds = array<i64: 3, 192, 64>}, {pipeline_mode = #tpu.pipeline_mode<synchronous>, transform_indices = @transform_6, window_bounds = array<i64: 1, 64>}, {pipeline_mode = #tpu.pipeline_mode<synchronous>, transform_indices = @transform_7, window_bounds = array<i64: 3, 192, 128>}, {pipeline_mode = #tpu.pipeline_mode<synchronous>, transform_indices = @transform_8, window_bounds = array<i64: 1, 128>}, {pipeline_mode = #tpu.pipeline_mode<synchronous>, transform_indices = @transform_9, window_bounds = array<i64: 2, 256, 512>}, {pipeline_mode = #tpu.pipeline_mode<synchronous>, transform_indices = @transform_10, window_bounds = array<i64: 1, 512>}, {pipeline_mode = #tpu.pipeline_mode<synchronous>, transform_indices = @transform_11, window_bounds = array<i64: 512, 512>}, {pipeline_mode = #tpu.pipeline_mode<synchronous>, transform_indices = @transform_12, window_bounds = array<i64: 1, 512>}, {pipeline_mode = #tpu.pipeline_mode<synchronous>, transform_indices = @transform_13, window_bounds = array<i64: 512, 512>}, {pipeline_mode = #tpu.pipeline_mode<synchronous>, transform_indices = @transform_14, window_bounds = array<i64: 1, 512>}, {pipeline_mode = #tpu.pipeline_mode<synchronous>, transform_indices = @transform_15, window_bounds = array<i64: 512, 1>}, {pipeline_mode = #tpu.pipeline_mode<synchronous>, transform_indices = @transform_16, window_bounds = array<i64: 1, 1>}, {pipeline_mode = #tpu.pipeline_mode<synchronous>, transform_indices = @transform_17, window_bounds = array<i64: 512, 6>}, {pipeline_mode = #tpu.pipeline_mode<synchronous>, transform_indices = @transform_18, window_bounds = array<i64: 1, 6>}, {transform_indices = @transform_19, window_bounds = array<i64: 1, 1, 1>}, {transform_indices = @transform_20, window_bounds = array<i64: 1, 1, 6>}]} {
    %c0 = arith.constant 0 : index
    %c0_0 = arith.constant 0 : index
    %c0_1 = arith.constant 0 : index
    %c0_2 = arith.constant 0 : index
    %0 = vector.load %arg1[%c0, %c0_0, %c0_1, %c0_2] : memref<1x16x16x4xbf16, #tpu.memory_space<vmem>>, vector<1x1x16x4xbf16>
    %1 = vector.shape_cast %0 : vector<1x1x16x4xbf16> to vector<16x4xbf16>
    %c0_3 = arith.constant 0 : index
    %c1 = arith.constant 1 : index
    %c0_4 = arith.constant 0 : index
    %c0_5 = arith.constant 0 : index
    %2 = vector.load %arg1[%c0_3, %c1, %c0_4, %c0_5] : memref<1x16x16x4xbf16, #tpu.memory_space<vmem>>, vector<1x1x16x4xbf16>
    %3 = vector.shape_cast %2 : vector<1x1x16x4xbf16> to vector<16x4xbf16>
    %c0_6 = arith.constant 0 : index
    %c2 = arith.constant 2 : index
    %c0_7 = arith.constant 0 : index
    %c0_8 = arith.constant 0 : index
    %4 = vector.load %arg1[%c0_6, %c2, %c0_7, %c0_8] : memref<1x16x16x4xbf16, #tpu.memory_space<vmem>>, vector<1x1x16x4xbf16>
    %5 = vector.shape_cast %4 : vector<1x1x16x4xbf16> to vector<16x4xbf16>
    %c0_9 = arith.constant 0 : index
    %c3 = arith.constant 3 : index
    %c0_10 = arith.constant 0 : index
    %c0_11 = arith.constant 0 : index
    %6 = vector.load %arg1[%c0_9, %c3, %c0_10, %c0_11] : memref<1x16x16x4xbf16, #tpu.memory_space<vmem>>, vector<1x1x16x4xbf16>
    %7 = vector.shape_cast %6 : vector<1x1x16x4xbf16> to vector<16x4xbf16>
    %c0_12 = arith.constant 0 : index
    %c4 = arith.constant 4 : index
    %c0_13 = arith.constant 0 : index
    %c0_14 = arith.constant 0 : index
    %8 = vector.load %arg1[%c0_12, %c4, %c0_13, %c0_14] : memref<1x16x16x4xbf16, #tpu.memory_space<vmem>>, vector<1x1x16x4xbf16>
    %9 = vector.shape_cast %8 : vector<1x1x16x4xbf16> to vector<16x4xbf16>
    %c0_15 = arith.constant 0 : index
    %c5 = arith.constant 5 : index
    %c0_16 = arith.constant 0 : index
    %c0_17 = arith.constant 0 : index
    %10 = vector.load %arg1[%c0_15, %c5, %c0_16, %c0_17] : memref<1x16x16x4xbf16, #tpu.memory_space<vmem>>, vector<1x1x16x4xbf16>
    %11 = vector.shape_cast %10 : vector<1x1x16x4xbf16> to vector<16x4xbf16>
    %c0_18 = arith.constant 0 : index
    %c6 = arith.constant 6 : index
    %c0_19 = arith.constant 0 : index
    %c0_20 = arith.constant 0 : index
    %12 = vector.load %arg1[%c0_18, %c6, %c0_19, %c0_20] : memref<1x16x16x4xbf16, #tpu.memory_space<vmem>>, vector<1x1x16x4xbf16>
    %13 = vector.shape_cast %12 : vector<1x1x16x4xbf16> to vector<16x4xbf16>
    %c0_21 = arith.constant 0 : index
    %c7 = arith.constant 7 : index
    %c0_22 = arith.constant 0 : index
    %c0_23 = arith.constant 0 : index
    %14 = vector.load %arg1[%c0_21, %c7, %c0_22, %c0_23] : memref<1x16x16x4xbf16, #tpu.memory_space<vmem>>, vector<1x1x16x4xbf16>
    %15 = vector.shape_cast %14 : vector<1x1x16x4xbf16> to vector<16x4xbf16>
    %c0_24 = arith.constant 0 : index
    %c8 = arith.constant 8 : index
    %c0_25 = arith.constant 0 : index
    %c0_26 = arith.constant 0 : index
    %16 = vector.load %arg1[%c0_24, %c8, %c0_25, %c0_26] : memref<1x16x16x4xbf16, #tpu.memory_space<vmem>>, vector<1x1x16x4xbf16>
    %17 = vector.shape_cast %16 : vector<1x1x16x4xbf16> to vector<16x4xbf16>
    %c0_27 = arith.constant 0 : index
    %c9 = arith.constant 9 : index
    %c0_28 = arith.constant 0 : index
    %c0_29 = arith.constant 0 : index
    %18 = vector.load %arg1[%c0_27, %c9, %c0_28, %c0_29] : memref<1x16x16x4xbf16, #tpu.memory_space<vmem>>, vector<1x1x16x4xbf16>
    %19 = vector.shape_cast %18 : vector<1x1x16x4xbf16> to vector<16x4xbf16>
    %c0_30 = arith.constant 0 : index
    %c10 = arith.constant 10 : index
    %c0_31 = arith.constant 0 : index
    %c0_32 = arith.constant 0 : index
    %20 = vector.load %arg1[%c0_30, %c10, %c0_31, %c0_32] : memref<1x16x16x4xbf16, #tpu.memory_space<vmem>>, vector<1x1x16x4xbf16>
    %21 = vector.shape_cast %20 : vector<1x1x16x4xbf16> to vector<16x4xbf16>
    %c0_33 = arith.constant 0 : index
    %c11 = arith.constant 11 : index
    %c0_34 = arith.constant 0 : index
    %c0_35 = arith.constant 0 : index
    %22 = vector.load %arg1[%c0_33, %c11, %c0_34, %c0_35] : memref<1x16x16x4xbf16, #tpu.memory_space<vmem>>, vector<1x1x16x4xbf16>
    %23 = vector.shape_cast %22 : vector<1x1x16x4xbf16> to vector<16x4xbf16>
    %c0_36 = arith.constant 0 : index
    %c12 = arith.constant 12 : index
    %c0_37 = arith.constant 0 : index
    %c0_38 = arith.constant 0 : index
    %24 = vector.load %arg1[%c0_36, %c12, %c0_37, %c0_38] : memref<1x16x16x4xbf16, #tpu.memory_space<vmem>>, vector<1x1x16x4xbf16>
    %25 = vector.shape_cast %24 : vector<1x1x16x4xbf16> to vector<16x4xbf16>
    %c0_39 = arith.constant 0 : index
    %c13 = arith.constant 13 : index
    %c0_40 = arith.constant 0 : index
    %c0_41 = arith.constant 0 : index
    %26 = vector.load %arg1[%c0_39, %c13, %c0_40, %c0_41] : memref<1x16x16x4xbf16, #tpu.memory_space<vmem>>, vector<1x1x16x4xbf16>
    %27 = vector.shape_cast %26 : vector<1x1x16x4xbf16> to vector<16x4xbf16>
    %c0_42 = arith.constant 0 : index
    %c14 = arith.constant 14 : index
    %c0_43 = arith.constant 0 : index
    %c0_44 = arith.constant 0 : index
    %28 = vector.load %arg1[%c0_42, %c14, %c0_43, %c0_44] : memref<1x16x16x4xbf16, #tpu.memory_space<vmem>>, vector<1x1x16x4xbf16>
    %29 = vector.shape_cast %28 : vector<1x1x16x4xbf16> to vector<16x4xbf16>
    %c0_45 = arith.constant 0 : index
    %c15 = arith.constant 15 : index
    %c0_46 = arith.constant 0 : index
    %c0_47 = arith.constant 0 : index
    %30 = vector.load %arg1[%c0_45, %c15, %c0_46, %c0_47] : memref<1x16x16x4xbf16, #tpu.memory_space<vmem>>, vector<1x1x16x4xbf16>
    %31 = vector.shape_cast %30 : vector<1x1x16x4xbf16> to vector<16x4xbf16>
    %32 = tpu.iota {dimensions = array<i32: 0>} : vector<8x16xi32>
    %33 = tpu.iota {dimensions = array<i32: 1>} : vector<8x16xi32>
    %c2_i32 = arith.constant 2 : i32
    %34 = vector.broadcast %c2_i32 : i32 to vector<8x16xi32>
    %35 = arith.muli %34, %32 : vector<8x16xi32>
    %c-1_i32 = arith.constant -1 : i32
    %36 = vector.broadcast %c-1_i32 : i32 to vector<8x16xi32>
    %37 = arith.addi %35, %36 : vector<8x16xi32>
    %38 = arith.cmpi eq, %33, %37 : vector<8x16xi32>
    %cst = arith.constant 1.000000e+00 : f32
    %cst_48 = arith.constant 0.000000e+00 : f32
    %39 = vector.broadcast %cst : f32 to vector<8x16xf32>
    %40 = vector.broadcast %cst_48 : f32 to vector<8x16xf32>
    %41 = arith.select %38, %39, %40 : vector<8x16xi1>, vector<8x16xf32>
    %42 = arith.truncf %41 : vector<8x16xf32> to vector<8x16xbf16>
    %c2_i32_49 = arith.constant 2 : i32
    %43 = vector.broadcast %c2_i32_49 : i32 to vector<8x16xi32>
    %44 = arith.muli %43, %32 : vector<8x16xi32>
    %c0_i32 = arith.constant 0 : i32
    %45 = vector.broadcast %c0_i32 : i32 to vector<8x16xi32>
    %46 = arith.addi %44, %45 : vector<8x16xi32>
    %47 = arith.cmpi eq, %33, %46 : vector<8x16xi32>
    %cst_50 = arith.constant 1.000000e+00 : f32
    %cst_51 = arith.constant 0.000000e+00 : f32
    %48 = vector.broadcast %cst_50 : f32 to vector<8x16xf32>
    %49 = vector.broadcast %cst_51 : f32 to vector<8x16xf32>
    %50 = arith.select %47, %48, %49 : vector<8x16xi1>, vector<8x16xf32>
    %51 = arith.truncf %50 : vector<8x16xf32> to vector<8x16xbf16>
    %c2_i32_52 = arith.constant 2 : i32
    %52 = vector.broadcast %c2_i32_52 : i32 to vector<8x16xi32>
    %53 = arith.muli %52, %32 : vector<8x16xi32>
    %c1_i32 = arith.constant 1 : i32
    %54 = vector.broadcast %c1_i32 : i32 to vector<8x16xi32>
    %55 = arith.addi %53, %54 : vector<8x16xi32>
    %56 = arith.cmpi eq, %33, %55 : vector<8x16xi32>
    %cst_53 = arith.constant 1.000000e+00 : f32
    %cst_54 = arith.constant 0.000000e+00 : f32
    %57 = vector.broadcast %cst_53 : f32 to vector<8x16xf32>
    %58 = vector.broadcast %cst_54 : f32 to vector<8x16xf32>
    %59 = arith.select %56, %57, %58 : vector<8x16xi1>, vector<8x16xf32>
    %60 = arith.truncf %59 : vector<8x16xf32> to vector<8x16xbf16>
    %cst_55 = arith.constant 0.000000e+00 : bf16
    %61 = vector.broadcast %cst_55 : bf16 to vector<16x4xbf16>
    %62 = tpu.concatenate %61, %1, %3 in 1 : vector<16x4xbf16>, vector<16x4xbf16>, vector<16x4xbf16> -> vector<16x12xbf16>
    %cst_56 = arith.constant 0.000000e+00 : f32
    %63 = vector.broadcast %cst_56 : f32 to vector<8x32xf32>
    %cst_57 = arith.constant dense<0.000000e+00> : vector<8x12xf32>
    %64 = tpu.matmul %42, %62, %cst_57 {dimension_numbers = #tpu.dot_dimension_numbers<[1], [0], [0], [1], [0, 0, 1, 1], [], []>} : vector<8x16xbf16>, vector<16x12xbf16>, vector<8x12xf32> -> vector<8x12xf32>
    %65 = arith.truncf %64 : vector<8x12xf32> to vector<8x12xbf16>
    %c0_58 = arith.constant 0 : index
    %c0_59 = arith.constant 0 : index
    %c0_60 = arith.constant 0 : index
    %66 = vector.load %arg2[%c0_58, %c0_59, %c0_60] : memref<3x12x32xbf16, #tpu.memory_space<vmem>>, vector<1x12x32xbf16>
    %67 = vector.shape_cast %66 : vector<1x12x32xbf16> to vector<12x32xbf16>
    %cst_61 = arith.constant dense<0.000000e+00> : vector<8x32xf32>
    %68 = tpu.matmul %65, %67, %cst_61 {dimension_numbers = #tpu.dot_dimension_numbers<[1], [0], [0], [1], [0, 0, 1, 1], [], []>} : vector<8x12xbf16>, vector<12x32xbf16>, vector<8x32xf32> -> vector<8x32xf32>
    %69 = arith.addf %63, %68 : vector<8x32xf32>
    %cst_62 = arith.constant dense<0.000000e+00> : vector<8x12xf32>
    %70 = tpu.matmul %51, %62, %cst_62 {dimension_numbers = #tpu.dot_dimension_numbers<[1], [0], [0], [1], [0, 0, 1, 1], [], []>} : vector<8x16xbf16>, vector<16x12xbf16>, vector<8x12xf32> -> vector<8x12xf32>
    %71 = arith.truncf %70 : vector<8x12xf32> to vector<8x12xbf16>
    %c1_63 = arith.constant 1 : index
    %c0_64 = arith.constant 0 : index
    %c0_65 = arith.constant 0 : index
    %72 = vector.load %arg2[%c1_63, %c0_64, %c0_65] : memref<3x12x32xbf16, #tpu.memory_space<vmem>>, vector<1x12x32xbf16>
    %73 = vector.shape_cast %72 : vector<1x12x32xbf16> to vector<12x32xbf16>
    %cst_66 = arith.constant dense<0.000000e+00> : vector<8x32xf32>
    %74 = tpu.matmul %71, %73, %cst_66 {dimension_numbers = #tpu.dot_dimension_numbers<[1], [0], [0], [1], [0, 0, 1, 1], [], []>} : vector<8x12xbf16>, vector<12x32xbf16>, vector<8x32xf32> -> vector<8x32xf32>
    %75 = arith.addf %69, %74 : vector<8x32xf32>
    %cst_67 = arith.constant dense<0.000000e+00> : vector<8x12xf32>
    %76 = tpu.matmul %60, %62, %cst_67 {dimension_numbers = #tpu.dot_dimension_numbers<[1], [0], [0], [1], [0, 0, 1, 1], [], []>} : vector<8x16xbf16>, vector<16x12xbf16>, vector<8x12xf32> -> vector<8x12xf32>
    %77 = arith.truncf %76 : vector<8x12xf32> to vector<8x12xbf16>
    %c2_68 = arith.constant 2 : index
    %c0_69 = arith.constant 0 : index
    %c0_70 = arith.constant 0 : index
    %78 = vector.load %arg2[%c2_68, %c0_69, %c0_70] : memref<3x12x32xbf16, #tpu.memory_space<vmem>>, vector<1x12x32xbf16>
    %79 = vector.shape_cast %78 : vector<1x12x32xbf16> to vector<12x32xbf16>
    %cst_71 = arith.constant dense<0.000000e+00> : vector<8x32xf32>
    %80 = tpu.matmul %77, %79, %cst_71 {dimension_numbers = #tpu.dot_dimension_numbers<[1], [0], [0], [1], [0, 0, 1, 1], [], []>} : vector<8x12xbf16>, vector<12x32xbf16>, vector<8x32xf32> -> vector<8x32xf32>
    %81 = arith.addf %75, %80 : vector<8x32xf32>
    %c0_72 = arith.constant 0 : index
    %c0_73 = arith.constant 0 : index
    %82 = vector.load %arg3[%c0_72, %c0_73] : memref<1x32xf32, #tpu.memory_space<vmem>>, vector<1x32xf32>
    %83 = vector.broadcast %82 : vector<1x32xf32> to vector<8x32xf32>
    %84 = arith.addf %81, %83 : vector<8x32xf32>
    %cst_74 = arith.constant 0.000000e+00 : f32
    %85 = vector.broadcast %cst_74 : f32 to vector<8x32xf32>
    %86 = arith.maximumf %84, %85 : vector<8x32xf32>
    %87 = arith.truncf %86 : vector<8x32xf32> to vector<8x32xbf16>
    %88 = tpu.concatenate %3, %5, %7 in 1 : vector<16x4xbf16>, vector<16x4xbf16>, vector<16x4xbf16> -> vector<16x12xbf16>
    %cst_75 = arith.constant 0.000000e+00 : f32
    %89 = vector.broadcast %cst_75 : f32 to vector<8x32xf32>
    %cst_76 = arith.constant dense<0.000000e+00> : vector<8x12xf32>
    %90 = tpu.matmul %42, %88, %cst_76 {dimension_numbers = #tpu.dot_dimension_numbers<[1], [0], [0], [1], [0, 0, 1, 1], [], []>} : vector<8x16xbf16>, vector<16x12xbf16>, vector<8x12xf32> -> vector<8x12xf32>
    %91 = arith.truncf %90 : vector<8x12xf32> to vector<8x12xbf16>
    %c0_77 = arith.constant 0 : index
    %c0_78 = arith.constant 0 : index
    %c0_79 = arith.constant 0 : index
    %92 = vector.load %arg2[%c0_77, %c0_78, %c0_79] : memref<3x12x32xbf16, #tpu.memory_space<vmem>>, vector<1x12x32xbf16>
    %93 = vector.shape_cast %92 : vector<1x12x32xbf16> to vector<12x32xbf16>
    %cst_80 = arith.constant dense<0.000000e+00> : vector<8x32xf32>
    %94 = tpu.matmul %91, %93, %cst_80 {dimension_numbers = #tpu.dot_dimension_numbers<[1], [0], [0], [1], [0, 0, 1, 1], [], []>} : vector<8x12xbf16>, vector<12x32xbf16>, vector<8x32xf32> -> vector<8x32xf32>
    %95 = arith.addf %89, %94 : vector<8x32xf32>
    %cst_81 = arith.constant dense<0.000000e+00> : vector<8x12xf32>
    %96 = tpu.matmul %51, %88, %cst_81 {dimension_numbers = #tpu.dot_dimension_numbers<[1], [0], [0], [1], [0, 0, 1, 1], [], []>} : vector<8x16xbf16>, vector<16x12xbf16>, vector<8x12xf32> -> vector<8x12xf32>
    %97 = arith.truncf %96 : vector<8x12xf32> to vector<8x12xbf16>
    %c1_82 = arith.constant 1 : index
    %c0_83 = arith.constant 0 : index
    %c0_84 = arith.constant 0 : index
    %98 = vector.load %arg2[%c1_82, %c0_83, %c0_84] : memref<3x12x32xbf16, #tpu.memory_space<vmem>>, vector<1x12x32xbf16>
    %99 = vector.shape_cast %98 : vector<1x12x32xbf16> to vector<12x32xbf16>
    %cst_85 = arith.constant dense<0.000000e+00> : vector<8x32xf32>
    %100 = tpu.matmul %97, %99, %cst_85 {dimension_numbers = #tpu.dot_dimension_numbers<[1], [0], [0], [1], [0, 0, 1, 1], [], []>} : vector<8x12xbf16>, vector<12x32xbf16>, vector<8x32xf32> -> vector<8x32xf32>
    %101 = arith.addf %95, %100 : vector<8x32xf32>
    %cst_86 = arith.constant dense<0.000000e+00> : vector<8x12xf32>
    %102 = tpu.matmul %60, %88, %cst_86 {dimension_numbers = #tpu.dot_dimension_numbers<[1], [0], [0], [1], [0, 0, 1, 1], [], []>} : vector<8x16xbf16>, vector<16x12xbf16>, vector<8x12xf32> -> vector<8x12xf32>
    %103 = arith.truncf %102 : vector<8x12xf32> to vector<8x12xbf16>
    %c2_87 = arith.constant 2 : index
    %c0_88 = arith.constant 0 : index
    %c0_89 = arith.constant 0 : index
    %104 = vector.load %arg2[%c2_87, %c0_88, %c0_89] : memref<3x12x32xbf16, #tpu.memory_space<vmem>>, vector<1x12x32xbf16>
    %105 = vector.shape_cast %104 : vector<1x12x32xbf16> to vector<12x32xbf16>
    %cst_90 = arith.constant dense<0.000000e+00> : vector<8x32xf32>
    %106 = tpu.matmul %103, %105, %cst_90 {dimension_numbers = #tpu.dot_dimension_numbers<[1], [0], [0], [1], [0, 0, 1, 1], [], []>} : vector<8x12xbf16>, vector<12x32xbf16>, vector<8x32xf32> -> vector<8x32xf32>
    %107 = arith.addf %101, %106 : vector<8x32xf32>
    %c0_91 = arith.constant 0 : index
    %c0_92 = arith.constant 0 : index
    %108 = vector.load %arg3[%c0_91, %c0_92] : memref<1x32xf32, #tpu.memory_space<vmem>>, vector<1x32xf32>
    %109 = vector.broadcast %108 : vector<1x32xf32> to vector<8x32xf32>
    %110 = arith.addf %107, %109 : vector<8x32xf32>
    %cst_93 = arith.constant 0.000000e+00 : f32
    %111 = vector.broadcast %cst_93 : f32 to vector<8x32xf32>
    %112 = arith.maximumf %110, %111 : vector<8x32xf32>
    %113 = arith.truncf %112 : vector<8x32xf32> to vector<8x32xbf16>
    %114 = tpu.concatenate %7, %9, %11 in 1 : vector<16x4xbf16>, vector<16x4xbf16>, vector<16x4xbf16> -> vector<16x12xbf16>
    %cst_94 = arith.constant 0.000000e+00 : f32
    %115 = vector.broadcast %cst_94 : f32 to vector<8x32xf32>
    %cst_95 = arith.constant dense<0.000000e+00> : vector<8x12xf32>
    %116 = tpu.matmul %42, %114, %cst_95 {dimension_numbers = #tpu.dot_dimension_numbers<[1], [0], [0], [1], [0, 0, 1, 1], [], []>} : vector<8x16xbf16>, vector<16x12xbf16>, vector<8x12xf32> -> vector<8x12xf32>
    %117 = arith.truncf %116 : vector<8x12xf32> to vector<8x12xbf16>
    %c0_96 = arith.constant 0 : index
    %c0_97 = arith.constant 0 : index
    %c0_98 = arith.constant 0 : index
    %118 = vector.load %arg2[%c0_96, %c0_97, %c0_98] : memref<3x12x32xbf16, #tpu.memory_space<vmem>>, vector<1x12x32xbf16>
    %119 = vector.shape_cast %118 : vector<1x12x32xbf16> to vector<12x32xbf16>
    %cst_99 = arith.constant dense<0.000000e+00> : vector<8x32xf32>
    %120 = tpu.matmul %117, %119, %cst_99 {dimension_numbers = #tpu.dot_dimension_numbers<[1], [0], [0], [1], [0, 0, 1, 1], [], []>} : vector<8x12xbf16>, vector<12x32xbf16>, vector<8x32xf32> -> vector<8x32xf32>
    %121 = arith.addf %115, %120 : vector<8x32xf32>
    %cst_100 = arith.constant dense<0.000000e+00> : vector<8x12xf32>
    %122 = tpu.matmul %51, %114, %cst_100 {dimension_numbers = #tpu.dot_dimension_numbers<[1], [0], [0], [1], [0, 0, 1, 1], [], []>} : vector<8x16xbf16>, vector<16x12xbf16>, vector<8x12xf32> -> vector<8x12xf32>
    %123 = arith.truncf %122 : vector<8x12xf32> to vector<8x12xbf16>
    %c1_101 = arith.constant 1 : index
    %c0_102 = arith.constant 0 : index
    %c0_103 = arith.constant 0 : index
    %124 = vector.load %arg2[%c1_101, %c0_102, %c0_103] : memref<3x12x32xbf16, #tpu.memory_space<vmem>>, vector<1x12x32xbf16>
    %125 = vector.shape_cast %124 : vector<1x12x32xbf16> to vector<12x32xbf16>
    %cst_104 = arith.constant dense<0.000000e+00> : vector<8x32xf32>
    %126 = tpu.matmul %123, %125, %cst_104 {dimension_numbers = #tpu.dot_dimension_numbers<[1], [0], [0], [1], [0, 0, 1, 1], [], []>} : vector<8x12xbf16>, vector<12x32xbf16>, vector<8x32xf32> -> vector<8x32xf32>
    %127 = arith.addf %121, %126 : vector<8x32xf32>
    %cst_105 = arith.constant dense<0.000000e+00> : vector<8x12xf32>
    %128 = tpu.matmul %60, %114, %cst_105 {dimension_numbers = #tpu.dot_dimension_numbers<[1], [0], [0], [1], [0, 0, 1, 1], [], []>} : vector<8x16xbf16>, vector<16x12xbf16>, vector<8x12xf32> -> vector<8x12xf32>
    %129 = arith.truncf %128 : vector<8x12xf32> to vector<8x12xbf16>
    %c2_106 = arith.constant 2 : index
    %c0_107 = arith.constant 0 : index
    %c0_108 = arith.constant 0 : index
    %130 = vector.load %arg2[%c2_106, %c0_107, %c0_108] : memref<3x12x32xbf16, #tpu.memory_space<vmem>>, vector<1x12x32xbf16>
    %131 = vector.shape_cast %130 : vector<1x12x32xbf16> to vector<12x32xbf16>
    %cst_109 = arith.constant dense<0.000000e+00> : vector<8x32xf32>
    %132 = tpu.matmul %129, %131, %cst_109 {dimension_numbers = #tpu.dot_dimension_numbers<[1], [0], [0], [1], [0, 0, 1, 1], [], []>} : vector<8x12xbf16>, vector<12x32xbf16>, vector<8x32xf32> -> vector<8x32xf32>
    %133 = arith.addf %127, %132 : vector<8x32xf32>
    %c0_110 = arith.constant 0 : index
    %c0_111 = arith.constant 0 : index
    %134 = vector.load %arg3[%c0_110, %c0_111] : memref<1x32xf32, #tpu.memory_space<vmem>>, vector<1x32xf32>
    %135 = vector.broadcast %134 : vector<1x32xf32> to vector<8x32xf32>
    %136 = arith.addf %133, %135 : vector<8x32xf32>
    %cst_112 = arith.constant 0.000000e+00 : f32
    %137 = vector.broadcast %cst_112 : f32 to vector<8x32xf32>
    %138 = arith.maximumf %136, %137 : vector<8x32xf32>
    %139 = arith.truncf %138 : vector<8x32xf32> to vector<8x32xbf16>
    %140 = tpu.concatenate %11, %13, %15 in 1 : vector<16x4xbf16>, vector<16x4xbf16>, vector<16x4xbf16> -> vector<16x12xbf16>
    %cst_113 = arith.constant 0.000000e+00 : f32
    %141 = vector.broadcast %cst_113 : f32 to vector<8x32xf32>
    %cst_114 = arith.constant dense<0.000000e+00> : vector<8x12xf32>
    %142 = tpu.matmul %42, %140, %cst_114 {dimension_numbers = #tpu.dot_dimension_numbers<[1], [0], [0], [1], [0, 0, 1, 1], [], []>} : vector<8x16xbf16>, vector<16x12xbf16>, vector<8x12xf32> -> vector<8x12xf32>
    %143 = arith.truncf %142 : vector<8x12xf32> to vector<8x12xbf16>
    %c0_115 = arith.constant 0 : index
    %c0_116 = arith.constant 0 : index
    %c0_117 = arith.constant 0 : index
    %144 = vector.load %arg2[%c0_115, %c0_116, %c0_117] : memref<3x12x32xbf16, #tpu.memory_space<vmem>>, vector<1x12x32xbf16>
    %145 = vector.shape_cast %144 : vector<1x12x32xbf16> to vector<12x32xbf16>
    %cst_118 = arith.constant dense<0.000000e+00> : vector<8x32xf32>
    %146 = tpu.matmul %143, %145, %cst_118 {dimension_numbers = #tpu.dot_dimension_numbers<[1], [0], [0], [1], [0, 0, 1, 1], [], []>} : vector<8x12xbf16>, vector<12x32xbf16>, vector<8x32xf32> -> vector<8x32xf32>
    %147 = arith.addf %141, %146 : vector<8x32xf32>
    %cst_119 = arith.constant dense<0.000000e+00> : vector<8x12xf32>
    %148 = tpu.matmul %51, %140, %cst_119 {dimension_numbers = #tpu.dot_dimension_numbers<[1], [0], [0], [1], [0, 0, 1, 1], [], []>} : vector<8x16xbf16>, vector<16x12xbf16>, vector<8x12xf32> -> vector<8x12xf32>
    %149 = arith.truncf %148 : vector<8x12xf32> to vector<8x12xbf16>
    %c1_120 = arith.constant 1 : index
    %c0_121 = arith.constant 0 : index
    %c0_122 = arith.constant 0 : index
    %150 = vector.load %arg2[%c1_120, %c0_121, %c0_122] : memref<3x12x32xbf16, #tpu.memory_space<vmem>>, vector<1x12x32xbf16>
    %151 = vector.shape_cast %150 : vector<1x12x32xbf16> to vector<12x32xbf16>
    %cst_123 = arith.constant dense<0.000000e+00> : vector<8x32xf32>
    %152 = tpu.matmul %149, %151, %cst_123 {dimension_numbers = #tpu.dot_dimension_numbers<[1], [0], [0], [1], [0, 0, 1, 1], [], []>} : vector<8x12xbf16>, vector<12x32xbf16>, vector<8x32xf32> -> vector<8x32xf32>
    %153 = arith.addf %147, %152 : vector<8x32xf32>
    %cst_124 = arith.constant dense<0.000000e+00> : vector<8x12xf32>
    %154 = tpu.matmul %60, %140, %cst_124 {dimension_numbers = #tpu.dot_dimension_numbers<[1], [0], [0], [1], [0, 0, 1, 1], [], []>} : vector<8x16xbf16>, vector<16x12xbf16>, vector<8x12xf32> -> vector<8x12xf32>
    %155 = arith.truncf %154 : vector<8x12xf32> to vector<8x12xbf16>
    %c2_125 = arith.constant 2 : index
    %c0_126 = arith.constant 0 : index
    %c0_127 = arith.constant 0 : index
    %156 = vector.load %arg2[%c2_125, %c0_126, %c0_127] : memref<3x12x32xbf16, #tpu.memory_space<vmem>>, vector<1x12x32xbf16>
    %157 = vector.shape_cast %156 : vector<1x12x32xbf16> to vector<12x32xbf16>
    %cst_128 = arith.constant dense<0.000000e+00> : vector<8x32xf32>
    %158 = tpu.matmul %155, %157, %cst_128 {dimension_numbers = #tpu.dot_dimension_numbers<[1], [0], [0], [1], [0, 0, 1, 1], [], []>} : vector<8x12xbf16>, vector<12x32xbf16>, vector<8x32xf32> -> vector<8x32xf32>
    %159 = arith.addf %153, %158 : vector<8x32xf32>
    %c0_129 = arith.constant 0 : index
    %c0_130 = arith.constant 0 : index
    %160 = vector.load %arg3[%c0_129, %c0_130] : memref<1x32xf32, #tpu.memory_space<vmem>>, vector<1x32xf32>
    %161 = vector.broadcast %160 : vector<1x32xf32> to vector<8x32xf32>
    %162 = arith.addf %159, %161 : vector<8x32xf32>
    %cst_131 = arith.constant 0.000000e+00 : f32
    %163 = vector.broadcast %cst_131 : f32 to vector<8x32xf32>
    %164 = arith.maximumf %162, %163 : vector<8x32xf32>
    %165 = arith.truncf %164 : vector<8x32xf32> to vector<8x32xbf16>
    %166 = tpu.concatenate %15, %17, %19 in 1 : vector<16x4xbf16>, vector<16x4xbf16>, vector<16x4xbf16> -> vector<16x12xbf16>
    %cst_132 = arith.constant 0.000000e+00 : f32
    %167 = vector.broadcast %cst_132 : f32 to vector<8x32xf32>
    %cst_133 = arith.constant dense<0.000000e+00> : vector<8x12xf32>
    %168 = tpu.matmul %42, %166, %cst_133 {dimension_numbers = #tpu.dot_dimension_numbers<[1], [0], [0], [1], [0, 0, 1, 1], [], []>} : vector<8x16xbf16>, vector<16x12xbf16>, vector<8x12xf32> -> vector<8x12xf32>
    %169 = arith.truncf %168 : vector<8x12xf32> to vector<8x12xbf16>
    %c0_134 = arith.constant 0 : index
    %c0_135 = arith.constant 0 : index
    %c0_136 = arith.constant 0 : index
    %170 = vector.load %arg2[%c0_134, %c0_135, %c0_136] : memref<3x12x32xbf16, #tpu.memory_space<vmem>>, vector<1x12x32xbf16>
    %171 = vector.shape_cast %170 : vector<1x12x32xbf16> to vector<12x32xbf16>
    %cst_137 = arith.constant dense<0.000000e+00> : vector<8x32xf32>
    %172 = tpu.matmul %169, %171, %cst_137 {dimension_numbers = #tpu.dot_dimension_numbers<[1], [0], [0], [1], [0, 0, 1, 1], [], []>} : vector<8x12xbf16>, vector<12x32xbf16>, vector<8x32xf32> -> vector<8x32xf32>
    %173 = arith.addf %167, %172 : vector<8x32xf32>
    %cst_138 = arith.constant dense<0.000000e+00> : vector<8x12xf32>
    %174 = tpu.matmul %51, %166, %cst_138 {dimension_numbers = #tpu.dot_dimension_numbers<[1], [0], [0], [1], [0, 0, 1, 1], [], []>} : vector<8x16xbf16>, vector<16x12xbf16>, vector<8x12xf32> -> vector<8x12xf32>
    %175 = arith.truncf %174 : vector<8x12xf32> to vector<8x12xbf16>
    %c1_139 = arith.constant 1 : index
    %c0_140 = arith.constant 0 : index
    %c0_141 = arith.constant 0 : index
    %176 = vector.load %arg2[%c1_139, %c0_140, %c0_141] : memref<3x12x32xbf16, #tpu.memory_space<vmem>>, vector<1x12x32xbf16>
    %177 = vector.shape_cast %176 : vector<1x12x32xbf16> to vector<12x32xbf16>
    %cst_142 = arith.constant dense<0.000000e+00> : vector<8x32xf32>
    %178 = tpu.matmul %175, %177, %cst_142 {dimension_numbers = #tpu.dot_dimension_numbers<[1], [0], [0], [1], [0, 0, 1, 1], [], []>} : vector<8x12xbf16>, vector<12x32xbf16>, vector<8x32xf32> -> vector<8x32xf32>
    %179 = arith.addf %173, %178 : vector<8x32xf32>
    %cst_143 = arith.constant dense<0.000000e+00> : vector<8x12xf32>
    %180 = tpu.matmul %60, %166, %cst_143 {dimension_numbers = #tpu.dot_dimension_numbers<[1], [0], [0], [1], [0, 0, 1, 1], [], []>} : vector<8x16xbf16>, vector<16x12xbf16>, vector<8x12xf32> -> vector<8x12xf32>
    %181 = arith.truncf %180 : vector<8x12xf32> to vector<8x12xbf16>
    %c2_144 = arith.constant 2 : index
    %c0_145 = arith.constant 0 : index
    %c0_146 = arith.constant 0 : index
    %182 = vector.load %arg2[%c2_144, %c0_145, %c0_146] : memref<3x12x32xbf16, #tpu.memory_space<vmem>>, vector<1x12x32xbf16>
    %183 = vector.shape_cast %182 : vector<1x12x32xbf16> to vector<12x32xbf16>
    %cst_147 = arith.constant dense<0.000000e+00> : vector<8x32xf32>
    %184 = tpu.matmul %181, %183, %cst_147 {dimension_numbers = #tpu.dot_dimension_numbers<[1], [0], [0], [1], [0, 0, 1, 1], [], []>} : vector<8x12xbf16>, vector<12x32xbf16>, vector<8x32xf32> -> vector<8x32xf32>
    %185 = arith.addf %179, %184 : vector<8x32xf32>
    %c0_148 = arith.constant 0 : index
    %c0_149 = arith.constant 0 : index
    %186 = vector.load %arg3[%c0_148, %c0_149] : memref<1x32xf32, #tpu.memory_space<vmem>>, vector<1x32xf32>
    %187 = vector.broadcast %186 : vector<1x32xf32> to vector<8x32xf32>
    %188 = arith.addf %185, %187 : vector<8x32xf32>
    %cst_150 = arith.constant 0.000000e+00 : f32
    %189 = vector.broadcast %cst_150 : f32 to vector<8x32xf32>
    %190 = arith.maximumf %188, %189 : vector<8x32xf32>
    %191 = arith.truncf %190 : vector<8x32xf32> to vector<8x32xbf16>
    %192 = tpu.concatenate %19, %21, %23 in 1 : vector<16x4xbf16>, vector<16x4xbf16>, vector<16x4xbf16> -> vector<16x12xbf16>
    %cst_151 = arith.constant 0.000000e+00 : f32
    %193 = vector.broadcast %cst_151 : f32 to vector<8x32xf32>
    %cst_152 = arith.constant dense<0.000000e+00> : vector<8x12xf32>
    %194 = tpu.matmul %42, %192, %cst_152 {dimension_numbers = #tpu.dot_dimension_numbers<[1], [0], [0], [1], [0, 0, 1, 1], [], []>} : vector<8x16xbf16>, vector<16x12xbf16>, vector<8x12xf32> -> vector<8x12xf32>
    %195 = arith.truncf %194 : vector<8x12xf32> to vector<8x12xbf16>
    %c0_153 = arith.constant 0 : index
    %c0_154 = arith.constant 0 : index
    %c0_155 = arith.constant 0 : index
    %196 = vector.load %arg2[%c0_153, %c0_154, %c0_155] : memref<3x12x32xbf16, #tpu.memory_space<vmem>>, vector<1x12x32xbf16>
    %197 = vector.shape_cast %196 : vector<1x12x32xbf16> to vector<12x32xbf16>
    %cst_156 = arith.constant dense<0.000000e+00> : vector<8x32xf32>
    %198 = tpu.matmul %195, %197, %cst_156 {dimension_numbers = #tpu.dot_dimension_numbers<[1], [0], [0], [1], [0, 0, 1, 1], [], []>} : vector<8x12xbf16>, vector<12x32xbf16>, vector<8x32xf32> -> vector<8x32xf32>
    %199 = arith.addf %193, %198 : vector<8x32xf32>
    %cst_157 = arith.constant dense<0.000000e+00> : vector<8x12xf32>
    %200 = tpu.matmul %51, %192, %cst_157 {dimension_numbers = #tpu.dot_dimension_numbers<[1], [0], [0], [1], [0, 0, 1, 1], [], []>} : vector<8x16xbf16>, vector<16x12xbf16>, vector<8x12xf32> -> vector<8x12xf32>
    %201 = arith.truncf %200 : vector<8x12xf32> to vector<8x12xbf16>
    %c1_158 = arith.constant 1 : index
    %c0_159 = arith.constant 0 : index
    %c0_160 = arith.constant 0 : index
    %202 = vector.load %arg2[%c1_158, %c0_159, %c0_160] : memref<3x12x32xbf16, #tpu.memory_space<vmem>>, vector<1x12x32xbf16>
    %203 = vector.shape_cast %202 : vector<1x12x32xbf16> to vector<12x32xbf16>
    %cst_161 = arith.constant dense<0.000000e+00> : vector<8x32xf32>
    %204 = tpu.matmul %201, %203, %cst_161 {dimension_numbers = #tpu.dot_dimension_numbers<[1], [0], [0], [1], [0, 0, 1, 1], [], []>} : vector<8x12xbf16>, vector<12x32xbf16>, vector<8x32xf32> -> vector<8x32xf32>
    %205 = arith.addf %199, %204 : vector<8x32xf32>
    %cst_162 = arith.constant dense<0.000000e+00> : vector<8x12xf32>
    %206 = tpu.matmul %60, %192, %cst_162 {dimension_numbers = #tpu.dot_dimension_numbers<[1], [0], [0], [1], [0, 0, 1, 1], [], []>} : vector<8x16xbf16>, vector<16x12xbf16>, vector<8x12xf32> -> vector<8x12xf32>
    %207 = arith.truncf %206 : vector<8x12xf32> to vector<8x12xbf16>
    %c2_163 = arith.constant 2 : index
    %c0_164 = arith.constant 0 : index
    %c0_165 = arith.constant 0 : index
    %208 = vector.load %arg2[%c2_163, %c0_164, %c0_165] : memref<3x12x32xbf16, #tpu.memory_space<vmem>>, vector<1x12x32xbf16>
    %209 = vector.shape_cast %208 : vector<1x12x32xbf16> to vector<12x32xbf16>
    %cst_166 = arith.constant dense<0.000000e+00> : vector<8x32xf32>
    %210 = tpu.matmul %207, %209, %cst_166 {dimension_numbers = #tpu.dot_dimension_numbers<[1], [0], [0], [1], [0, 0, 1, 1], [], []>} : vector<8x12xbf16>, vector<12x32xbf16>, vector<8x32xf32> -> vector<8x32xf32>
    %211 = arith.addf %205, %210 : vector<8x32xf32>
    %c0_167 = arith.constant 0 : index
    %c0_168 = arith.constant 0 : index
    %212 = vector.load %arg3[%c0_167, %c0_168] : memref<1x32xf32, #tpu.memory_space<vmem>>, vector<1x32xf32>
    %213 = vector.broadcast %212 : vector<1x32xf32> to vector<8x32xf32>
    %214 = arith.addf %211, %213 : vector<8x32xf32>
    %cst_169 = arith.constant 0.000000e+00 : f32
    %215 = vector.broadcast %cst_169 : f32 to vector<8x32xf32>
    %216 = arith.maximumf %214, %215 : vector<8x32xf32>
    %217 = arith.truncf %216 : vector<8x32xf32> to vector<8x32xbf16>
    %218 = tpu.concatenate %23, %25, %27 in 1 : vector<16x4xbf16>, vector<16x4xbf16>, vector<16x4xbf16> -> vector<16x12xbf16>
    %cst_170 = arith.constant 0.000000e+00 : f32
    %219 = vector.broadcast %cst_170 : f32 to vector<8x32xf32>
    %cst_171 = arith.constant dense<0.000000e+00> : vector<8x12xf32>
    %220 = tpu.matmul %42, %218, %cst_171 {dimension_numbers = #tpu.dot_dimension_numbers<[1], [0], [0], [1], [0, 0, 1, 1], [], []>} : vector<8x16xbf16>, vector<16x12xbf16>, vector<8x12xf32> -> vector<8x12xf32>
    %221 = arith.truncf %220 : vector<8x12xf32> to vector<8x12xbf16>
    %c0_172 = arith.constant 0 : index
    %c0_173 = arith.constant 0 : index
    %c0_174 = arith.constant 0 : index
    %222 = vector.load %arg2[%c0_172, %c0_173, %c0_174] : memref<3x12x32xbf16, #tpu.memory_space<vmem>>, vector<1x12x32xbf16>
    %223 = vector.shape_cast %222 : vector<1x12x32xbf16> to vector<12x32xbf16>
    %cst_175 = arith.constant dense<0.000000e+00> : vector<8x32xf32>
    %224 = tpu.matmul %221, %223, %cst_175 {dimension_numbers = #tpu.dot_dimension_numbers<[1], [0], [0], [1], [0, 0, 1, 1], [], []>} : vector<8x12xbf16>, vector<12x32xbf16>, vector<8x32xf32> -> vector<8x32xf32>
    %225 = arith.addf %219, %224 : vector<8x32xf32>
    %cst_176 = arith.constant dense<0.000000e+00> : vector<8x12xf32>
    %226 = tpu.matmul %51, %218, %cst_176 {dimension_numbers = #tpu.dot_dimension_numbers<[1], [0], [0], [1], [0, 0, 1, 1], [], []>} : vector<8x16xbf16>, vector<16x12xbf16>, vector<8x12xf32> -> vector<8x12xf32>
    %227 = arith.truncf %226 : vector<8x12xf32> to vector<8x12xbf16>
    %c1_177 = arith.constant 1 : index
    %c0_178 = arith.constant 0 : index
    %c0_179 = arith.constant 0 : index
    %228 = vector.load %arg2[%c1_177, %c0_178, %c0_179] : memref<3x12x32xbf16, #tpu.memory_space<vmem>>, vector<1x12x32xbf16>
    %229 = vector.shape_cast %228 : vector<1x12x32xbf16> to vector<12x32xbf16>
    %cst_180 = arith.constant dense<0.000000e+00> : vector<8x32xf32>
    %230 = tpu.matmul %227, %229, %cst_180 {dimension_numbers = #tpu.dot_dimension_numbers<[1], [0], [0], [1], [0, 0, 1, 1], [], []>} : vector<8x12xbf16>, vector<12x32xbf16>, vector<8x32xf32> -> vector<8x32xf32>
    %231 = arith.addf %225, %230 : vector<8x32xf32>
    %cst_181 = arith.constant dense<0.000000e+00> : vector<8x12xf32>
    %232 = tpu.matmul %60, %218, %cst_181 {dimension_numbers = #tpu.dot_dimension_numbers<[1], [0], [0], [1], [0, 0, 1, 1], [], []>} : vector<8x16xbf16>, vector<16x12xbf16>, vector<8x12xf32> -> vector<8x12xf32>
    %233 = arith.truncf %232 : vector<8x12xf32> to vector<8x12xbf16>
    %c2_182 = arith.constant 2 : index
    %c0_183 = arith.constant 0 : index
    %c0_184 = arith.constant 0 : index
    %234 = vector.load %arg2[%c2_182, %c0_183, %c0_184] : memref<3x12x32xbf16, #tpu.memory_space<vmem>>, vector<1x12x32xbf16>
    %235 = vector.shape_cast %234 : vector<1x12x32xbf16> to vector<12x32xbf16>
    %cst_185 = arith.constant dense<0.000000e+00> : vector<8x32xf32>
    %236 = tpu.matmul %233, %235, %cst_185 {dimension_numbers = #tpu.dot_dimension_numbers<[1], [0], [0], [1], [0, 0, 1, 1], [], []>} : vector<8x12xbf16>, vector<12x32xbf16>, vector<8x32xf32> -> vector<8x32xf32>
    %237 = arith.addf %231, %236 : vector<8x32xf32>
    %c0_186 = arith.constant 0 : index
    %c0_187 = arith.constant 0 : index
    %238 = vector.load %arg3[%c0_186, %c0_187] : memref<1x32xf32, #tpu.memory_space<vmem>>, vector<1x32xf32>
    %239 = vector.broadcast %238 : vector<1x32xf32> to vector<8x32xf32>
    %240 = arith.addf %237, %239 : vector<8x32xf32>
    %cst_188 = arith.constant 0.000000e+00 : f32
    %241 = vector.broadcast %cst_188 : f32 to vector<8x32xf32>
    %242 = arith.maximumf %240, %241 : vector<8x32xf32>
    %243 = arith.truncf %242 : vector<8x32xf32> to vector<8x32xbf16>
    %244 = tpu.concatenate %27, %29, %31 in 1 : vector<16x4xbf16>, vector<16x4xbf16>, vector<16x4xbf16> -> vector<16x12xbf16>
    %cst_189 = arith.constant 0.000000e+00 : f32
    %245 = vector.broadcast %cst_189 : f32 to vector<8x32xf32>
    %cst_190 = arith.constant dense<0.000000e+00> : vector<8x12xf32>
    %246 = tpu.matmul %42, %244, %cst_190 {dimension_numbers = #tpu.dot_dimension_numbers<[1], [0], [0], [1], [0, 0, 1, 1], [], []>} : vector<8x16xbf16>, vector<16x12xbf16>, vector<8x12xf32> -> vector<8x12xf32>
    %247 = arith.truncf %246 : vector<8x12xf32> to vector<8x12xbf16>
    %c0_191 = arith.constant 0 : index
    %c0_192 = arith.constant 0 : index
    %c0_193 = arith.constant 0 : index
    %248 = vector.load %arg2[%c0_191, %c0_192, %c0_193] : memref<3x12x32xbf16, #tpu.memory_space<vmem>>, vector<1x12x32xbf16>
    %249 = vector.shape_cast %248 : vector<1x12x32xbf16> to vector<12x32xbf16>
    %cst_194 = arith.constant dense<0.000000e+00> : vector<8x32xf32>
    %250 = tpu.matmul %247, %249, %cst_194 {dimension_numbers = #tpu.dot_dimension_numbers<[1], [0], [0], [1], [0, 0, 1, 1], [], []>} : vector<8x12xbf16>, vector<12x32xbf16>, vector<8x32xf32> -> vector<8x32xf32>
    %251 = arith.addf %245, %250 : vector<8x32xf32>
    %cst_195 = arith.constant dense<0.000000e+00> : vector<8x12xf32>
    %252 = tpu.matmul %51, %244, %cst_195 {dimension_numbers = #tpu.dot_dimension_numbers<[1], [0], [0], [1], [0, 0, 1, 1], [], []>} : vector<8x16xbf16>, vector<16x12xbf16>, vector<8x12xf32> -> vector<8x12xf32>
    %253 = arith.truncf %252 : vector<8x12xf32> to vector<8x12xbf16>
    %c1_196 = arith.constant 1 : index
    %c0_197 = arith.constant 0 : index
    %c0_198 = arith.constant 0 : index
    %254 = vector.load %arg2[%c1_196, %c0_197, %c0_198] : memref<3x12x32xbf16, #tpu.memory_space<vmem>>, vector<1x12x32xbf16>
    %255 = vector.shape_cast %254 : vector<1x12x32xbf16> to vector<12x32xbf16>
    %cst_199 = arith.constant dense<0.000000e+00> : vector<8x32xf32>
    %256 = tpu.matmul %253, %255, %cst_199 {dimension_numbers = #tpu.dot_dimension_numbers<[1], [0], [0], [1], [0, 0, 1, 1], [], []>} : vector<8x12xbf16>, vector<12x32xbf16>, vector<8x32xf32> -> vector<8x32xf32>
    %257 = arith.addf %251, %256 : vector<8x32xf32>
    %cst_200 = arith.constant dense<0.000000e+00> : vector<8x12xf32>
    %258 = tpu.matmul %60, %244, %cst_200 {dimension_numbers = #tpu.dot_dimension_numbers<[1], [0], [0], [1], [0, 0, 1, 1], [], []>} : vector<8x16xbf16>, vector<16x12xbf16>, vector<8x12xf32> -> vector<8x12xf32>
    %259 = arith.truncf %258 : vector<8x12xf32> to vector<8x12xbf16>
    %c2_201 = arith.constant 2 : index
    %c0_202 = arith.constant 0 : index
    %c0_203 = arith.constant 0 : index
    %260 = vector.load %arg2[%c2_201, %c0_202, %c0_203] : memref<3x12x32xbf16, #tpu.memory_space<vmem>>, vector<1x12x32xbf16>
    %261 = vector.shape_cast %260 : vector<1x12x32xbf16> to vector<12x32xbf16>
    %cst_204 = arith.constant dense<0.000000e+00> : vector<8x32xf32>
    %262 = tpu.matmul %259, %261, %cst_204 {dimension_numbers = #tpu.dot_dimension_numbers<[1], [0], [0], [1], [0, 0, 1, 1], [], []>} : vector<8x12xbf16>, vector<12x32xbf16>, vector<8x32xf32> -> vector<8x32xf32>
    %263 = arith.addf %257, %262 : vector<8x32xf32>
    %c0_205 = arith.constant 0 : index
    %c0_206 = arith.constant 0 : index
    %264 = vector.load %arg3[%c0_205, %c0_206] : memref<1x32xf32, #tpu.memory_space<vmem>>, vector<1x32xf32>
    %265 = vector.broadcast %264 : vector<1x32xf32> to vector<8x32xf32>
    %266 = arith.addf %263, %265 : vector<8x32xf32>
    %cst_207 = arith.constant 0.000000e+00 : f32
    %267 = vector.broadcast %cst_207 : f32 to vector<8x32xf32>
    %268 = arith.maximumf %266, %267 : vector<8x32xf32>
    %269 = arith.truncf %268 : vector<8x32xf32> to vector<8x32xbf16>
    %270 = tpu.iota {dimensions = array<i32: 0>} : vector<4x8xi32>
    %271 = tpu.iota {dimensions = array<i32: 1>} : vector<4x8xi32>
    %c2_i32_208 = arith.constant 2 : i32
    %272 = vector.broadcast %c2_i32_208 : i32 to vector<4x8xi32>
    %273 = arith.muli %272, %270 : vector<4x8xi32>
    %c-1_i32_209 = arith.constant -1 : i32
    %274 = vector.broadcast %c-1_i32_209 : i32 to vector<4x8xi32>
    %275 = arith.addi %273, %274 : vector<4x8xi32>
    %276 = arith.cmpi eq, %271, %275 : vector<4x8xi32>
    %cst_210 = arith.constant 1.000000e+00 : f32
    %cst_211 = arith.constant 0.000000e+00 : f32
    %277 = vector.broadcast %cst_210 : f32 to vector<4x8xf32>
    %278 = vector.broadcast %cst_211 : f32 to vector<4x8xf32>
    %279 = arith.select %276, %277, %278 : vector<4x8xi1>, vector<4x8xf32>
    %280 = arith.truncf %279 : vector<4x8xf32> to vector<4x8xbf16>
    %c2_i32_212 = arith.constant 2 : i32
    %281 = vector.broadcast %c2_i32_212 : i32 to vector<4x8xi32>
    %282 = arith.muli %281, %270 : vector<4x8xi32>
    %c0_i32_213 = arith.constant 0 : i32
    %283 = vector.broadcast %c0_i32_213 : i32 to vector<4x8xi32>
    %284 = arith.addi %282, %283 : vector<4x8xi32>
    %285 = arith.cmpi eq, %271, %284 : vector<4x8xi32>
    %cst_214 = arith.constant 1.000000e+00 : f32
    %cst_215 = arith.constant 0.000000e+00 : f32
    %286 = vector.broadcast %cst_214 : f32 to vector<4x8xf32>
    %287 = vector.broadcast %cst_215 : f32 to vector<4x8xf32>
    %288 = arith.select %285, %286, %287 : vector<4x8xi1>, vector<4x8xf32>
    %289 = arith.truncf %288 : vector<4x8xf32> to vector<4x8xbf16>
    %c2_i32_216 = arith.constant 2 : i32
    %290 = vector.broadcast %c2_i32_216 : i32 to vector<4x8xi32>
    %291 = arith.muli %290, %270 : vector<4x8xi32>
    %c1_i32_217 = arith.constant 1 : i32
    %292 = vector.broadcast %c1_i32_217 : i32 to vector<4x8xi32>
    %293 = arith.addi %291, %292 : vector<4x8xi32>
    %294 = arith.cmpi eq, %271, %293 : vector<4x8xi32>
    %cst_218 = arith.constant 1.000000e+00 : f32
    %cst_219 = arith.constant 0.000000e+00 : f32
    %295 = vector.broadcast %cst_218 : f32 to vector<4x8xf32>
    %296 = vector.broadcast %cst_219 : f32 to vector<4x8xf32>
    %297 = arith.select %294, %295, %296 : vector<4x8xi1>, vector<4x8xf32>
    %298 = arith.truncf %297 : vector<4x8xf32> to vector<4x8xbf16>
    %cst_220 = arith.constant 0.000000e+00 : bf16
    %299 = vector.broadcast %cst_220 : bf16 to vector<8x32xbf16>
    %300 = tpu.concatenate %299, %87, %113 in 1 : vector<8x32xbf16>, vector<8x32xbf16>, vector<8x32xbf16> -> vector<8x96xbf16>
    %cst_221 = arith.constant 0.000000e+00 : f32
    %301 = vector.broadcast %cst_221 : f32 to vector<4x64xf32>
    %cst_222 = arith.constant dense<0.000000e+00> : vector<4x96xf32>
    %302 = tpu.matmul %280, %300, %cst_222 {dimension_numbers = #tpu.dot_dimension_numbers<[1], [0], [0], [1], [0, 0, 1, 1], [], []>} : vector<4x8xbf16>, vector<8x96xbf16>, vector<4x96xf32> -> vector<4x96xf32>
    %303 = arith.truncf %302 : vector<4x96xf32> to vector<4x96xbf16>
    %c0_223 = arith.constant 0 : index
    %c0_224 = arith.constant 0 : index
    %c0_225 = arith.constant 0 : index
    %304 = vector.load %arg4[%c0_223, %c0_224, %c0_225] : memref<3x96x64xbf16, #tpu.memory_space<vmem>>, vector<1x96x64xbf16>
    %305 = vector.shape_cast %304 : vector<1x96x64xbf16> to vector<96x64xbf16>
    %cst_226 = arith.constant dense<0.000000e+00> : vector<4x64xf32>
    %306 = tpu.matmul %303, %305, %cst_226 {dimension_numbers = #tpu.dot_dimension_numbers<[1], [0], [0], [1], [0, 0, 1, 1], [], []>} : vector<4x96xbf16>, vector<96x64xbf16>, vector<4x64xf32> -> vector<4x64xf32>
    %307 = arith.addf %301, %306 : vector<4x64xf32>
    %cst_227 = arith.constant dense<0.000000e+00> : vector<4x96xf32>
    %308 = tpu.matmul %289, %300, %cst_227 {dimension_numbers = #tpu.dot_dimension_numbers<[1], [0], [0], [1], [0, 0, 1, 1], [], []>} : vector<4x8xbf16>, vector<8x96xbf16>, vector<4x96xf32> -> vector<4x96xf32>
    %309 = arith.truncf %308 : vector<4x96xf32> to vector<4x96xbf16>
    %c1_228 = arith.constant 1 : index
    %c0_229 = arith.constant 0 : index
    %c0_230 = arith.constant 0 : index
    %310 = vector.load %arg4[%c1_228, %c0_229, %c0_230] : memref<3x96x64xbf16, #tpu.memory_space<vmem>>, vector<1x96x64xbf16>
    %311 = vector.shape_cast %310 : vector<1x96x64xbf16> to vector<96x64xbf16>
    %cst_231 = arith.constant dense<0.000000e+00> : vector<4x64xf32>
    %312 = tpu.matmul %309, %311, %cst_231 {dimension_numbers = #tpu.dot_dimension_numbers<[1], [0], [0], [1], [0, 0, 1, 1], [], []>} : vector<4x96xbf16>, vector<96x64xbf16>, vector<4x64xf32> -> vector<4x64xf32>
    %313 = arith.addf %307, %312 : vector<4x64xf32>
    %cst_232 = arith.constant dense<0.000000e+00> : vector<4x96xf32>
    %314 = tpu.matmul %298, %300, %cst_232 {dimension_numbers = #tpu.dot_dimension_numbers<[1], [0], [0], [1], [0, 0, 1, 1], [], []>} : vector<4x8xbf16>, vector<8x96xbf16>, vector<4x96xf32> -> vector<4x96xf32>
    %315 = arith.truncf %314 : vector<4x96xf32> to vector<4x96xbf16>
    %c2_233 = arith.constant 2 : index
    %c0_234 = arith.constant 0 : index
    %c0_235 = arith.constant 0 : index
    %316 = vector.load %arg4[%c2_233, %c0_234, %c0_235] : memref<3x96x64xbf16, #tpu.memory_space<vmem>>, vector<1x96x64xbf16>
    %317 = vector.shape_cast %316 : vector<1x96x64xbf16> to vector<96x64xbf16>
    %cst_236 = arith.constant dense<0.000000e+00> : vector<4x64xf32>
    %318 = tpu.matmul %315, %317, %cst_236 {dimension_numbers = #tpu.dot_dimension_numbers<[1], [0], [0], [1], [0, 0, 1, 1], [], []>} : vector<4x96xbf16>, vector<96x64xbf16>, vector<4x64xf32> -> vector<4x64xf32>
    %319 = arith.addf %313, %318 : vector<4x64xf32>
    %c0_237 = arith.constant 0 : index
    %c0_238 = arith.constant 0 : index
    %320 = vector.load %arg5[%c0_237, %c0_238] : memref<1x64xf32, #tpu.memory_space<vmem>>, vector<1x64xf32>
    %321 = vector.broadcast %320 : vector<1x64xf32> to vector<4x64xf32>
    %322 = arith.addf %319, %321 : vector<4x64xf32>
    %cst_239 = arith.constant 0.000000e+00 : f32
    %323 = vector.broadcast %cst_239 : f32 to vector<4x64xf32>
    %324 = arith.maximumf %322, %323 : vector<4x64xf32>
    %325 = arith.truncf %324 : vector<4x64xf32> to vector<4x64xbf16>
    %326 = tpu.concatenate %113, %139, %165 in 1 : vector<8x32xbf16>, vector<8x32xbf16>, vector<8x32xbf16> -> vector<8x96xbf16>
    %cst_240 = arith.constant 0.000000e+00 : f32
    %327 = vector.broadcast %cst_240 : f32 to vector<4x64xf32>
    %cst_241 = arith.constant dense<0.000000e+00> : vector<4x96xf32>
    %328 = tpu.matmul %280, %326, %cst_241 {dimension_numbers = #tpu.dot_dimension_numbers<[1], [0], [0], [1], [0, 0, 1, 1], [], []>} : vector<4x8xbf16>, vector<8x96xbf16>, vector<4x96xf32> -> vector<4x96xf32>
    %329 = arith.truncf %328 : vector<4x96xf32> to vector<4x96xbf16>
    %c0_242 = arith.constant 0 : index
    %c0_243 = arith.constant 0 : index
    %c0_244 = arith.constant 0 : index
    %330 = vector.load %arg4[%c0_242, %c0_243, %c0_244] : memref<3x96x64xbf16, #tpu.memory_space<vmem>>, vector<1x96x64xbf16>
    %331 = vector.shape_cast %330 : vector<1x96x64xbf16> to vector<96x64xbf16>
    %cst_245 = arith.constant dense<0.000000e+00> : vector<4x64xf32>
    %332 = tpu.matmul %329, %331, %cst_245 {dimension_numbers = #tpu.dot_dimension_numbers<[1], [0], [0], [1], [0, 0, 1, 1], [], []>} : vector<4x96xbf16>, vector<96x64xbf16>, vector<4x64xf32> -> vector<4x64xf32>
    %333 = arith.addf %327, %332 : vector<4x64xf32>
    %cst_246 = arith.constant dense<0.000000e+00> : vector<4x96xf32>
    %334 = tpu.matmul %289, %326, %cst_246 {dimension_numbers = #tpu.dot_dimension_numbers<[1], [0], [0], [1], [0, 0, 1, 1], [], []>} : vector<4x8xbf16>, vector<8x96xbf16>, vector<4x96xf32> -> vector<4x96xf32>
    %335 = arith.truncf %334 : vector<4x96xf32> to vector<4x96xbf16>
    %c1_247 = arith.constant 1 : index
    %c0_248 = arith.constant 0 : index
    %c0_249 = arith.constant 0 : index
    %336 = vector.load %arg4[%c1_247, %c0_248, %c0_249] : memref<3x96x64xbf16, #tpu.memory_space<vmem>>, vector<1x96x64xbf16>
    %337 = vector.shape_cast %336 : vector<1x96x64xbf16> to vector<96x64xbf16>
    %cst_250 = arith.constant dense<0.000000e+00> : vector<4x64xf32>
    %338 = tpu.matmul %335, %337, %cst_250 {dimension_numbers = #tpu.dot_dimension_numbers<[1], [0], [0], [1], [0, 0, 1, 1], [], []>} : vector<4x96xbf16>, vector<96x64xbf16>, vector<4x64xf32> -> vector<4x64xf32>
    %339 = arith.addf %333, %338 : vector<4x64xf32>
    %cst_251 = arith.constant dense<0.000000e+00> : vector<4x96xf32>
    %340 = tpu.matmul %298, %326, %cst_251 {dimension_numbers = #tpu.dot_dimension_numbers<[1], [0], [0], [1], [0, 0, 1, 1], [], []>} : vector<4x8xbf16>, vector<8x96xbf16>, vector<4x96xf32> -> vector<4x96xf32>
    %341 = arith.truncf %340 : vector<4x96xf32> to vector<4x96xbf16>
    %c2_252 = arith.constant 2 : index
    %c0_253 = arith.constant 0 : index
    %c0_254 = arith.constant 0 : index
    %342 = vector.load %arg4[%c2_252, %c0_253, %c0_254] : memref<3x96x64xbf16, #tpu.memory_space<vmem>>, vector<1x96x64xbf16>
    %343 = vector.shape_cast %342 : vector<1x96x64xbf16> to vector<96x64xbf16>
    %cst_255 = arith.constant dense<0.000000e+00> : vector<4x64xf32>
    %344 = tpu.matmul %341, %343, %cst_255 {dimension_numbers = #tpu.dot_dimension_numbers<[1], [0], [0], [1], [0, 0, 1, 1], [], []>} : vector<4x96xbf16>, vector<96x64xbf16>, vector<4x64xf32> -> vector<4x64xf32>
    %345 = arith.addf %339, %344 : vector<4x64xf32>
    %c0_256 = arith.constant 0 : index
    %c0_257 = arith.constant 0 : index
    %346 = vector.load %arg5[%c0_256, %c0_257] : memref<1x64xf32, #tpu.memory_space<vmem>>, vector<1x64xf32>
    %347 = vector.broadcast %346 : vector<1x64xf32> to vector<4x64xf32>
    %348 = arith.addf %345, %347 : vector<4x64xf32>
    %cst_258 = arith.constant 0.000000e+00 : f32
    %349 = vector.broadcast %cst_258 : f32 to vector<4x64xf32>
    %350 = arith.maximumf %348, %349 : vector<4x64xf32>
    %351 = arith.truncf %350 : vector<4x64xf32> to vector<4x64xbf16>
    %352 = tpu.concatenate %165, %191, %217 in 1 : vector<8x32xbf16>, vector<8x32xbf16>, vector<8x32xbf16> -> vector<8x96xbf16>
    %cst_259 = arith.constant 0.000000e+00 : f32
    %353 = vector.broadcast %cst_259 : f32 to vector<4x64xf32>
    %cst_260 = arith.constant dense<0.000000e+00> : vector<4x96xf32>
    %354 = tpu.matmul %280, %352, %cst_260 {dimension_numbers = #tpu.dot_dimension_numbers<[1], [0], [0], [1], [0, 0, 1, 1], [], []>} : vector<4x8xbf16>, vector<8x96xbf16>, vector<4x96xf32> -> vector<4x96xf32>
    %355 = arith.truncf %354 : vector<4x96xf32> to vector<4x96xbf16>
    %c0_261 = arith.constant 0 : index
    %c0_262 = arith.constant 0 : index
    %c0_263 = arith.constant 0 : index
    %356 = vector.load %arg4[%c0_261, %c0_262, %c0_263] : memref<3x96x64xbf16, #tpu.memory_space<vmem>>, vector<1x96x64xbf16>
    %357 = vector.shape_cast %356 : vector<1x96x64xbf16> to vector<96x64xbf16>
    %cst_264 = arith.constant dense<0.000000e+00> : vector<4x64xf32>
    %358 = tpu.matmul %355, %357, %cst_264 {dimension_numbers = #tpu.dot_dimension_numbers<[1], [0], [0], [1], [0, 0, 1, 1], [], []>} : vector<4x96xbf16>, vector<96x64xbf16>, vector<4x64xf32> -> vector<4x64xf32>
    %359 = arith.addf %353, %358 : vector<4x64xf32>
    %cst_265 = arith.constant dense<0.000000e+00> : vector<4x96xf32>
    %360 = tpu.matmul %289, %352, %cst_265 {dimension_numbers = #tpu.dot_dimension_numbers<[1], [0], [0], [1], [0, 0, 1, 1], [], []>} : vector<4x8xbf16>, vector<8x96xbf16>, vector<4x96xf32> -> vector<4x96xf32>
    %361 = arith.truncf %360 : vector<4x96xf32> to vector<4x96xbf16>
    %c1_266 = arith.constant 1 : index
    %c0_267 = arith.constant 0 : index
    %c0_268 = arith.constant 0 : index
    %362 = vector.load %arg4[%c1_266, %c0_267, %c0_268] : memref<3x96x64xbf16, #tpu.memory_space<vmem>>, vector<1x96x64xbf16>
    %363 = vector.shape_cast %362 : vector<1x96x64xbf16> to vector<96x64xbf16>
    %cst_269 = arith.constant dense<0.000000e+00> : vector<4x64xf32>
    %364 = tpu.matmul %361, %363, %cst_269 {dimension_numbers = #tpu.dot_dimension_numbers<[1], [0], [0], [1], [0, 0, 1, 1], [], []>} : vector<4x96xbf16>, vector<96x64xbf16>, vector<4x64xf32> -> vector<4x64xf32>
    %365 = arith.addf %359, %364 : vector<4x64xf32>
    %cst_270 = arith.constant dense<0.000000e+00> : vector<4x96xf32>
    %366 = tpu.matmul %298, %352, %cst_270 {dimension_numbers = #tpu.dot_dimension_numbers<[1], [0], [0], [1], [0, 0, 1, 1], [], []>} : vector<4x8xbf16>, vector<8x96xbf16>, vector<4x96xf32> -> vector<4x96xf32>
    %367 = arith.truncf %366 : vector<4x96xf32> to vector<4x96xbf16>
    %c2_271 = arith.constant 2 : index
    %c0_272 = arith.constant 0 : index
    %c0_273 = arith.constant 0 : index
    %368 = vector.load %arg4[%c2_271, %c0_272, %c0_273] : memref<3x96x64xbf16, #tpu.memory_space<vmem>>, vector<1x96x64xbf16>
    %369 = vector.shape_cast %368 : vector<1x96x64xbf16> to vector<96x64xbf16>
    %cst_274 = arith.constant dense<0.000000e+00> : vector<4x64xf32>
    %370 = tpu.matmul %367, %369, %cst_274 {dimension_numbers = #tpu.dot_dimension_numbers<[1], [0], [0], [1], [0, 0, 1, 1], [], []>} : vector<4x96xbf16>, vector<96x64xbf16>, vector<4x64xf32> -> vector<4x64xf32>
    %371 = arith.addf %365, %370 : vector<4x64xf32>
    %c0_275 = arith.constant 0 : index
    %c0_276 = arith.constant 0 : index
    %372 = vector.load %arg5[%c0_275, %c0_276] : memref<1x64xf32, #tpu.memory_space<vmem>>, vector<1x64xf32>
    %373 = vector.broadcast %372 : vector<1x64xf32> to vector<4x64xf32>
    %374 = arith.addf %371, %373 : vector<4x64xf32>
    %cst_277 = arith.constant 0.000000e+00 : f32
    %375 = vector.broadcast %cst_277 : f32 to vector<4x64xf32>
    %376 = arith.maximumf %374, %375 : vector<4x64xf32>
    %377 = arith.truncf %376 : vector<4x64xf32> to vector<4x64xbf16>
    %378 = tpu.concatenate %217, %243, %269 in 1 : vector<8x32xbf16>, vector<8x32xbf16>, vector<8x32xbf16> -> vector<8x96xbf16>
    %cst_278 = arith.constant 0.000000e+00 : f32
    %379 = vector.broadcast %cst_278 : f32 to vector<4x64xf32>
    %cst_279 = arith.constant dense<0.000000e+00> : vector<4x96xf32>
    %380 = tpu.matmul %280, %378, %cst_279 {dimension_numbers = #tpu.dot_dimension_numbers<[1], [0], [0], [1], [0, 0, 1, 1], [], []>} : vector<4x8xbf16>, vector<8x96xbf16>, vector<4x96xf32> -> vector<4x96xf32>
    %381 = arith.truncf %380 : vector<4x96xf32> to vector<4x96xbf16>
    %c0_280 = arith.constant 0 : index
    %c0_281 = arith.constant 0 : index
    %c0_282 = arith.constant 0 : index
    %382 = vector.load %arg4[%c0_280, %c0_281, %c0_282] : memref<3x96x64xbf16, #tpu.memory_space<vmem>>, vector<1x96x64xbf16>
    %383 = vector.shape_cast %382 : vector<1x96x64xbf16> to vector<96x64xbf16>
    %cst_283 = arith.constant dense<0.000000e+00> : vector<4x64xf32>
    %384 = tpu.matmul %381, %383, %cst_283 {dimension_numbers = #tpu.dot_dimension_numbers<[1], [0], [0], [1], [0, 0, 1, 1], [], []>} : vector<4x96xbf16>, vector<96x64xbf16>, vector<4x64xf32> -> vector<4x64xf32>
    %385 = arith.addf %379, %384 : vector<4x64xf32>
    %cst_284 = arith.constant dense<0.000000e+00> : vector<4x96xf32>
    %386 = tpu.matmul %289, %378, %cst_284 {dimension_numbers = #tpu.dot_dimension_numbers<[1], [0], [0], [1], [0, 0, 1, 1], [], []>} : vector<4x8xbf16>, vector<8x96xbf16>, vector<4x96xf32> -> vector<4x96xf32>
    %387 = arith.truncf %386 : vector<4x96xf32> to vector<4x96xbf16>
    %c1_285 = arith.constant 1 : index
    %c0_286 = arith.constant 0 : index
    %c0_287 = arith.constant 0 : index
    %388 = vector.load %arg4[%c1_285, %c0_286, %c0_287] : memref<3x96x64xbf16, #tpu.memory_space<vmem>>, vector<1x96x64xbf16>
    %389 = vector.shape_cast %388 : vector<1x96x64xbf16> to vector<96x64xbf16>
    %cst_288 = arith.constant dense<0.000000e+00> : vector<4x64xf32>
    %390 = tpu.matmul %387, %389, %cst_288 {dimension_numbers = #tpu.dot_dimension_numbers<[1], [0], [0], [1], [0, 0, 1, 1], [], []>} : vector<4x96xbf16>, vector<96x64xbf16>, vector<4x64xf32> -> vector<4x64xf32>
    %391 = arith.addf %385, %390 : vector<4x64xf32>
    %cst_289 = arith.constant dense<0.000000e+00> : vector<4x96xf32>
    %392 = tpu.matmul %298, %378, %cst_289 {dimension_numbers = #tpu.dot_dimension_numbers<[1], [0], [0], [1], [0, 0, 1, 1], [], []>} : vector<4x8xbf16>, vector<8x96xbf16>, vector<4x96xf32> -> vector<4x96xf32>
    %393 = arith.truncf %392 : vector<4x96xf32> to vector<4x96xbf16>
    %c2_290 = arith.constant 2 : index
    %c0_291 = arith.constant 0 : index
    %c0_292 = arith.constant 0 : index
    %394 = vector.load %arg4[%c2_290, %c0_291, %c0_292] : memref<3x96x64xbf16, #tpu.memory_space<vmem>>, vector<1x96x64xbf16>
    %395 = vector.shape_cast %394 : vector<1x96x64xbf16> to vector<96x64xbf16>
    %cst_293 = arith.constant dense<0.000000e+00> : vector<4x64xf32>
    %396 = tpu.matmul %393, %395, %cst_293 {dimension_numbers = #tpu.dot_dimension_numbers<[1], [0], [0], [1], [0, 0, 1, 1], [], []>} : vector<4x96xbf16>, vector<96x64xbf16>, vector<4x64xf32> -> vector<4x64xf32>
    %397 = arith.addf %391, %396 : vector<4x64xf32>
    %c0_294 = arith.constant 0 : index
    %c0_295 = arith.constant 0 : index
    %398 = vector.load %arg5[%c0_294, %c0_295] : memref<1x64xf32, #tpu.memory_space<vmem>>, vector<1x64xf32>
    %399 = vector.broadcast %398 : vector<1x64xf32> to vector<4x64xf32>
    %400 = arith.addf %397, %399 : vector<4x64xf32>
    %cst_296 = arith.constant 0.000000e+00 : f32
    %401 = vector.broadcast %cst_296 : f32 to vector<4x64xf32>
    %402 = arith.maximumf %400, %401 : vector<4x64xf32>
    %403 = arith.truncf %402 : vector<4x64xf32> to vector<4x64xbf16>
    %404 = tpu.iota {dimensions = array<i32: 0>} : vector<2x4xi32>
    %405 = tpu.iota {dimensions = array<i32: 1>} : vector<2x4xi32>
    %c2_i32_297 = arith.constant 2 : i32
    %406 = vector.broadcast %c2_i32_297 : i32 to vector<2x4xi32>
    %407 = arith.muli %406, %404 : vector<2x4xi32>
    %c-1_i32_298 = arith.constant -1 : i32
    %408 = vector.broadcast %c-1_i32_298 : i32 to vector<2x4xi32>
    %409 = arith.addi %407, %408 : vector<2x4xi32>
    %410 = arith.cmpi eq, %405, %409 : vector<2x4xi32>
    %cst_299 = arith.constant 1.000000e+00 : f32
    %cst_300 = arith.constant 0.000000e+00 : f32
    %411 = vector.broadcast %cst_299 : f32 to vector<2x4xf32>
    %412 = vector.broadcast %cst_300 : f32 to vector<2x4xf32>
    %413 = arith.select %410, %411, %412 : vector<2x4xi1>, vector<2x4xf32>
    %414 = arith.truncf %413 : vector<2x4xf32> to vector<2x4xbf16>
    %c2_i32_301 = arith.constant 2 : i32
    %415 = vector.broadcast %c2_i32_301 : i32 to vector<2x4xi32>
    %416 = arith.muli %415, %404 : vector<2x4xi32>
    %c0_i32_302 = arith.constant 0 : i32
    %417 = vector.broadcast %c0_i32_302 : i32 to vector<2x4xi32>
    %418 = arith.addi %416, %417 : vector<2x4xi32>
    %419 = arith.cmpi eq, %405, %418 : vector<2x4xi32>
    %cst_303 = arith.constant 1.000000e+00 : f32
    %cst_304 = arith.constant 0.000000e+00 : f32
    %420 = vector.broadcast %cst_303 : f32 to vector<2x4xf32>
    %421 = vector.broadcast %cst_304 : f32 to vector<2x4xf32>
    %422 = arith.select %419, %420, %421 : vector<2x4xi1>, vector<2x4xf32>
    %423 = arith.truncf %422 : vector<2x4xf32> to vector<2x4xbf16>
    %c2_i32_305 = arith.constant 2 : i32
    %424 = vector.broadcast %c2_i32_305 : i32 to vector<2x4xi32>
    %425 = arith.muli %424, %404 : vector<2x4xi32>
    %c1_i32_306 = arith.constant 1 : i32
    %426 = vector.broadcast %c1_i32_306 : i32 to vector<2x4xi32>
    %427 = arith.addi %425, %426 : vector<2x4xi32>
    %428 = arith.cmpi eq, %405, %427 : vector<2x4xi32>
    %cst_307 = arith.constant 1.000000e+00 : f32
    %cst_308 = arith.constant 0.000000e+00 : f32
    %429 = vector.broadcast %cst_307 : f32 to vector<2x4xf32>
    %430 = vector.broadcast %cst_308 : f32 to vector<2x4xf32>
    %431 = arith.select %428, %429, %430 : vector<2x4xi1>, vector<2x4xf32>
    %432 = arith.truncf %431 : vector<2x4xf32> to vector<2x4xbf16>
    %cst_309 = arith.constant 0.000000e+00 : bf16
    %433 = vector.broadcast %cst_309 : bf16 to vector<4x64xbf16>
    %434 = tpu.concatenate %433, %325, %351 in 1 : vector<4x64xbf16>, vector<4x64xbf16>, vector<4x64xbf16> -> vector<4x192xbf16>
    %cst_310 = arith.constant 0.000000e+00 : f32
    %435 = vector.broadcast %cst_310 : f32 to vector<2x64xf32>
    %cst_311 = arith.constant dense<0.000000e+00> : vector<2x192xf32>
    %436 = tpu.matmul %414, %434, %cst_311 {dimension_numbers = #tpu.dot_dimension_numbers<[1], [0], [0], [1], [0, 0, 1, 1], [], []>} : vector<2x4xbf16>, vector<4x192xbf16>, vector<2x192xf32> -> vector<2x192xf32>
    %437 = arith.truncf %436 : vector<2x192xf32> to vector<2x192xbf16>
    %c0_312 = arith.constant 0 : index
    %c0_313 = arith.constant 0 : index
    %c0_314 = arith.constant 0 : index
    %438 = vector.load %arg6[%c0_312, %c0_313, %c0_314] : memref<3x192x64xbf16, #tpu.memory_space<vmem>>, vector<1x192x64xbf16>
    %439 = vector.shape_cast %438 : vector<1x192x64xbf16> to vector<192x64xbf16>
    %cst_315 = arith.constant dense<0.000000e+00> : vector<2x64xf32>
    %440 = tpu.matmul %437, %439, %cst_315 {dimension_numbers = #tpu.dot_dimension_numbers<[1], [0], [0], [1], [0, 0, 1, 1], [], []>} : vector<2x192xbf16>, vector<192x64xbf16>, vector<2x64xf32> -> vector<2x64xf32>
    %441 = arith.addf %435, %440 : vector<2x64xf32>
    %cst_316 = arith.constant dense<0.000000e+00> : vector<2x192xf32>
    %442 = tpu.matmul %423, %434, %cst_316 {dimension_numbers = #tpu.dot_dimension_numbers<[1], [0], [0], [1], [0, 0, 1, 1], [], []>} : vector<2x4xbf16>, vector<4x192xbf16>, vector<2x192xf32> -> vector<2x192xf32>
    %443 = arith.truncf %442 : vector<2x192xf32> to vector<2x192xbf16>
    %c1_317 = arith.constant 1 : index
    %c0_318 = arith.constant 0 : index
    %c0_319 = arith.constant 0 : index
    %444 = vector.load %arg6[%c1_317, %c0_318, %c0_319] : memref<3x192x64xbf16, #tpu.memory_space<vmem>>, vector<1x192x64xbf16>
    %445 = vector.shape_cast %444 : vector<1x192x64xbf16> to vector<192x64xbf16>
    %cst_320 = arith.constant dense<0.000000e+00> : vector<2x64xf32>
    %446 = tpu.matmul %443, %445, %cst_320 {dimension_numbers = #tpu.dot_dimension_numbers<[1], [0], [0], [1], [0, 0, 1, 1], [], []>} : vector<2x192xbf16>, vector<192x64xbf16>, vector<2x64xf32> -> vector<2x64xf32>
    %447 = arith.addf %441, %446 : vector<2x64xf32>
    %cst_321 = arith.constant dense<0.000000e+00> : vector<2x192xf32>
    %448 = tpu.matmul %432, %434, %cst_321 {dimension_numbers = #tpu.dot_dimension_numbers<[1], [0], [0], [1], [0, 0, 1, 1], [], []>} : vector<2x4xbf16>, vector<4x192xbf16>, vector<2x192xf32> -> vector<2x192xf32>
    %449 = arith.truncf %448 : vector<2x192xf32> to vector<2x192xbf16>
    %c2_322 = arith.constant 2 : index
    %c0_323 = arith.constant 0 : index
    %c0_324 = arith.constant 0 : index
    %450 = vector.load %arg6[%c2_322, %c0_323, %c0_324] : memref<3x192x64xbf16, #tpu.memory_space<vmem>>, vector<1x192x64xbf16>
    %451 = vector.shape_cast %450 : vector<1x192x64xbf16> to vector<192x64xbf16>
    %cst_325 = arith.constant dense<0.000000e+00> : vector<2x64xf32>
    %452 = tpu.matmul %449, %451, %cst_325 {dimension_numbers = #tpu.dot_dimension_numbers<[1], [0], [0], [1], [0, 0, 1, 1], [], []>} : vector<2x192xbf16>, vector<192x64xbf16>, vector<2x64xf32> -> vector<2x64xf32>
    %453 = arith.addf %447, %452 : vector<2x64xf32>
    %c0_326 = arith.constant 0 : index
    %c0_327 = arith.constant 0 : index
    %454 = vector.load %arg7[%c0_326, %c0_327] : memref<1x64xf32, #tpu.memory_space<vmem>>, vector<1x64xf32>
    %455 = vector.broadcast %454 : vector<1x64xf32> to vector<2x64xf32>
    %456 = arith.addf %453, %455 : vector<2x64xf32>
    %cst_328 = arith.constant 0.000000e+00 : f32
    %457 = vector.broadcast %cst_328 : f32 to vector<2x64xf32>
    %458 = arith.maximumf %456, %457 : vector<2x64xf32>
    %459 = arith.truncf %458 : vector<2x64xf32> to vector<2x64xbf16>
    %460 = tpu.concatenate %351, %377, %403 in 1 : vector<4x64xbf16>, vector<4x64xbf16>, vector<4x64xbf16> -> vector<4x192xbf16>
    %cst_329 = arith.constant 0.000000e+00 : f32
    %461 = vector.broadcast %cst_329 : f32 to vector<2x64xf32>
    %cst_330 = arith.constant dense<0.000000e+00> : vector<2x192xf32>
    %462 = tpu.matmul %414, %460, %cst_330 {dimension_numbers = #tpu.dot_dimension_numbers<[1], [0], [0], [1], [0, 0, 1, 1], [], []>} : vector<2x4xbf16>, vector<4x192xbf16>, vector<2x192xf32> -> vector<2x192xf32>
    %463 = arith.truncf %462 : vector<2x192xf32> to vector<2x192xbf16>
    %c0_331 = arith.constant 0 : index
    %c0_332 = arith.constant 0 : index
    %c0_333 = arith.constant 0 : index
    %464 = vector.load %arg6[%c0_331, %c0_332, %c0_333] : memref<3x192x64xbf16, #tpu.memory_space<vmem>>, vector<1x192x64xbf16>
    %465 = vector.shape_cast %464 : vector<1x192x64xbf16> to vector<192x64xbf16>
    %cst_334 = arith.constant dense<0.000000e+00> : vector<2x64xf32>
    %466 = tpu.matmul %463, %465, %cst_334 {dimension_numbers = #tpu.dot_dimension_numbers<[1], [0], [0], [1], [0, 0, 1, 1], [], []>} : vector<2x192xbf16>, vector<192x64xbf16>, vector<2x64xf32> -> vector<2x64xf32>
    %467 = arith.addf %461, %466 : vector<2x64xf32>
    %cst_335 = arith.constant dense<0.000000e+00> : vector<2x192xf32>
    %468 = tpu.matmul %423, %460, %cst_335 {dimension_numbers = #tpu.dot_dimension_numbers<[1], [0], [0], [1], [0, 0, 1, 1], [], []>} : vector<2x4xbf16>, vector<4x192xbf16>, vector<2x192xf32> -> vector<2x192xf32>
    %469 = arith.truncf %468 : vector<2x192xf32> to vector<2x192xbf16>
    %c1_336 = arith.constant 1 : index
    %c0_337 = arith.constant 0 : index
    %c0_338 = arith.constant 0 : index
    %470 = vector.load %arg6[%c1_336, %c0_337, %c0_338] : memref<3x192x64xbf16, #tpu.memory_space<vmem>>, vector<1x192x64xbf16>
    %471 = vector.shape_cast %470 : vector<1x192x64xbf16> to vector<192x64xbf16>
    %cst_339 = arith.constant dense<0.000000e+00> : vector<2x64xf32>
    %472 = tpu.matmul %469, %471, %cst_339 {dimension_numbers = #tpu.dot_dimension_numbers<[1], [0], [0], [1], [0, 0, 1, 1], [], []>} : vector<2x192xbf16>, vector<192x64xbf16>, vector<2x64xf32> -> vector<2x64xf32>
    %473 = arith.addf %467, %472 : vector<2x64xf32>
    %cst_340 = arith.constant dense<0.000000e+00> : vector<2x192xf32>
    %474 = tpu.matmul %432, %460, %cst_340 {dimension_numbers = #tpu.dot_dimension_numbers<[1], [0], [0], [1], [0, 0, 1, 1], [], []>} : vector<2x4xbf16>, vector<4x192xbf16>, vector<2x192xf32> -> vector<2x192xf32>
    %475 = arith.truncf %474 : vector<2x192xf32> to vector<2x192xbf16>
    %c2_341 = arith.constant 2 : index
    %c0_342 = arith.constant 0 : index
    %c0_343 = arith.constant 0 : index
    %476 = vector.load %arg6[%c2_341, %c0_342, %c0_343] : memref<3x192x64xbf16, #tpu.memory_space<vmem>>, vector<1x192x64xbf16>
    %477 = vector.shape_cast %476 : vector<1x192x64xbf16> to vector<192x64xbf16>
    %cst_344 = arith.constant dense<0.000000e+00> : vector<2x64xf32>
    %478 = tpu.matmul %475, %477, %cst_344 {dimension_numbers = #tpu.dot_dimension_numbers<[1], [0], [0], [1], [0, 0, 1, 1], [], []>} : vector<2x192xbf16>, vector<192x64xbf16>, vector<2x64xf32> -> vector<2x64xf32>
    %479 = arith.addf %473, %478 : vector<2x64xf32>
    %c0_345 = arith.constant 0 : index
    %c0_346 = arith.constant 0 : index
    %480 = vector.load %arg7[%c0_345, %c0_346] : memref<1x64xf32, #tpu.memory_space<vmem>>, vector<1x64xf32>
    %481 = vector.broadcast %480 : vector<1x64xf32> to vector<2x64xf32>
    %482 = arith.addf %479, %481 : vector<2x64xf32>
    %cst_347 = arith.constant 0.000000e+00 : f32
    %483 = vector.broadcast %cst_347 : f32 to vector<2x64xf32>
    %484 = arith.maximumf %482, %483 : vector<2x64xf32>
    %485 = arith.truncf %484 : vector<2x64xf32> to vector<2x64xbf16>
    %486 = tpu.iota {dimensions = array<i32: 0>} : vector<2x2xi32>
    %487 = tpu.iota {dimensions = array<i32: 1>} : vector<2x2xi32>
    %c1_i32_348 = arith.constant 1 : i32
    %488 = vector.broadcast %c1_i32_348 : i32 to vector<2x2xi32>
    %489 = arith.muli %488, %486 : vector<2x2xi32>
    %c-1_i32_349 = arith.constant -1 : i32
    %490 = vector.broadcast %c-1_i32_349 : i32 to vector<2x2xi32>
    %491 = arith.addi %489, %490 : vector<2x2xi32>
    %492 = arith.cmpi eq, %487, %491 : vector<2x2xi32>
    %cst_350 = arith.constant 1.000000e+00 : f32
    %cst_351 = arith.constant 0.000000e+00 : f32
    %493 = vector.broadcast %cst_350 : f32 to vector<2x2xf32>
    %494 = vector.broadcast %cst_351 : f32 to vector<2x2xf32>
    %495 = arith.select %492, %493, %494 : vector<2x2xi1>, vector<2x2xf32>
    %496 = arith.truncf %495 : vector<2x2xf32> to vector<2x2xbf16>
    %c1_i32_352 = arith.constant 1 : i32
    %497 = vector.broadcast %c1_i32_352 : i32 to vector<2x2xi32>
    %498 = arith.muli %497, %486 : vector<2x2xi32>
    %c0_i32_353 = arith.constant 0 : i32
    %499 = vector.broadcast %c0_i32_353 : i32 to vector<2x2xi32>
    %500 = arith.addi %498, %499 : vector<2x2xi32>
    %501 = arith.cmpi eq, %487, %500 : vector<2x2xi32>
    %cst_354 = arith.constant 1.000000e+00 : f32
    %cst_355 = arith.constant 0.000000e+00 : f32
    %502 = vector.broadcast %cst_354 : f32 to vector<2x2xf32>
    %503 = vector.broadcast %cst_355 : f32 to vector<2x2xf32>
    %504 = arith.select %501, %502, %503 : vector<2x2xi1>, vector<2x2xf32>
    %505 = arith.truncf %504 : vector<2x2xf32> to vector<2x2xbf16>
    %c1_i32_356 = arith.constant 1 : i32
    %506 = vector.broadcast %c1_i32_356 : i32 to vector<2x2xi32>
    %507 = arith.muli %506, %486 : vector<2x2xi32>
    %c1_i32_357 = arith.constant 1 : i32
    %508 = vector.broadcast %c1_i32_357 : i32 to vector<2x2xi32>
    %509 = arith.addi %507, %508 : vector<2x2xi32>
    %510 = arith.cmpi eq, %487, %509 : vector<2x2xi32>
    %cst_358 = arith.constant 1.000000e+00 : f32
    %cst_359 = arith.constant 0.000000e+00 : f32
    %511 = vector.broadcast %cst_358 : f32 to vector<2x2xf32>
    %512 = vector.broadcast %cst_359 : f32 to vector<2x2xf32>
    %513 = arith.select %510, %511, %512 : vector<2x2xi1>, vector<2x2xf32>
    %514 = arith.truncf %513 : vector<2x2xf32> to vector<2x2xbf16>
    %cst_360 = arith.constant 0.000000e+00 : bf16
    %515 = vector.broadcast %cst_360 : bf16 to vector<2x64xbf16>
    %516 = tpu.concatenate %515, %459, %485 in 1 : vector<2x64xbf16>, vector<2x64xbf16>, vector<2x64xbf16> -> vector<2x192xbf16>
    %cst_361 = arith.constant 0.000000e+00 : f32
    %517 = vector.broadcast %cst_361 : f32 to vector<2x128xf32>
    %cst_362 = arith.constant dense<0.000000e+00> : vector<2x192xf32>
    %518 = tpu.matmul %496, %516, %cst_362 {dimension_numbers = #tpu.dot_dimension_numbers<[1], [0], [0], [1], [0, 0, 1, 1], [], []>} : vector<2x2xbf16>, vector<2x192xbf16>, vector<2x192xf32> -> vector<2x192xf32>
    %519 = arith.truncf %518 : vector<2x192xf32> to vector<2x192xbf16>
    %c0_363 = arith.constant 0 : index
    %c0_364 = arith.constant 0 : index
    %c0_365 = arith.constant 0 : index
    %520 = vector.load %arg8[%c0_363, %c0_364, %c0_365] : memref<3x192x128xbf16, #tpu.memory_space<vmem>>, vector<1x192x128xbf16>
    %521 = vector.shape_cast %520 : vector<1x192x128xbf16> to vector<192x128xbf16>
    %cst_366 = arith.constant dense<0.000000e+00> : vector<2x128xf32>
    %522 = tpu.matmul %519, %521, %cst_366 {dimension_numbers = #tpu.dot_dimension_numbers<[1], [0], [0], [1], [0, 0, 1, 1], [], []>} : vector<2x192xbf16>, vector<192x128xbf16>, vector<2x128xf32> -> vector<2x128xf32>
    %523 = arith.addf %517, %522 : vector<2x128xf32>
    %cst_367 = arith.constant dense<0.000000e+00> : vector<2x192xf32>
    %524 = tpu.matmul %505, %516, %cst_367 {dimension_numbers = #tpu.dot_dimension_numbers<[1], [0], [0], [1], [0, 0, 1, 1], [], []>} : vector<2x2xbf16>, vector<2x192xbf16>, vector<2x192xf32> -> vector<2x192xf32>
    %525 = arith.truncf %524 : vector<2x192xf32> to vector<2x192xbf16>
    %c1_368 = arith.constant 1 : index
    %c0_369 = arith.constant 0 : index
    %c0_370 = arith.constant 0 : index
    %526 = vector.load %arg8[%c1_368, %c0_369, %c0_370] : memref<3x192x128xbf16, #tpu.memory_space<vmem>>, vector<1x192x128xbf16>
    %527 = vector.shape_cast %526 : vector<1x192x128xbf16> to vector<192x128xbf16>
    %cst_371 = arith.constant dense<0.000000e+00> : vector<2x128xf32>
    %528 = tpu.matmul %525, %527, %cst_371 {dimension_numbers = #tpu.dot_dimension_numbers<[1], [0], [0], [1], [0, 0, 1, 1], [], []>} : vector<2x192xbf16>, vector<192x128xbf16>, vector<2x128xf32> -> vector<2x128xf32>
    %529 = arith.addf %523, %528 : vector<2x128xf32>
    %cst_372 = arith.constant dense<0.000000e+00> : vector<2x192xf32>
    %530 = tpu.matmul %514, %516, %cst_372 {dimension_numbers = #tpu.dot_dimension_numbers<[1], [0], [0], [1], [0, 0, 1, 1], [], []>} : vector<2x2xbf16>, vector<2x192xbf16>, vector<2x192xf32> -> vector<2x192xf32>
    %531 = arith.truncf %530 : vector<2x192xf32> to vector<2x192xbf16>
    %c2_373 = arith.constant 2 : index
    %c0_374 = arith.constant 0 : index
    %c0_375 = arith.constant 0 : index
    %532 = vector.load %arg8[%c2_373, %c0_374, %c0_375] : memref<3x192x128xbf16, #tpu.memory_space<vmem>>, vector<1x192x128xbf16>
    %533 = vector.shape_cast %532 : vector<1x192x128xbf16> to vector<192x128xbf16>
    %cst_376 = arith.constant dense<0.000000e+00> : vector<2x128xf32>
    %534 = tpu.matmul %531, %533, %cst_376 {dimension_numbers = #tpu.dot_dimension_numbers<[1], [0], [0], [1], [0, 0, 1, 1], [], []>} : vector<2x192xbf16>, vector<192x128xbf16>, vector<2x128xf32> -> vector<2x128xf32>
    %535 = arith.addf %529, %534 : vector<2x128xf32>
    %c0_377 = arith.constant 0 : index
    %c0_378 = arith.constant 0 : index
    %536 = vector.load %arg9[%c0_377, %c0_378] : memref<1x128xf32, #tpu.memory_space<vmem>>, vector<1x128xf32>
    %537 = vector.broadcast %536 : vector<1x128xf32> to vector<2x128xf32>
    %538 = arith.addf %535, %537 : vector<2x128xf32>
    %cst_379 = arith.constant 0.000000e+00 : f32
    %539 = vector.broadcast %cst_379 : f32 to vector<2x128xf32>
    %540 = arith.maximumf %538, %539 : vector<2x128xf32>
    %541 = arith.truncf %540 : vector<2x128xf32> to vector<2x128xbf16>
    %542 = tpu.concatenate %459, %485, %515 in 1 : vector<2x64xbf16>, vector<2x64xbf16>, vector<2x64xbf16> -> vector<2x192xbf16>
    %cst_380 = arith.constant 0.000000e+00 : f32
    %543 = vector.broadcast %cst_380 : f32 to vector<2x128xf32>
    %cst_381 = arith.constant dense<0.000000e+00> : vector<2x192xf32>
    %544 = tpu.matmul %496, %542, %cst_381 {dimension_numbers = #tpu.dot_dimension_numbers<[1], [0], [0], [1], [0, 0, 1, 1], [], []>} : vector<2x2xbf16>, vector<2x192xbf16>, vector<2x192xf32> -> vector<2x192xf32>
    %545 = arith.truncf %544 : vector<2x192xf32> to vector<2x192xbf16>
    %c0_382 = arith.constant 0 : index
    %c0_383 = arith.constant 0 : index
    %c0_384 = arith.constant 0 : index
    %546 = vector.load %arg8[%c0_382, %c0_383, %c0_384] : memref<3x192x128xbf16, #tpu.memory_space<vmem>>, vector<1x192x128xbf16>
    %547 = vector.shape_cast %546 : vector<1x192x128xbf16> to vector<192x128xbf16>
    %cst_385 = arith.constant dense<0.000000e+00> : vector<2x128xf32>
    %548 = tpu.matmul %545, %547, %cst_385 {dimension_numbers = #tpu.dot_dimension_numbers<[1], [0], [0], [1], [0, 0, 1, 1], [], []>} : vector<2x192xbf16>, vector<192x128xbf16>, vector<2x128xf32> -> vector<2x128xf32>
    %549 = arith.addf %543, %548 : vector<2x128xf32>
    %cst_386 = arith.constant dense<0.000000e+00> : vector<2x192xf32>
    %550 = tpu.matmul %505, %542, %cst_386 {dimension_numbers = #tpu.dot_dimension_numbers<[1], [0], [0], [1], [0, 0, 1, 1], [], []>} : vector<2x2xbf16>, vector<2x192xbf16>, vector<2x192xf32> -> vector<2x192xf32>
    %551 = arith.truncf %550 : vector<2x192xf32> to vector<2x192xbf16>
    %c1_387 = arith.constant 1 : index
    %c0_388 = arith.constant 0 : index
    %c0_389 = arith.constant 0 : index
    %552 = vector.load %arg8[%c1_387, %c0_388, %c0_389] : memref<3x192x128xbf16, #tpu.memory_space<vmem>>, vector<1x192x128xbf16>
    %553 = vector.shape_cast %552 : vector<1x192x128xbf16> to vector<192x128xbf16>
    %cst_390 = arith.constant dense<0.000000e+00> : vector<2x128xf32>
    %554 = tpu.matmul %551, %553, %cst_390 {dimension_numbers = #tpu.dot_dimension_numbers<[1], [0], [0], [1], [0, 0, 1, 1], [], []>} : vector<2x192xbf16>, vector<192x128xbf16>, vector<2x128xf32> -> vector<2x128xf32>
    %555 = arith.addf %549, %554 : vector<2x128xf32>
    %cst_391 = arith.constant dense<0.000000e+00> : vector<2x192xf32>
    %556 = tpu.matmul %514, %542, %cst_391 {dimension_numbers = #tpu.dot_dimension_numbers<[1], [0], [0], [1], [0, 0, 1, 1], [], []>} : vector<2x2xbf16>, vector<2x192xbf16>, vector<2x192xf32> -> vector<2x192xf32>
    %557 = arith.truncf %556 : vector<2x192xf32> to vector<2x192xbf16>
    %c2_392 = arith.constant 2 : index
    %c0_393 = arith.constant 0 : index
    %c0_394 = arith.constant 0 : index
    %558 = vector.load %arg8[%c2_392, %c0_393, %c0_394] : memref<3x192x128xbf16, #tpu.memory_space<vmem>>, vector<1x192x128xbf16>
    %559 = vector.shape_cast %558 : vector<1x192x128xbf16> to vector<192x128xbf16>
    %cst_395 = arith.constant dense<0.000000e+00> : vector<2x128xf32>
    %560 = tpu.matmul %557, %559, %cst_395 {dimension_numbers = #tpu.dot_dimension_numbers<[1], [0], [0], [1], [0, 0, 1, 1], [], []>} : vector<2x192xbf16>, vector<192x128xbf16>, vector<2x128xf32> -> vector<2x128xf32>
    %561 = arith.addf %555, %560 : vector<2x128xf32>
    %c0_396 = arith.constant 0 : index
    %c0_397 = arith.constant 0 : index
    %562 = vector.load %arg9[%c0_396, %c0_397] : memref<1x128xf32, #tpu.memory_space<vmem>>, vector<1x128xf32>
    %563 = vector.broadcast %562 : vector<1x128xf32> to vector<2x128xf32>
    %564 = arith.addf %561, %563 : vector<2x128xf32>
    %cst_398 = arith.constant 0.000000e+00 : f32
    %565 = vector.broadcast %cst_398 : f32 to vector<2x128xf32>
    %566 = arith.maximumf %564, %565 : vector<2x128xf32>
    %567 = arith.truncf %566 : vector<2x128xf32> to vector<2x128xbf16>
    %cst_399 = arith.constant 0.000000e+00 : f32
    %568 = vector.broadcast %cst_399 : f32 to vector<1x512xf32>
    %569 = vector.extract_strided_slice %541 {offsets = [0, 0], sizes = [1, 128], strides = [1, 1]} : vector<2x128xbf16> to vector<1x128xbf16>
    %570 = vector.extract_strided_slice %541 {offsets = [1, 0], sizes = [1, 128], strides = [1, 1]} : vector<2x128xbf16> to vector<1x128xbf16>
    %571 = tpu.concatenate %569, %570 in 1 : vector<1x128xbf16>, vector<1x128xbf16> -> vector<1x256xbf16>
    %c0_400 = arith.constant 0 : index
    %c0_401 = arith.constant 0 : index
    %c0_402 = arith.constant 0 : index
    %572 = vector.load %arg10[%c0_400, %c0_401, %c0_402] : memref<2x256x512xbf16, #tpu.memory_space<vmem>>, vector<1x256x512xbf16>
    %573 = vector.shape_cast %572 : vector<1x256x512xbf16> to vector<256x512xbf16>
    %cst_403 = arith.constant dense<0.000000e+00> : vector<1x512xf32>
    %574 = tpu.matmul %571, %573, %cst_403 {dimension_numbers = #tpu.dot_dimension_numbers<[1], [0], [0], [1], [0, 0, 1, 1], [], []>} : vector<1x256xbf16>, vector<256x512xbf16>, vector<1x512xf32> -> vector<1x512xf32>
    %575 = arith.addf %568, %574 : vector<1x512xf32>
    %576 = vector.extract_strided_slice %567 {offsets = [0, 0], sizes = [1, 128], strides = [1, 1]} : vector<2x128xbf16> to vector<1x128xbf16>
    %577 = vector.extract_strided_slice %567 {offsets = [1, 0], sizes = [1, 128], strides = [1, 1]} : vector<2x128xbf16> to vector<1x128xbf16>
    %578 = tpu.concatenate %576, %577 in 1 : vector<1x128xbf16>, vector<1x128xbf16> -> vector<1x256xbf16>
    %c1_404 = arith.constant 1 : index
    %c0_405 = arith.constant 0 : index
    %c0_406 = arith.constant 0 : index
    %579 = vector.load %arg10[%c1_404, %c0_405, %c0_406] : memref<2x256x512xbf16, #tpu.memory_space<vmem>>, vector<1x256x512xbf16>
    %580 = vector.shape_cast %579 : vector<1x256x512xbf16> to vector<256x512xbf16>
    %cst_407 = arith.constant dense<0.000000e+00> : vector<1x512xf32>
    %581 = tpu.matmul %578, %580, %cst_407 {dimension_numbers = #tpu.dot_dimension_numbers<[1], [0], [0], [1], [0, 0, 1, 1], [], []>} : vector<1x256xbf16>, vector<256x512xbf16>, vector<1x512xf32> -> vector<1x512xf32>
    %582 = arith.addf %575, %581 : vector<1x512xf32>
    %c0_408 = arith.constant 0 : index
    %c0_409 = arith.constant 0 : index
    %583 = vector.load %arg11[%c0_408, %c0_409] : memref<1x512xf32, #tpu.memory_space<vmem>>, vector<1x512xf32>
    %584 = arith.addf %582, %583 : vector<1x512xf32>
    %cst_410 = arith.constant 0.000000e+00 : f32
    %585 = vector.broadcast %cst_410 : f32 to vector<1x512xf32>
    %586 = arith.maximumf %584, %585 : vector<1x512xf32>
    %587 = arith.truncf %586 : vector<1x512xf32> to vector<1x512xbf16>
    %c0_411 = arith.constant 0 : index
    %c0_412 = arith.constant 0 : index
    %588 = vector.load %arg12[%c0_411, %c0_412] : memref<512x512xbf16, #tpu.memory_space<vmem>>, vector<512x512xbf16>
    %cst_413 = arith.constant dense<0.000000e+00> : vector<1x512xf32>
    %589 = tpu.matmul %587, %588, %cst_413 {dimension_numbers = #tpu.dot_dimension_numbers<[1], [0], [0], [1], [0, 0, 1, 1], [], []>} : vector<1x512xbf16>, vector<512x512xbf16>, vector<1x512xf32> -> vector<1x512xf32>
    %c0_414 = arith.constant 0 : index
    %c0_415 = arith.constant 0 : index
    %590 = vector.load %arg13[%c0_414, %c0_415] : memref<1x512xf32, #tpu.memory_space<vmem>>, vector<1x512xf32>
    %591 = arith.addf %589, %590 : vector<1x512xf32>
    %cst_416 = arith.constant 0.000000e+00 : f32
    %592 = vector.broadcast %cst_416 : f32 to vector<1x512xf32>
    %593 = arith.maximumf %591, %592 : vector<1x512xf32>
    %594 = arith.truncf %593 : vector<1x512xf32> to vector<1x512xbf16>
    %c0_417 = arith.constant 0 : index
    %c0_418 = arith.constant 0 : index
    %595 = vector.load %arg14[%c0_417, %c0_418] : memref<512x512xbf16, #tpu.memory_space<vmem>>, vector<512x512xbf16>
    %cst_419 = arith.constant dense<0.000000e+00> : vector<1x512xf32>
    %596 = tpu.matmul %587, %595, %cst_419 {dimension_numbers = #tpu.dot_dimension_numbers<[1], [0], [0], [1], [0, 0, 1, 1], [], []>} : vector<1x512xbf16>, vector<512x512xbf16>, vector<1x512xf32> -> vector<1x512xf32>
    %c0_420 = arith.constant 0 : index
    %c0_421 = arith.constant 0 : index
    %597 = vector.load %arg15[%c0_420, %c0_421] : memref<1x512xf32, #tpu.memory_space<vmem>>, vector<1x512xf32>
    %598 = arith.addf %596, %597 : vector<1x512xf32>
    %cst_422 = arith.constant 0.000000e+00 : f32
    %599 = vector.broadcast %cst_422 : f32 to vector<1x512xf32>
    %600 = arith.maximumf %598, %599 : vector<1x512xf32>
    %601 = arith.truncf %600 : vector<1x512xf32> to vector<1x512xbf16>
    %c0_423 = arith.constant 0 : index
    %c0_424 = arith.constant 0 : index
    %602 = vector.load %arg16[%c0_423, %c0_424] : memref<512x1xbf16, #tpu.memory_space<vmem>>, vector<512x1xbf16>
    %cst_425 = arith.constant dense<0.000000e+00> : vector<1x1xf32>
    %603 = tpu.matmul %594, %602, %cst_425 {dimension_numbers = #tpu.dot_dimension_numbers<[1], [0], [0], [1], [0, 0, 1, 1], [], []>} : vector<1x512xbf16>, vector<512x1xbf16>, vector<1x1xf32> -> vector<1x1xf32>
    %c0_426 = arith.constant 0 : index
    %c0_427 = arith.constant 0 : index
    %604 = vector.load %arg17[%c0_426, %c0_427] : memref<1x1xf32, #tpu.memory_space<vmem>>, vector<1x1xf32>
    %605 = arith.addf %603, %604 : vector<1x1xf32>
    %c0_428 = arith.constant 0 : index
    %c0_429 = arith.constant 0 : index
    %606 = vector.load %arg18[%c0_428, %c0_429] : memref<512x6xbf16, #tpu.memory_space<vmem>>, vector<512x6xbf16>
    %cst_430 = arith.constant dense<0.000000e+00> : vector<1x6xf32>
    %607 = tpu.matmul %601, %606, %cst_430 {dimension_numbers = #tpu.dot_dimension_numbers<[1], [0], [0], [1], [0, 0, 1, 1], [], []>} : vector<1x512xbf16>, vector<512x6xbf16>, vector<1x6xf32> -> vector<1x6xf32>
    %c0_431 = arith.constant 0 : index
    %c0_432 = arith.constant 0 : index
    %608 = vector.load %arg19[%c0_431, %c0_432] : memref<1x6xf32, #tpu.memory_space<vmem>>, vector<1x6xf32>
    %609 = arith.addf %607, %608 : vector<1x6xf32>
    %cst_433 = arith.constant dense<0xFF800000> : vector<1xf32>
    %610 = vector.multi_reduction <maximumf>, %609, %cst_433 [1] : vector<1x6xf32> to vector<1xf32>
    %611 = vector.shape_cast %610 : vector<1xf32> to vector<1x1xf32>
    %612 = vector.broadcast %611 : vector<1x1xf32> to vector<1x6xf32>
    %613 = arith.subf %609, %612 : vector<1x6xf32>
    %614 = math.exp %613 : vector<1x6xf32>
    %cst_434 = arith.constant dense<0.000000e+00> : vector<1xf32>
    %615 = vector.multi_reduction <add>, %614, %cst_434 [1] : vector<1x6xf32> to vector<1xf32>
    %616 = vector.shape_cast %615 : vector<1xf32> to vector<1x1xf32>
    %617 = vector.broadcast %616 : vector<1x1xf32> to vector<1x6xf32>
    %618 = arith.divf %614, %617 : vector<1x6xf32>
    %619 = vector.shape_cast %605 : vector<1x1xf32> to vector<1x1x1xf32>
    %c0_435 = arith.constant 0 : index
    %c0_436 = arith.constant 0 : index
    %c0_437 = arith.constant 0 : index
    %620 = vector.load %arg20[%c0_435, %c0_436, %c0_437] : memref<1x1x1xf32, #tpu.memory_space<vmem>>, vector<1x1x1xf32>
    tpu.vector_store %arg20[%c0_435, %c0_436, %c0_437], %619 {strides = array<i32>} : memref<1x1x1xf32, #tpu.memory_space<vmem>>, vector<1x1x1xf32>,
    %621 = vector.shape_cast %618 : vector<1x6xf32> to vector<1x1x6xf32>
    %c0_438 = arith.constant 0 : index
    %c0_439 = arith.constant 0 : index
    %c0_440 = arith.constant 0 : index
    %622 = vector.load %arg21[%c0_438, %c0_439, %c0_440] : memref<1x1x6xf32, #tpu.memory_space<vmem>>, vector<1x1x6xf32>
    tpu.vector_store %arg21[%c0_438, %c0_439, %c0_440], %621 {strides = array<i32>} : memref<1x1x6xf32, #tpu.memory_space<vmem>>, vector<1x1x6xf32>,
    return
  }
  func.func @transform_0(%arg0: i32) -> (i32, i32, i32, i32) {
    %c0_i32 = arith.constant 0 : i32
    %c0_i32_0 = arith.constant 0 : i32
    %c0_i32_1 = arith.constant 0 : i32
    %c0_i32_2 = arith.constant 0 : i32
    return %arg0, %c0_i32, %c0_i32_0, %c0_i32_1 : i32, i32, i32, i32
  }
  func.func @transform_1(%arg0: i32) -> (i32, i32, i32) {
    %c0_i32 = arith.constant 0 : i32
    %c0_i32_0 = arith.constant 0 : i32
    %c0_i32_1 = arith.constant 0 : i32
    %c0_i32_2 = arith.constant 0 : i32
    return %c0_i32, %c0_i32_0, %c0_i32_1 : i32, i32, i32
  }
  func.func @transform_2(%arg0: i32) -> (i32, i32) {
    %c0_i32 = arith.constant 0 : i32
    %c0_i32_0 = arith.constant 0 : i32
    %c0_i32_1 = arith.constant 0 : i32
    return %c0_i32, %c0_i32_0 : i32, i32
  }
  func.func @transform_3(%arg0: i32) -> (i32, i32, i32) {
    %c0_i32 = arith.constant 0 : i32
    %c0_i32_0 = arith.constant 0 : i32
    %c0_i32_1 = arith.constant 0 : i32
    %c0_i32_2 = arith.constant 0 : i32
    return %c0_i32, %c0_i32_0, %c0_i32_1 : i32, i32, i32
  }
  func.func @transform_4(%arg0: i32) -> (i32, i32) {
    %c0_i32 = arith.constant 0 : i32
    %c0_i32_0 = arith.constant 0 : i32
    %c0_i32_1 = arith.constant 0 : i32
    return %c0_i32, %c0_i32_0 : i32, i32
  }
  func.func @transform_5(%arg0: i32) -> (i32, i32, i32) {
    %c0_i32 = arith.constant 0 : i32
    %c0_i32_0 = arith.constant 0 : i32
    %c0_i32_1 = arith.constant 0 : i32
    %c0_i32_2 = arith.constant 0 : i32
    return %c0_i32, %c0_i32_0, %c0_i32_1 : i32, i32, i32
  }
  func.func @transform_6(%arg0: i32) -> (i32, i32) {
    %c0_i32 = arith.constant 0 : i32
    %c0_i32_0 = arith.constant 0 : i32
    %c0_i32_1 = arith.constant 0 : i32
    return %c0_i32, %c0_i32_0 : i32, i32
  }
  func.func @transform_7(%arg0: i32) -> (i32, i32, i32) {
    %c0_i32 = arith.constant 0 : i32
    %c0_i32_0 = arith.constant 0 : i32
    %c0_i32_1 = arith.constant 0 : i32
    %c0_i32_2 = arith.constant 0 : i32
    return %c0_i32, %c0_i32_0, %c0_i32_1 : i32, i32, i32
  }
  func.func @transform_8(%arg0: i32) -> (i32, i32) {
    %c0_i32 = arith.constant 0 : i32
    %c0_i32_0 = arith.constant 0 : i32
    %c0_i32_1 = arith.constant 0 : i32
    return %c0_i32, %c0_i32_0 : i32, i32
  }
  func.func @transform_9(%arg0: i32) -> (i32, i32, i32) {
    %c0_i32 = arith.constant 0 : i32
    %c0_i32_0 = arith.constant 0 : i32
    %c0_i32_1 = arith.constant 0 : i32
    %c0_i32_2 = arith.constant 0 : i32
    return %c0_i32, %c0_i32_0, %c0_i32_1 : i32, i32, i32
  }
  func.func @transform_10(%arg0: i32) -> (i32, i32) {
    %c0_i32 = arith.constant 0 : i32
    %c0_i32_0 = arith.constant 0 : i32
    %c0_i32_1 = arith.constant 0 : i32
    return %c0_i32, %c0_i32_0 : i32, i32
  }
  func.func @transform_11(%arg0: i32) -> (i32, i32) {
    %c0_i32 = arith.constant 0 : i32
    %c0_i32_0 = arith.constant 0 : i32
    %c0_i32_1 = arith.constant 0 : i32
    return %c0_i32, %c0_i32_0 : i32, i32
  }
  func.func @transform_12(%arg0: i32) -> (i32, i32) {
    %c0_i32 = arith.constant 0 : i32
    %c0_i32_0 = arith.constant 0 : i32
    %c0_i32_1 = arith.constant 0 : i32
    return %c0_i32, %c0_i32_0 : i32, i32
  }
  func.func @transform_13(%arg0: i32) -> (i32, i32) {
    %c0_i32 = arith.constant 0 : i32
    %c0_i32_0 = arith.constant 0 : i32
    %c0_i32_1 = arith.constant 0 : i32
    return %c0_i32, %c0_i32_0 : i32, i32
  }
  func.func @transform_14(%arg0: i32) -> (i32, i32) {
    %c0_i32 = arith.constant 0 : i32
    %c0_i32_0 = arith.constant 0 : i32
    %c0_i32_1 = arith.constant 0 : i32
    return %c0_i32, %c0_i32_0 : i32, i32
  }
  func.func @transform_15(%arg0: i32) -> (i32, i32) {
    %c0_i32 = arith.constant 0 : i32
    %c0_i32_0 = arith.constant 0 : i32
    %c0_i32_1 = arith.constant 0 : i32
    return %c0_i32, %c0_i32_0 : i32, i32
  }
  func.func @transform_16(%arg0: i32) -> (i32, i32) {
    %c0_i32 = arith.constant 0 : i32
    %c0_i32_0 = arith.constant 0 : i32
    %c0_i32_1 = arith.constant 0 : i32
    return %c0_i32, %c0_i32_0 : i32, i32
  }
  func.func @transform_17(%arg0: i32) -> (i32, i32) {
    %c0_i32 = arith.constant 0 : i32
    %c0_i32_0 = arith.constant 0 : i32
    %c0_i32_1 = arith.constant 0 : i32
    return %c0_i32, %c0_i32_0 : i32, i32
  }
  func.func @transform_18(%arg0: i32) -> (i32, i32) {
    %c0_i32 = arith.constant 0 : i32
    %c0_i32_0 = arith.constant 0 : i32
    %c0_i32_1 = arith.constant 0 : i32
    return %c0_i32, %c0_i32_0 : i32, i32
  }
  func.func @transform_19(%arg0: i32) -> (i32, i32, i32) {
    %c0_i32 = arith.constant 0 : i32
    %c0_i32_0 = arith.constant 0 : i32
    %c0_i32_1 = arith.constant 0 : i32
    return %arg0, %c0_i32, %c0_i32_0 : i32, i32, i32
  }
  func.func @transform_20(%arg0: i32) -> (i32, i32, i32) {
    %c0_i32 = arith.constant 0 : i32
    %c0_i32_0 = arith.constant 0 : i32
    %c0_i32_1 = arith.constant 0 : i32
    return %arg0, %c0_i32, %c0_i32_0 : i32, i32, i32
  }
}

</mosaic_0001>

<llo_original>
// kernel: ppo_atari_forward.1
$region0: #{ppo_atari_forward.1}
  #allocation0 [shape = 'u32[]', space=smem, size = 0x4, offset = 0x4, fixed_abs, tag = 'smem constant byte address 0x4 - core index']
  #allocation1 [shape = 'u32[144,128]{1,0:T(1,128)}', space=vmem, size = 0x12000, scoped, tag = 'internal scratch']
  #allocation2 [shape = 'f32[1,1]{1,0:T(1,128)S(1)}', space=vmem, size = 0x200, scoped, tag = 'scoped memory for ppo_atari_forward.1']
  %s0 = inlined_call_operand.vmem [shape: bf16[2,16,16,4], index: 0, kind: input, shape index: {}]
  %s1 = inlined_call_operand.vmem [shape: bf16[3,12,32], index: 1, kind: input, shape index: {}]
  %s2 = inlined_call_operand.vmem [shape: f32[1,32], index: 2, kind: input, shape index: {}]
  %s3 = inlined_call_operand.vmem [shape: bf16[3,96,64], index: 3, kind: input, shape index: {}]
  %s4 = inlined_call_operand.vmem [shape: f32[1,64], index: 4, kind: input, shape index: {}]
  %s5 = inlined_call_operand.vmem [shape: bf16[3,192,64], index: 5, kind: input, shape index: {}]
  %s6 = inlined_call_operand.vmem [shape: f32[1,64], index: 6, kind: input, shape index: {}]
  %s7 = inlined_call_operand.vmem [shape: bf16[3,192,128], index: 7, kind: input, shape index: {}]
  %s8 = inlined_call_operand.vmem [shape: f32[1,128], index: 8, kind: input, shape index: {}]
  %s9 = inlined_call_operand.vmem [shape: bf16[2,256,512], index: 9, kind: input, shape index: {}]
  %s10 = inlined_call_operand.vmem [shape: f32[1,512], index: 10, kind: input, shape index: {}]
  %s11 = inlined_call_operand.hbm [shape: bf16[512,512], index: 11, kind: input, shape index: {}]
  %s12 = inlined_call_operand.vmem [shape: f32[1,512], index: 12, kind: input, shape index: {}]
  %s13 = inlined_call_operand.hbm [shape: bf16[512,512], index: 13, kind: input, shape index: {}]
  %s14 = inlined_call_operand.vmem [shape: f32[1,512], index: 14, kind: input, shape index: {}]
  %s15 = inlined_call_operand.vmem [shape: bf16[512,1], index: 15, kind: input, shape index: {}]
  %s16 = inlined_call_operand.<no memory space> [shape: f32[1,1], index: 16, kind: input, shape index: {}]
  %s17 = inlined_call_operand.vmem [shape: bf16[512,6], index: 17, kind: input, shape index: {}]
  %s18 = inlined_call_operand.vmem [shape: f32[1,6], index: 18, kind: input, shape index: {}]
  %s19 = inlined_call_operand.vmem [shape: f32[2,1,1], index: 19, kind: output, shape index: {0}]
  %s20 = inlined_call_operand.vmem [shape: f32[2,1,6], index: 20, kind: output, shape index: {1}]
  %21 = xla_tuple %s19, %s20
  %s22 = sld [smem:[#allocation0]]
  $region125: #{ppo_atari_forward.1} parent=0
    _
  %s24 = ssub.s32 1, %s22
  %s25 = scalar_select 0, %s24, %s22
  %v26 = vstv %s16
  %27 = vst [vmem:[#allocation2] sm:$0x1] %v26
  $region1: #{ppo_atari_forward.1} parent=0
    #allocation3 [shape = 'u8[524288]{0}', space=vmem, size = 0x80000, scoped, tag = 'input window, operand 11, single buffered']
    #allocation4 [shape = 's32[2]{0}', space=sflag, size = 0x8, scoped, tag = 'scoped memory for ppo_atari_forward.1']
    #allocation5 [shape = 'u8[524288]{0}', space=vmem, size = 0x80000, scoped, tag = 'input window, operand 13, single buffered']
    #allocation6 [shape = 's32[1]{0}', space=sflag, size = 0x4, scoped, tag = 'scoped memory for ppo_atari_forward.1']
    %28 = vsyncpa [#allocation4], 0
    %29 = vsyncpa [#allocation6], 0
    loop: start=0, step=1, limit=4
    $region2: #{ppo_atari_forward.1} parent=1 // loop_pre_header
      _
    $region3: #{ppo_atari_forward.1} parent=1 // loop_header
      %s31 = sphi 0, %s35
      %p32 = scmp.ge.s32.totalorder %s31, 4
      %s41 = sphi 0, %s43
      %s44 = sphi 0, %s41
      %s45 = sphi 0, %s44
      %s61 = sphi 0, %s45
      %s65 = sphi 0, %s65
      %s67 = sphi 0, %s65
      %s68 = sphi 0, %s67
      %s82 = sphi 0, %s68
      %s86 = sphi 0, %s86
      %s88 = sphi 0, %s86
      %s89 = sphi 0, %s88
      %s103 = sphi 0, %s89
      %s107 = sphi 0, %s107
      %s109 = sphi 0, %s107
      %s110 = sphi 0, %s109
      %s124 = sphi 0, %s110
      %s128 = sphi 0, %s128
      %s130 = sphi 0, %s128
      %s131 = sphi 0, %s130
      %s145 = sphi 0, %s131
      %s149 = sphi 0, %s149
      %s151 = sphi 0, %s149
      %s152 = sphi 0, %s151
      %s166 = sphi 0, %s152
      %s170 = sphi 0, %s170
      %s172 = sphi 0, %s170
      %s173 = sphi 0, %s172
      %s187 = sphi 0, %s173
      %s191 = sphi 0, %s191
      %s193 = sphi 0, %s191
      %s194 = sphi 0, %s193
      %s208 = sphi 0, %s194
      %s212 = sphi 0, %s212
      %s214 = sphi 0, %s212
      %s215 = sphi 0, %s214
      %s229 = sphi 0, %s215
      %s233 = sphi 0, %s233
      %s235 = sphi 0, %s233
      %s236 = sphi 0, %s235
      %s250 = sphi 0, %s236
      %s254 = sphi 0, %s254
      %s256 = sphi 0, %s254
      %s257 = sphi 0, %s256
      %s271 = sphi 0, %s257
      %s275 = sphi 0, %s275
      %s277 = sphi 0, %s275
      %s278 = sphi 0, %s277
      %s292 = sphi 0, %s278
      %s296 = sphi 0, %s296
      %s298 = sphi 0, %s296
      %s299 = sphi 0, %s298
      %s313 = sphi 0, %s299
      %s317 = sphi 0, %s317
      %s319 = sphi 0, %s317
      %s320 = sphi 0, %s319
      %s334 = sphi 0, %s320
      %s338 = sphi 0, %s338
      %s340 = sphi 0, %s338
      %s341 = sphi 0, %s340
      %s355 = sphi 0, %s341
      %s359 = sphi 0, %s359
      %s361 = sphi 0, %s359
      %s362 = sphi 0, %s361
      %s376 = sphi 0, %s362
      %s380 = sphi 0, %s380
      %s382 = sphi 0, %s380
      %s383 = sphi 0, %s382
      %s397 = sphi 0, %s383
      %s401 = sphi 0, %s401
      %s403 = sphi 0, %s401
      %s404 = sphi 0, %s403
      %s418 = sphi 0, %s404
      %s422 = sphi 0, %s422
      %s424 = sphi 0, %s422
      %s425 = sphi 0, %s424
      %s439 = sphi 0, %s425
      %s445 = sphi 0, %s447
      %s448 = sphi 0, %s445
      %s449 = sphi 0, %s448
      %s465 = sphi 0, %s449
      %s471 = sphi 0, %s473
      %s474 = sphi 0, %s471
      %s475 = sphi 0, %s474
      %s491 = sphi 0, %s475
    $region4: #{ppo_atari_forward.1} parent=1 // loop_header_branch
      %34 = sbr.rel (%p32) target = $region8
    $region5: #{ppo_atari_forward.1} parent=1 // loop_body
      %s36 = ssub.s32 %s31, 1
      %s37 = ssub.s32 %s31, 2
      %s38 = sadd.s32 %s31, 1
      %s39 = ssub.s32 %s31, %s38
      %p40 = scmp.eq.s32.totalorder %s39, 0
      %s42 = sadd.s32 %s41, 1
      %s43 = scalar_select %p40, %s41, %s42
      %p46 = pneg %p40
      %p47 = scmp.eq.s32.totalorder %s31, 1
      %p48 = por %p46, %p47
      %p49 = scmp.ne.s32.totalorder %s41, %s44
      %p50 = scmp.eq.s32.totalorder %s31, 0
      %p51 = por %p49, %p50
      %p52 = scmp.ne.s32.totalorder %s41, %s44
      %p53 = scmp.eq.s32.totalorder %s36, 1
      %p54 = por %p52, %p53
      %p55 = scmp.ne.s32.totalorder %s44, %s45
      %p56 = scmp.eq.s32.totalorder %s36, 0
      %p57 = por %p55, %p56
      %p58 = scmp.ne.s32.totalorder %s44, %s45
      %p59 = scmp.eq.s32.totalorder %s37, 1
      %p60 = por %p58, %p59
      %p62 = scmp.ne.s32.totalorder %s45, %s61
      %p63 = scmp.eq.s32.totalorder %s37, 0
      %p64 = por %p62, %p63
      %s66 = sadd.s32 %s65, 1
      %p69 = scmp.eq.s32.totalorder %s31, 1
      %p70 = scmp.ne.s32.totalorder %s65, %s67
      %p71 = scmp.eq.s32.totalorder %s31, 0
      %p72 = por %p70, %p71
      %p73 = scmp.ne.s32.totalorder %s65, %s67
      %p74 = scmp.eq.s32.totalorder %s36, 1
      %p75 = por %p73, %p74
      %p76 = scmp.ne.s32.totalorder %s67, %s68
      %p77 = scmp.eq.s32.totalorder %s36, 0
      %p78 = por %p76, %p77
      %p79 = scmp.ne.s32.totalorder %s67, %s68
      %p80 = scmp.eq.s32.totalorder %s37, 1
      %p81 = por %p79, %p80
      %p83 = scmp.ne.s32.totalorder %s68, %s82
      %p84 = scmp.eq.s32.totalorder %s37, 0
      %p85 = por %p83, %p84
      %s87 = sadd.s32 %s86, 1
      %p90 = scmp.eq.s32.totalorder %s31, 1
      %p91 = scmp.ne.s32.totalorder %s86, %s88
      %p92 = scmp.eq.s32.totalorder %s31, 0
      %p93 = por %p91, %p92
      %p94 = scmp.ne.s32.totalorder %s86, %s88
      %p95 = scmp.eq.s32.totalorder %s36, 1
      %p96 = por %p94, %p95
      %p97 = scmp.ne.s32.totalorder %s88, %s89
      %p98 = scmp.eq.s32.totalorder %s36, 0
      %p99 = por %p97, %p98
      %p100 = scmp.ne.s32.totalorder %s88, %s89
      %p101 = scmp.eq.s32.totalorder %s37, 1
      %p102 = por %p100, %p101
      %p104 = scmp.ne.s32.totalorder %s89, %s103
      %p105 = scmp.eq.s32.totalorder %s37, 0
      %p106 = por %p104, %p105
      %s108 = sadd.s32 %s107, 1
      %p111 = scmp.eq.s32.totalorder %s31, 1
      %p112 = scmp.ne.s32.totalorder %s107, %s109
      %p113 = scmp.eq.s32.totalorder %s31, 0
      %p114 = por %p112, %p113
      %p115 = scmp.ne.s32.totalorder %s107, %s109
      %p116 = scmp.eq.s32.totalorder %s36, 1
      %p117 = por %p115, %p116
      %p118 = scmp.ne.s32.totalorder %s109, %s110
      %p119 = scmp.eq.s32.totalorder %s36, 0
      %p120 = por %p118, %p119
      %p121 = scmp.ne.s32.totalorder %s109, %s110
      %p122 = scmp.eq.s32.totalorder %s37, 1
      %p123 = por %p121, %p122
      %p125 = scmp.ne.s32.totalorder %s110, %s124
      %p126 = scmp.eq.s32.totalorder %s37, 0
      %p127 = por %p125, %p126
      %s129 = sadd.s32 %s128, 1
      %p132 = scmp.eq.s32.totalorder %s31, 1
      %p133 = scmp.ne.s32.totalorder %s128, %s130
      %p134 = scmp.eq.s32.totalorder %s31, 0
      %p135 = por %p133, %p134
      %p136 = scmp.ne.s32.totalorder %s128, %s130
      %p137 = scmp.eq.s32.totalorder %s36, 1
      %p138 = por %p136, %p137
      %p139 = scmp.ne.s32.totalorder %s130, %s131
      %p140 = scmp.eq.s32.totalorder %s36, 0
      %p141 = por %p139, %p140
      %p142 = scmp.ne.s32.totalorder %s130, %s131
      %p143 = scmp.eq.s32.totalorder %s37, 1
      %p144 = por %p142, %p143
      %p146 = scmp.ne.s32.totalorder %s131, %s145
      %p147 = scmp.eq.s32.totalorder %s37, 0
      %p148 = por %p146, %p147
      %s150 = sadd.s32 %s149, 1
      %p153 = scmp.eq.s32.totalorder %s31, 1
      %p154 = scmp.ne.s32.totalorder %s149, %s151
      %p155 = scmp.eq.s32.totalorder %s31, 0
      %p156 = por %p154, %p155
      %p157 = scmp.ne.s32.totalorder %s149, %s151
      %p158 = scmp.eq.s32.totalorder %s36, 1
      %p159 = por %p157, %p158
      %p160 = scmp.ne.s32.totalorder %s151, %s152
      %p161 = scmp.eq.s32.totalorder %s36, 0
      %p162 = por %p160, %p161
      %p163 = scmp.ne.s32.totalorder %s151, %s152
      %p164 = scmp.eq.s32.totalorder %s37, 1
      %p165 = por %p163, %p164
      %p167 = scmp.ne.s32.totalorder %s152, %s166
      %p168 = scmp.eq.s32.totalorder %s37, 0
      %p169 = por %p167, %p168
      %s171 = sadd.s32 %s170, 1
      %p174 = scmp.eq.s32.totalorder %s31, 1
      %p175 = scmp.ne.s32.totalorder %s170, %s172
      %p176 = scmp.eq.s32.totalorder %s31, 0
      %p177 = por %p175, %p176
      %p178 = scmp.ne.s32.totalorder %s170, %s172
      %p179 = scmp.eq.s32.totalorder %s36, 1
      %p180 = por %p178, %p179
      %p181 = scmp.ne.s32.totalorder %s172, %s173
      %p182 = scmp.eq.s32.totalorder %s36, 0
      %p183 = por %p181, %p182
      %p184 = scmp.ne.s32.totalorder %s172, %s173
      %p185 = scmp.eq.s32.totalorder %s37, 1
      %p186 = por %p184, %p185
      %p188 = scmp.ne.s32.totalorder %s173, %s187
      %p189 = scmp.eq.s32.totalorder %s37, 0
      %p190 = por %p188, %p189
      %s192 = sadd.s32 %s191, 1
      %p195 = scmp.eq.s32.totalorder %s31, 1
      %p196 = scmp.ne.s32.totalorder %s191, %s193
      %p197 = scmp.eq.s32.totalorder %s31, 0
      %p198 = por %p196, %p197
      %p199 = scmp.ne.s32.totalorder %s191, %s193
      %p200 = scmp.eq.s32.totalorder %s36, 1
      %p201 = por %p199, %p200
      %p202 = scmp.ne.s32.totalorder %s193, %s194
      %p203 = scmp.eq.s32.totalorder %s36, 0
      %p204 = por %p202, %p203
      %p205 = scmp.ne.s32.totalorder %s193, %s194
      %p206 = scmp.eq.s32.totalorder %s37, 1
      %p207 = por %p205, %p206
      %p209 = scmp.ne.s32.totalorder %s194, %s208
      %p210 = scmp.eq.s32.totalorder %s37, 0
      %p211 = por %p209, %p210
      %s213 = sadd.s32 %s212, 1
      %p216 = scmp.eq.s32.totalorder %s31, 1
      %p217 = scmp.ne.s32.totalorder %s212, %s214
      %p218 = scmp.eq.s32.totalorder %s31, 0
      %p219 = por %p217, %p218
      %p220 = scmp.ne.s32.totalorder %s212, %s214
      %p221 = scmp.eq.s32.totalorder %s36, 1
      %p222 = por %p220, %p221
      %p223 = scmp.ne.s32.totalorder %s214, %s215
      %p224 = scmp.eq.s32.totalorder %s36, 0
      %p225 = por %p223, %p224
      %p226 = scmp.ne.s32.totalorder %s214, %s215
      %p227 = scmp.eq.s32.totalorder %s37, 1
      %p228 = por %p226, %p227
      %p230 = scmp.ne.s32.totalorder %s215, %s229
      %p231 = scmp.eq.s32.totalorder %s37, 0
      %p232 = por %p230, %p231
      %s234 = sadd.s32 %s233, 1
      %p237 = scmp.eq.s32.totalorder %s31, 1
      %p238 = scmp.ne.s32.totalorder %s233, %s235
      %p239 = scmp.eq.s32.totalorder %s31, 0
      %p240 = por %p238, %p239
      %p241 = scmp.ne.s32.totalorder %s233, %s235
      %p242 = scmp.eq.s32.totalorder %s36, 1
      %p243 = por %p241, %p242
      %p244 = scmp.ne.s32.totalorder %s235, %s236
      %p245 = scmp.eq.s32.totalorder %s36, 0
      %p246 = por %p244, %p245
      %p247 = scmp.ne.s32.totalorder %s235, %s236
      %p248 = scmp.eq.s32.totalorder %s37, 1
      %p249 = por %p247, %p248
      %p251 = scmp.ne.s32.totalorder %s236, %s250
      %p252 = scmp.eq.s32.totalorder %s37, 0
      %p253 = por %p251, %p252
      %s255 = sadd.s32 %s254, 1
      %p258 = scmp.eq.s32.totalorder %s31, 1
      %p259 = scmp.ne.s32.totalorder %s254, %s256
      %p260 = scmp.eq.s32.totalorder %s31, 0
      %p261 = por %p259, %p260
      %p262 = scmp.ne.s32.totalorder %s254, %s256
      %p263 = scmp.eq.s32.totalorder %s36, 1
      %p264 = por %p262, %p263
      %p265 = scmp.ne.s32.totalorder %s256, %s257
      %p266 = scmp.eq.s32.totalorder %s36, 0
      %p267 = por %p265, %p266
      %p268 = scmp.ne.s32.totalorder %s256, %s257
      %p269 = scmp.eq.s32.totalorder %s37, 1
      %p270 = por %p268, %p269
      %p272 = scmp.ne.s32.totalorder %s257, %s271
      %p273 = scmp.eq.s32.totalorder %s37, 0
      %p274 = por %p272, %p273
      %s276 = sadd.s32 %s275, 1
      %p279 = scmp.eq.s32.totalorder %s31, 1
      %p280 = scmp.ne.s32.totalorder %s275, %s277
      %p281 = scmp.eq.s32.totalorder %s31, 0
      %p282 = por %p280, %p281
      %p283 = scmp.ne.s32.totalorder %s275, %s277
      %p284 = scmp.eq.s32.totalorder %s36, 1
      %p285 = por %p283, %p284
      %p286 = scmp.ne.s32.totalorder %s277, %s278
      %p287 = scmp.eq.s32.totalorder %s36, 0
      %p288 = por %p286, %p287
      %p289 = scmp.ne.s32.totalorder %s277, %s278
      %p290 = scmp.eq.s32.totalorder %s37, 1
      %p291 = por %p289, %p290
      %p293 = scmp.ne.s32.totalorder %s278, %s292
      %p294 = scmp.eq.s32.totalorder %s37, 0
      %p295 = por %p293, %p294
      %s297 = sadd.s32 %s296, 1
      %p300 = scmp.eq.s32.totalorder %s31, 1
      %p301 = scmp.ne.s32.totalorder %s296, %s298
      %p302 = scmp.eq.s32.totalorder %s31, 0
      %p303 = por %p301, %p302
      %p304 = scmp.ne.s32.totalorder %s296, %s298
      %p305 = scmp.eq.s32.totalorder %s36, 1
      %p306 = por %p304, %p305
      %p307 = scmp.ne.s32.totalorder %s298, %s299
      %p308 = scmp.eq.s32.totalorder %s36, 0
      %p309 = por %p307, %p308
      %p310 = scmp.ne.s32.totalorder %s298, %s299
      %p311 = scmp.eq.s32.totalorder %s37, 1
      %p312 = por %p310, %p311
      %p314 = scmp.ne.s32.totalorder %s299, %s313
      %p315 = scmp.eq.s32.totalorder %s37, 0
      %p316 = por %p314, %p315
      %s318 = sadd.s32 %s317, 1
      %p321 = scmp.eq.s32.totalorder %s31, 1
      %p322 = scmp.ne.s32.totalorder %s317, %s319
      %p323 = scmp.eq.s32.totalorder %s31, 0
      %p324 = por %p322, %p323
      %p325 = scmp.ne.s32.totalorder %s317, %s319
      %p326 = scmp.eq.s32.totalorder %s36, 1
      %p327 = por %p325, %p326
      %p328 = scmp.ne.s32.totalorder %s319, %s320
      %p329 = scmp.eq.s32.totalorder %s36, 0
      %p330 = por %p328, %p329
      %p331 = scmp.ne.s32.totalorder %s319, %s320
      %p332 = scmp.eq.s32.totalorder %s37, 1
      %p333 = por %p331, %p332
      %p335 = scmp.ne.s32.totalorder %s320, %s334
      %p336 = scmp.eq.s32.totalorder %s37, 0
      %p337 = por %p335, %p336
      %s339 = sadd.s32 %s338, 1
      %p342 = scmp.eq.s32.totalorder %s31, 1
      %p343 = scmp.ne.s32.totalorder %s338, %s340
      %p344 = scmp.eq.s32.totalorder %s31, 0
      %p345 = por %p343, %p344
      %p346 = scmp.ne.s32.totalorder %s338, %s340
      %p347 = scmp.eq.s32.totalorder %s36, 1
      %p348 = por %p346, %p347
      %p349 = scmp.ne.s32.totalorder %s340, %s341
      %p350 = scmp.eq.s32.totalorder %s36, 0
      %p351 = por %p349, %p350
      %p352 = scmp.ne.s32.totalorder %s340, %s341
      %p353 = scmp.eq.s32.totalorder %s37, 1
      %p354 = por %p352, %p353
      %p356 = scmp.ne.s32.totalorder %s341, %s355
      %p357 = scmp.eq.s32.totalorder %s37, 0
      %p358 = por %p356, %p357
      %s360 = sadd.s32 %s359, 1
      %p363 = scmp.eq.s32.totalorder %s31, 1
      %p364 = scmp.ne.s32.totalorder %s359, %s361
      %p365 = scmp.eq.s32.totalorder %s31, 0
      %p366 = por %p364, %p365
      %p367 = scmp.ne.s32.totalorder %s359, %s361
      %p368 = scmp.eq.s32.totalorder %s36, 1
      %p369 = por %p367, %p368
      %p370 = scmp.ne.s32.totalorder %s361, %s362
      %p371 = scmp.eq.s32.totalorder %s36, 0
      %p372 = por %p370, %p371
      %p373 = scmp.ne.s32.totalorder %s361, %s362
      %p374 = scmp.eq.s32.totalorder %s37, 1
      %p375 = por %p373, %p374
      %p377 = scmp.ne.s32.totalorder %s362, %s376
      %p378 = scmp.eq.s32.totalorder %s37, 0
      %p379 = por %p377, %p378
      %s381 = sadd.s32 %s380, 1
      %p384 = scmp.eq.s32.totalorder %s31, 1
      %p385 = scmp.ne.s32.totalorder %s380, %s382
      %p386 = scmp.eq.s32.totalorder %s31, 0
      %p387 = por %p385, %p386
      %p388 = scmp.ne.s32.totalorder %s380, %s382
      %p389 = scmp.eq.s32.totalorder %s36, 1
      %p390 = por %p388, %p389
      %p391 = scmp.ne.s32.totalorder %s382, %s383
      %p392 = scmp.eq.s32.totalorder %s36, 0
      %p393 = por %p391, %p392
      %p394 = scmp.ne.s32.totalorder %s382, %s383
      %p395 = scmp.eq.s32.totalorder %s37, 1
      %p396 = por %p394, %p395
      %p398 = scmp.ne.s32.totalorder %s383, %s397
      %p399 = scmp.eq.s32.totalorder %s37, 0
      %p400 = por %p398, %p399
      %s402 = sadd.s32 %s401, 1
      %p405 = scmp.eq.s32.totalorder %s31, 1
      %p406 = scmp.ne.s32.totalorder %s401, %s403
      %p407 = scmp.eq.s32.totalorder %s31, 0
      %p408 = por %p406, %p407
      %p409 = scmp.ne.s32.totalorder %s401, %s403
      %p410 = scmp.eq.s32.totalorder %s36, 1
      %p411 = por %p409, %p410
      %p412 = scmp.ne.s32.totalorder %s403, %s404
      %p413 = scmp.eq.s32.totalorder %s36, 0
      %p414 = por %p412, %p413
      %p415 = scmp.ne.s32.totalorder %s403, %s404
      %p416 = scmp.eq.s32.totalorder %s37, 1
      %p417 = por %p415, %p416
      %p419 = scmp.ne.s32.totalorder %s404, %s418
      %p420 = scmp.eq.s32.totalorder %s37, 0
      %p421 = por %p419, %p420
      %s423 = sadd.s32 %s422, 1
      %p426 = scmp.eq.s32.totalorder %s31, 1
      %p427 = scmp.ne.s32.totalorder %s422, %s424
      %p428 = scmp.eq.s32.totalorder %s31, 0
      %p429 = por %p427, %p428
      %p430 = scmp.ne.s32.totalorder %s422, %s424
      %p431 = scmp.eq.s32.totalorder %s36, 1
      %p432 = por %p430, %p431
      %p433 = scmp.ne.s32.totalorder %s424, %s425
      %p434 = scmp.eq.s32.totalorder %s36, 0
      %p435 = por %p433, %p434
      %p436 = scmp.ne.s32.totalorder %s424, %s425
      %p437 = scmp.eq.s32.totalorder %s37, 1
      %p438 = por %p436, %p437
      %p440 = scmp.ne.s32.totalorder %s425, %s439
      %p441 = scmp.eq.s32.totalorder %s37, 0
      %p442 = por %p440, %p441
      %s443 = ssub.s32 %s31, %s38
      %p444 = scmp.eq.s32.totalorder %s443, 0
      %s446 = sadd.s32 %s445, 1
      %s447 = scalar_select %p444, %s445, %s446
      %p450 = pneg %p444
      %p451 = scmp.eq.s32.totalorder %s31, 1
      %p452 = por %p450, %p451
      %p453 = scmp.ne.s32.totalorder %s445, %s448
      %p454 = scmp.eq.s32.totalorder %s31, 0
      %p455 = por %p453, %p454
      %p456 = scmp.ne.s32.totalorder %s445, %s448
      %p457 = scmp.eq.s32.totalorder %s36, 1
      %p458 = por %p456, %p457
      %p459 = scmp.ne.s32.totalorder %s448, %s449
      %p460 = scmp.eq.s32.totalorder %s36, 0
      %p461 = por %p459, %p460
      %p462 = scmp.ne.s32.totalorder %s448, %s449
      %p463 = scmp.eq.s32.totalorder %s37, 1
      %p464 = por %p462, %p463
      %p466 = scmp.ne.s32.totalorder %s449, %s465
      %p467 = scmp.eq.s32.totalorder %s37, 0
      %p468 = por %p466, %p467
      %s469 = ssub.s32 %s31, %s38
      %p470 = scmp.eq.s32.totalorder %s469, 0
      %s472 = sadd.s32 %s471, 1
      %s473 = scalar_select %p470, %s471, %s472
      %p476 = pneg %p470
      %p477 = scmp.eq.s32.totalorder %s31, 1
      %p478 = por %p476, %p477
      %p479 = scmp.ne.s32.totalorder %s471, %s474
      %p480 = scmp.eq.s32.totalorder %s31, 0
      %p481 = por %p479, %p480
      %p482 = scmp.ne.s32.totalorder %s471, %s474
      %p483 = scmp.eq.s32.totalorder %s36, 1
      %p484 = por %p482, %p483
      %p485 = scmp.ne.s32.totalorder %s474, %s475
      %p486 = scmp.eq.s32.totalorder %s36, 0
      %p487 = por %p485, %p486
      %p488 = scmp.ne.s32.totalorder %s474, %s475
      %p489 = scmp.eq.s32.totalorder %s37, 1
      %p490 = por %p488, %p489
      %p492 = scmp.ne.s32.totalorder %s475, %s491
      %p493 = scmp.eq.s32.totalorder %s37, 0
      %p494 = por %p492, %p493
      %p495 = scmp.le.s32.totalorder 1, %s31
      %p496 = scmp.lt.s32.totalorder %s31, 3
      %p497 = pnand %p495, %p496
      %p498 = pneg %p497
      // Predicated region
      $region9: #{ppo_atari_forward.1} parent=5 // pred_check
        _
      $region10: #{ppo_atari_forward.1} parent=5 // pred_check_branch
        %500 = sbr.rel (%p497) target = $region12
      $region11: #{ppo_atari_forward.1} parent=5 // pred_region
        %s501 = ssub.s32 %s31, 1
        // Predicated region
        $region13: #{ppo_atari_forward.1} parent=11 // pred_check
          %p502 = pneg %p78
        $region14: #{ppo_atari_forward.1} parent=11 // pred_check_branch
          %504 = sbr.rel (%p502) target = $region16
        $region15: #{ppo_atari_forward.1} parent=11 // pred_region
          _
        $region16: #{ppo_atari_forward.1} parent=11 // pred_fallthru
          _
        // Predicated region
        $region17: #{ppo_atari_forward.1} parent=11 // pred_check
          %p505 = pneg %p99
        $region18: #{ppo_atari_forward.1} parent=11 // pred_check_branch
          %507 = sbr.rel (%p505) target = $region20
        $region19: #{ppo_atari_forward.1} parent=11 // pred_region
          _
        $region20: #{ppo_atari_forward.1} parent=11 // pred_fallthru
          _
        // Predicated region
        $region21: #{ppo_atari_forward.1} parent=11 // pred_check
          %p508 = pneg %p120
        $region22: #{ppo_atari_forward.1} parent=11 // pred_check_branch
          %510 = sbr.rel (%p508) target = $region24
        $region23: #{ppo_atari_forward.1} parent=11 // pred_region
          _
        $region24: #{ppo_atari_forward.1} parent=11 // pred_fallthru
          _
        // Predicated region
        $region25: #{ppo_atari_forward.1} parent=11 // pred_check
          %p511 = pneg %p141
        $region26: #{ppo_atari_forward.1} parent=11 // pred_check_branch
          %513 = sbr.rel (%p511) target = $region28
        $region27: #{ppo_atari_forward.1} parent=11 // pred_region
          _
        $region28: #{ppo_atari_forward.1} parent=11 // pred_fallthru
          _
        // Predicated region
        $region29: #{ppo_atari_forward.1} parent=11 // pred_check
          %p514 = pneg %p162
        $region30: #{ppo_atari_forward.1} parent=11 // pred_check_branch
          %516 = sbr.rel (%p514) target = $region32
        $region31: #{ppo_atari_forward.1} parent=11 // pred_region
          _
        $region32: #{ppo_atari_forward.1} parent=11 // pred_fallthru
          _
        // Predicated region
        $region33: #{ppo_atari_forward.1} parent=11 // pred_check
          %p517 = pneg %p183
        $region34: #{ppo_atari_forward.1} parent=11 // pred_check_branch
          %519 = sbr.rel (%p517) target = $region36
        $region35: #{ppo_atari_forward.1} parent=11 // pred_region
          _
        $region36: #{ppo_atari_forward.1} parent=11 // pred_fallthru
          _
        // Predicated region
        $region37: #{ppo_atari_forward.1} parent=11 // pred_check
          %p520 = pneg %p204
        $region38: #{ppo_atari_forward.1} parent=11 // pred_check_branch
          %522 = sbr.rel (%p520) target = $region40
        $region39: #{ppo_atari_forward.1} parent=11 // pred_region
          _
        $region40: #{ppo_atari_forward.1} parent=11 // pred_fallthru
          _
        // Predicated region
        $region41: #{ppo_atari_forward.1} parent=11 // pred_check
          %p523 = pneg %p225
        $region42: #{ppo_atari_forward.1} parent=11 // pred_check_branch
          %525 = sbr.rel (%p523) target = $region44
        $region43: #{ppo_atari_forward.1} parent=11 // pred_region
          _
        $region44: #{ppo_atari_forward.1} parent=11 // pred_fallthru
          _
        // Predicated region
        $region45: #{ppo_atari_forward.1} parent=11 // pred_check
          %p526 = pneg %p246
        $region46: #{ppo_atari_forward.1} parent=11 // pred_check_branch
          %528 = sbr.rel (%p526) target = $region48
        $region47: #{ppo_atari_forward.1} parent=11 // pred_region
          _
        $region48: #{ppo_atari_forward.1} parent=11 // pred_fallthru
          _
        // Predicated region
        $region49: #{ppo_atari_forward.1} parent=11 // pred_check
          %p529 = pneg %p267
        $region50: #{ppo_atari_forward.1} parent=11 // pred_check_branch
          %531 = sbr.rel (%p529) target = $region52
        $region51: #{ppo_atari_forward.1} parent=11 // pred_region
          _
        $region52: #{ppo_atari_forward.1} parent=11 // pred_fallthru
          _
        // Predicated region
        $region53: #{ppo_atari_forward.1} parent=11 // pred_check
          %p532 = pneg %p288
        $region54: #{ppo_atari_forward.1} parent=11 // pred_check_branch
          %534 = sbr.rel (%p532) target = $region56
        $region55: #{ppo_atari_forward.1} parent=11 // pred_region
          %s536 = ssub.s32 16384, 16384
          %537 = vsyncadd [#allocation4], %s536
          %s538 = sshll.u32 [#allocation3], 4
          %s539 = int_to_ptr.vmem [resolvable:$true] %s538
          %544 = dma.hbm_to_vmem [thread:$0]  %s11, 16384, %s539, [#allocation4], 256, 256, 16
        $region56: #{ppo_atari_forward.1} parent=11 // pred_fallthru
          _
        // Predicated region
        $region57: #{ppo_atari_forward.1} parent=11 // pred_check
          %p545 = pneg %p309
        $region58: #{ppo_atari_forward.1} parent=11 // pred_check_branch
          %547 = sbr.rel (%p545) target = $region60
        $region59: #{ppo_atari_forward.1} parent=11 // pred_region
          _
        $region60: #{ppo_atari_forward.1} parent=11 // pred_fallthru
          _
        // Predicated region
        $region61: #{ppo_atari_forward.1} parent=11 // pred_check
          %p548 = pneg %p330
        $region62: #{ppo_atari_forward.1} parent=11 // pred_check_branch
          %550 = sbr.rel (%p548) target = $region64
        $region63: #{ppo_atari_forward.1} parent=11 // pred_region
          %s552 = ssub.s32 16384, 16384
          %553 = vsyncadd [#allocation6], %s552
          %s554 = sshll.u32 [#allocation5], 4
          %s555 = int_to_ptr.vmem [resolvable:$true] %s554
          %560 = dma.hbm_to_vmem [thread:$0]  %s13, 16384, %s555, [#allocation6], 256, 256, 16
        $region64: #{ppo_atari_forward.1} parent=11 // pred_fallthru
          _
        // Predicated region
        $region65: #{ppo_atari_forward.1} parent=11 // pred_check
          %p561 = pneg %p351
        $region66: #{ppo_atari_forward.1} parent=11 // pred_check_branch
          %563 = sbr.rel (%p561) target = $region68
        $region67: #{ppo_atari_forward.1} parent=11 // pred_region
          _
        $region68: #{ppo_atari_forward.1} parent=11 // pred_fallthru
          _
        // Predicated region
        $region69: #{ppo_atari_forward.1} parent=11 // pred_check
          %p564 = pneg %p372
        $region70: #{ppo_atari_forward.1} parent=11 // pred_check_branch
          %566 = sbr.rel (%p564) target = $region72
        $region71: #{ppo_atari_forward.1} parent=11 // pred_region
          _
        $region72: #{ppo_atari_forward.1} parent=11 // pred_fallthru
          _
        // Predicated region
        $region73: #{ppo_atari_forward.1} parent=11 // pred_check
          %p567 = pneg %p393
        $region74: #{ppo_atari_forward.1} parent=11 // pred_check_branch
          %569 = sbr.rel (%p567) target = $region76
        $region75: #{ppo_atari_forward.1} parent=11 // pred_region
          _
        $region76: #{ppo_atari_forward.1} parent=11 // pred_fallthru
          _
        // Predicated region
        $region77: #{ppo_atari_forward.1} parent=11 // pred_check
          %p570 = pneg %p414
        $region78: #{ppo_atari_forward.1} parent=11 // pred_check_branch
          %572 = sbr.rel (%p570) target = $region80
        $region79: #{ppo_atari_forward.1} parent=11 // pred_region
          _
        $region80: #{ppo_atari_forward.1} parent=11 // pred_fallthru
          _
        // Predicated region
        $region81: #{ppo_atari_forward.1} parent=11 // pred_check
          %p573 = pneg %p435
        $region82: #{ppo_atari_forward.1} parent=11 // pred_check_branch
          %575 = sbr.rel (%p573) target = $region84
        $region83: #{ppo_atari_forward.1} parent=11 // pred_region
          _
        $region84: #{ppo_atari_forward.1} parent=11 // pred_fallthru
          _
      $region12: #{ppo_atari_forward.1} parent=5 // pred_fallthru
        _
      %p576 = scmp.lt.s32.totalorder %s31, 2
      // Predicated region
      $region85: #{ppo_atari_forward.1} parent=5 // pred_check
        %p577 = pneg %p576
      $region86: #{ppo_atari_forward.1} parent=5 // pred_check_branch
        %579 = sbr.rel (%p577) target = $region88
      $region87: #{ppo_atari_forward.1} parent=5 // pred_region
        // Predicated region
        $region89: #{ppo_atari_forward.1} parent=87 // pred_check
          %p580 = pneg %p51
        $region90: #{ppo_atari_forward.1} parent=87 // pred_check_branch
          %582 = sbr.rel (%p580) target = $region92
        $region91: #{ppo_atari_forward.1} parent=87 // pred_region
          %p583 = scmp.lt.s32.totalorder %s31, 1
          %s584 = scalar_select %p583, %s31, 1
          %s585 = smul.addr %s584, 32
          %s586 = smul.addr %s585, 4
          %s587 = scalar_lea.vmem %s0, %s586
        $region92: #{ppo_atari_forward.1} parent=87 // pred_fallthru
          _
      $region88: #{ppo_atari_forward.1} parent=5 // pred_fallthru
        _
      %p588 = scmp.le.s32.totalorder 1, %s31
      %p589 = scmp.lt.s32.totalorder %s31, 3
      %p590 = pnand %p588, %p589
      %p591 = pneg %p590
      // Predicated region
      $region93: #{ppo_atari_forward.1} parent=5 // pred_check
        _
      $region94: #{ppo_atari_forward.1} parent=5 // pred_check_branch
        %593 = sbr.rel (%p590) target = $region96
      $region95: #{ppo_atari_forward.1} parent=5 // pred_region
        %s594 = ssub.s32 %s31, 1
        // Predicated region
        $region97: #{ppo_atari_forward.1} parent=95 // pred_check
          %p595 = pneg %p288
        $region98: #{ppo_atari_forward.1} parent=95 // pred_check_branch
          %597 = sbr.rel (%p595) target = $region100
        $region99: #{ppo_atari_forward.1} parent=95 // pred_region
          %598 = dma.done [#allocation4], 16384
        $region100: #{ppo_atari_forward.1} parent=95 // pred_fallthru
          _
        // Predicated region
        $region101: #{ppo_atari_forward.1} parent=95 // pred_check
          %p599 = pneg %p330
        $region102: #{ppo_atari_forward.1} parent=95 // pred_check_branch
          %601 = sbr.rel (%p599) target = $region104
        $region103: #{ppo_atari_forward.1} parent=95 // pred_region
          %602 = dma.done [#allocation6], 16384
        $region104: #{ppo_atari_forward.1} parent=95 // pred_fallthru
          _
        %p603 = scmp.lt.s32.totalorder %s36, 1
        %s604 = scalar_select %p603, %s36, 1
        %s605 = smul.addr %s604, 32
        %s606 = smul.addr %s605, 4
        %s607 = scalar_lea.vmem %s0, %s606
        %p608 = pneg %p57
        %p609 = pneg %p54
        %p610 = pneg %p78
        %p611 = pneg %p75
        %p612 = pneg %p99
        %p613 = pneg %p96
        %p614 = pneg %p120
        %p615 = pneg %p117
        %p616 = pneg %p141
        %p617 = pneg %p138
        %p618 = pneg %p162
        %p619 = pneg %p159
        %p620 = pneg %p183
        %p621 = pneg %p180
        %p622 = pneg %p204
        %p623 = pneg %p201
        %p624 = pneg %p225
        %p625 = pneg %p222
        %p626 = pneg %p246
        %p627 = pneg %p243
        %p628 = pneg %p267
        %p629 = pneg %p264
        %p630 = pneg %p288
        %p631 = pneg %p285
        %p632 = pneg %p309
        %p633 = pneg %p306
        %p634 = pneg %p330
        %p635 = pneg %p327
        %p636 = pneg %p351
        %p637 = pneg %p348
        %p638 = pneg %p372
        %p639 = pneg %p369
        %p640 = pneg %p393
        %p641 = pneg %p390
        %p642 = pneg %p414
        %p643 = pneg %p411
        %p644 = pneg %p435
        %p645 = pneg %p432
        %p646 = pneg %p461
        %p647 = pneg %p458
        %p648 = scmp.lt.s32.totalorder %s36, 1
        %s649 = scalar_select %p648, %s36, 1
        %s650 = scalar_lea.vmem %s19, %s649
        %p651 = pneg %p487
        %p652 = pneg %p484
        %p653 = scmp.lt.s32.totalorder %s36, 1
        %s654 = scalar_select %p653, %s36, 1
        %s655 = scalar_lea.vmem %s20, %s654
        %p656 = scmp.lt.s32.totalorder %s36, 1
        %s657 = scalar_select %p656, %s36, 1
        %s658 = smul.addr %s657, 32
        %s659 = smul.addr %s658, 4
        %s660 = scalar_lea.vmem %s0, %s659
        %p661 = scmp.lt.s32.totalorder %s36, 1
        %s662 = scalar_select %p661, %s36, 1
        %s663 = scalar_lea.vmem %s19, %s662
        %p664 = scmp.lt.s32.totalorder %s36, 1
        %s665 = scalar_select %p664, %s36, 1
        %s666 = scalar_lea.vmem %s20, %s665
        %v668 = vld [vmem:[%s660] sm:$0xf]
        %v669 = vld [vmem:[%s660 + $0x4] sm:$0xf]
        %s670 = scalar_lea.vmem %s660, 8
        %v671 = vld [vmem:[%s670] sm:$0xf]
        %v672 = vld [vmem:[%s670 + $0x4] sm:$0xf]
        %s673 = scalar_lea.vmem %s660, 16
        %v674 = vld [vmem:[%s673] sm:$0xf]
        %v675 = vld [vmem:[%s673 + $0x4] sm:$0xf]
        %s676 = scalar_lea.vmem %s660, 24
        %v677 = vld [vmem:[%s676] sm:$0xf]
        %v678 = vld [vmem:[%s676 + $0x4] sm:$0xf]
        %s679 = scalar_lea.vmem %s660, 32
        %v680 = vld [vmem:[%s679] sm:$0xf]
        %v681 = vld [vmem:[%s679 + $0x4] sm:$0xf]
        %s682 = scalar_lea.vmem %s660, 40
        %v683 = vld [vmem:[%s682] sm:$0xf]
        %v684 = vld [vmem:[%s682 + $0x4] sm:$0xf]
        %s685 = scalar_lea.vmem %s660, 48
        %v686 = vld [vmem:[%s685] sm:$0xf]
        %v687 = vld [vmem:[%s685 + $0x4] sm:$0xf]
        %s688 = scalar_lea.vmem %s660, 56
        %v689 = vld [vmem:[%s688] sm:$0xf]
        %v690 = vld [vmem:[%s688 + $0x4] sm:$0xf]
        %s691 = scalar_lea.vmem %s660, 64
        %v692 = vld [vmem:[%s691] sm:$0xf]
        %v693 = vld [vmem:[%s691 + $0x4] sm:$0xf]
        %s694 = scalar_lea.vmem %s660, 72
        %v695 = vld [vmem:[%s694] sm:$0xf]
        %v696 = vld [vmem:[%s694 + $0x4] sm:$0xf]
        %s697 = scalar_lea.vmem %s660, 80
        %v698 = vld [vmem:[%s697] sm:$0xf]
        %v699 = vld [vmem:[%s697 + $0x4] sm:$0xf]
        %s700 = scalar_lea.vmem %s660, 88
        %v701 = vld [vmem:[%s700] sm:$0xf]
        %v702 = vld [vmem:[%s700 + $0x4] sm:$0xf]
        %s703 = scalar_lea.vmem %s660, 96
        %v704 = vld [vmem:[%s703] sm:$0xf]
        %v705 = vld [vmem:[%s703 + $0x4] sm:$0xf]
        %s706 = scalar_lea.vmem %s660, 104
        %v707 = vld [vmem:[%s706] sm:$0xf]
        %v708 = vld [vmem:[%s706 + $0x4] sm:$0xf]
        %s709 = scalar_lea.vmem %s660, 112
        %v710 = vld [vmem:[%s709] sm:$0xf]
        %v711 = vld [vmem:[%s709 + $0x4] sm:$0xf]
        %s712 = scalar_lea.vmem %s660, 120
        %v713 = vld [vmem:[%s712] sm:$0xf]
        %v714 = vld [vmem:[%s712 + $0x4] sm:$0xf]
        %v715 = vlaneseq
        %v716 = vshrl.u32 %v715, 7
        %v717 = vlaneseq
        %v718 = vand.u32 %v717, 127
        %v719 = vmul.u32 %v716, 2
        %v720 = vadd.s32 %v719, 4294967295
        %vm721 = vcmp.eq.s32.totalorder %v718, %v720
        %v722 = vsel %vm721, 1.0, 0.0
        %v723 = vpack.c.bf16 %v722, %v722
        %vm724 = vcmp.eq.s32.totalorder %v718, %v719
        %v725 = vsel %vm724, 1.0, 0.0
        %v726 = vpack.c.bf16 %v725, %v725
        %v727 = vadd.s32 %v719, 1
        %vm728 = vcmp.eq.s32.totalorder %v718, %v727
        %v729 = vsel %vm728, 1.0, 0.0
        %v730 = vpack.c.bf16 %v729, %v729
        %v733 = vunpack.c.l.b16 %v668
        %v734 = vunpack.c.l.b16 %v669
        %v735 = vpack.c.b16 %v734, %v733
        %736 = vrot.lane.b32.xlu0 %v735, 4
        %v737 = vpop.permute.xlu0 %736
        %v740 = vunpack.c.l.b16 %v671
        %v741 = vunpack.c.l.b16 %v672
        %v742 = vpack.c.b16 %v741, %v740
        %743 = vrot.lane.b32.xlu0 %v742, 8
        %v744 = vpop.permute.xlu0 %743
        %vm745 = vcmask 31744
        %v748 = vsel %vm745, 0, %v737
        %vm749 = vcmask 64512
        %v751 = vsel %vm749, %v748, %v744
        %vm753 = vcmask 130048
        %v755 = vsel %vm753, %v723, 0
        %757 = vmatprep.subr.bf16.mxu0 0
        %758 = vmatpush1.bf16.msra.mxu0 %v751
        %759 = vmatprep.subr.bf16.mxu0 0
        %760 = vmatpush1.bf16.msra.mxu0 0
        %761 = vmatprep.subr.bf16.mxu0 0
        %762 = vmatpush1.bf16.msra.mxu0 0
        %763 = vmatprep.subr.bf16.mxu0 0
        %764 = vmatpush1.bf16.msra.mxu0 0
        %765 = vmatprep.subr.bf16.mxu0 0
        %766 = vmatpush1.bf16.msra.mxu0 0
        %767 = vmatprep.subr.bf16.mxu0 0
        %768 = vmatpush1.bf16.msra.mxu0 0
        %769 = vmatprep.subr.bf16.mxu0 0
        %770 = vmatpush1.bf16.msra.mxu0 0
        %771 = vmatprep.subr.bf16.mxu0 0
        %772 = vmatpush1.bf16.msra.mxu0 0
        %773 = vmatprep.subr.bf16.mxu0 0
        %774 = vmatpush1.bf16.msra.mxu0 0
        %775 = vmatprep.subr.bf16.mxu0 0
        %776 = vmatpush1.bf16.msra.mxu0 0
        %777 = vmatprep.subr.bf16.mxu0 0
        %778 = vmatpush1.bf16.msra.mxu0 0
        %779 = vmatprep.subr.bf16.mxu0 0
        %780 = vmatpush1.bf16.msra.mxu0 0
        %781 = vmatprep.subr.bf16.mxu0 0
        %782 = vmatpush1.bf16.msra.mxu0 0
        %783 = vmatprep.subr.bf16.mxu0 0
        %784 = vmatpush1.bf16.msra.mxu0 0
        %785 = vmatprep.subr.bf16.mxu0 0
        %786 = vmatpush1.bf16.msra.mxu0 0
        %787 = vmatprep.subr.bf16.mxu0 0
        %788 = vmatpush1.bf16.msra.mxu0 0
        %789 = vmatprep.mubr.bf16.mxu0 0
        %790 = vmatmul.mubr.bf16.gmra.mrb[0].mxu0 %v755
        %v791 = vpop.f32.mrb[0].mxu0
        %v792 = vadd.f32 0.0, %v791
        %v793 = vpop.f32.mrb[0].mxu0
        %v794 = vpop.f32.mrb[0].mxu0
        %v795 = vpop.f32.mrb[0].mxu0
        %796 = vdwg.mxu0
        %v797 = vpack.c.bf16 %v792, %v792
        %v798 = vld [vmem:[%s1] sm:$0xf]
        %v799 = vld [vmem:[%s1 + $0x4] sm:$0x3]
        %v801 = vsel %vm753, %v726, 0
        %803 = vmatprep.subr.bf16.mxu0 0
        %804 = vmatpush1.bf16.msra.mxu0 %v751
        %805 = vmatprep.subr.bf16.mxu0 0
        %806 = vmatpush1.bf16.msra.mxu0 0
        %807 = vmatprep.subr.bf16.mxu0 0
        %808 = vmatpush1.bf16.msra.mxu0 0
        %809 = vmatprep.subr.bf16.mxu0 0
        %810 = vmatpush1.bf16.msra.mxu0 0
        %811 = vmatprep.subr.bf16.mxu0 0
        %812 = vmatpush1.bf16.msra.mxu0 0
        %813 = vmatprep.subr.bf16.mxu0 0
        %814 = vmatpush1.bf16.msra.mxu0 0
        %815 = vmatprep.subr.bf16.mxu0 0
        %816 = vmatpush1.bf16.msra.mxu0 0
        %817 = vmatprep.subr.bf16.mxu0 0
        %818 = vmatpush1.bf16.msra.mxu0 0
        %819 = vmatprep.subr.bf16.mxu0 0
        %820 = vmatpush1.bf16.msra.mxu0 0
        %821 = vmatprep.subr.bf16.mxu0 0
        %822 = vmatpush1.bf16.msra.mxu0 0
        %823 = vmatprep.subr.bf16.mxu0 0
        %824 = vmatpush1.bf16.msra.mxu0 0
        %825 = vmatprep.subr.bf16.mxu0 0
        %826 = vmatpush1.bf16.msra.mxu0 0
        %827 = vmatprep.subr.bf16.mxu0 0
        %828 = vmatpush1.bf16.msra.mxu0 0
        %829 = vmatprep.subr.bf16.mxu0 0
        %830 = vmatpush1.bf16.msra.mxu0 0
        %831 = vmatprep.subr.bf16.mxu0 0
        %832 = vmatpush1.bf16.msra.mxu0 0
        %833 = vmatprep.subr.bf16.mxu0 0
        %834 = vmatpush1.bf16.msra.mxu0 0
        %835 = vmatprep.mubr.bf16.mxu0 0
        %836 = vmatmul.mubr.bf16.gmra.mrb[0].mxu0 %v801
        %v837 = vpop.f32.mrb[0].mxu0
        %v838 = vadd.f32 0.0, %v837
        %v839 = vpop.f32.mrb[0].mxu0
        %v840 = vpop.f32.mrb[0].mxu0
        %v841 = vpop.f32.mrb[0].mxu0
        %842 = vdwg.mxu0
        %v843 = vpack.c.bf16 %v838, %v838
        %s844 = scalar_lea.vmem %s1, 8
        %v845 = vld [vmem:[%s844] sm:$0xf]
        %v846 = vld [vmem:[%s844 + $0x4] sm:$0x3]
        %v849 = vunpack.c.l.b16 %v845
        %v850 = vunpack.c.l.b16 %v846
        %v851 = vpack.c.b16 %v850, %v849
        %vm852 = vcmask 97280
        %v854 = vsel %vm852, %v843, 0
        %vm856 = vcmask 1045504
        %v858 = vsel %vm856, %v851, 0
        %860 = vmatprep.subr.bf16.mxu0 0
        %861 = vmatpush1.bf16.msra.mxu0 %v858
        %862 = vmatprep.subr.bf16.mxu0 0
        %863 = vmatpush1.bf16.msra.mxu0 0
        %864 = vmatprep.subr.bf16.mxu0 0
        %865 = vmatpush1.bf16.msra.mxu0 0
        %866 = vmatprep.subr.bf16.mxu0 0
        %867 = vmatpush1.bf16.msra.mxu0 0
        %868 = vmatprep.subr.bf16.mxu0 0
        %869 = vmatpush1.bf16.msra.mxu0 0
        %870 = vmatprep.subr.bf16.mxu0 0
        %871 = vmatpush1.bf16.msra.mxu0 0
        %872 = vmatprep.subr.bf16.mxu0 0
        %873 = vmatpush1.bf16.msra.mxu0 0
        %874 = vmatprep.subr.bf16.mxu0 0
        %875 = vmatpush1.bf16.msra.mxu0 0
        %876 = vmatprep.subr.bf16.mxu0 0
        %877 = vmatpush1.bf16.msra.mxu0 0
        %878 = vmatprep.subr.bf16.mxu0 0
        %879 = vmatpush1.bf16.msra.mxu0 0
        %880 = vmatprep.subr.bf16.mxu0 0
        %881 = vmatpush1.bf16.msra.mxu0 0
        %882 = vmatprep.subr.bf16.mxu0 0
        %883 = vmatpush1.bf16.msra.mxu0 0
        %884 = vmatprep.subr.bf16.mxu0 0
        %885 = vmatpush1.bf16.msra.mxu0 0
        %886 = vmatprep.subr.bf16.mxu0 0
        %887 = vmatpush1.bf16.msra.mxu0 0
        %888 = vmatprep.subr.bf16.mxu0 0
        %889 = vmatpush1.bf16.msra.mxu0 0
        %890 = vmatprep.subr.bf16.mxu0 0
        %891 = vmatpush1.bf16.msra.mxu0 0
        %892 = vmatprep.mubr.bf16.mxu0 0
        %893 = vmatmul.mubr.bf16.gmra.mrb[0].mxu0 %v854
        %v894 = vpop.f32.mrb[0].mxu0
        %v895 = vadd.f32 0.0, %v894
        %v896 = vpop.f32.mrb[0].mxu0
        %v897 = vpop.f32.mrb[0].mxu0
        %v898 = vpop.f32.mrb[0].mxu0
        %899 = vdwg.mxu0
        %v902 = vunpack.c.l.b16 %v798
        %v903 = vunpack.c.l.b16 %v799
        %v904 = vpack.c.b16 %v903, %v902
        %v906 = vsel %vm852, %v797, 0
        %v909 = vsel %vm856, %v904, 0
        %911 = vmatprep.subr.bf16.mxu0 0
        %912 = vmatpush1.bf16.msra.mxu0 %v909
        %913 = vmatprep.subr.bf16.mxu0 0
        %914 = vmatpush1.bf16.msra.mxu0 0
        %915 = vmatprep.subr.bf16.mxu0 0
        %916 = vmatpush1.bf16.msra.mxu0 0
        %917 = vmatprep.subr.bf16.mxu0 0
        %918 = vmatpush1.bf16.msra.mxu0 0
        %919 = vmatprep.subr.bf16.mxu0 0
        %920 = vmatpush1.bf16.msra.mxu0 0
        %921 = vmatprep.subr.bf16.mxu0 0
        %922 = vmatpush1.bf16.msra.mxu0 0
        %923 = vmatprep.subr.bf16.mxu0 0
        %924 = vmatpush1.bf16.msra.mxu0 0
        %925 = vmatprep.subr.bf16.mxu0 0
        %926 = vmatpush1.bf16.msra.mxu0 0
        %927 = vmatprep.subr.bf16.mxu0 0
        %928 = vmatpush1.bf16.msra.mxu0 0
        %929 = vmatprep.subr.bf16.mxu0 0
        %930 = vmatpush1.bf16.msra.mxu0 0
        %931 = vmatprep.subr.bf16.mxu0 0
        %932 = vmatpush1.bf16.msra.mxu0 0
        %933 = vmatprep.subr.bf16.mxu0 0
        %934 = vmatpush1.bf16.msra.mxu0 0
        %935 = vmatprep.subr.bf16.mxu0 0
        %936 = vmatpush1.bf16.msra.mxu0 0
        %937 = vmatprep.subr.bf16.mxu0 0
        %938 = vmatpush1.bf16.msra.mxu0 0
        %939 = vmatprep.subr.bf16.mxu0 0
        %940 = vmatpush1.bf16.msra.mxu0 0
        %941 = vmatprep.subr.bf16.mxu0 0
        %942 = vmatpush1.bf16.msra.mxu0 0
        %943 = vmatprep.mubr.bf16.mxu0 0
        %944 = vmatmul.mubr.bf16.gmra.mrb[0].mxu0 %v906
        %v945 = vpop.f32.mrb[0].mxu0
        %v946 = vadd.f32 %v895, %v945
        %v947 = vpop.f32.mrb[0].mxu0
        %v948 = vpop.f32.mrb[0].mxu0
        %v949 = vpop.f32.mrb[0].mxu0
        %950 = vdwg.mxu0
        %v952 = vsel %vm753, %v730, 0
        %954 = vmatprep.subr.bf16.mxu0 0
        %955 = vmatpush1.bf16.msra.mxu0 %v751
        %956 = vmatprep.subr.bf16.mxu0 0
        %957 = vmatpush1.bf16.msra.mxu0 0
        %958 = vmatprep.subr.bf16.mxu0 0
        %959 = vmatpush1.bf16.msra.mxu0 0
        %960 = vmatprep.subr.bf16.mxu0 0
        %961 = vmatpush1.bf16.msra.mxu0 0
        %962 = vmatprep.subr.bf16.mxu0 0
        %963 = vmatpush1.bf16.msra.mxu0 0
        %964 = vmatprep.subr.bf16.mxu0 0
        %965 = vmatpush1.bf16.msra.mxu0 0
        %966 = vmatprep.subr.bf16.mxu0 0
        %967 = vmatpush1.bf16.msra.mxu0 0
        %968 = vmatprep.subr.bf16.mxu0 0
        %969 = vmatpush1.bf16.msra.mxu0 0
        %970 = vmatprep.subr.bf16.mxu0 0
        %971 = vmatpush1.bf16.msra.mxu0 0
        %972 = vmatprep.subr.bf16.mxu0 0
        %973 = vmatpush1.bf16.msra.mxu0 0
        %974 = vmatprep.subr.bf16.mxu0 0
        %975 = vmatpush1.bf16.msra.mxu0 0
        %976 = vmatprep.subr.bf16.mxu0 0
        %977 = vmatpush1.bf16.msra.mxu0 0
        %978 = vmatprep.subr.bf16.mxu0 0
        %979 = vmatpush1.bf16.msra.mxu0 0
        %980 = vmatprep.subr.bf16.mxu0 0
        %981 = vmatpush1.bf16.msra.mxu0 0
        %982 = vmatprep.subr.bf16.mxu0 0
        %983 = vmatpush1.bf16.msra.mxu0 0
        %984 = vmatprep.subr.bf16.mxu0 0
        %985 = vmatpush1.bf16.msra.mxu0 0
        %986 = vmatprep.mubr.bf16.mxu0 0
        %987 = vmatmul.mubr.bf16.gmra.mrb[0].mxu0 %v952
        %v988 = vpop.f32.mrb[0].mxu0
        %v989 = vadd.f32 0.0, %v988
        %v990 = vpop.f32.mrb[0].mxu0
        %v991 = vpop.f32.mrb[0].mxu0
        %v992 = vpop.f32.mrb[0].mxu0
        %993 = vdwg.mxu0
        %v994 = vpack.c.bf16 %v989, %v989
        %s995 = scalar_lea.vmem %s1, 16
        %v996 = vld [vmem:[%s995] sm:$0xf]
        %v997 = vld [vmem:[%s995 + $0x4] sm:$0x3]
        %v1000 = vunpack.c.l.b16 %v996
        %v1001 = vunpack.c.l.b16 %v997
        %v1002 = vpack.c.b16 %v1001, %v1000
        %v1004 = vsel %vm852, %v994, 0
        %v1007 = vsel %vm856, %v1002, 0
        %1009 = vmatprep.subr.bf16.mxu0 0
        %1010 = vmatpush1.bf16.msra.mxu0 %v1007
        %1011 = vmatprep.subr.bf16.mxu0 0
        %1012 = vmatpush1.bf16.msra.mxu0 0
        %1013 = vmatprep.subr.bf16.mxu0 0
        %1014 = vmatpush1.bf16.msra.mxu0 0
        %1015 = vmatprep.subr.bf16.mxu0 0
        %1016 = vmatpush1.bf16.msra.mxu0 0
        %1017 = vmatprep.subr.bf16.mxu0 0
        %1018 = vmatpush1.bf16.msra.mxu0 0
        %1019 = vmatprep.subr.bf16.mxu0 0
        %1020 = vmatpush1.bf16.msra.mxu0 0
        %1021 = vmatprep.subr.bf16.mxu0 0
        %1022 = vmatpush1.bf16.msra.mxu0 0
        %1023 = vmatprep.subr.bf16.mxu0 0
        %1024 = vmatpush1.bf16.msra.mxu0 0
        %1025 = vmatprep.subr.bf16.mxu0 0
        %1026 = vmatpush1.bf16.msra.mxu0 0
        %1027 = vmatprep.subr.bf16.mxu0 0
        %1028 = vmatpush1.bf16.msra.mxu0 0
        %1029 = vmatprep.subr.bf16.mxu0 0
        %1030 = vmatpush1.bf16.msra.mxu0 0
        %1031 = vmatprep.subr.bf16.mxu0 0
        %1032 = vmatpush1.bf16.msra.mxu0 0
        %1033 = vmatprep.subr.bf16.mxu0 0
        %1034 = vmatpush1.bf16.msra.mxu0 0
        %1035 = vmatprep.subr.bf16.mxu0 0
        %1036 = vmatpush1.bf16.msra.mxu0 0
        %1037 = vmatprep.subr.bf16.mxu0 0
        %1038 = vmatpush1.bf16.msra.mxu0 0
        %1039 = vmatprep.subr.bf16.mxu0 0
        %1040 = vmatpush1.bf16.msra.mxu0 0
        %1041 = vmatprep.mubr.bf16.mxu0 0
        %1042 = vmatmul.mubr.bf16.gmra.mrb[0].mxu0 %v1004
        %v1043 = vpop.f32.mrb[0].mxu0
        %v1044 = vadd.f32 0.0, %v1043
        %v1045 = vpop.f32.mrb[0].mxu0
        %v1046 = vpop.f32.mrb[0].mxu0
        %v1047 = vpop.f32.mrb[0].mxu0
        %1048 = vdwg.mxu0
        %v1049 = vadd.f32 %v946, %v1044
        %v1050 = vld [vmem:[%s2] sm:$0x1]
        %v1052 = vlaneseq
        %v1053 = vshrl.u32 %v1052, 7
        %v1054 = vsub.s32 0, %v1053
        %v1055 = vrot.slane %v1050, %v1054
        %v1057 = vadd.f32 %v1049, %v1055
        %v1058 = vmax.f32 %v1057, 0.0
        %v1059 = vpack.c.bf16 %v1058, %v1058
        %v1062 = vunpack.c.l.b16 %v674
        %v1063 = vunpack.c.l.b16 %v675
        %v1064 = vpack.c.b16 %v1063, %v1062
        %1065 = vrot.lane.b32.xlu0 %v1064, 4
        %v1066 = vpop.permute.xlu0 %1065
        %v1069 = vunpack.c.l.b16 %v677
        %v1070 = vunpack.c.l.b16 %v678
        %v1071 = vpack.c.b16 %v1070, %v1069
        %1072 = vrot.lane.b32.xlu0 %v1071, 8
        %v1073 = vpop.permute.xlu0 %1072
        %v1076 = vsel %vm745, %v742, %v1066
        %v1078 = vsel %vm749, %v1076, %v1073
        %1080 = vmatprep.subr.bf16.mxu0 0
        %1081 = vmatpush1.bf16.msra.mxu0 %v1078
        %1082 = vmatprep.subr.bf16.mxu0 0
        %1083 = vmatpush1.bf16.msra.mxu0 0
        %1084 = vmatprep.subr.bf16.mxu0 0
        %1085 = vmatpush1.bf16.msra.mxu0 0
        %1086 = vmatprep.subr.bf16.mxu0 0
        %1087 = vmatpush1.bf16.msra.mxu0 0
        %1088 = vmatprep.subr.bf16.mxu0 0
        %1089 = vmatpush1.bf16.msra.mxu0 0
        %1090 = vmatprep.subr.bf16.mxu0 0
        %1091 = vmatpush1.bf16.msra.mxu0 0
        %1092 = vmatprep.subr.bf16.mxu0 0
        %1093 = vmatpush1.bf16.msra.mxu0 0
        %1094 = vmatprep.subr.bf16.mxu0 0
        %1095 = vmatpush1.bf16.msra.mxu0 0
        %1096 = vmatprep.subr.bf16.mxu0 0
        %1097 = vmatpush1.bf16.msra.mxu0 0
        %1098 = vmatprep.subr.bf16.mxu0 0
        %1099 = vmatpush1.bf16.msra.mxu0 0
        %1100 = vmatprep.subr.bf16.mxu0 0
        %1101 = vmatpush1.bf16.msra.mxu0 0
        %1102 = vmatprep.subr.bf16.mxu0 0
        %1103 = vmatpush1.bf16.msra.mxu0 0
        %1104 = vmatprep.subr.bf16.mxu0 0
        %1105 = vmatpush1.bf16.msra.mxu0 0
        %1106 = vmatprep.subr.bf16.mxu0 0
        %1107 = vmatpush1.bf16.msra.mxu0 0
        %1108 = vmatprep.subr.bf16.mxu0 0
        %1109 = vmatpush1.bf16.msra.mxu0 0
        %1110 = vmatprep.subr.bf16.mxu0 0
        %1111 = vmatpush1.bf16.msra.mxu0 0
        %1112 = vmatprep.mubr.bf16.mxu0 0
        %1113 = vmatmul.mubr.bf16.gmra.mrb[0].mxu0 %v755
        %v1114 = vpop.f32.mrb[0].mxu0
        %v1115 = vadd.f32 0.0, %v1114
        %v1116 = vpop.f32.mrb[0].mxu0
        %v1117 = vpop.f32.mrb[0].mxu0
        %v1118 = vpop.f32.mrb[0].mxu0
        %1119 = vdwg.mxu0
        %v1120 = vpack.c.bf16 %v1115, %v1115
        %1121 = vmatprep.subr.bf16.mxu0 0
        %1122 = vmatpush1.bf16.msra.mxu0 %v1078
        %1123 = vmatprep.subr.bf16.mxu0 0
        %1124 = vmatpush1.bf16.msra.mxu0 0
        %1125 = vmatprep.subr.bf16.mxu0 0
        %1126 = vmatpush1.bf16.msra.mxu0 0
        %1127 = vmatprep.subr.bf16.mxu0 0
        %1128 = vmatpush1.bf16.msra.mxu0 0
        %1129 = vmatprep.subr.bf16.mxu0 0
        %1130 = vmatpush1.bf16.msra.mxu0 0
        %1131 = vmatprep.subr.bf16.mxu0 0
        %1132 = vmatpush1.bf16.msra.mxu0 0
        %1133 = vmatprep.subr.bf16.mxu0 0
        %1134 = vmatpush1.bf16.msra.mxu0 0
        %1135 = vmatprep.subr.bf16.mxu0 0
        %1136 = vmatpush1.bf16.msra.mxu0 0
        %1137 = vmatprep.subr.bf16.mxu0 0
        %1138 = vmatpush1.bf16.msra.mxu0 0
        %1139 = vmatprep.subr.bf16.mxu0 0
        %1140 = vmatpush1.bf16.msra.mxu0 0
        %1141 = vmatprep.subr.bf16.mxu0 0
        %1142 = vmatpush1.bf16.msra.mxu0 0
        %1143 = vmatprep.subr.bf16.mxu0 0
        %1144 = vmatpush1.bf16.msra.mxu0 0
        %1145 = vmatprep.subr.bf16.mxu0 0
        %1146 = vmatpush1.bf16.msra.mxu0 0
        %1147 = vmatprep.subr.bf16.mxu0 0
        %1148 = vmatpush1.bf16.msra.mxu0 0
        %1149 = vmatprep.subr.bf16.mxu0 0
        %1150 = vmatpush1.bf16.msra.mxu0 0
        %1151 = vmatprep.subr.bf16.mxu0 0
        %1152 = vmatpush1.bf16.msra.mxu0 0
        %1153 = vmatprep.mubr.bf16.mxu0 0
        %1154 = vmatmul.mubr.bf16.gmra.mrb[0].mxu0 %v801
        %v1155 = vpop.f32.mrb[0].mxu0
        %v1156 = vadd.f32 0.0, %v1155
        %v1157 = vpop.f32.mrb[0].mxu0
        %v1158 = vpop.f32.mrb[0].mxu0
        %v1159 = vpop.f32.mrb[0].mxu0
        %1160 = vdwg.mxu0
        %v1161 = vpack.c.bf16 %v1156, %v1156
        %v1163 = vsel %vm852, %v1161, 0
        %1165 = vmatprep.subr.bf16.mxu0 0
        %1166 = vmatpush1.bf16.msra.mxu0 %v858
        %1167 = vmatprep.subr.bf16.mxu0 0
        %1168 = vmatpush1.bf16.msra.mxu0 0
        %1169 = vmatprep.subr.bf16.mxu0 0
        %1170 = vmatpush1.bf16.msra.mxu0 0
        %1171 = vmatprep.subr.bf16.mxu0 0
        %1172 = vmatpush1.bf16.msra.mxu0 0
        %1173 = vmatprep.subr.bf16.mxu0 0
        %1174 = vmatpush1.bf16.msra.mxu0 0
        %1175 = vmatprep.subr.bf16.mxu0 0
        %1176 = vmatpush1.bf16.msra.mxu0 0
        %1177 = vmatprep.subr.bf16.mxu0 0
        %1178 = vmatpush1.bf16.msra.mxu0 0
        %1179 = vmatprep.subr.bf16.mxu0 0
        %1180 = vmatpush1.bf16.msra.mxu0 0
        %1181 = vmatprep.subr.bf16.mxu0 0
        %1182 = vmatpush1.bf16.msra.mxu0 0
        %1183 = vmatprep.subr.bf16.mxu0 0
        %1184 = vmatpush1.bf16.msra.mxu0 0
        %1185 = vmatprep.subr.bf16.mxu0 0
        %1186 = vmatpush1.bf16.msra.mxu0 0
        %1187 = vmatprep.subr.bf16.mxu0 0
        %1188 = vmatpush1.bf16.msra.mxu0 0
        %1189 = vmatprep.subr.bf16.mxu0 0
        %1190 = vmatpush1.bf16.msra.mxu0 0
        %1191 = vmatprep.subr.bf16.mxu0 0
        %1192 = vmatpush1.bf16.msra.mxu0 0
        %1193 = vmatprep.subr.bf16.mxu0 0
        %1194 = vmatpush1.bf16.msra.mxu0 0
        %1195 = vmatprep.subr.bf16.mxu0 0
        %1196 = vmatpush1.bf16.msra.mxu0 0
        %1197 = vmatprep.mubr.bf16.mxu0 0
        %1198 = vmatmul.mubr.bf16.gmra.mrb[0].mxu0 %v1163
        %v1199 = vpop.f32.mrb[0].mxu0
        %v1200 = vadd.f32 0.0, %v1199
        %v1201 = vpop.f32.mrb[0].mxu0
        %v1202 = vpop.f32.mrb[0].mxu0
        %v1203 = vpop.f32.mrb[0].mxu0
        %1204 = vdwg.mxu0
        %v1206 = vsel %vm852, %v1120, 0
        %1208 = vmatprep.subr.bf16.mxu0 0
        %1209 = vmatpush1.bf16.msra.mxu0 %v909
        %1210 = vmatprep.subr.bf16.mxu0 0
        %1211 = vmatpush1.bf16.msra.mxu0 0
        %1212 = vmatprep.subr.bf16.mxu0 0
        %1213 = vmatpush1.bf16.msra.mxu0 0
        %1214 = vmatprep.subr.bf16.mxu0 0
        %1215 = vmatpush1.bf16.msra.mxu0 0
        %1216 = vmatprep.subr.bf16.mxu0 0
        %1217 = vmatpush1.bf16.msra.mxu0 0
        %1218 = vmatprep.subr.bf16.mxu0 0
        %1219 = vmatpush1.bf16.msra.mxu0 0
        %1220 = vmatprep.subr.bf16.mxu0 0
        %1221 = vmatpush1.bf16.msra.mxu0 0
        %1222 = vmatprep.subr.bf16.mxu0 0
        %1223 = vmatpush1.bf16.msra.mxu0 0
        %1224 = vmatprep.subr.bf16.mxu0 0
        %1225 = vmatpush1.bf16.msra.mxu0 0
        %1226 = vmatprep.subr.bf16.mxu0 0
        %1227 = vmatpush1.bf16.msra.mxu0 0
        %1228 = vmatprep.subr.bf16.mxu0 0
        %1229 = vmatpush1.bf16.msra.mxu0 0
        %1230 = vmatprep.subr.bf16.mxu0 0
        %1231 = vmatpush1.bf16.msra.mxu0 0
        %1232 = vmatprep.subr.bf16.mxu0 0
        %1233 = vmatpush1.bf16.msra.mxu0 0
        %1234 = vmatprep.subr.bf16.mxu0 0
        %1235 = vmatpush1.bf16.msra.mxu0 0
        %1236 = vmatprep.subr.bf16.mxu0 0
        %1237 = vmatpush1.bf16.msra.mxu0 0
        %1238 = vmatprep.subr.bf16.mxu0 0
        %1239 = vmatpush1.bf16.msra.mxu0 0
        %1240 = vmatprep.mubr.bf16.mxu0 0
        %1241 = vmatmul.mubr.bf16.gmra.mrb[0].mxu0 %v1206
        %v1242 = vpop.f32.mrb[0].mxu0
        %v1243 = vadd.f32 %v1200, %v1242
        %v1244 = vpop.f32.mrb[0].mxu0
        %v1245 = vpop.f32.mrb[0].mxu0
        %v1246 = vpop.f32.mrb[0].mxu0
        %1247 = vdwg.mxu0
        %1248 = vmatprep.subr.bf16.mxu0 0
        %1249 = vmatpush1.bf16.msra.mxu0 %v1078
        %1250 = vmatprep.subr.bf16.mxu0 0
        %1251 = vmatpush1.bf16.msra.mxu0 0
        %1252 = vmatprep.subr.bf16.mxu0 0
        %1253 = vmatpush1.bf16.msra.mxu0 0
        %1254 = vmatprep.subr.bf16.mxu0 0
        %1255 = vmatpush1.bf16.msra.mxu0 0
        %1256 = vmatprep.subr.bf16.mxu0 0
        %1257 = vmatpush1.bf16.msra.mxu0 0
        %1258 = vmatprep.subr.bf16.mxu0 0
        %1259 = vmatpush1.bf16.msra.mxu0 0
        %1260 = vmatprep.subr.bf16.mxu0 0
        %1261 = vmatpush1.bf16.msra.mxu0 0
        %1262 = vmatprep.subr.bf16.mxu0 0
        %1263 = vmatpush1.bf16.msra.mxu0 0
        %1264 = vmatprep.subr.bf16.mxu0 0
        %1265 = vmatpush1.bf16.msra.mxu0 0
        %1266 = vmatprep.subr.bf16.mxu0 0
        %1267 = vmatpush1.bf16.msra.mxu0 0
        %1268 = vmatprep.subr.bf16.mxu0 0
        %1269 = vmatpush1.bf16.msra.mxu0 0
        %1270 = vmatprep.subr.bf16.mxu0 0
        %1271 = vmatpush1.bf16.msra.mxu0 0
        %1272 = vmatprep.subr.bf16.mxu0 0
        %1273 = vmatpush1.bf16.msra.mxu0 0
        %1274 = vmatprep.subr.bf16.mxu0 0
        %1275 = vmatpush1.bf16.msra.mxu0 0
        %1276 = vmatprep.subr.bf16.mxu0 0
        %1277 = vmatpush1.bf16.msra.mxu0 0
        %1278 = vmatprep.subr.bf16.mxu0 0
        %1279 = vmatpush1.bf16.msra.mxu0 0
        %1280 = vmatprep.mubr.bf16.mxu0 0
        %1281 = vmatmul.mubr.bf16.gmra.mrb[0].mxu0 %v952
        %v1282 = vpop.f32.mrb[0].mxu0
        %v1283 = vadd.f32 0.0, %v1282
        %v1284 = vpop.f32.mrb[0].mxu0
        %v1285 = vpop.f32.mrb[0].mxu0
        %v1286 = vpop.f32.mrb[0].mxu0
        %1287 = vdwg.mxu0
        %v1288 = vpack.c.bf16 %v1283, %v1283
        %v1290 = vsel %vm852, %v1288, 0
        %1292 = vmatprep.subr.bf16.mxu0 0
        %1293 = vmatpush1.bf16.msra.mxu0 %v1007
        %1294 = vmatprep.subr.bf16.mxu0 0
        %1295 = vmatpush1.bf16.msra.mxu0 0
        %1296 = vmatprep.subr.bf16.mxu0 0
        %1297 = vmatpush1.bf16.msra.mxu0 0
        %1298 = vmatprep.subr.bf16.mxu0 0
        %1299 = vmatpush1.bf16.msra.mxu0 0
        %1300 = vmatprep.subr.bf16.mxu0 0
        %1301 = vmatpush1.bf16.msra.mxu0 0
        %1302 = vmatprep.subr.bf16.mxu0 0
        %1303 = vmatpush1.bf16.msra.mxu0 0
        %1304 = vmatprep.subr.bf16.mxu0 0
        %1305 = vmatpush1.bf16.msra.mxu0 0
        %1306 = vmatprep.subr.bf16.mxu0 0
        %1307 = vmatpush1.bf16.msra.mxu0 0
        %1308 = vmatprep.subr.bf16.mxu0 0
        %1309 = vmatpush1.bf16.msra.mxu0 0
        %1310 = vmatprep.subr.bf16.mxu0 0
        %1311 = vmatpush1.bf16.msra.mxu0 0
        %1312 = vmatprep.subr.bf16.mxu0 0
        %1313 = vmatpush1.bf16.msra.mxu0 0
        %1314 = vmatprep.subr.bf16.mxu0 0
        %1315 = vmatpush1.bf16.msra.mxu0 0
        %1316 = vmatprep.subr.bf16.mxu0 0
        %1317 = vmatpush1.bf16.msra.mxu0 0
        %1318 = vmatprep.subr.bf16.mxu0 0
        %1319 = vmatpush1.bf16.msra.mxu0 0
        %1320 = vmatprep.subr.bf16.mxu0 0
        %1321 = vmatpush1.bf16.msra.mxu0 0
        %1322 = vmatprep.subr.bf16.mxu0 0
        %1323 = vmatpush1.bf16.msra.mxu0 0
        %1324 = vmatprep.mubr.bf16.mxu0 0
        %1325 = vmatmul.mubr.bf16.gmra.mrb[0].mxu0 %v1290
        %v1326 = vpop.f32.mrb[0].mxu0
        %v1327 = vadd.f32 0.0, %v1326
        %v1328 = vpop.f32.mrb[0].mxu0
        %v1329 = vpop.f32.mrb[0].mxu0
        %v1330 = vpop.f32.mrb[0].mxu0
        %1331 = vdwg.mxu0
        %v1332 = vadd.f32 %v1243, %v1327
        %v1333 = vadd.f32 %v1332, %v1055
        %v1334 = vmax.f32 %v1333, 0.0
        %v1335 = vpack.c.bf16 %v1334, %v1334
        %v1338 = vunpack.c.l.b16 %v680
        %v1339 = vunpack.c.l.b16 %v681
        %v1340 = vpack.c.b16 %v1339, %v1338
        %1341 = vrot.lane.b32.xlu0 %v1340, 4
        %v1342 = vpop.permute.xlu0 %1341
        %v1345 = vunpack.c.l.b16 %v683
        %v1346 = vunpack.c.l.b16 %v684
        %v1347 = vpack.c.b16 %v1346, %v1345
        %1348 = vrot.lane.b32.xlu0 %v1347, 8
        %v1349 = vpop.permute.xlu0 %1348
        %v1352 = vsel %vm745, %v1071, %v1342
        %v1354 = vsel %vm749, %v1352, %v1349
        %1356 = vmatprep.subr.bf16.mxu0 0
        %1357 = vmatpush1.bf16.msra.mxu0 %v1354
        %1358 = vmatprep.subr.bf16.mxu0 0
        %1359 = vmatpush1.bf16.msra.mxu0 0
        %1360 = vmatprep.subr.bf16.mxu0 0
        %1361 = vmatpush1.bf16.msra.mxu0 0
        %1362 = vmatprep.subr.bf16.mxu0 0
        %1363 = vmatpush1.bf16.msra.mxu0 0
        %1364 = vmatprep.subr.bf16.mxu0 0
        %1365 = vmatpush1.bf16.msra.mxu0 0
        %1366 = vmatprep.subr.bf16.mxu0 0
        %1367 = vmatpush1.bf16.msra.mxu0 0
        %1368 = vmatprep.subr.bf16.mxu0 0
        %1369 = vmatpush1.bf16.msra.mxu0 0
        %1370 = vmatprep.subr.bf16.mxu0 0
        %1371 = vmatpush1.bf16.msra.mxu0 0
        %1372 = vmatprep.subr.bf16.mxu0 0
        %1373 = vmatpush1.bf16.msra.mxu0 0
        %1374 = vmatprep.subr.bf16.mxu0 0
        %1375 = vmatpush1.bf16.msra.mxu0 0
        %1376 = vmatprep.subr.bf16.mxu0 0
        %1377 = vmatpush1.bf16.msra.mxu0 0
        %1378 = vmatprep.subr.bf16.mxu0 0
        %1379 = vmatpush1.bf16.msra.mxu0 0
        %1380 = vmatprep.subr.bf16.mxu0 0
        %1381 = vmatpush1.bf16.msra.mxu0 0
        %1382 = vmatprep.subr.bf16.mxu0 0
        %1383 = vmatpush1.bf16.msra.mxu0 0
        %1384 = vmatprep.subr.bf16.mxu0 0
        %1385 = vmatpush1.bf16.msra.mxu0 0
        %1386 = vmatprep.subr.bf16.mxu0 0
        %1387 = vmatpush1.bf16.msra.mxu0 0
        %1388 = vmatprep.mubr.bf16.mxu0 0
        %1389 = vmatmul.mubr.bf16.gmra.mrb[0].mxu0 %v755
        %v1390 = vpop.f32.mrb[0].mxu0
        %v1391 = vadd.f32 0.0, %v1390
        %v1392 = vpop.f32.mrb[0].mxu0
        %v1393 = vpop.f32.mrb[0].mxu0
        %v1394 = vpop.f32.mrb[0].mxu0
        %1395 = vdwg.mxu0
        %v1396 = vpack.c.bf16 %v1391, %v1391
        %1397 = vmatprep.subr.bf16.mxu0 0
        %1398 = vmatpush1.bf16.msra.mxu0 %v1354
        %1399 = vmatprep.subr.bf16.mxu0 0
        %1400 = vmatpush1.bf16.msra.mxu0 0
        %1401 = vmatprep.subr.bf16.mxu0 0
        %1402 = vmatpush1.bf16.msra.mxu0 0
        %1403 = vmatprep.subr.bf16.mxu0 0
        %1404 = vmatpush1.bf16.msra.mxu0 0
        %1405 = vmatprep.subr.bf16.mxu0 0
        %1406 = vmatpush1.bf16.msra.mxu0 0
        %1407 = vmatprep.subr.bf16.mxu0 0
        %1408 = vmatpush1.bf16.msra.mxu0 0
        %1409 = vmatprep.subr.bf16.mxu0 0
        %1410 = vmatpush1.bf16.msra.mxu0 0
        %1411 = vmatprep.subr.bf16.mxu0 0
        %1412 = vmatpush1.bf16.msra.mxu0 0
        %1413 = vmatprep.subr.bf16.mxu0 0
        %1414 = vmatpush1.bf16.msra.mxu0 0
        %1415 = vmatprep.subr.bf16.mxu0 0
        %1416 = vmatpush1.bf16.msra.mxu0 0
        %1417 = vmatprep.subr.bf16.mxu0 0
        %1418 = vmatpush1.bf16.msra.mxu0 0
        %1419 = vmatprep.subr.bf16.mxu0 0
        %1420 = vmatpush1.bf16.msra.mxu0 0
        %1421 = vmatprep.subr.bf16.mxu0 0
        %1422 = vmatpush1.bf16.msra.mxu0 0
        %1423 = vmatprep.subr.bf16.mxu0 0
        %1424 = vmatpush1.bf16.msra.mxu0 0
        %1425 = vmatprep.subr.bf16.mxu0 0
        %1426 = vmatpush1.bf16.msra.mxu0 0
        %1427 = vmatprep.subr.bf16.mxu0 0
        %1428 = vmatpush1.bf16.msra.mxu0 0
        %1429 = vmatprep.mubr.bf16.mxu0 0
        %1430 = vmatmul.mubr.bf16.gmra.mrb[0].mxu0 %v801
        %v1431 = vpop.f32.mrb[0].mxu0
        %v1432 = vadd.f32 0.0, %v1431
        %v1433 = vpop.f32.mrb[0].mxu0
        %v1434 = vpop.f32.mrb[0].mxu0
        %v1435 = vpop.f32.mrb[0].mxu0
        %1436 = vdwg.mxu0
        %v1437 = vpack.c.bf16 %v1432, %v1432
        %v1439 = vsel %vm852, %v1437, 0
        %1441 = vmatprep.subr.bf16.mxu0 0
        %1442 = vmatpush1.bf16.msra.mxu0 %v858
        %1443 = vmatprep.subr.bf16.mxu0 0
        %1444 = vmatpush1.bf16.msra.mxu0 0
        %1445 = vmatprep.subr.bf16.mxu0 0
        %1446 = vmatpush1.bf16.msra.mxu0 0
        %1447 = vmatprep.subr.bf16.mxu0 0
        %1448 = vmatpush1.bf16.msra.mxu0 0
        %1449 = vmatprep.subr.bf16.mxu0 0
        %1450 = vmatpush1.bf16.msra.mxu0 0
        %1451 = vmatprep.subr.bf16.mxu0 0
        %1452 = vmatpush1.bf16.msra.mxu0 0
        %1453 = vmatprep.subr.bf16.mxu0 0
        %1454 = vmatpush1.bf16.msra.mxu0 0
        %1455 = vmatprep.subr.bf16.mxu0 0
        %1456 = vmatpush1.bf16.msra.mxu0 0
        %1457 = vmatprep.subr.bf16.mxu0 0
        %1458 = vmatpush1.bf16.msra.mxu0 0
        %1459 = vmatprep.subr.bf16.mxu0 0
        %1460 = vmatpush1.bf16.msra.mxu0 0
        %1461 = vmatprep.subr.bf16.mxu0 0
        %1462 = vmatpush1.bf16.msra.mxu0 0
        %1463 = vmatprep.subr.bf16.mxu0 0
        %1464 = vmatpush1.bf16.msra.mxu0 0
        %1465 = vmatprep.subr.bf16.mxu0 0
        %1466 = vmatpush1.bf16.msra.mxu0 0
        %1467 = vmatprep.subr.bf16.mxu0 0
        %1468 = vmatpush1.bf16.msra.mxu0 0
        %1469 = vmatprep.subr.bf16.mxu0 0
        %1470 = vmatpush1.bf16.msra.mxu0 0
        %1471 = vmatprep.subr.bf16.mxu0 0
        %1472 = vmatpush1.bf16.msra.mxu0 0
        %1473 = vmatprep.mubr.bf16.mxu0 0
        %1474 = vmatmul.mubr.bf16.gmra.mrb[0].mxu0 %v1439
        %v1475 = vpop.f32.mrb[0].mxu0
        %v1476 = vadd.f32 0.0, %v1475
        %v1477 = vpop.f32.mrb[0].mxu0
        %v1478 = vpop.f32.mrb[0].mxu0
        %v1479 = vpop.f32.mrb[0].mxu0
        %1480 = vdwg.mxu0
        %v1482 = vsel %vm852, %v1396, 0
        %1484 = vmatprep.subr.bf16.mxu0 0
        %1485 = vmatpush1.bf16.msra.mxu0 %v909
        %1486 = vmatprep.subr.bf16.mxu0 0
        %1487 = vmatpush1.bf16.msra.mxu0 0
        %1488 = vmatprep.subr.bf16.mxu0 0
        %1489 = vmatpush1.bf16.msra.mxu0 0
        %1490 = vmatprep.subr.bf16.mxu0 0
        %1491 = vmatpush1.bf16.msra.mxu0 0
        %1492 = vmatprep.subr.bf16.mxu0 0
        %1493 = vmatpush1.bf16.msra.mxu0 0
        %1494 = vmatprep.subr.bf16.mxu0 0
        %1495 = vmatpush1.bf16.msra.mxu0 0
        %1496 = vmatprep.subr.bf16.mxu0 0
        %1497 = vmatpush1.bf16.msra.mxu0 0
        %1498 = vmatprep.subr.bf16.mxu0 0
        %1499 = vmatpush1.bf16.msra.mxu0 0
        %1500 = vmatprep.subr.bf16.mxu0 0
        %1501 = vmatpush1.bf16.msra.mxu0 0
        %1502 = vmatprep.subr.bf16.mxu0 0
        %1503 = vmatpush1.bf16.msra.mxu0 0
        %1504 = vmatprep.subr.bf16.mxu0 0
        %1505 = vmatpush1.bf16.msra.mxu0 0
        %1506 = vmatprep.subr.bf16.mxu0 0
        %1507 = vmatpush1.bf16.msra.mxu0 0
        %1508 = vmatprep.subr.bf16.mxu0 0
        %1509 = vmatpush1.bf16.msra.mxu0 0
        %1510 = vmatprep.subr.bf16.mxu0 0
        %1511 = vmatpush1.bf16.msra.mxu0 0
        %1512 = vmatprep.subr.bf16.mxu0 0
        %1513 = vmatpush1.bf16.msra.mxu0 0
        %1514 = vmatprep.subr.bf16.mxu0 0
        %1515 = vmatpush1.bf16.msra.mxu0 0
        %1516 = vmatprep.mubr.bf16.mxu0 0
        %1517 = vmatmul.mubr.bf16.gmra.mrb[0].mxu0 %v1482
        %v1518 = vpop.f32.mrb[0].mxu0
        %v1519 = vadd.f32 %v1476, %v1518
        %v1520 = vpop.f32.mrb[0].mxu0
        %v1521 = vpop.f32.mrb[0].mxu0
        %v1522 = vpop.f32.mrb[0].mxu0
        %1523 = vdwg.mxu0
        %1524 = vmatprep.subr.bf16.mxu0 0
        %1525 = vmatpush1.bf16.msra.mxu0 %v1354
        %1526 = vmatprep.subr.bf16.mxu0 0
        %1527 = vmatpush1.bf16.msra.mxu0 0
        %1528 = vmatprep.subr.bf16.mxu0 0
        %1529 = vmatpush1.bf16.msra.mxu0 0
        %1530 = vmatprep.subr.bf16.mxu0 0
        %1531 = vmatpush1.bf16.msra.mxu0 0
        %1532 = vmatprep.subr.bf16.mxu0 0
        %1533 = vmatpush1.bf16.msra.mxu0 0
        %1534 = vmatprep.subr.bf16.mxu0 0
        %1535 = vmatpush1.bf16.msra.mxu0 0
        %1536 = vmatprep.subr.bf16.mxu0 0
        %1537 = vmatpush1.bf16.msra.mxu0 0
        %1538 = vmatprep.subr.bf16.mxu0 0
        %1539 = vmatpush1.bf16.msra.mxu0 0
        %1540 = vmatprep.subr.bf16.mxu0 0
        %1541 = vmatpush1.bf16.msra.mxu0 0
        %1542 = vmatprep.subr.bf16.mxu0 0
        %1543 = vmatpush1.bf16.msra.mxu0 0
        %1544 = vmatprep.subr.bf16.mxu0 0
        %1545 = vmatpush1.bf16.msra.mxu0 0
        %1546 = vmatprep.subr.bf16.mxu0 0
        %1547 = vmatpush1.bf16.msra.mxu0 0
        %1548 = vmatprep.subr.bf16.mxu0 0
        %1549 = vmatpush1.bf16.msra.mxu0 0
        %1550 = vmatprep.subr.bf16.mxu0 0
        %1551 = vmatpush1.bf16.msra.mxu0 0
        %1552 = vmatprep.subr.bf16.mxu0 0
        %1553 = vmatpush1.bf16.msra.mxu0 0
        %1554 = vmatprep.subr.bf16.mxu0 0
        %1555 = vmatpush1.bf16.msra.mxu0 0
        %1556 = vmatprep.mubr.bf16.mxu0 0
        %1557 = vmatmul.mubr.bf16.gmra.mrb[0].mxu0 %v952
        %v1558 = vpop.f32.mrb[0].mxu0
        %v1559 = vadd.f32 0.0, %v1558
        %v1560 = vpop.f32.mrb[0].mxu0
        %v1561 = vpop.f32.mrb[0].mxu0
        %v1562 = vpop.f32.mrb[0].mxu0
        %1563 = vdwg.mxu0
        %v1564 = vpack.c.bf16 %v1559, %v1559
        %v1566 = vsel %vm852, %v1564, 0
        %1568 = vmatprep.subr.bf16.mxu0 0
        %1569 = vmatpush1.bf16.msra.mxu0 %v1007
        %1570 = vmatprep.subr.bf16.mxu0 0
        %1571 = vmatpush1.bf16.msra.mxu0 0
        %1572 = vmatprep.subr.bf16.mxu0 0
        %1573 = vmatpush1.bf16.msra.mxu0 0
        %1574 = vmatprep.subr.bf16.mxu0 0
        %1575 = vmatpush1.bf16.msra.mxu0 0
        %1576 = vmatprep.subr.bf16.mxu0 0
        %1577 = vmatpush1.bf16.msra.mxu0 0
        %1578 = vmatprep.subr.bf16.mxu0 0
        %1579 = vmatpush1.bf16.msra.mxu0 0
        %1580 = vmatprep.subr.bf16.mxu0 0
        %1581 = vmatpush1.bf16.msra.mxu0 0
        %1582 = vmatprep.subr.bf16.mxu0 0
        %1583 = vmatpush1.bf16.msra.mxu0 0
        %1584 = vmatprep.subr.bf16.mxu0 0
        %1585 = vmatpush1.bf16.msra.mxu0 0
        %1586 = vmatprep.subr.bf16.mxu0 0
        %1587 = vmatpush1.bf16.msra.mxu0 0
        %1588 = vmatprep.subr.bf16.mxu0 0
        %1589 = vmatpush1.bf16.msra.mxu0 0
        %1590 = vmatprep.subr.bf16.mxu0 0
        %1591 = vmatpush1.bf16.msra.mxu0 0
        %1592 = vmatprep.subr.bf16.mxu0 0
        %1593 = vmatpush1.bf16.msra.mxu0 0
        %1594 = vmatprep.subr.bf16.mxu0 0
        %1595 = vmatpush1.bf16.msra.mxu0 0
        %1596 = vmatprep.subr.bf16.mxu0 0
        %1597 = vmatpush1.bf16.msra.mxu0 0
        %1598 = vmatprep.subr.bf16.mxu0 0
        %1599 = vmatpush1.bf16.msra.mxu0 0
        %1600 = vmatprep.mubr.bf16.mxu0 0
        %1601 = vmatmul.mubr.bf16.gmra.mrb[0].mxu0 %v1566
        %v1602 = vpop.f32.mrb[0].mxu0
        %v1603 = vadd.f32 0.0, %v1602
        %v1604 = vpop.f32.mrb[0].mxu0
        %v1605 = vpop.f32.mrb[0].mxu0
        %v1606 = vpop.f32.mrb[0].mxu0
        %1607 = vdwg.mxu0
        %v1608 = vadd.f32 %v1519, %v1603
        %v1609 = vadd.f32 %v1608, %v1055
        %v1610 = vmax.f32 %v1609, 0.0
        %v1611 = vpack.c.bf16 %v1610, %v1610
        %v1614 = vunpack.c.l.b16 %v686
        %v1615 = vunpack.c.l.b16 %v687
        %v1616 = vpack.c.b16 %v1615, %v1614
        %1617 = vrot.lane.b32.xlu0 %v1616, 4
        %v1618 = vpop.permute.xlu0 %1617
        %v1621 = vunpack.c.l.b16 %v689
        %v1622 = vunpack.c.l.b16 %v690
        %v1623 = vpack.c.b16 %v1622, %v1621
        %1624 = vrot.lane.b32.xlu0 %v1623, 8
        %v1625 = vpop.permute.xlu0 %1624
        %v1628 = vsel %vm745, %v1347, %v1618
        %v1630 = vsel %vm749, %v1628, %v1625
        %1632 = vmatprep.subr.bf16.mxu0 0
        %1633 = vmatpush1.bf16.msra.mxu0 %v1630
        %1634 = vmatprep.subr.bf16.mxu0 0
        %1635 = vmatpush1.bf16.msra.mxu0 0
        %1636 = vmatprep.subr.bf16.mxu0 0
        %1637 = vmatpush1.bf16.msra.mxu0 0
        %1638 = vmatprep.subr.bf16.mxu0 0
        %1639 = vmatpush1.bf16.msra.mxu0 0
        %1640 = vmatprep.subr.bf16.mxu0 0
        %1641 = vmatpush1.bf16.msra.mxu0 0
        %1642 = vmatprep.subr.bf16.mxu0 0
        %1643 = vmatpush1.bf16.msra.mxu0 0
        %1644 = vmatprep.subr.bf16.mxu0 0
        %1645 = vmatpush1.bf16.msra.mxu0 0
        %1646 = vmatprep.subr.bf16.mxu0 0
        %1647 = vmatpush1.bf16.msra.mxu0 0
        %1648 = vmatprep.subr.bf16.mxu0 0
        %1649 = vmatpush1.bf16.msra.mxu0 0
        %1650 = vmatprep.subr.bf16.mxu0 0
        %1651 = vmatpush1.bf16.msra.mxu0 0
        %1652 = vmatprep.subr.bf16.mxu0 0
        %1653 = vmatpush1.bf16.msra.mxu0 0
        %1654 = vmatprep.subr.bf16.mxu0 0
        %1655 = vmatpush1.bf16.msra.mxu0 0
        %1656 = vmatprep.subr.bf16.mxu0 0
        %1657 = vmatpush1.bf16.msra.mxu0 0
        %1658 = vmatprep.subr.bf16.mxu0 0
        %1659 = vmatpush1.bf16.msra.mxu0 0
        %1660 = vmatprep.subr.bf16.mxu0 0
        %1661 = vmatpush1.bf16.msra.mxu0 0
        %1662 = vmatprep.subr.bf16.mxu0 0
        %1663 = vmatpush1.bf16.msra.mxu0 0
        %1664 = vmatprep.mubr.bf16.mxu0 0
        %1665 = vmatmul.mubr.bf16.gmra.mrb[0].mxu0 %v755
        %v1666 = vpop.f32.mrb[0].mxu0
        %v1667 = vadd.f32 0.0, %v1666
        %v1668 = vpop.f32.mrb[0].mxu0
        %v1669 = vpop.f32.mrb[0].mxu0
        %v1670 = vpop.f32.mrb[0].mxu0
        %1671 = vdwg.mxu0
        %v1672 = vpack.c.bf16 %v1667, %v1667
        %1673 = vmatprep.subr.bf16.mxu0 0
        %1674 = vmatpush1.bf16.msra.mxu0 %v1630
        %1675 = vmatprep.subr.bf16.mxu0 0
        %1676 = vmatpush1.bf16.msra.mxu0 0
        %1677 = vmatprep.subr.bf16.mxu0 0
        %1678 = vmatpush1.bf16.msra.mxu0 0
        %1679 = vmatprep.subr.bf16.mxu0 0
        %1680 = vmatpush1.bf16.msra.mxu0 0
        %1681 = vmatprep.subr.bf16.mxu0 0
        %1682 = vmatpush1.bf16.msra.mxu0 0
        %1683 = vmatprep.subr.bf16.mxu0 0
        %1684 = vmatpush1.bf16.msra.mxu0 0
        %1685 = vmatprep.subr.bf16.mxu0 0
        %1686 = vmatpush1.bf16.msra.mxu0 0
        %1687 = vmatprep.subr.bf16.mxu0 0
        %1688 = vmatpush1.bf16.msra.mxu0 0
        %1689 = vmatprep.subr.bf16.mxu0 0
        %1690 = vmatpush1.bf16.msra.mxu0 0
        %1691 = vmatprep.subr.bf16.mxu0 0
        %1692 = vmatpush1.bf16.msra.mxu0 0
        %1693 = vmatprep.subr.bf16.mxu0 0
        %1694 = vmatpush1.bf16.msra.mxu0 0
        %1695 = vmatprep.subr.bf16.mxu0 0
        %1696 = vmatpush1.bf16.msra.mxu0 0
        %1697 = vmatprep.subr.bf16.mxu0 0
        %1698 = vmatpush1.bf16.msra.mxu0 0
        %1699 = vmatprep.subr.bf16.mxu0 0
        %1700 = vmatpush1.bf16.msra.mxu0 0
        %1701 = vmatprep.subr.bf16.mxu0 0
        %1702 = vmatpush1.bf16.msra.mxu0 0
        %1703 = vmatprep.subr.bf16.mxu0 0
        %1704 = vmatpush1.bf16.msra.mxu0 0
        %1705 = vmatprep.mubr.bf16.mxu0 0
        %1706 = vmatmul.mubr.bf16.gmra.mrb[0].mxu0 %v801
        %v1707 = vpop.f32.mrb[0].mxu0
        %v1708 = vadd.f32 0.0, %v1707
        %v1709 = vpop.f32.mrb[0].mxu0
        %v1710 = vpop.f32.mrb[0].mxu0
        %v1711 = vpop.f32.mrb[0].mxu0
        %1712 = vdwg.mxu0
        %v1713 = vpack.c.bf16 %v1708, %v1708
        %v1715 = vsel %vm852, %v1713, 0
        %1717 = vmatprep.subr.bf16.mxu0 0
        %1718 = vmatpush1.bf16.msra.mxu0 %v858
        %1719 = vmatprep.subr.bf16.mxu0 0
        %1720 = vmatpush1.bf16.msra.mxu0 0
        %1721 = vmatprep.subr.bf16.mxu0 0
        %1722 = vmatpush1.bf16.msra.mxu0 0
        %1723 = vmatprep.subr.bf16.mxu0 0
        %1724 = vmatpush1.bf16.msra.mxu0 0
        %1725 = vmatprep.subr.bf16.mxu0 0
        %1726 = vmatpush1.bf16.msra.mxu0 0
        %1727 = vmatprep.subr.bf16.mxu0 0
        %1728 = vmatpush1.bf16.msra.mxu0 0
        %1729 = vmatprep.subr.bf16.mxu0 0
        %1730 = vmatpush1.bf16.msra.mxu0 0
        %1731 = vmatprep.subr.bf16.mxu0 0
        %1732 = vmatpush1.bf16.msra.mxu0 0
        %1733 = vmatprep.subr.bf16.mxu0 0
        %1734 = vmatpush1.bf16.msra.mxu0 0
        %1735 = vmatprep.subr.bf16.mxu0 0
        %1736 = vmatpush1.bf16.msra.mxu0 0
        %1737 = vmatprep.subr.bf16.mxu0 0
        %1738 = vmatpush1.bf16.msra.mxu0 0
        %1739 = vmatprep.subr.bf16.mxu0 0
        %1740 = vmatpush1.bf16.msra.mxu0 0
        %1741 = vmatprep.subr.bf16.mxu0 0
        %1742 = vmatpush1.bf16.msra.mxu0 0
        %1743 = vmatprep.subr.bf16.mxu0 0
        %1744 = vmatpush1.bf16.msra.mxu0 0
        %1745 = vmatprep.subr.bf16.mxu0 0
        %1746 = vmatpush1.bf16.msra.mxu0 0
        %1747 = vmatprep.subr.bf16.mxu0 0
        %1748 = vmatpush1.bf16.msra.mxu0 0
        %1749 = vmatprep.mubr.bf16.mxu0 0
        %1750 = vmatmul.mubr.bf16.gmra.mrb[0].mxu0 %v1715
        %v1751 = vpop.f32.mrb[0].mxu0
        %v1752 = vadd.f32 0.0, %v1751
        %v1753 = vpop.f32.mrb[0].mxu0
        %v1754 = vpop.f32.mrb[0].mxu0
        %v1755 = vpop.f32.mrb[0].mxu0
        %1756 = vdwg.mxu0
        %v1758 = vsel %vm852, %v1672, 0
        %1760 = vmatprep.subr.bf16.mxu0 0
        %1761 = vmatpush1.bf16.msra.mxu0 %v909
        %1762 = vmatprep.subr.bf16.mxu0 0
        %1763 = vmatpush1.bf16.msra.mxu0 0
        %1764 = vmatprep.subr.bf16.mxu0 0
        %1765 = vmatpush1.bf16.msra.mxu0 0
        %1766 = vmatprep.subr.bf16.mxu0 0
        %1767 = vmatpush1.bf16.msra.mxu0 0
        %1768 = vmatprep.subr.bf16.mxu0 0
        %1769 = vmatpush1.bf16.msra.mxu0 0
        %1770 = vmatprep.subr.bf16.mxu0 0
        %1771 = vmatpush1.bf16.msra.mxu0 0
        %1772 = vmatprep.subr.bf16.mxu0 0
        %1773 = vmatpush1.bf16.msra.mxu0 0
        %1774 = vmatprep.subr.bf16.mxu0 0
        %1775 = vmatpush1.bf16.msra.mxu0 0
        %1776 = vmatprep.subr.bf16.mxu0 0
        %1777 = vmatpush1.bf16.msra.mxu0 0
        %1778 = vmatprep.subr.bf16.mxu0 0
        %1779 = vmatpush1.bf16.msra.mxu0 0
        %1780 = vmatprep.subr.bf16.mxu0 0
        %1781 = vmatpush1.bf16.msra.mxu0 0
        %1782 = vmatprep.subr.bf16.mxu0 0
        %1783 = vmatpush1.bf16.msra.mxu0 0
        %1784 = vmatprep.subr.bf16.mxu0 0
        %1785 = vmatpush1.bf16.msra.mxu0 0
        %1786 = vmatprep.subr.bf16.mxu0 0
        %1787 = vmatpush1.bf16.msra.mxu0 0
        %1788 = vmatprep.subr.bf16.mxu0 0
        %1789 = vmatpush1.bf16.msra.mxu0 0
        %1790 = vmatprep.subr.bf16.mxu0 0
        %1791 = vmatpush1.bf16.msra.mxu0 0
        %1792 = vmatprep.mubr.bf16.mxu0 0
        %1793 = vmatmul.mubr.bf16.gmra.mrb[0].mxu0 %v1758
        %v1794 = vpop.f32.mrb[0].mxu0
        %v1795 = vadd.f32 %v1752, %v1794
        %v1796 = vpop.f32.mrb[0].mxu0
        %v1797 = vpop.f32.mrb[0].mxu0
        %v1798 = vpop.f32.mrb[0].mxu0
        %1799 = vdwg.mxu0
        %1800 = vmatprep.subr.bf16.mxu0 0
        %1801 = vmatpush1.bf16.msra.mxu0 %v1630
        %1802 = vmatprep.subr.bf16.mxu0 0
        %1803 = vmatpush1.bf16.msra.mxu0 0
        %1804 = vmatprep.subr.bf16.mxu0 0
        %1805 = vmatpush1.bf16.msra.mxu0 0
        %1806 = vmatprep.subr.bf16.mxu0 0
        %1807 = vmatpush1.bf16.msra.mxu0 0
        %1808 = vmatprep.subr.bf16.mxu0 0
        %1809 = vmatpush1.bf16.msra.mxu0 0
        %1810 = vmatprep.subr.bf16.mxu0 0
        %1811 = vmatpush1.bf16.msra.mxu0 0
        %1812 = vmatprep.subr.bf16.mxu0 0
        %1813 = vmatpush1.bf16.msra.mxu0 0
        %1814 = vmatprep.subr.bf16.mxu0 0
        %1815 = vmatpush1.bf16.msra.mxu0 0
        %1816 = vmatprep.subr.bf16.mxu0 0
        %1817 = vmatpush1.bf16.msra.mxu0 0
        %1818 = vmatprep.subr.bf16.mxu0 0
        %1819 = vmatpush1.bf16.msra.mxu0 0
        %1820 = vmatprep.subr.bf16.mxu0 0
        %1821 = vmatpush1.bf16.msra.mxu0 0
        %1822 = vmatprep.subr.bf16.mxu0 0
        %1823 = vmatpush1.bf16.msra.mxu0 0
        %1824 = vmatprep.subr.bf16.mxu0 0
        %1825 = vmatpush1.bf16.msra.mxu0 0
        %1826 = vmatprep.subr.bf16.mxu0 0
        %1827 = vmatpush1.bf16.msra.mxu0 0
        %1828 = vmatprep.subr.bf16.mxu0 0
        %1829 = vmatpush1.bf16.msra.mxu0 0
        %1830 = vmatprep.subr.bf16.mxu0 0
        %1831 = vmatpush1.bf16.msra.mxu0 0
        %1832 = vmatprep.mubr.bf16.mxu0 0
        %1833 = vmatmul.mubr.bf16.gmra.mrb[0].mxu0 %v952
        %v1834 = vpop.f32.mrb[0].mxu0
        %v1835 = vadd.f32 0.0, %v1834
        %v1836 = vpop.f32.mrb[0].mxu0
        %v1837 = vpop.f32.mrb[0].mxu0
        %v1838 = vpop.f32.mrb[0].mxu0
        %1839 = vdwg.mxu0
        %v1840 = vpack.c.bf16 %v1835, %v1835
        %v1842 = vsel %vm852, %v1840, 0
        %1844 = vmatprep.subr.bf16.mxu0 0
        %1845 = vmatpush1.bf16.msra.mxu0 %v1007
        %1846 = vmatprep.subr.bf16.mxu0 0
        %1847 = vmatpush1.bf16.msra.mxu0 0
        %1848 = vmatprep.subr.bf16.mxu0 0
        %1849 = vmatpush1.bf16.msra.mxu0 0
        %1850 = vmatprep.subr.bf16.mxu0 0
        %1851 = vmatpush1.bf16.msra.mxu0 0
        %1852 = vmatprep.subr.bf16.mxu0 0
        %1853 = vmatpush1.bf16.msra.mxu0 0
        %1854 = vmatprep.subr.bf16.mxu0 0
        %1855 = vmatpush1.bf16.msra.mxu0 0
        %1856 = vmatprep.subr.bf16.mxu0 0
        %1857 = vmatpush1.bf16.msra.mxu0 0
        %1858 = vmatprep.subr.bf16.mxu0 0
        %1859 = vmatpush1.bf16.msra.mxu0 0
        %1860 = vmatprep.subr.bf16.mxu0 0
        %1861 = vmatpush1.bf16.msra.mxu0 0
        %1862 = vmatprep.subr.bf16.mxu0 0
        %1863 = vmatpush1.bf16.msra.mxu0 0
        %1864 = vmatprep.subr.bf16.mxu0 0
        %1865 = vmatpush1.bf16.msra.mxu0 0
        %1866 = vmatprep.subr.bf16.mxu0 0
        %1867 = vmatpush1.bf16.msra.mxu0 0
        %1868 = vmatprep.subr.bf16.mxu0 0
        %1869 = vmatpush1.bf16.msra.mxu0 0
        %1870 = vmatprep.subr.bf16.mxu0 0
        %1871 = vmatpush1.bf16.msra.mxu0 0
        %1872 = vmatprep.subr.bf16.mxu0 0
        %1873 = vmatpush1.bf16.msra.mxu0 0
        %1874 = vmatprep.subr.bf16.mxu0 0
        %1875 = vmatpush1.bf16.msra.mxu0 0
        %1876 = vmatprep.mubr.bf16.mxu0 0
        %1877 = vmatmul.mubr.bf16.gmra.mrb[0].mxu0 %v1842
        %v1878 = vpop.f32.mrb[0].mxu0
        %v1879 = vadd.f32 0.0, %v1878
        %v1880 = vpop.f32.mrb[0].mxu0
        %v1881 = vpop.f32.mrb[0].mxu0
        %v1882 = vpop.f32.mrb[0].mxu0
        %1883 = vdwg.mxu0
        %v1884 = vadd.f32 %v1795, %v1879
        %v1885 = vadd.f32 %v1884, %v1055
        %v1886 = vmax.f32 %v1885, 0.0
        %v1887 = vpack.c.bf16 %v1886, %v1886
        %v1890 = vunpack.c.l.b16 %v692
        %v1891 = vunpack.c.l.b16 %v693
        %v1892 = vpack.c.b16 %v1891, %v1890
        %1893 = vrot.lane.b32.xlu0 %v1892, 4
        %v1894 = vpop.permute.xlu0 %1893
        %v1897 = vunpack.c.l.b16 %v695
        %v1898 = vunpack.c.l.b16 %v696
        %v1899 = vpack.c.b16 %v1898, %v1897
        %1900 = vrot.lane.b32.xlu0 %v1899, 8
        %v1901 = vpop.permute.xlu0 %1900
        %v1904 = vsel %vm745, %v1623, %v1894
        %v1906 = vsel %vm749, %v1904, %v1901
        %1908 = vmatprep.subr.bf16.mxu0 0
        %1909 = vmatpush1.bf16.msra.mxu0 %v1906
        %1910 = vmatprep.subr.bf16.mxu0 0
        %1911 = vmatpush1.bf16.msra.mxu0 0
        %1912 = vmatprep.subr.bf16.mxu0 0
        %1913 = vmatpush1.bf16.msra.mxu0 0
        %1914 = vmatprep.subr.bf16.mxu0 0
        %1915 = vmatpush1.bf16.msra.mxu0 0
        %1916 = vmatprep.subr.bf16.mxu0 0
        %1917 = vmatpush1.bf16.msra.mxu0 0
        %1918 = vmatprep.subr.bf16.mxu0 0
        %1919 = vmatpush1.bf16.msra.mxu0 0
        %1920 = vmatprep.subr.bf16.mxu0 0
        %1921 = vmatpush1.bf16.msra.mxu0 0
        %1922 = vmatprep.subr.bf16.mxu0 0
        %1923 = vmatpush1.bf16.msra.mxu0 0
        %1924 = vmatprep.subr.bf16.mxu0 0
        %1925 = vmatpush1.bf16.msra.mxu0 0
        %1926 = vmatprep.subr.bf16.mxu0 0
        %1927 = vmatpush1.bf16.msra.mxu0 0
        %1928 = vmatprep.subr.bf16.mxu0 0
        %1929 = vmatpush1.bf16.msra.mxu0 0
        %1930 = vmatprep.subr.bf16.mxu0 0
        %1931 = vmatpush1.bf16.msra.mxu0 0
        %1932 = vmatprep.subr.bf16.mxu0 0
        %1933 = vmatpush1.bf16.msra.mxu0 0
        %1934 = vmatprep.subr.bf16.mxu0 0
        %1935 = vmatpush1.bf16.msra.mxu0 0
        %1936 = vmatprep.subr.bf16.mxu0 0
        %1937 = vmatpush1.bf16.msra.mxu0 0
        %1938 = vmatprep.subr.bf16.mxu0 0
        %1939 = vmatpush1.bf16.msra.mxu0 0
        %1940 = vmatprep.mubr.bf16.mxu0 0
        %1941 = vmatmul.mubr.bf16.gmra.mrb[0].mxu0 %v755
        %v1942 = vpop.f32.mrb[0].mxu0
        %v1943 = vadd.f32 0.0, %v1942
        %v1944 = vpop.f32.mrb[0].mxu0
        %v1945 = vpop.f32.mrb[0].mxu0
        %v1946 = vpop.f32.mrb[0].mxu0
        %1947 = vdwg.mxu0
        %v1948 = vpack.c.bf16 %v1943, %v1943
        %1949 = vmatprep.subr.bf16.mxu0 0
        %1950 = vmatpush1.bf16.msra.mxu0 %v1906
        %1951 = vmatprep.subr.bf16.mxu0 0
        %1952 = vmatpush1.bf16.msra.mxu0 0
        %1953 = vmatprep.subr.bf16.mxu0 0
        %1954 = vmatpush1.bf16.msra.mxu0 0
        %1955 = vmatprep.subr.bf16.mxu0 0
        %1956 = vmatpush1.bf16.msra.mxu0 0
        %1957 = vmatprep.subr.bf16.mxu0 0
        %1958 = vmatpush1.bf16.msra.mxu0 0
        %1959 = vmatprep.subr.bf16.mxu0 0
        %1960 = vmatpush1.bf16.msra.mxu0 0
        %1961 = vmatprep.subr.bf16.mxu0 0
        %1962 = vmatpush1.bf16.msra.mxu0 0
        %1963 = vmatprep.subr.bf16.mxu0 0
        %1964 = vmatpush1.bf16.msra.mxu0 0
        %1965 = vmatprep.subr.bf16.mxu0 0
        %1966 = vmatpush1.bf16.msra.mxu0 0
        %1967 = vmatprep.subr.bf16.mxu0 0
        %1968 = vmatpush1.bf16.msra.mxu0 0
        %1969 = vmatprep.subr.bf16.mxu0 0
        %1970 = vmatpush1.bf16.msra.mxu0 0
        %1971 = vmatprep.subr.bf16.mxu0 0
        %1972 = vmatpush1.bf16.msra.mxu0 0
        %1973 = vmatprep.subr.bf16.mxu0 0
        %1974 = vmatpush1.bf16.msra.mxu0 0
        %1975 = vmatprep.subr.bf16.mxu0 0
        %1976 = vmatpush1.bf16.msra.mxu0 0
        %1977 = vmatprep.subr.bf16.mxu0 0
        %1978 = vmatpush1.bf16.msra.mxu0 0
        %1979 = vmatprep.subr.bf16.mxu0 0
        %1980 = vmatpush1.bf16.msra.mxu0 0
        %1981 = vmatprep.mubr.bf16.mxu0 0
        %1982 = vmatmul.mubr.bf16.gmra.mrb[0].mxu0 %v801
        %v1983 = vpop.f32.mrb[0].mxu0
        %v1984 = vadd.f32 0.0, %v1983
        %v1985 = vpop.f32.mrb[0].mxu0
        %v1986 = vpop.f32.mrb[0].mxu0
        %v1987 = vpop.f32.mrb[0].mxu0
        %1988 = vdwg.mxu0
        %v1989 = vpack.c.bf16 %v1984, %v1984
        %v1991 = vsel %vm852, %v1989, 0
        %1993 = vmatprep.subr.bf16.mxu0 0
        %1994 = vmatpush1.bf16.msra.mxu0 %v858
        %1995 = vmatprep.subr.bf16.mxu0 0
        %1996 = vmatpush1.bf16.msra.mxu0 0
        %1997 = vmatprep.subr.bf16.mxu0 0
        %1998 = vmatpush1.bf16.msra.mxu0 0
        %1999 = vmatprep.subr.bf16.mxu0 0
        %2000 = vmatpush1.bf16.msra.mxu0 0
        %2001 = vmatprep.subr.bf16.mxu0 0
        %2002 = vmatpush1.bf16.msra.mxu0 0
        %2003 = vmatprep.subr.bf16.mxu0 0
        %2004 = vmatpush1.bf16.msra.mxu0 0
        %2005 = vmatprep.subr.bf16.mxu0 0
        %2006 = vmatpush1.bf16.msra.mxu0 0
        %2007 = vmatprep.subr.bf16.mxu0 0
        %2008 = vmatpush1.bf16.msra.mxu0 0
        %2009 = vmatprep.subr.bf16.mxu0 0
        %2010 = vmatpush1.bf16.msra.mxu0 0
        %2011 = vmatprep.subr.bf16.mxu0 0
        %2012 = vmatpush1.bf16.msra.mxu0 0
        %2013 = vmatprep.subr.bf16.mxu0 0
        %2014 = vmatpush1.bf16.msra.mxu0 0
        %2015 = vmatprep.subr.bf16.mxu0 0
        %2016 = vmatpush1.bf16.msra.mxu0 0
        %2017 = vmatprep.subr.bf16.mxu0 0
        %2018 = vmatpush1.bf16.msra.mxu0 0
        %2019 = vmatprep.subr.bf16.mxu0 0
        %2020 = vmatpush1.bf16.msra.mxu0 0
        %2021 = vmatprep.subr.bf16.mxu0 0
        %2022 = vmatpush1.bf16.msra.mxu0 0
        %2023 = vmatprep.subr.bf16.mxu0 0
        %2024 = vmatpush1.bf16.msra.mxu0 0
        %2025 = vmatprep.mubr.bf16.mxu0 0
        %2026 = vmatmul.mubr.bf16.gmra.mrb[0].mxu0 %v1991
        %v2027 = vpop.f32.mrb[0].mxu0
        %v2028 = vadd.f32 0.0, %v2027
        %v2029 = vpop.f32.mrb[0].mxu0
        %v2030 = vpop.f32.mrb[0].mxu0
        %v2031 = vpop.f32.mrb[0].mxu0
        %2032 = vdwg.mxu0
        %v2034 = vsel %vm852, %v1948, 0
        %2036 = vmatprep.subr.bf16.mxu0 0
        %2037 = vmatpush1.bf16.msra.mxu0 %v909
        %2038 = vmatprep.subr.bf16.mxu0 0
        %2039 = vmatpush1.bf16.msra.mxu0 0
        %2040 = vmatprep.subr.bf16.mxu0 0
        %2041 = vmatpush1.bf16.msra.mxu0 0
        %2042 = vmatprep.subr.bf16.mxu0 0
        %2043 = vmatpush1.bf16.msra.mxu0 0
        %2044 = vmatprep.subr.bf16.mxu0 0
        %2045 = vmatpush1.bf16.msra.mxu0 0
        %2046 = vmatprep.subr.bf16.mxu0 0
        %2047 = vmatpush1.bf16.msra.mxu0 0
        %2048 = vmatprep.subr.bf16.mxu0 0
        %2049 = vmatpush1.bf16.msra.mxu0 0
        %2050 = vmatprep.subr.bf16.mxu0 0
        %2051 = vmatpush1.bf16.msra.mxu0 0
        %2052 = vmatprep.subr.bf16.mxu0 0
        %2053 = vmatpush1.bf16.msra.mxu0 0
        %2054 = vmatprep.subr.bf16.mxu0 0
        %2055 = vmatpush1.bf16.msra.mxu0 0
        %2056 = vmatprep.subr.bf16.mxu0 0
        %2057 = vmatpush1.bf16.msra.mxu0 0
        %2058 = vmatprep.subr.bf16.mxu0 0
        %2059 = vmatpush1.bf16.msra.mxu0 0
        %2060 = vmatprep.subr.bf16.mxu0 0
        %2061 = vmatpush1.bf16.msra.mxu0 0
        %2062 = vmatprep.subr.bf16.mxu0 0
        %2063 = vmatpush1.bf16.msra.mxu0 0
        %2064 = vmatprep.subr.bf16.mxu0 0
        %2065 = vmatpush1.bf16.msra.mxu0 0
        %2066 = vmatprep.subr.bf16.mxu0 0
        %2067 = vmatpush1.bf16.msra.mxu0 0
        %2068 = vmatprep.mubr.bf16.mxu0 0
        %2069 = vmatmul.mubr.bf16.gmra.mrb[0].mxu0 %v2034
        %v2070 = vpop.f32.mrb[0].mxu0
        %v2071 = vadd.f32 %v2028, %v2070
        %v2072 = vpop.f32.mrb[0].mxu0
        %v2073 = vpop.f32.mrb[0].mxu0
        %v2074 = vpop.f32.mrb[0].mxu0
        %2075 = vdwg.mxu0
        %2076 = vmatprep.subr.bf16.mxu0 0
        %2077 = vmatpush1.bf16.msra.mxu0 %v1906
        %2078 = vmatprep.subr.bf16.mxu0 0
        %2079 = vmatpush1.bf16.msra.mxu0 0
        %2080 = vmatprep.subr.bf16.mxu0 0
        %2081 = vmatpush1.bf16.msra.mxu0 0
        %2082 = vmatprep.subr.bf16.mxu0 0
        %2083 = vmatpush1.bf16.msra.mxu0 0
        %2084 = vmatprep.subr.bf16.mxu0 0
        %2085 = vmatpush1.bf16.msra.mxu0 0
        %2086 = vmatprep.subr.bf16.mxu0 0
        %2087 = vmatpush1.bf16.msra.mxu0 0
        %2088 = vmatprep.subr.bf16.mxu0 0
        %2089 = vmatpush1.bf16.msra.mxu0 0
        %2090 = vmatprep.subr.bf16.mxu0 0
        %2091 = vmatpush1.bf16.msra.mxu0 0
        %2092 = vmatprep.subr.bf16.mxu0 0
        %2093 = vmatpush1.bf16.msra.mxu0 0
        %2094 = vmatprep.subr.bf16.mxu0 0
        %2095 = vmatpush1.bf16.msra.mxu0 0
        %2096 = vmatprep.subr.bf16.mxu0 0
        %2097 = vmatpush1.bf16.msra.mxu0 0
        %2098 = vmatprep.subr.bf16.mxu0 0
        %2099 = vmatpush1.bf16.msra.mxu0 0
        %2100 = vmatprep.subr.bf16.mxu0 0
        %2101 = vmatpush1.bf16.msra.mxu0 0
        %2102 = vmatprep.subr.bf16.mxu0 0
        %2103 = vmatpush1.bf16.msra.mxu0 0
        %2104 = vmatprep.subr.bf16.mxu0 0
        %2105 = vmatpush1.bf16.msra.mxu0 0
        %2106 = vmatprep.subr.bf16.mxu0 0
        %2107 = vmatpush1.bf16.msra.mxu0 0
        %2108 = vmatprep.mubr.bf16.mxu0 0
        %2109 = vmatmul.mubr.bf16.gmra.mrb[0].mxu0 %v952
        %v2110 = vpop.f32.mrb[0].mxu0
        %v2111 = vadd.f32 0.0, %v2110
        %v2112 = vpop.f32.mrb[0].mxu0
        %v2113 = vpop.f32.mrb[0].mxu0
        %v2114 = vpop.f32.mrb[0].mxu0
        %2115 = vdwg.mxu0
        %v2116 = vpack.c.bf16 %v2111, %v2111
        %v2118 = vsel %vm852, %v2116, 0
        %2120 = vmatprep.subr.bf16.mxu0 0
        %2121 = vmatpush1.bf16.msra.mxu0 %v1007
        %2122 = vmatprep.subr.bf16.mxu0 0
        %2123 = vmatpush1.bf16.msra.mxu0 0
        %2124 = vmatprep.subr.bf16.mxu0 0
        %2125 = vmatpush1.bf16.msra.mxu0 0
        %2126 = vmatprep.subr.bf16.mxu0 0
        %2127 = vmatpush1.bf16.msra.mxu0 0
        %2128 = vmatprep.subr.bf16.mxu0 0
        %2129 = vmatpush1.bf16.msra.mxu0 0
        %2130 = vmatprep.subr.bf16.mxu0 0
        %2131 = vmatpush1.bf16.msra.mxu0 0
        %2132 = vmatprep.subr.bf16.mxu0 0
        %2133 = vmatpush1.bf16.msra.mxu0 0
        %2134 = vmatprep.subr.bf16.mxu0 0
        %2135 = vmatpush1.bf16.msra.mxu0 0
        %2136 = vmatprep.subr.bf16.mxu0 0
        %2137 = vmatpush1.bf16.msra.mxu0 0
        %2138 = vmatprep.subr.bf16.mxu0 0
        %2139 = vmatpush1.bf16.msra.mxu0 0
        %2140 = vmatprep.subr.bf16.mxu0 0
        %2141 = vmatpush1.bf16.msra.mxu0 0
        %2142 = vmatprep.subr.bf16.mxu0 0
        %2143 = vmatpush1.bf16.msra.mxu0 0
        %2144 = vmatprep.subr.bf16.mxu0 0
        %2145 = vmatpush1.bf16.msra.mxu0 0
        %2146 = vmatprep.subr.bf16.mxu0 0
        %2147 = vmatpush1.bf16.msra.mxu0 0
        %2148 = vmatprep.subr.bf16.mxu0 0
        %2149 = vmatpush1.bf16.msra.mxu0 0
        %2150 = vmatprep.subr.bf16.mxu0 0
        %2151 = vmatpush1.bf16.msra.mxu0 0
        %2152 = vmatprep.mubr.bf16.mxu0 0
        %2153 = vmatmul.mubr.bf16.gmra.mrb[0].mxu0 %v2118
        %v2154 = vpop.f32.mrb[0].mxu0
        %v2155 = vadd.f32 0.0, %v2154
        %v2156 = vpop.f32.mrb[0].mxu0
        %v2157 = vpop.f32.mrb[0].mxu0
        %v2158 = vpop.f32.mrb[0].mxu0
        %2159 = vdwg.mxu0
        %v2160 = vadd.f32 %v2071, %v2155
        %v2161 = vadd.f32 %v2160, %v1055
        %v2162 = vmax.f32 %v2161, 0.0
        %v2163 = vpack.c.bf16 %v2162, %v2162
        %v2166 = vunpack.c.l.b16 %v698
        %v2167 = vunpack.c.l.b16 %v699
        %v2168 = vpack.c.b16 %v2167, %v2166
        %2169 = vrot.lane.b32.xlu0 %v2168, 4
        %v2170 = vpop.permute.xlu0 %2169
        %v2173 = vunpack.c.l.b16 %v701
        %v2174 = vunpack.c.l.b16 %v702
        %v2175 = vpack.c.b16 %v2174, %v2173
        %2176 = vrot.lane.b32.xlu0 %v2175, 8
        %v2177 = vpop.permute.xlu0 %2176
        %v2180 = vsel %vm745, %v1899, %v2170
        %v2182 = vsel %vm749, %v2180, %v2177
        %2184 = vmatprep.subr.bf16.mxu0 0
        %2185 = vmatpush1.bf16.msra.mxu0 %v2182
        %2186 = vmatprep.subr.bf16.mxu0 0
        %2187 = vmatpush1.bf16.msra.mxu0 0
        %2188 = vmatprep.subr.bf16.mxu0 0
        %2189 = vmatpush1.bf16.msra.mxu0 0
        %2190 = vmatprep.subr.bf16.mxu0 0
        %2191 = vmatpush1.bf16.msra.mxu0 0
        %2192 = vmatprep.subr.bf16.mxu0 0
        %2193 = vmatpush1.bf16.msra.mxu0 0
        %2194 = vmatprep.subr.bf16.mxu0 0
        %2195 = vmatpush1.bf16.msra.mxu0 0
        %2196 = vmatprep.subr.bf16.mxu0 0
        %2197 = vmatpush1.bf16.msra.mxu0 0
        %2198 = vmatprep.subr.bf16.mxu0 0
        %2199 = vmatpush1.bf16.msra.mxu0 0
        %2200 = vmatprep.subr.bf16.mxu0 0
        %2201 = vmatpush1.bf16.msra.mxu0 0
        %2202 = vmatprep.subr.bf16.mxu0 0
        %2203 = vmatpush1.bf16.msra.mxu0 0
        %2204 = vmatprep.subr.bf16.mxu0 0
        %2205 = vmatpush1.bf16.msra.mxu0 0
        %2206 = vmatprep.subr.bf16.mxu0 0
        %2207 = vmatpush1.bf16.msra.mxu0 0
        %2208 = vmatprep.subr.bf16.mxu0 0
        %2209 = vmatpush1.bf16.msra.mxu0 0
        %2210 = vmatprep.subr.bf16.mxu0 0
        %2211 = vmatpush1.bf16.msra.mxu0 0
        %2212 = vmatprep.subr.bf16.mxu0 0
        %2213 = vmatpush1.bf16.msra.mxu0 0
        %2214 = vmatprep.subr.bf16.mxu0 0
        %2215 = vmatpush1.bf16.msra.mxu0 0
        %2216 = vmatprep.mubr.bf16.mxu0 0
        %2217 = vmatmul.mubr.bf16.gmra.mrb[0].mxu0 %v755
        %v2218 = vpop.f32.mrb[0].mxu0
        %v2219 = vadd.f32 0.0, %v2218
        %v2220 = vpop.f32.mrb[0].mxu0
        %v2221 = vpop.f32.mrb[0].mxu0
        %v2222 = vpop.f32.mrb[0].mxu0
        %2223 = vdwg.mxu0
        %v2224 = vpack.c.bf16 %v2219, %v2219
        %2225 = vmatprep.subr.bf16.mxu0 0
        %2226 = vmatpush1.bf16.msra.mxu0 %v2182
        %2227 = vmatprep.subr.bf16.mxu0 0
        %2228 = vmatpush1.bf16.msra.mxu0 0
        %2229 = vmatprep.subr.bf16.mxu0 0
        %2230 = vmatpush1.bf16.msra.mxu0 0
        %2231 = vmatprep.subr.bf16.mxu0 0
        %2232 = vmatpush1.bf16.msra.mxu0 0
        %2233 = vmatprep.subr.bf16.mxu0 0
        %2234 = vmatpush1.bf16.msra.mxu0 0
        %2235 = vmatprep.subr.bf16.mxu0 0
        %2236 = vmatpush1.bf16.msra.mxu0 0
        %2237 = vmatprep.subr.bf16.mxu0 0
        %2238 = vmatpush1.bf16.msra.mxu0 0
        %2239 = vmatprep.subr.bf16.mxu0 0
        %2240 = vmatpush1.bf16.msra.mxu0 0
        %2241 = vmatprep.subr.bf16.mxu0 0
        %2242 = vmatpush1.bf16.msra.mxu0 0
        %2243 = vmatprep.subr.bf16.mxu0 0
        %2244 = vmatpush1.bf16.msra.mxu0 0
        %2245 = vmatprep.subr.bf16.mxu0 0
        %2246 = vmatpush1.bf16.msra.mxu0 0
        %2247 = vmatprep.subr.bf16.mxu0 0
        %2248 = vmatpush1.bf16.msra.mxu0 0
        %2249 = vmatprep.subr.bf16.mxu0 0
        %2250 = vmatpush1.bf16.msra.mxu0 0
        %2251 = vmatprep.subr.bf16.mxu0 0
        %2252 = vmatpush1.bf16.msra.mxu0 0
        %2253 = vmatprep.subr.bf16.mxu0 0
        %2254 = vmatpush1.bf16.msra.mxu0 0
        %2255 = vmatprep.subr.bf16.mxu0 0
        %2256 = vmatpush1.bf16.msra.mxu0 0
        %2257 = vmatprep.mubr.bf16.mxu0 0
        %2258 = vmatmul.mubr.bf16.gmra.mrb[0].mxu0 %v801
        %v2259 = vpop.f32.mrb[0].mxu0
        %v2260 = vadd.f32 0.0, %v2259
        %v2261 = vpop.f32.mrb[0].mxu0
        %v2262 = vpop.f32.mrb[0].mxu0
        %v2263 = vpop.f32.mrb[0].mxu0
        %2264 = vdwg.mxu0
        %v2265 = vpack.c.bf16 %v2260, %v2260
        %v2267 = vsel %vm852, %v2265, 0
        %2269 = vmatprep.subr.bf16.mxu0 0
        %2270 = vmatpush1.bf16.msra.mxu0 %v858
        %2271 = vmatprep.subr.bf16.mxu0 0
        %2272 = vmatpush1.bf16.msra.mxu0 0
        %2273 = vmatprep.subr.bf16.mxu0 0
        %2274 = vmatpush1.bf16.msra.mxu0 0
        %2275 = vmatprep.subr.bf16.mxu0 0
        %2276 = vmatpush1.bf16.msra.mxu0 0
        %2277 = vmatprep.subr.bf16.mxu0 0
        %2278 = vmatpush1.bf16.msra.mxu0 0
        %2279 = vmatprep.subr.bf16.mxu0 0
        %2280 = vmatpush1.bf16.msra.mxu0 0
        %2281 = vmatprep.subr.bf16.mxu0 0
        %2282 = vmatpush1.bf16.msra.mxu0 0
        %2283 = vmatprep.subr.bf16.mxu0 0
        %2284 = vmatpush1.bf16.msra.mxu0 0
        %2285 = vmatprep.subr.bf16.mxu0 0
        %2286 = vmatpush1.bf16.msra.mxu0 0
        %2287 = vmatprep.subr.bf16.mxu0 0
        %2288 = vmatpush1.bf16.msra.mxu0 0
        %2289 = vmatprep.subr.bf16.mxu0 0
        %2290 = vmatpush1.bf16.msra.mxu0 0
        %2291 = vmatprep.subr.bf16.mxu0 0
        %2292 = vmatpush1.bf16.msra.mxu0 0
        %2293 = vmatprep.subr.bf16.mxu0 0
        %2294 = vmatpush1.bf16.msra.mxu0 0
        %2295 = vmatprep.subr.bf16.mxu0 0
        %2296 = vmatpush1.bf16.msra.mxu0 0
        %2297 = vmatprep.subr.bf16.mxu0 0
        %2298 = vmatpush1.bf16.msra.mxu0 0
        %2299 = vmatprep.subr.bf16.mxu0 0
        %2300 = vmatpush1.bf16.msra.mxu0 0
        %2301 = vmatprep.mubr.bf16.mxu0 0
        %2302 = vmatmul.mubr.bf16.gmra.mrb[0].mxu0 %v2267
        %v2303 = vpop.f32.mrb[0].mxu0
        %v2304 = vadd.f32 0.0, %v2303
        %v2305 = vpop.f32.mrb[0].mxu0
        %v2306 = vpop.f32.mrb[0].mxu0
        %v2307 = vpop.f32.mrb[0].mxu0
        %2308 = vdwg.mxu0
        %v2310 = vsel %vm852, %v2224, 0
        %2312 = vmatprep.subr.bf16.mxu0 0
        %2313 = vmatpush1.bf16.msra.mxu0 %v909
        %2314 = vmatprep.subr.bf16.mxu0 0
        %2315 = vmatpush1.bf16.msra.mxu0 0
        %2316 = vmatprep.subr.bf16.mxu0 0
        %2317 = vmatpush1.bf16.msra.mxu0 0
        %2318 = vmatprep.subr.bf16.mxu0 0
        %2319 = vmatpush1.bf16.msra.mxu0 0
        %2320 = vmatprep.subr.bf16.mxu0 0
        %2321 = vmatpush1.bf16.msra.mxu0 0
        %2322 = vmatprep.subr.bf16.mxu0 0
        %2323 = vmatpush1.bf16.msra.mxu0 0
        %2324 = vmatprep.subr.bf16.mxu0 0
        %2325 = vmatpush1.bf16.msra.mxu0 0
        %2326 = vmatprep.subr.bf16.mxu0 0
        %2327 = vmatpush1.bf16.msra.mxu0 0
        %2328 = vmatprep.subr.bf16.mxu0 0
        %2329 = vmatpush1.bf16.msra.mxu0 0
        %2330 = vmatprep.subr.bf16.mxu0 0
        %2331 = vmatpush1.bf16.msra.mxu0 0
        %2332 = vmatprep.subr.bf16.mxu0 0
        %2333 = vmatpush1.bf16.msra.mxu0 0
        %2334 = vmatprep.subr.bf16.mxu0 0
        %2335 = vmatpush1.bf16.msra.mxu0 0
        %2336 = vmatprep.subr.bf16.mxu0 0
        %2337 = vmatpush1.bf16.msra.mxu0 0
        %2338 = vmatprep.subr.bf16.mxu0 0
        %2339 = vmatpush1.bf16.msra.mxu0 0
        %2340 = vmatprep.subr.bf16.mxu0 0
        %2341 = vmatpush1.bf16.msra.mxu0 0
        %2342 = vmatprep.subr.bf16.mxu0 0
        %2343 = vmatpush1.bf16.msra.mxu0 0
        %2344 = vmatprep.mubr.bf16.mxu0 0
        %2345 = vmatmul.mubr.bf16.gmra.mrb[0].mxu0 %v2310
        %v2346 = vpop.f32.mrb[0].mxu0
        %v2347 = vadd.f32 %v2304, %v2346
        %v2348 = vpop.f32.mrb[0].mxu0
        %v2349 = vpop.f32.mrb[0].mxu0
        %v2350 = vpop.f32.mrb[0].mxu0
        %2351 = vdwg.mxu0
        %2352 = vmatprep.subr.bf16.mxu0 0
        %2353 = vmatpush1.bf16.msra.mxu0 %v2182
        %2354 = vmatprep.subr.bf16.mxu0 0
        %2355 = vmatpush1.bf16.msra.mxu0 0
        %2356 = vmatprep.subr.bf16.mxu0 0
        %2357 = vmatpush1.bf16.msra.mxu0 0
        %2358 = vmatprep.subr.bf16.mxu0 0
        %2359 = vmatpush1.bf16.msra.mxu0 0
        %2360 = vmatprep.subr.bf16.mxu0 0
        %2361 = vmatpush1.bf16.msra.mxu0 0
        %2362 = vmatprep.subr.bf16.mxu0 0
        %2363 = vmatpush1.bf16.msra.mxu0 0
        %2364 = vmatprep.subr.bf16.mxu0 0
        %2365 = vmatpush1.bf16.msra.mxu0 0
        %2366 = vmatprep.subr.bf16.mxu0 0
        %2367 = vmatpush1.bf16.msra.mxu0 0
        %2368 = vmatprep.subr.bf16.mxu0 0
        %2369 = vmatpush1.bf16.msra.mxu0 0
        %2370 = vmatprep.subr.bf16.mxu0 0
        %2371 = vmatpush1.bf16.msra.mxu0 0
        %2372 = vmatprep.subr.bf16.mxu0 0
        %2373 = vmatpush1.bf16.msra.mxu0 0
        %2374 = vmatprep.subr.bf16.mxu0 0
        %2375 = vmatpush1.bf16.msra.mxu0 0
        %2376 = vmatprep.subr.bf16.mxu0 0
        %2377 = vmatpush1.bf16.msra.mxu0 0
        %2378 = vmatprep.subr.bf16.mxu0 0
        %2379 = vmatpush1.bf16.msra.mxu0 0
        %2380 = vmatprep.subr.bf16.mxu0 0
        %2381 = vmatpush1.bf16.msra.mxu0 0
        %2382 = vmatprep.subr.bf16.mxu0 0
        %2383 = vmatpush1.bf16.msra.mxu0 0
        %2384 = vmatprep.mubr.bf16.mxu0 0
        %2385 = vmatmul.mubr.bf16.gmra.mrb[0].mxu0 %v952
        %v2386 = vpop.f32.mrb[0].mxu0
        %v2387 = vadd.f32 0.0, %v2386
        %v2388 = vpop.f32.mrb[0].mxu0
        %v2389 = vpop.f32.mrb[0].mxu0
        %v2390 = vpop.f32.mrb[0].mxu0
        %2391 = vdwg.mxu0
        %v2392 = vpack.c.bf16 %v2387, %v2387
        %v2394 = vsel %vm852, %v2392, 0
        %2396 = vmatprep.subr.bf16.mxu0 0
        %2397 = vmatpush1.bf16.msra.mxu0 %v1007
        %2398 = vmatprep.subr.bf16.mxu0 0
        %2399 = vmatpush1.bf16.msra.mxu0 0
        %2400 = vmatprep.subr.bf16.mxu0 0
        %2401 = vmatpush1.bf16.msra.mxu0 0
        %2402 = vmatprep.subr.bf16.mxu0 0
        %2403 = vmatpush1.bf16.msra.mxu0 0
        %2404 = vmatprep.subr.bf16.mxu0 0
        %2405 = vmatpush1.bf16.msra.mxu0 0
        %2406 = vmatprep.subr.bf16.mxu0 0
        %2407 = vmatpush1.bf16.msra.mxu0 0
        %2408 = vmatprep.subr.bf16.mxu0 0
        %2409 = vmatpush1.bf16.msra.mxu0 0
        %2410 = vmatprep.subr.bf16.mxu0 0
        %2411 = vmatpush1.bf16.msra.mxu0 0
        %2412 = vmatprep.subr.bf16.mxu0 0
        %2413 = vmatpush1.bf16.msra.mxu0 0
        %2414 = vmatprep.subr.bf16.mxu0 0
        %2415 = vmatpush1.bf16.msra.mxu0 0
        %2416 = vmatprep.subr.bf16.mxu0 0
        %2417 = vmatpush1.bf16.msra.mxu0 0
        %2418 = vmatprep.subr.bf16.mxu0 0
        %2419 = vmatpush1.bf16.msra.mxu0 0
        %2420 = vmatprep.subr.bf16.mxu0 0
        %2421 = vmatpush1.bf16.msra.mxu0 0
        %2422 = vmatprep.subr.bf16.mxu0 0
        %2423 = vmatpush1.bf16.msra.mxu0 0
        %2424 = vmatprep.subr.bf16.mxu0 0
        %2425 = vmatpush1.bf16.msra.mxu0 0
        %2426 = vmatprep.subr.bf16.mxu0 0
        %2427 = vmatpush1.bf16.msra.mxu0 0
        %2428 = vmatprep.mubr.bf16.mxu0 0
        %2429 = vmatmul.mubr.bf16.gmra.mrb[0].mxu0 %v2394
        %v2430 = vpop.f32.mrb[0].mxu0
        %v2431 = vadd.f32 0.0, %v2430
        %v2432 = vpop.f32.mrb[0].mxu0
        %v2433 = vpop.f32.mrb[0].mxu0
        %v2434 = vpop.f32.mrb[0].mxu0
        %2435 = vdwg.mxu0
        %v2436 = vadd.f32 %v2347, %v2431
        %v2437 = vadd.f32 %v2436, %v1055
        %v2438 = vmax.f32 %v2437, 0.0
        %v2439 = vpack.c.bf16 %v2438, %v2438
        %v2442 = vunpack.c.l.b16 %v704
        %v2443 = vunpack.c.l.b16 %v705
        %v2444 = vpack.c.b16 %v2443, %v2442
        %2445 = vrot.lane.b32.xlu0 %v2444, 4
        %v2446 = vpop.permute.xlu0 %2445
        %v2449 = vunpack.c.l.b16 %v707
        %v2450 = vunpack.c.l.b16 %v708
        %v2451 = vpack.c.b16 %v2450, %v2449
        %2452 = vrot.lane.b32.xlu0 %v2451, 8
        %v2453 = vpop.permute.xlu0 %2452
        %v2456 = vsel %vm745, %v2175, %v2446
        %v2458 = vsel %vm749, %v2456, %v2453
        %2460 = vmatprep.subr.bf16.mxu0 0
        %2461 = vmatpush1.bf16.msra.mxu0 %v2458
        %2462 = vmatprep.subr.bf16.mxu0 0
        %2463 = vmatpush1.bf16.msra.mxu0 0
        %2464 = vmatprep.subr.bf16.mxu0 0
        %2465 = vmatpush1.bf16.msra.mxu0 0
        %2466 = vmatprep.subr.bf16.mxu0 0
        %2467 = vmatpush1.bf16.msra.mxu0 0
        %2468 = vmatprep.subr.bf16.mxu0 0
        %2469 = vmatpush1.bf16.msra.mxu0 0
        %2470 = vmatprep.subr.bf16.mxu0 0
        %2471 = vmatpush1.bf16.msra.mxu0 0
        %2472 = vmatprep.subr.bf16.mxu0 0
        %2473 = vmatpush1.bf16.msra.mxu0 0
        %2474 = vmatprep.subr.bf16.mxu0 0
        %2475 = vmatpush1.bf16.msra.mxu0 0
        %2476 = vmatprep.subr.bf16.mxu0 0
        %2477 = vmatpush1.bf16.msra.mxu0 0
        %2478 = vmatprep.subr.bf16.mxu0 0
        %2479 = vmatpush1.bf16.msra.mxu0 0
        %2480 = vmatprep.subr.bf16.mxu0 0
        %2481 = vmatpush1.bf16.msra.mxu0 0
        %2482 = vmatprep.subr.bf16.mxu0 0
        %2483 = vmatpush1.bf16.msra.mxu0 0
        %2484 = vmatprep.subr.bf16.mxu0 0
        %2485 = vmatpush1.bf16.msra.mxu0 0
        %2486 = vmatprep.subr.bf16.mxu0 0
        %2487 = vmatpush1.bf16.msra.mxu0 0
        %2488 = vmatprep.subr.bf16.mxu0 0
        %2489 = vmatpush1.bf16.msra.mxu0 0
        %2490 = vmatprep.subr.bf16.mxu0 0
        %2491 = vmatpush1.bf16.msra.mxu0 0
        %2492 = vmatprep.mubr.bf16.mxu0 0
        %2493 = vmatmul.mubr.bf16.gmra.mrb[0].mxu0 %v755
        %v2494 = vpop.f32.mrb[0].mxu0
        %v2495 = vadd.f32 0.0, %v2494
        %v2496 = vpop.f32.mrb[0].mxu0
        %v2497 = vpop.f32.mrb[0].mxu0
        %v2498 = vpop.f32.mrb[0].mxu0
        %2499 = vdwg.mxu0
        %v2500 = vpack.c.bf16 %v2495, %v2495
        %2501 = vmatprep.subr.bf16.mxu0 0
        %2502 = vmatpush1.bf16.msra.mxu0 %v2458
        %2503 = vmatprep.subr.bf16.mxu0 0
        %2504 = vmatpush1.bf16.msra.mxu0 0
        %2505 = vmatprep.subr.bf16.mxu0 0
        %2506 = vmatpush1.bf16.msra.mxu0 0
        %2507 = vmatprep.subr.bf16.mxu0 0
        %2508 = vmatpush1.bf16.msra.mxu0 0
        %2509 = vmatprep.subr.bf16.mxu0 0
        %2510 = vmatpush1.bf16.msra.mxu0 0
        %2511 = vmatprep.subr.bf16.mxu0 0
        %2512 = vmatpush1.bf16.msra.mxu0 0
        %2513 = vmatprep.subr.bf16.mxu0 0
        %2514 = vmatpush1.bf16.msra.mxu0 0
        %2515 = vmatprep.subr.bf16.mxu0 0
        %2516 = vmatpush1.bf16.msra.mxu0 0
        %2517 = vmatprep.subr.bf16.mxu0 0
        %2518 = vmatpush1.bf16.msra.mxu0 0
        %2519 = vmatprep.subr.bf16.mxu0 0
        %2520 = vmatpush1.bf16.msra.mxu0 0
        %2521 = vmatprep.subr.bf16.mxu0 0
        %2522 = vmatpush1.bf16.msra.mxu0 0
        %2523 = vmatprep.subr.bf16.mxu0 0
        %2524 = vmatpush1.bf16.msra.mxu0 0
        %2525 = vmatprep.subr.bf16.mxu0 0
        %2526 = vmatpush1.bf16.msra.mxu0 0
        %2527 = vmatprep.subr.bf16.mxu0 0
        %2528 = vmatpush1.bf16.msra.mxu0 0
        %2529 = vmatprep.subr.bf16.mxu0 0
        %2530 = vmatpush1.bf16.msra.mxu0 0
        %2531 = vmatprep.subr.bf16.mxu0 0
        %2532 = vmatpush1.bf16.msra.mxu0 0
        %2533 = vmatprep.mubr.bf16.mxu0 0
        %2534 = vmatmul.mubr.bf16.gmra.mrb[0].mxu0 %v801
        %v2535 = vpop.f32.mrb[0].mxu0
        %v2536 = vadd.f32 0.0, %v2535
        %v2537 = vpop.f32.mrb[0].mxu0
        %v2538 = vpop.f32.mrb[0].mxu0
        %v2539 = vpop.f32.mrb[0].mxu0
        %2540 = vdwg.mxu0
        %v2541 = vpack.c.bf16 %v2536, %v2536
        %v2543 = vsel %vm852, %v2541, 0
        %2545 = vmatprep.subr.bf16.mxu0 0
        %2546 = vmatpush1.bf16.msra.mxu0 %v858
        %2547 = vmatprep.subr.bf16.mxu0 0
        %2548 = vmatpush1.bf16.msra.mxu0 0
        %2549 = vmatprep.subr.bf16.mxu0 0
        %2550 = vmatpush1.bf16.msra.mxu0 0
        %2551 = vmatprep.subr.bf16.mxu0 0
        %2552 = vmatpush1.bf16.msra.mxu0 0
        %2553 = vmatprep.subr.bf16.mxu0 0
        %2554 = vmatpush1.bf16.msra.mxu0 0
        %2555 = vmatprep.subr.bf16.mxu0 0
        %2556 = vmatpush1.bf16.msra.mxu0 0
        %2557 = vmatprep.subr.bf16.mxu0 0
        %2558 = vmatpush1.bf16.msra.mxu0 0
        %2559 = vmatprep.subr.bf16.mxu0 0
        %2560 = vmatpush1.bf16.msra.mxu0 0
        %2561 = vmatprep.subr.bf16.mxu0 0
        %2562 = vmatpush1.bf16.msra.mxu0 0
        %2563 = vmatprep.subr.bf16.mxu0 0
        %2564 = vmatpush1.bf16.msra.mxu0 0
        %2565 = vmatprep.subr.bf16.mxu0 0
        %2566 = vmatpush1.bf16.msra.mxu0 0
        %2567 = vmatprep.subr.bf16.mxu0 0
        %2568 = vmatpush1.bf16.msra.mxu0 0
        %2569 = vmatprep.subr.bf16.mxu0 0
        %2570 = vmatpush1.bf16.msra.mxu0 0
        %2571 = vmatprep.subr.bf16.mxu0 0
        %2572 = vmatpush1.bf16.msra.mxu0 0
        %2573 = vmatprep.subr.bf16.mxu0 0
        %2574 = vmatpush1.bf16.msra.mxu0 0
        %2575 = vmatprep.subr.bf16.mxu0 0
        %2576 = vmatpush1.bf16.msra.mxu0 0
        %2577 = vmatprep.mubr.bf16.mxu0 0
        %2578 = vmatmul.mubr.bf16.gmra.mrb[0].mxu0 %v2543
        %v2579 = vpop.f32.mrb[0].mxu0
        %v2580 = vadd.f32 0.0, %v2579
        %v2581 = vpop.f32.mrb[0].mxu0
        %v2582 = vpop.f32.mrb[0].mxu0
        %v2583 = vpop.f32.mrb[0].mxu0
        %2584 = vdwg.mxu0
        %v2586 = vsel %vm852, %v2500, 0
        %2588 = vmatprep.subr.bf16.mxu0 0
        %2589 = vmatpush1.bf16.msra.mxu0 %v909
        %2590 = vmatprep.subr.bf16.mxu0 0
        %2591 = vmatpush1.bf16.msra.mxu0 0
        %2592 = vmatprep.subr.bf16.mxu0 0
        %2593 = vmatpush1.bf16.msra.mxu0 0
        %2594 = vmatprep.subr.bf16.mxu0 0
        %2595 = vmatpush1.bf16.msra.mxu0 0
        %2596 = vmatprep.subr.bf16.mxu0 0
        %2597 = vmatpush1.bf16.msra.mxu0 0
        %2598 = vmatprep.subr.bf16.mxu0 0
        %2599 = vmatpush1.bf16.msra.mxu0 0
        %2600 = vmatprep.subr.bf16.mxu0 0
        %2601 = vmatpush1.bf16.msra.mxu0 0
        %2602 = vmatprep.subr.bf16.mxu0 0
        %2603 = vmatpush1.bf16.msra.mxu0 0
        %2604 = vmatprep.subr.bf16.mxu0 0
        %2605 = vmatpush1.bf16.msra.mxu0 0
        %2606 = vmatprep.subr.bf16.mxu0 0
        %2607 = vmatpush1.bf16.msra.mxu0 0
        %2608 = vmatprep.subr.bf16.mxu0 0
        %2609 = vmatpush1.bf16.msra.mxu0 0
        %2610 = vmatprep.subr.bf16.mxu0 0
        %2611 = vmatpush1.bf16.msra.mxu0 0
        %2612 = vmatprep.subr.bf16.mxu0 0
        %2613 = vmatpush1.bf16.msra.mxu0 0
        %2614 = vmatprep.subr.bf16.mxu0 0
        %2615 = vmatpush1.bf16.msra.mxu0 0
        %2616 = vmatprep.subr.bf16.mxu0 0
        %2617 = vmatpush1.bf16.msra.mxu0 0
        %2618 = vmatprep.subr.bf16.mxu0 0
        %2619 = vmatpush1.bf16.msra.mxu0 0
        %2620 = vmatprep.mubr.bf16.mxu0 0
        %2621 = vmatmul.mubr.bf16.gmra.mrb[0].mxu0 %v2586
        %v2622 = vpop.f32.mrb[0].mxu0
        %v2623 = vadd.f32 %v2580, %v2622
        %v2624 = vpop.f32.mrb[0].mxu0
        %v2625 = vpop.f32.mrb[0].mxu0
        %v2626 = vpop.f32.mrb[0].mxu0
        %2627 = vdwg.mxu0
        %2628 = vmatprep.subr.bf16.mxu0 0
        %2629 = vmatpush1.bf16.msra.mxu0 %v2458
        %2630 = vmatprep.subr.bf16.mxu0 0
        %2631 = vmatpush1.bf16.msra.mxu0 0
        %2632 = vmatprep.subr.bf16.mxu0 0
        %2633 = vmatpush1.bf16.msra.mxu0 0
        %2634 = vmatprep.subr.bf16.mxu0 0
        %2635 = vmatpush1.bf16.msra.mxu0 0
        %2636 = vmatprep.subr.bf16.mxu0 0
        %2637 = vmatpush1.bf16.msra.mxu0 0
        %2638 = vmatprep.subr.bf16.mxu0 0
        %2639 = vmatpush1.bf16.msra.mxu0 0
        %2640 = vmatprep.subr.bf16.mxu0 0
        %2641 = vmatpush1.bf16.msra.mxu0 0
        %2642 = vmatprep.subr.bf16.mxu0 0
        %2643 = vmatpush1.bf16.msra.mxu0 0
        %2644 = vmatprep.subr.bf16.mxu0 0
        %2645 = vmatpush1.bf16.msra.mxu0 0
        %2646 = vmatprep.subr.bf16.mxu0 0
        %2647 = vmatpush1.bf16.msra.mxu0 0
        %2648 = vmatprep.subr.bf16.mxu0 0
        %2649 = vmatpush1.bf16.msra.mxu0 0
        %2650 = vmatprep.subr.bf16.mxu0 0
        %2651 = vmatpush1.bf16.msra.mxu0 0
        %2652 = vmatprep.subr.bf16.mxu0 0
        %2653 = vmatpush1.bf16.msra.mxu0 0
        %2654 = vmatprep.subr.bf16.mxu0 0
        %2655 = vmatpush1.bf16.msra.mxu0 0
        %2656 = vmatprep.subr.bf16.mxu0 0
        %2657 = vmatpush1.bf16.msra.mxu0 0
        %2658 = vmatprep.subr.bf16.mxu0 0
        %2659 = vmatpush1.bf16.msra.mxu0 0
        %2660 = vmatprep.mubr.bf16.mxu0 0
        %2661 = vmatmul.mubr.bf16.gmra.mrb[0].mxu0 %v952
        %v2662 = vpop.f32.mrb[0].mxu0
        %v2663 = vadd.f32 0.0, %v2662
        %v2664 = vpop.f32.mrb[0].mxu0
        %v2665 = vpop.f32.mrb[0].mxu0
        %v2666 = vpop.f32.mrb[0].mxu0
        %2667 = vdwg.mxu0
        %v2668 = vpack.c.bf16 %v2663, %v2663
        %v2670 = vsel %vm852, %v2668, 0
        %2672 = vmatprep.subr.bf16.mxu0 0
        %2673 = vmatpush1.bf16.msra.mxu0 %v1007
        %2674 = vmatprep.subr.bf16.mxu0 0
        %2675 = vmatpush1.bf16.msra.mxu0 0
        %2676 = vmatprep.subr.bf16.mxu0 0
        %2677 = vmatpush1.bf16.msra.mxu0 0
        %2678 = vmatprep.subr.bf16.mxu0 0
        %2679 = vmatpush1.bf16.msra.mxu0 0
        %2680 = vmatprep.subr.bf16.mxu0 0
        %2681 = vmatpush1.bf16.msra.mxu0 0
        %2682 = vmatprep.subr.bf16.mxu0 0
        %2683 = vmatpush1.bf16.msra.mxu0 0
        %2684 = vmatprep.subr.bf16.mxu0 0
        %2685 = vmatpush1.bf16.msra.mxu0 0
        %2686 = vmatprep.subr.bf16.mxu0 0
        %2687 = vmatpush1.bf16.msra.mxu0 0
        %2688 = vmatprep.subr.bf16.mxu0 0
        %2689 = vmatpush1.bf16.msra.mxu0 0
        %2690 = vmatprep.subr.bf16.mxu0 0
        %2691 = vmatpush1.bf16.msra.mxu0 0
        %2692 = vmatprep.subr.bf16.mxu0 0
        %2693 = vmatpush1.bf16.msra.mxu0 0
        %2694 = vmatprep.subr.bf16.mxu0 0
        %2695 = vmatpush1.bf16.msra.mxu0 0
        %2696 = vmatprep.subr.bf16.mxu0 0
        %2697 = vmatpush1.bf16.msra.mxu0 0
        %2698 = vmatprep.subr.bf16.mxu0 0
        %2699 = vmatpush1.bf16.msra.mxu0 0
        %2700 = vmatprep.subr.bf16.mxu0 0
        %2701 = vmatpush1.bf16.msra.mxu0 0
        %2702 = vmatprep.subr.bf16.mxu0 0
        %2703 = vmatpush1.bf16.msra.mxu0 0
        %2704 = vmatprep.mubr.bf16.mxu0 0
        %2705 = vmatmul.mubr.bf16.gmra.mrb[0].mxu0 %v2670
        %v2706 = vpop.f32.mrb[0].mxu0
        %v2707 = vadd.f32 0.0, %v2706
        %v2708 = vpop.f32.mrb[0].mxu0
        %v2709 = vpop.f32.mrb[0].mxu0
        %v2710 = vpop.f32.mrb[0].mxu0
        %2711 = vdwg.mxu0
        %v2712 = vadd.f32 %v2623, %v2707
        %v2713 = vadd.f32 %v2712, %v1055
        %v2714 = vmax.f32 %v2713, 0.0
        %v2715 = vpack.c.bf16 %v2714, %v2714
        %v2718 = vunpack.c.l.b16 %v710
        %v2719 = vunpack.c.l.b16 %v711
        %v2720 = vpack.c.b16 %v2719, %v2718
        %2721 = vrot.lane.b32.xlu0 %v2720, 4
        %v2722 = vpop.permute.xlu0 %2721
        %v2725 = vunpack.c.l.b16 %v713
        %v2726 = vunpack.c.l.b16 %v714
        %v2727 = vpack.c.b16 %v2726, %v2725
        %2728 = vrot.lane.b32.xlu0 %v2727, 8
        %v2729 = vpop.permute.xlu0 %2728
        %v2732 = vsel %vm745, %v2451, %v2722
        %v2734 = vsel %vm749, %v2732, %v2729
        %2736 = vmatprep.subr.bf16.mxu0 0
        %2737 = vmatpush1.bf16.msra.mxu0 %v2734
        %2738 = vmatprep.subr.bf16.mxu0 0
        %2739 = vmatpush1.bf16.msra.mxu0 0
        %2740 = vmatprep.subr.bf16.mxu0 0
        %2741 = vmatpush1.bf16.msra.mxu0 0
        %2742 = vmatprep.subr.bf16.mxu0 0
        %2743 = vmatpush1.bf16.msra.mxu0 0
        %2744 = vmatprep.subr.bf16.mxu0 0
        %2745 = vmatpush1.bf16.msra.mxu0 0
        %2746 = vmatprep.subr.bf16.mxu0 0
        %2747 = vmatpush1.bf16.msra.mxu0 0
        %2748 = vmatprep.subr.bf16.mxu0 0
        %2749 = vmatpush1.bf16.msra.mxu0 0
        %2750 = vmatprep.subr.bf16.mxu0 0
        %2751 = vmatpush1.bf16.msra.mxu0 0
        %2752 = vmatprep.subr.bf16.mxu0 0
        %2753 = vmatpush1.bf16.msra.mxu0 0
        %2754 = vmatprep.subr.bf16.mxu0 0
        %2755 = vmatpush1.bf16.msra.mxu0 0
        %2756 = vmatprep.subr.bf16.mxu0 0
        %2757 = vmatpush1.bf16.msra.mxu0 0
        %2758 = vmatprep.subr.bf16.mxu0 0
        %2759 = vmatpush1.bf16.msra.mxu0 0
        %2760 = vmatprep.subr.bf16.mxu0 0
        %2761 = vmatpush1.bf16.msra.mxu0 0
        %2762 = vmatprep.subr.bf16.mxu0 0
        %2763 = vmatpush1.bf16.msra.mxu0 0
        %2764 = vmatprep.subr.bf16.mxu0 0
        %2765 = vmatpush1.bf16.msra.mxu0 0
        %2766 = vmatprep.subr.bf16.mxu0 0
        %2767 = vmatpush1.bf16.msra.mxu0 0
        %2768 = vmatprep.mubr.bf16.mxu0 0
        %2769 = vmatmul.mubr.bf16.gmra.mrb[0].mxu0 %v755
        %v2770 = vpop.f32.mrb[0].mxu0
        %v2771 = vadd.f32 0.0, %v2770
        %v2772 = vpop.f32.mrb[0].mxu0
        %v2773 = vpop.f32.mrb[0].mxu0
        %v2774 = vpop.f32.mrb[0].mxu0
        %2775 = vdwg.mxu0
        %v2776 = vpack.c.bf16 %v2771, %v2771
        %2777 = vmatprep.subr.bf16.mxu0 0
        %2778 = vmatpush1.bf16.msra.mxu0 %v2734
        %2779 = vmatprep.subr.bf16.mxu0 0
        %2780 = vmatpush1.bf16.msra.mxu0 0
        %2781 = vmatprep.subr.bf16.mxu0 0
        %2782 = vmatpush1.bf16.msra.mxu0 0
        %2783 = vmatprep.subr.bf16.mxu0 0
        %2784 = vmatpush1.bf16.msra.mxu0 0
        %2785 = vmatprep.subr.bf16.mxu0 0
        %2786 = vmatpush1.bf16.msra.mxu0 0
        %2787 = vmatprep.subr.bf16.mxu0 0
        %2788 = vmatpush1.bf16.msra.mxu0 0
        %2789 = vmatprep.subr.bf16.mxu0 0
        %2790 = vmatpush1.bf16.msra.mxu0 0
        %2791 = vmatprep.subr.bf16.mxu0 0
        %2792 = vmatpush1.bf16.msra.mxu0 0
        %2793 = vmatprep.subr.bf16.mxu0 0
        %2794 = vmatpush1.bf16.msra.mxu0 0
        %2795 = vmatprep.subr.bf16.mxu0 0
        %2796 = vmatpush1.bf16.msra.mxu0 0
        %2797 = vmatprep.subr.bf16.mxu0 0
        %2798 = vmatpush1.bf16.msra.mxu0 0
        %2799 = vmatprep.subr.bf16.mxu0 0
        %2800 = vmatpush1.bf16.msra.mxu0 0
        %2801 = vmatprep.subr.bf16.mxu0 0
        %2802 = vmatpush1.bf16.msra.mxu0 0
        %2803 = vmatprep.subr.bf16.mxu0 0
        %2804 = vmatpush1.bf16.msra.mxu0 0
        %2805 = vmatprep.subr.bf16.mxu0 0
        %2806 = vmatpush1.bf16.msra.mxu0 0
        %2807 = vmatprep.subr.bf16.mxu0 0
        %2808 = vmatpush1.bf16.msra.mxu0 0
        %2809 = vmatprep.mubr.bf16.mxu0 0
        %2810 = vmatmul.mubr.bf16.gmra.mrb[0].mxu0 %v801
        %v2811 = vpop.f32.mrb[0].mxu0
        %v2812 = vadd.f32 0.0, %v2811
        %v2813 = vpop.f32.mrb[0].mxu0
        %v2814 = vpop.f32.mrb[0].mxu0
        %v2815 = vpop.f32.mrb[0].mxu0
        %2816 = vdwg.mxu0
        %v2817 = vpack.c.bf16 %v2812, %v2812
        %v2819 = vsel %vm852, %v2817, 0
        %2821 = vmatprep.subr.bf16.mxu0 0
        %2822 = vmatpush1.bf16.msra.mxu0 %v858
        %2823 = vmatprep.subr.bf16.mxu0 0
        %2824 = vmatpush1.bf16.msra.mxu0 0
        %2825 = vmatprep.subr.bf16.mxu0 0
        %2826 = vmatpush1.bf16.msra.mxu0 0
        %2827 = vmatprep.subr.bf16.mxu0 0
        %2828 = vmatpush1.bf16.msra.mxu0 0
        %2829 = vmatprep.subr.bf16.mxu0 0
        %2830 = vmatpush1.bf16.msra.mxu0 0
        %2831 = vmatprep.subr.bf16.mxu0 0
        %2832 = vmatpush1.bf16.msra.mxu0 0
        %2833 = vmatprep.subr.bf16.mxu0 0
        %2834 = vmatpush1.bf16.msra.mxu0 0
        %2835 = vmatprep.subr.bf16.mxu0 0
        %2836 = vmatpush1.bf16.msra.mxu0 0
        %2837 = vmatprep.subr.bf16.mxu0 0
        %2838 = vmatpush1.bf16.msra.mxu0 0
        %2839 = vmatprep.subr.bf16.mxu0 0
        %2840 = vmatpush1.bf16.msra.mxu0 0
        %2841 = vmatprep.subr.bf16.mxu0 0
        %2842 = vmatpush1.bf16.msra.mxu0 0
        %2843 = vmatprep.subr.bf16.mxu0 0
        %2844 = vmatpush1.bf16.msra.mxu0 0
        %2845 = vmatprep.subr.bf16.mxu0 0
        %2846 = vmatpush1.bf16.msra.mxu0 0
        %2847 = vmatprep.subr.bf16.mxu0 0
        %2848 = vmatpush1.bf16.msra.mxu0 0
        %2849 = vmatprep.subr.bf16.mxu0 0
        %2850 = vmatpush1.bf16.msra.mxu0 0
        %2851 = vmatprep.subr.bf16.mxu0 0
        %2852 = vmatpush1.bf16.msra.mxu0 0
        %2853 = vmatprep.mubr.bf16.mxu0 0
        %2854 = vmatmul.mubr.bf16.gmra.mrb[0].mxu0 %v2819
        %v2855 = vpop.f32.mrb[0].mxu0
        %v2856 = vadd.f32 0.0, %v2855
        %v2857 = vpop.f32.mrb[0].mxu0
        %v2858 = vpop.f32.mrb[0].mxu0
        %v2859 = vpop.f32.mrb[0].mxu0
        %2860 = vdwg.mxu0
        %v2862 = vsel %vm852, %v2776, 0
        %2864 = vmatprep.subr.bf16.mxu0 0
        %2865 = vmatpush1.bf16.msra.mxu0 %v909
        %2866 = vmatprep.subr.bf16.mxu0 0
        %2867 = vmatpush1.bf16.msra.mxu0 0
        %2868 = vmatprep.subr.bf16.mxu0 0
        %2869 = vmatpush1.bf16.msra.mxu0 0
        %2870 = vmatprep.subr.bf16.mxu0 0
        %2871 = vmatpush1.bf16.msra.mxu0 0
        %2872 = vmatprep.subr.bf16.mxu0 0
        %2873 = vmatpush1.bf16.msra.mxu0 0
        %2874 = vmatprep.subr.bf16.mxu0 0
        %2875 = vmatpush1.bf16.msra.mxu0 0
        %2876 = vmatprep.subr.bf16.mxu0 0
        %2877 = vmatpush1.bf16.msra.mxu0 0
        %2878 = vmatprep.subr.bf16.mxu0 0
        %2879 = vmatpush1.bf16.msra.mxu0 0
        %2880 = vmatprep.subr.bf16.mxu0 0
        %2881 = vmatpush1.bf16.msra.mxu0 0
        %2882 = vmatprep.subr.bf16.mxu0 0
        %2883 = vmatpush1.bf16.msra.mxu0 0
        %2884 = vmatprep.subr.bf16.mxu0 0
        %2885 = vmatpush1.bf16.msra.mxu0 0
        %2886 = vmatprep.subr.bf16.mxu0 0
        %2887 = vmatpush1.bf16.msra.mxu0 0
        %2888 = vmatprep.subr.bf16.mxu0 0
        %2889 = vmatpush1.bf16.msra.mxu0 0
        %2890 = vmatprep.subr.bf16.mxu0 0
        %2891 = vmatpush1.bf16.msra.mxu0 0
        %2892 = vmatprep.subr.bf16.mxu0 0
        %2893 = vmatpush1.bf16.msra.mxu0 0
        %2894 = vmatprep.subr.bf16.mxu0 0
        %2895 = vmatpush1.bf16.msra.mxu0 0
        %2896 = vmatprep.mubr.bf16.mxu0 0
        %2897 = vmatmul.mubr.bf16.gmra.mrb[0].mxu0 %v2862
        %v2898 = vpop.f32.mrb[0].mxu0
        %v2899 = vadd.f32 %v2856, %v2898
        %v2900 = vpop.f32.mrb[0].mxu0
        %v2901 = vpop.f32.mrb[0].mxu0
        %v2902 = vpop.f32.mrb[0].mxu0
        %2903 = vdwg.mxu0
        %2904 = vmatprep.subr.bf16.mxu0 0
        %2905 = vmatpush1.bf16.msra.mxu0 %v2734
        %2906 = vmatprep.subr.bf16.mxu0 0
        %2907 = vmatpush1.bf16.msra.mxu0 0
        %2908 = vmatprep.subr.bf16.mxu0 0
        %2909 = vmatpush1.bf16.msra.mxu0 0
        %2910 = vmatprep.subr.bf16.mxu0 0
        %2911 = vmatpush1.bf16.msra.mxu0 0
        %2912 = vmatprep.subr.bf16.mxu0 0
        %2913 = vmatpush1.bf16.msra.mxu0 0
        %2914 = vmatprep.subr.bf16.mxu0 0
        %2915 = vmatpush1.bf16.msra.mxu0 0
        %2916 = vmatprep.subr.bf16.mxu0 0
        %2917 = vmatpush1.bf16.msra.mxu0 0
        %2918 = vmatprep.subr.bf16.mxu0 0
        %2919 = vmatpush1.bf16.msra.mxu0 0
        %2920 = vmatprep.subr.bf16.mxu0 0
        %2921 = vmatpush1.bf16.msra.mxu0 0
        %2922 = vmatprep.subr.bf16.mxu0 0
        %2923 = vmatpush1.bf16.msra.mxu0 0
        %2924 = vmatprep.subr.bf16.mxu0 0
        %2925 = vmatpush1.bf16.msra.mxu0 0
        %2926 = vmatprep.subr.bf16.mxu0 0
        %2927 = vmatpush1.bf16.msra.mxu0 0
        %2928 = vmatprep.subr.bf16.mxu0 0
        %2929 = vmatpush1.bf16.msra.mxu0 0
        %2930 = vmatprep.subr.bf16.mxu0 0
        %2931 = vmatpush1.bf16.msra.mxu0 0
        %2932 = vmatprep.subr.bf16.mxu0 0
        %2933 = vmatpush1.bf16.msra.mxu0 0
        %2934 = vmatprep.subr.bf16.mxu0 0
        %2935 = vmatpush1.bf16.msra.mxu0 0
        %2936 = vmatprep.mubr.bf16.mxu0 0
        %2937 = vmatmul.mubr.bf16.gmra.mrb[0].mxu0 %v952
        %v2938 = vpop.f32.mrb[0].mxu0
        %v2939 = vadd.f32 0.0, %v2938
        %v2940 = vpop.f32.mrb[0].mxu0
        %v2941 = vpop.f32.mrb[0].mxu0
        %v2942 = vpop.f32.mrb[0].mxu0
        %2943 = vdwg.mxu0
        %v2944 = vpack.c.bf16 %v2939, %v2939
        %v2946 = vsel %vm852, %v2944, 0
        %2948 = vmatprep.subr.bf16.mxu0 0
        %2949 = vmatpush1.bf16.msra.mxu0 %v1007
        %2950 = vmatprep.subr.bf16.mxu0 0
        %2951 = vmatpush1.bf16.msra.mxu0 0
        %2952 = vmatprep.subr.bf16.mxu0 0
        %2953 = vmatpush1.bf16.msra.mxu0 0
        %2954 = vmatprep.subr.bf16.mxu0 0
        %2955 = vmatpush1.bf16.msra.mxu0 0
        %2956 = vmatprep.subr.bf16.mxu0 0
        %2957 = vmatpush1.bf16.msra.mxu0 0
        %2958 = vmatprep.subr.bf16.mxu0 0
        %2959 = vmatpush1.bf16.msra.mxu0 0
        %2960 = vmatprep.subr.bf16.mxu0 0
        %2961 = vmatpush1.bf16.msra.mxu0 0
        %2962 = vmatprep.subr.bf16.mxu0 0
        %2963 = vmatpush1.bf16.msra.mxu0 0
        %2964 = vmatprep.subr.bf16.mxu0 0
        %2965 = vmatpush1.bf16.msra.mxu0 0
        %2966 = vmatprep.subr.bf16.mxu0 0
        %2967 = vmatpush1.bf16.msra.mxu0 0
        %2968 = vmatprep.subr.bf16.mxu0 0
        %2969 = vmatpush1.bf16.msra.mxu0 0
        %2970 = vmatprep.subr.bf16.mxu0 0
        %2971 = vmatpush1.bf16.msra.mxu0 0
        %2972 = vmatprep.subr.bf16.mxu0 0
        %2973 = vmatpush1.bf16.msra.mxu0 0
        %2974 = vmatprep.subr.bf16.mxu0 0
        %2975 = vmatpush1.bf16.msra.mxu0 0
        %2976 = vmatprep.subr.bf16.mxu0 0
        %2977 = vmatpush1.bf16.msra.mxu0 0
        %2978 = vmatprep.subr.bf16.mxu0 0
        %2979 = vmatpush1.bf16.msra.mxu0 0
        %2980 = vmatprep.mubr.bf16.mxu0 0
        %2981 = vmatmul.mubr.bf16.gmra.mrb[0].mxu0 %v2946
        %v2982 = vpop.f32.mrb[0].mxu0
        %v2983 = vadd.f32 0.0, %v2982
        %v2984 = vpop.f32.mrb[0].mxu0
        %v2985 = vpop.f32.mrb[0].mxu0
        %v2986 = vpop.f32.mrb[0].mxu0
        %2987 = vdwg.mxu0
        %v2988 = vadd.f32 %v2899, %v2983
        %v2989 = vadd.f32 %v2988, %v1055
        %v2990 = vmax.f32 %v2989, 0.0
        %v2991 = vpack.c.bf16 %v2990, %v2990
        %2993 = vrot.lane.b32.xlu0 %v1059, 32
        %v2994 = vpop.permute.xlu0 %2993
        %2996 = vrot.lane.b32.xlu0 %v1335, 64
        %v2997 = vpop.permute.xlu0 %2996
        %vm2998 = vcmask 261120
        %v3000 = vsel %vm2998, 0, %v2994
        %vm3001 = vcmask 523264
        %v3003 = vsel %vm3001, %v3000, %v2997
        %v3004 = vsel %vm749, %v723, 0
        %vm3006 = vcmask 1043456
        %v3007 = vsel %vm3006, %v3003, 0
        %3009 = vmatprep.subr.bf16.mxu0 0
        %3010 = vmatpush1.bf16.msra.mxu0 %v3007
        %3011 = vmatprep.subr.bf16.mxu0 0
        %3012 = vmatpush1.bf16.msra.mxu0 0
        %3013 = vmatprep.subr.bf16.mxu0 0
        %3014 = vmatpush1.bf16.msra.mxu0 0
        %3015 = vmatprep.subr.bf16.mxu0 0
        %3016 = vmatpush1.bf16.msra.mxu0 0
        %3017 = vmatprep.subr.bf16.mxu0 0
        %3018 = vmatpush1.bf16.msra.mxu0 0
        %3019 = vmatprep.subr.bf16.mxu0 0
        %3020 = vmatpush1.bf16.msra.mxu0 0
        %3021 = vmatprep.subr.bf16.mxu0 0
        %3022 = vmatpush1.bf16.msra.mxu0 0
        %3023 = vmatprep.subr.bf16.mxu0 0
        %3024 = vmatpush1.bf16.msra.mxu0 0
        %3025 = vmatprep.subr.bf16.mxu0 0
        %3026 = vmatpush1.bf16.msra.mxu0 0
        %3027 = vmatprep.subr.bf16.mxu0 0
        %3028 = vmatpush1.bf16.msra.mxu0 0
        %3029 = vmatprep.subr.bf16.mxu0 0
        %3030 = vmatpush1.bf16.msra.mxu0 0
        %3031 = vmatprep.subr.bf16.mxu0 0
        %3032 = vmatpush1.bf16.msra.mxu0 0
        %3033 = vmatprep.subr.bf16.mxu0 0
        %3034 = vmatpush1.bf16.msra.mxu0 0
        %3035 = vmatprep.subr.bf16.mxu0 0
        %3036 = vmatpush1.bf16.msra.mxu0 0
        %3037 = vmatprep.subr.bf16.mxu0 0
        %3038 = vmatpush1.bf16.msra.mxu0 0
        %3039 = vmatprep.subr.bf16.mxu0 0
        %3040 = vmatpush1.bf16.msra.mxu0 0
        %3041 = vmatprep.mubr.bf16.mxu0 0
        %3042 = vmatmul.mubr.bf16.gmra.mrb[0].mxu0 %v3004
        %v3043 = vpop.f32.mrb[0].mxu0
        %v3044 = vadd.f32 0.0, %v3043
        %v3045 = vpop.f32.mrb[0].mxu0
        %v3046 = vpop.f32.mrb[0].mxu0
        %v3047 = vpop.f32.mrb[0].mxu0
        %3048 = vdwg.mxu0
        %v3049 = vpack.c.bf16 %v3044, %v3044
        %v3050 = vld [vmem:[%s3] sm:$0xf]
        %v3051 = vld [vmem:[%s3 + $0x4] sm:$0xf]
        %v3052 = vld [vmem:[%s3 + $0x8] sm:$0xf]
        %v3053 = vld [vmem:[%s3 + $0xc] sm:$0xf]
        %v3054 = vld [vmem:[%s3 + $0x10] sm:$0xf]
        %v3055 = vld [vmem:[%s3 + $0x14] sm:$0xf]
        %v3056 = vld [vmem:[%s3 + $0x18] sm:$0xf]
        %v3057 = vld [vmem:[%s3 + $0x1c] sm:$0xf]
        %v3058 = vld [vmem:[%s3 + $0x20] sm:$0xf]
        %v3059 = vld [vmem:[%s3 + $0x24] sm:$0xf]
        %v3060 = vld [vmem:[%s3 + $0x28] sm:$0xf]
        %v3061 = vld [vmem:[%s3 + $0x2c] sm:$0xf]
        %v3062 = vsel %vm749, %v726, 0
        %3064 = vmatprep.subr.bf16.mxu0 0
        %3065 = vmatpush1.bf16.msra.mxu0 %v3007
        %3066 = vmatprep.subr.bf16.mxu0 0
        %3067 = vmatpush1.bf16.msra.mxu0 0
        %3068 = vmatprep.subr.bf16.mxu0 0
        %3069 = vmatpush1.bf16.msra.mxu0 0
        %3070 = vmatprep.subr.bf16.mxu0 0
        %3071 = vmatpush1.bf16.msra.mxu0 0
        %3072 = vmatprep.subr.bf16.mxu0 0
        %3073 = vmatpush1.bf16.msra.mxu0 0
        %3074 = vmatprep.subr.bf16.mxu0 0
        %3075 = vmatpush1.bf16.msra.mxu0 0
        %3076 = vmatprep.subr.bf16.mxu0 0
        %3077 = vmatpush1.bf16.msra.mxu0 0
        %3078 = vmatprep.subr.bf16.mxu0 0
        %3079 = vmatpush1.bf16.msra.mxu0 0
        %3080 = vmatprep.subr.bf16.mxu0 0
        %3081 = vmatpush1.bf16.msra.mxu0 0
        %3082 = vmatprep.subr.bf16.mxu0 0
        %3083 = vmatpush1.bf16.msra.mxu0 0
        %3084 = vmatprep.subr.bf16.mxu0 0
        %3085 = vmatpush1.bf16.msra.mxu0 0
        %3086 = vmatprep.subr.bf16.mxu0 0
        %3087 = vmatpush1.bf16.msra.mxu0 0
        %3088 = vmatprep.subr.bf16.mxu0 0
        %3089 = vmatpush1.bf16.msra.mxu0 0
        %3090 = vmatprep.subr.bf16.mxu0 0
        %3091 = vmatpush1.bf16.msra.mxu0 0
        %3092 = vmatprep.subr.bf16.mxu0 0
        %3093 = vmatpush1.bf16.msra.mxu0 0
        %3094 = vmatprep.subr.bf16.mxu0 0
        %3095 = vmatpush1.bf16.msra.mxu0 0
        %3096 = vmatprep.mubr.bf16.mxu0 0
        %3097 = vmatmul.mubr.bf16.gmra.mrb[0].mxu0 %v3062
        %v3098 = vpop.f32.mrb[0].mxu0
        %v3099 = vadd.f32 0.0, %v3098
        %v3100 = vpop.f32.mrb[0].mxu0
        %v3101 = vpop.f32.mrb[0].mxu0
        %v3102 = vpop.f32.mrb[0].mxu0
        %3103 = vdwg.mxu0
        %v3104 = vpack.c.bf16 %v3099, %v3099
        %s3105 = scalar_lea.vmem %s3, 48
        %v3106 = vld [vmem:[%s3105] sm:$0xf]
        %v3107 = vld [vmem:[%s3105 + $0x4] sm:$0xf]
        %v3108 = vld [vmem:[%s3105 + $0x8] sm:$0xf]
        %v3109 = vld [vmem:[%s3105 + $0xc] sm:$0xf]
        %v3110 = vld [vmem:[%s3105 + $0x10] sm:$0xf]
        %v3111 = vld [vmem:[%s3105 + $0x14] sm:$0xf]
        %v3112 = vld [vmem:[%s3105 + $0x18] sm:$0xf]
        %v3113 = vld [vmem:[%s3105 + $0x1c] sm:$0xf]
        %v3114 = vld [vmem:[%s3105 + $0x20] sm:$0xf]
        %v3115 = vld [vmem:[%s3105 + $0x24] sm:$0xf]
        %v3116 = vld [vmem:[%s3105 + $0x28] sm:$0xf]
        %v3117 = vld [vmem:[%s3105 + $0x2c] sm:$0xf]
        %v3130 = vunpack.c.l.b16 %v3106
        %v3131 = vunpack.c.l.b16 %v3107
        %v3132 = vunpack.c.l.b16 %v3108
        %v3133 = vunpack.c.l.b16 %v3109
        %v3134 = vunpack.c.l.b16 %v3110
        %v3135 = vunpack.c.l.b16 %v3111
        %v3136 = vunpack.c.l.b16 %v3112
        %v3137 = vunpack.c.l.b16 %v3113
        %v3138 = vunpack.c.l.b16 %v3114
        %v3139 = vunpack.c.l.b16 %v3115
        %v3140 = vunpack.c.l.b16 %v3116
        %v3141 = vunpack.c.l.b16 %v3117
        %v3142 = vpack.c.b16 %v3131, %v3130
        %v3143 = vpack.c.b16 %v3133, %v3132
        %v3144 = vpack.c.b16 %v3135, %v3134
        %v3145 = vpack.c.b16 %v3137, %v3136
        %v3146 = vpack.c.b16 %v3139, %v3138
        %v3147 = vpack.c.b16 %v3141, %v3140
        %vm3154 = vcmask 785408
        %v3156 = vsel %vm3154, %v3104, 0
        %3158 = vmatprep.subr.bf16.mxu0 0
        %3159 = vmatpush1.bf16.msra.mxu0 %v3142
        %3160 = vmatprep.subr.bf16.mxu0 0
        %3161 = vmatpush1.bf16.msra.mxu0 %v3143
        %3162 = vmatprep.subr.bf16.mxu0 0
        %3163 = vmatpush1.bf16.msra.mxu0 %v3144
        %3164 = vmatprep.subr.bf16.mxu0 0
        %3165 = vmatpush1.bf16.msra.mxu0 %v3145
        %3166 = vmatprep.subr.bf16.mxu0 0
        %3167 = vmatpush1.bf16.msra.mxu0 %v3146
        %3168 = vmatprep.subr.bf16.mxu0 0
        %3169 = vmatpush1.bf16.msra.mxu0 %v3147
        %3170 = vmatprep.subr.bf16.mxu0 0
        %3171 = vmatpush1.bf16.msra.mxu0 0
        %3172 = vmatprep.subr.bf16.mxu0 0
        %3173 = vmatpush1.bf16.msra.mxu0 0
        %3174 = vmatprep.subr.bf16.mxu0 0
        %3175 = vmatpush1.bf16.msra.mxu0 0
        %3176 = vmatprep.subr.bf16.mxu0 0
        %3177 = vmatpush1.bf16.msra.mxu0 0
        %3178 = vmatprep.subr.bf16.mxu0 0
        %3179 = vmatpush1.bf16.msra.mxu0 0
        %3180 = vmatprep.subr.bf16.mxu0 0
        %3181 = vmatpush1.bf16.msra.mxu0 0
        %3182 = vmatprep.subr.bf16.mxu0 0
        %3183 = vmatpush1.bf16.msra.mxu0 0
        %3184 = vmatprep.subr.bf16.mxu0 0
        %3185 = vmatpush1.bf16.msra.mxu0 0
        %3186 = vmatprep.subr.bf16.mxu0 0
        %3187 = vmatpush1.bf16.msra.mxu0 0
        %3188 = vmatprep.subr.bf16.mxu0 0
        %3189 = vmatpush1.bf16.msra.mxu0 0
        %3190 = vmatprep.mubr.bf16.mxu0 0
        %3191 = vmatmul.mubr.bf16.gmra.mrb[0].mxu0 %v3156
        %v3192 = vpop.f32.mrb[0].mxu0
        %v3193 = vadd.f32 0.0, %v3192
        %v3194 = vpop.f32.mrb[0].mxu0
        %v3195 = vpop.f32.mrb[0].mxu0
        %v3196 = vpop.f32.mrb[0].mxu0
        %3197 = vdwg.mxu0
        %v3210 = vunpack.c.l.b16 %v3050
        %v3211 = vunpack.c.l.b16 %v3051
        %v3212 = vunpack.c.l.b16 %v3052
        %v3213 = vunpack.c.l.b16 %v3053
        %v3214 = vunpack.c.l.b16 %v3054
        %v3215 = vunpack.c.l.b16 %v3055
        %v3216 = vunpack.c.l.b16 %v3056
        %v3217 = vunpack.c.l.b16 %v3057
        %v3218 = vunpack.c.l.b16 %v3058
        %v3219 = vunpack.c.l.b16 %v3059
        %v3220 = vunpack.c.l.b16 %v3060
        %v3221 = vunpack.c.l.b16 %v3061
        %v3222 = vpack.c.b16 %v3211, %v3210
        %v3223 = vpack.c.b16 %v3213, %v3212
        %v3224 = vpack.c.b16 %v3215, %v3214
        %v3225 = vpack.c.b16 %v3217, %v3216
        %v3226 = vpack.c.b16 %v3219, %v3218
        %v3227 = vpack.c.b16 %v3221, %v3220
        %v3235 = vsel %vm3154, %v3049, 0
        %3237 = vmatprep.subr.bf16.mxu0 0
        %3238 = vmatpush1.bf16.msra.mxu0 %v3222
        %3239 = vmatprep.subr.bf16.mxu0 0
        %3240 = vmatpush1.bf16.msra.mxu0 %v3223
        %3241 = vmatprep.subr.bf16.mxu0 0
        %3242 = vmatpush1.bf16.msra.mxu0 %v3224
        %3243 = vmatprep.subr.bf16.mxu0 0
        %3244 = vmatpush1.bf16.msra.mxu0 %v3225
        %3245 = vmatprep.subr.bf16.mxu0 0
        %3246 = vmatpush1.bf16.msra.mxu0 %v3226
        %3247 = vmatprep.subr.bf16.mxu0 0
        %3248 = vmatpush1.bf16.msra.mxu0 %v3227
        %3249 = vmatprep.subr.bf16.mxu0 0
        %3250 = vmatpush1.bf16.msra.mxu0 0
        %3251 = vmatprep.subr.bf16.mxu0 0
        %3252 = vmatpush1.bf16.msra.mxu0 0
        %3253 = vmatprep.subr.bf16.mxu0 0
        %3254 = vmatpush1.bf16.msra.mxu0 0
        %3255 = vmatprep.subr.bf16.mxu0 0
        %3256 = vmatpush1.bf16.msra.mxu0 0
        %3257 = vmatprep.subr.bf16.mxu0 0
        %3258 = vmatpush1.bf16.msra.mxu0 0
        %3259 = vmatprep.subr.bf16.mxu0 0
        %3260 = vmatpush1.bf16.msra.mxu0 0
        %3261 = vmatprep.subr.bf16.mxu0 0
        %3262 = vmatpush1.bf16.msra.mxu0 0
        %3263 = vmatprep.subr.bf16.mxu0 0
        %3264 = vmatpush1.bf16.msra.mxu0 0
        %3265 = vmatprep.subr.bf16.mxu0 0
        %3266 = vmatpush1.bf16.msra.mxu0 0
        %3267 = vmatprep.subr.bf16.mxu0 0
        %3268 = vmatpush1.bf16.msra.mxu0 0
        %3269 = vmatprep.mubr.bf16.mxu0 0
        %3270 = vmatmul.mubr.bf16.gmra.mrb[0].mxu0 %v3235
        %v3271 = vpop.f32.mrb[0].mxu0
        %v3272 = vadd.f32 %v3193, %v3271
        %v3273 = vpop.f32.mrb[0].mxu0
        %v3274 = vpop.f32.mrb[0].mxu0
        %v3275 = vpop.f32.mrb[0].mxu0
        %3276 = vdwg.mxu0
        %v3277 = vsel %vm749, %v730, 0
        %3279 = vmatprep.subr.bf16.mxu0 0
        %3280 = vmatpush1.bf16.msra.mxu0 %v3007
        %3281 = vmatprep.subr.bf16.mxu0 0
        %3282 = vmatpush1.bf16.msra.mxu0 0
        %3283 = vmatprep.subr.bf16.mxu0 0
        %3284 = vmatpush1.bf16.msra.mxu0 0
        %3285 = vmatprep.subr.bf16.mxu0 0
        %3286 = vmatpush1.bf16.msra.mxu0 0
        %3287 = vmatprep.subr.bf16.mxu0 0
        %3288 = vmatpush1.bf16.msra.mxu0 0
        %3289 = vmatprep.subr.bf16.mxu0 0
        %3290 = vmatpush1.bf16.msra.mxu0 0
        %3291 = vmatprep.subr.bf16.mxu0 0
        %3292 = vmatpush1.bf16.msra.mxu0 0
        %3293 = vmatprep.subr.bf16.mxu0 0
        %3294 = vmatpush1.bf16.msra.mxu0 0
        %3295 = vmatprep.subr.bf16.mxu0 0
        %3296 = vmatpush1.bf16.msra.mxu0 0
        %3297 = vmatprep.subr.bf16.mxu0 0
        %3298 = vmatpush1.bf16.msra.mxu0 0
        %3299 = vmatprep.subr.bf16.mxu0 0
        %3300 = vmatpush1.bf16.msra.mxu0 0
        %3301 = vmatprep.subr.bf16.mxu0 0
        %3302 = vmatpush1.bf16.msra.mxu0 0
        %3303 = vmatprep.subr.bf16.mxu0 0
        %3304 = vmatpush1.bf16.msra.mxu0 0
        %3305 = vmatprep.subr.bf16.mxu0 0
        %3306 = vmatpush1.bf16.msra.mxu0 0
        %3307 = vmatprep.subr.bf16.mxu0 0
        %3308 = vmatpush1.bf16.msra.mxu0 0
        %3309 = vmatprep.subr.bf16.mxu0 0
        %3310 = vmatpush1.bf16.msra.mxu0 0
        %3311 = vmatprep.mubr.bf16.mxu0 0
        %3312 = vmatmul.mubr.bf16.gmra.mrb[0].mxu0 %v3277
        %v3313 = vpop.f32.mrb[0].mxu0
        %v3314 = vadd.f32 0.0, %v3313
        %v3315 = vpop.f32.mrb[0].mxu0
        %v3316 = vpop.f32.mrb[0].mxu0
        %v3317 = vpop.f32.mrb[0].mxu0
        %3318 = vdwg.mxu0
        %v3319 = vpack.c.bf16 %v3314, %v3314
        %s3320 = scalar_lea.vmem %s3, 96
        %v3321 = vld [vmem:[%s3320] sm:$0xf]
        %v3322 = vld [vmem:[%s3320 + $0x4] sm:$0xf]
        %v3323 = vld [vmem:[%s3320 + $0x8] sm:$0xf]
        %v3324 = vld [vmem:[%s3320 + $0xc] sm:$0xf]
        %v3325 = vld [vmem:[%s3320 + $0x10] sm:$0xf]
        %v3326 = vld [vmem:[%s3320 + $0x14] sm:$0xf]
        %v3327 = vld [vmem:[%s3320 + $0x18] sm:$0xf]
        %v3328 = vld [vmem:[%s3320 + $0x1c] sm:$0xf]
        %v3329 = vld [vmem:[%s3320 + $0x20] sm:$0xf]
        %v3330 = vld [vmem:[%s3320 + $0x24] sm:$0xf]
        %v3331 = vld [vmem:[%s3320 + $0x28] sm:$0xf]
        %v3332 = vld [vmem:[%s3320 + $0x2c] sm:$0xf]
        %v3345 = vunpack.c.l.b16 %v3321
        %v3346 = vunpack.c.l.b16 %v3322
        %v3347 = vunpack.c.l.b16 %v3323
        %v3348 = vunpack.c.l.b16 %v3324
        %v3349 = vunpack.c.l.b16 %v3325
        %v3350 = vunpack.c.l.b16 %v3326
        %v3351 = vunpack.c.l.b16 %v3327
        %v3352 = vunpack.c.l.b16 %v3328
        %v3353 = vunpack.c.l.b16 %v3329
        %v3354 = vunpack.c.l.b16 %v3330
        %v3355 = vunpack.c.l.b16 %v3331
        %v3356 = vunpack.c.l.b16 %v3332
        %v3357 = vpack.c.b16 %v3346, %v3345
        %v3358 = vpack.c.b16 %v3348, %v3347
        %v3359 = vpack.c.b16 %v3350, %v3349
        %v3360 = vpack.c.b16 %v3352, %v3351
        %v3361 = vpack.c.b16 %v3354, %v3353
        %v3362 = vpack.c.b16 %v3356, %v3355
        %v3370 = vsel %vm3154, %v3319, 0
        %3372 = vmatprep.subr.bf16.mxu0 0
        %3373 = vmatpush1.bf16.msra.mxu0 %v3357
        %3374 = vmatprep.subr.bf16.mxu0 0
        %3375 = vmatpush1.bf16.msra.mxu0 %v3358
        %3376 = vmatprep.subr.bf16.mxu0 0
        %3377 = vmatpush1.bf16.msra.mxu0 %v3359
        %3378 = vmatprep.subr.bf16.mxu0 0
        %3379 = vmatpush1.bf16.msra.mxu0 %v3360
        %3380 = vmatprep.subr.bf16.mxu0 0
        %3381 = vmatpush1.bf16.msra.mxu0 %v3361
        %3382 = vmatprep.subr.bf16.mxu0 0
        %3383 = vmatpush1.bf16.msra.mxu0 %v3362
        %3384 = vmatprep.subr.bf16.mxu0 0
        %3385 = vmatpush1.bf16.msra.mxu0 0
        %3386 = vmatprep.subr.bf16.mxu0 0
        %3387 = vmatpush1.bf16.msra.mxu0 0
        %3388 = vmatprep.subr.bf16.mxu0 0
        %3389 = vmatpush1.bf16.msra.mxu0 0
        %3390 = vmatprep.subr.bf16.mxu0 0
        %3391 = vmatpush1.bf16.msra.mxu0 0
        %3392 = vmatprep.subr.bf16.mxu0 0
        %3393 = vmatpush1.bf16.msra.mxu0 0
        %3394 = vmatprep.subr.bf16.mxu0 0
        %3395 = vmatpush1.bf16.msra.mxu0 0
        %3396 = vmatprep.subr.bf16.mxu0 0
        %3397 = vmatpush1.bf16.msra.mxu0 0
        %3398 = vmatprep.subr.bf16.mxu0 0
        %3399 = vmatpush1.bf16.msra.mxu0 0
        %3400 = vmatprep.subr.bf16.mxu0 0
        %3401 = vmatpush1.bf16.msra.mxu0 0
        %3402 = vmatprep.subr.bf16.mxu0 0
        %3403 = vmatpush1.bf16.msra.mxu0 0
        %3404 = vmatprep.mubr.bf16.mxu0 0
        %3405 = vmatmul.mubr.bf16.gmra.mrb[0].mxu0 %v3370
        %v3406 = vpop.f32.mrb[0].mxu0
        %v3407 = vadd.f32 0.0, %v3406
        %v3408 = vpop.f32.mrb[0].mxu0
        %v3409 = vpop.f32.mrb[0].mxu0
        %v3410 = vpop.f32.mrb[0].mxu0
        %3411 = vdwg.mxu0
        %v3412 = vadd.f32 %v3272, %v3407
        %v3413 = vld [vmem:[%s4] sm:$0x1]
        %v3415 = vlaneseq
        %v3416 = vshrl.u32 %v3415, 7
        %v3417 = vsub.s32 0, %v3416
        %v3418 = vrot.slane %v3413, %v3417
        %v3420 = vadd.f32 %v3412, %v3418
        %v3421 = vmax.f32 %v3420, 0.0
        %v3422 = vpack.c.bf16 %v3421, %v3421
        %3424 = vrot.lane.b32.xlu0 %v1611, 32
        %v3425 = vpop.permute.xlu0 %3424
        %3427 = vrot.lane.b32.xlu0 %v1887, 64
        %v3428 = vpop.permute.xlu0 %3427
        %v3431 = vsel %vm2998, %v1335, %v3425
        %v3433 = vsel %vm3001, %v3431, %v3428
        %v3434 = vsel %vm3006, %v3433, 0
        %3436 = vmatprep.subr.bf16.mxu0 0
        %3437 = vmatpush1.bf16.msra.mxu0 %v3434
        %3438 = vmatprep.subr.bf16.mxu0 0
        %3439 = vmatpush1.bf16.msra.mxu0 0
        %3440 = vmatprep.subr.bf16.mxu0 0
        %3441 = vmatpush1.bf16.msra.mxu0 0
        %3442 = vmatprep.subr.bf16.mxu0 0
        %3443 = vmatpush1.bf16.msra.mxu0 0
        %3444 = vmatprep.subr.bf16.mxu0 0
        %3445 = vmatpush1.bf16.msra.mxu0 0
        %3446 = vmatprep.subr.bf16.mxu0 0
        %3447 = vmatpush1.bf16.msra.mxu0 0
        %3448 = vmatprep.subr.bf16.mxu0 0
        %3449 = vmatpush1.bf16.msra.mxu0 0
        %3450 = vmatprep.subr.bf16.mxu0 0
        %3451 = vmatpush1.bf16.msra.mxu0 0
        %3452 = vmatprep.subr.bf16.mxu0 0
        %3453 = vmatpush1.bf16.msra.mxu0 0
        %3454 = vmatprep.subr.bf16.mxu0 0
        %3455 = vmatpush1.bf16.msra.mxu0 0
        %3456 = vmatprep.subr.bf16.mxu0 0
        %3457 = vmatpush1.bf16.msra.mxu0 0
        %3458 = vmatprep.subr.bf16.mxu0 0
        %3459 = vmatpush1.bf16.msra.mxu0 0
        %3460 = vmatprep.subr.bf16.mxu0 0
        %3461 = vmatpush1.bf16.msra.mxu0 0
        %3462 = vmatprep.subr.bf16.mxu0 0
        %3463 = vmatpush1.bf16.msra.mxu0 0
        %3464 = vmatprep.subr.bf16.mxu0 0
        %3465 = vmatpush1.bf16.msra.mxu0 0
        %3466 = vmatprep.subr.bf16.mxu0 0
        %3467 = vmatpush1.bf16.msra.mxu0 0
        %3468 = vmatprep.mubr.bf16.mxu0 0
        %3469 = vmatmul.mubr.bf16.gmra.mrb[0].mxu0 %v3004
        %v3470 = vpop.f32.mrb[0].mxu0
        %v3471 = vadd.f32 0.0, %v3470
        %v3472 = vpop.f32.mrb[0].mxu0
        %v3473 = vpop.f32.mrb[0].mxu0
        %v3474 = vpop.f32.mrb[0].mxu0
        %3475 = vdwg.mxu0
        %v3476 = vpack.c.bf16 %v3471, %v3471
        %3477 = vmatprep.subr.bf16.mxu0 0
        %3478 = vmatpush1.bf16.msra.mxu0 %v3434
        %3479 = vmatprep.subr.bf16.mxu0 0
        %3480 = vmatpush1.bf16.msra.mxu0 0
        %3481 = vmatprep.subr.bf16.mxu0 0
        %3482 = vmatpush1.bf16.msra.mxu0 0
        %3483 = vmatprep.subr.bf16.mxu0 0
        %3484 = vmatpush1.bf16.msra.mxu0 0
        %3485 = vmatprep.subr.bf16.mxu0 0
        %3486 = vmatpush1.bf16.msra.mxu0 0
        %3487 = vmatprep.subr.bf16.mxu0 0
        %3488 = vmatpush1.bf16.msra.mxu0 0
        %3489 = vmatprep.subr.bf16.mxu0 0
        %3490 = vmatpush1.bf16.msra.mxu0 0
        %3491 = vmatprep.subr.bf16.mxu0 0
        %3492 = vmatpush1.bf16.msra.mxu0 0
        %3493 = vmatprep.subr.bf16.mxu0 0
        %3494 = vmatpush1.bf16.msra.mxu0 0
        %3495 = vmatprep.subr.bf16.mxu0 0
        %3496 = vmatpush1.bf16.msra.mxu0 0
        %3497 = vmatprep.subr.bf16.mxu0 0
        %3498 = vmatpush1.bf16.msra.mxu0 0
        %3499 = vmatprep.subr.bf16.mxu0 0
        %3500 = vmatpush1.bf16.msra.mxu0 0
        %3501 = vmatprep.subr.bf16.mxu0 0
        %3502 = vmatpush1.bf16.msra.mxu0 0
        %3503 = vmatprep.subr.bf16.mxu0 0
        %3504 = vmatpush1.bf16.msra.mxu0 0
        %3505 = vmatprep.subr.bf16.mxu0 0
        %3506 = vmatpush1.bf16.msra.mxu0 0
        %3507 = vmatprep.subr.bf16.mxu0 0
        %3508 = vmatpush1.bf16.msra.mxu0 0
        %3509 = vmatprep.mubr.bf16.mxu0 0
        %3510 = vmatmul.mubr.bf16.gmra.mrb[0].mxu0 %v3062
        %v3511 = vpop.f32.mrb[0].mxu0
        %v3512 = vadd.f32 0.0, %v3511
        %v3513 = vpop.f32.mrb[0].mxu0
        %v3514 = vpop.f32.mrb[0].mxu0
        %v3515 = vpop.f32.mrb[0].mxu0
        %3516 = vdwg.mxu0
        %v3517 = vpack.c.bf16 %v3512, %v3512
        %v3519 = vsel %vm3154, %v3517, 0
        %3521 = vmatprep.subr.bf16.mxu0 0
        %3522 = vmatpush1.bf16.msra.mxu0 %v3142
        %3523 = vmatprep.subr.bf16.mxu0 0
        %3524 = vmatpush1.bf16.msra.mxu0 %v3143
        %3525 = vmatprep.subr.bf16.mxu0 0
        %3526 = vmatpush1.bf16.msra.mxu0 %v3144
        %3527 = vmatprep.subr.bf16.mxu0 0
        %3528 = vmatpush1.bf16.msra.mxu0 %v3145
        %3529 = vmatprep.subr.bf16.mxu0 0
        %3530 = vmatpush1.bf16.msra.mxu0 %v3146
        %3531 = vmatprep.subr.bf16.mxu0 0
        %3532 = vmatpush1.bf16.msra.mxu0 %v3147
        %3533 = vmatprep.subr.bf16.mxu0 0
        %3534 = vmatpush1.bf16.msra.mxu0 0
        %3535 = vmatprep.subr.bf16.mxu0 0
        %3536 = vmatpush1.bf16.msra.mxu0 0
        %3537 = vmatprep.subr.bf16.mxu0 0
        %3538 = vmatpush1.bf16.msra.mxu0 0
        %3539 = vmatprep.subr.bf16.mxu0 0
        %3540 = vmatpush1.bf16.msra.mxu0 0
        %3541 = vmatprep.subr.bf16.mxu0 0
        %3542 = vmatpush1.bf16.msra.mxu0 0
        %3543 = vmatprep.subr.bf16.mxu0 0
        %3544 = vmatpush1.bf16.msra.mxu0 0
        %3545 = vmatprep.subr.bf16.mxu0 0
        %3546 = vmatpush1.bf16.msra.mxu0 0
        %3547 = vmatprep.subr.bf16.mxu0 0
        %3548 = vmatpush1.bf16.msra.mxu0 0
        %3549 = vmatprep.subr.bf16.mxu0 0
        %3550 = vmatpush1.bf16.msra.mxu0 0
        %3551 = vmatprep.subr.bf16.mxu0 0
        %3552 = vmatpush1.bf16.msra.mxu0 0
        %3553 = vmatprep.mubr.bf16.mxu0 0
        %3554 = vmatmul.mubr.bf16.gmra.mrb[0].mxu0 %v3519
        %v3555 = vpop.f32.mrb[0].mxu0
        %v3556 = vadd.f32 0.0, %v3555
        %v3557 = vpop.f32.mrb[0].mxu0
        %v3558 = vpop.f32.mrb[0].mxu0
        %v3559 = vpop.f32.mrb[0].mxu0
        %3560 = vdwg.mxu0
        %v3562 = vsel %vm3154, %v3476, 0
        %3564 = vmatprep.subr.bf16.mxu0 0
        %3565 = vmatpush1.bf16.msra.mxu0 %v3222
        %3566 = vmatprep.subr.bf16.mxu0 0
        %3567 = vmatpush1.bf16.msra.mxu0 %v3223
        %3568 = vmatprep.subr.bf16.mxu0 0
        %3569 = vmatpush1.bf16.msra.mxu0 %v3224
        %3570 = vmatprep.subr.bf16.mxu0 0
        %3571 = vmatpush1.bf16.msra.mxu0 %v3225
        %3572 = vmatprep.subr.bf16.mxu0 0
        %3573 = vmatpush1.bf16.msra.mxu0 %v3226
        %3574 = vmatprep.subr.bf16.mxu0 0
        %3575 = vmatpush1.bf16.msra.mxu0 %v3227
        %3576 = vmatprep.subr.bf16.mxu0 0
        %3577 = vmatpush1.bf16.msra.mxu0 0
        %3578 = vmatprep.subr.bf16.mxu0 0
        %3579 = vmatpush1.bf16.msra.mxu0 0
        %3580 = vmatprep.subr.bf16.mxu0 0
        %3581 = vmatpush1.bf16.msra.mxu0 0
        %3582 = vmatprep.subr.bf16.mxu0 0
        %3583 = vmatpush1.bf16.msra.mxu0 0
        %3584 = vmatprep.subr.bf16.mxu0 0
        %3585 = vmatpush1.bf16.msra.mxu0 0
        %3586 = vmatprep.subr.bf16.mxu0 0
        %3587 = vmatpush1.bf16.msra.mxu0 0
        %3588 = vmatprep.subr.bf16.mxu0 0
        %3589 = vmatpush1.bf16.msra.mxu0 0
        %3590 = vmatprep.subr.bf16.mxu0 0
        %3591 = vmatpush1.bf16.msra.mxu0 0
        %3592 = vmatprep.subr.bf16.mxu0 0
        %3593 = vmatpush1.bf16.msra.mxu0 0
        %3594 = vmatprep.subr.bf16.mxu0 0
        %3595 = vmatpush1.bf16.msra.mxu0 0
        %3596 = vmatprep.mubr.bf16.mxu0 0
        %3597 = vmatmul.mubr.bf16.gmra.mrb[0].mxu0 %v3562
        %v3598 = vpop.f32.mrb[0].mxu0
        %v3599 = vadd.f32 %v3556, %v3598
        %v3600 = vpop.f32.mrb[0].mxu0
        %v3601 = vpop.f32.mrb[0].mxu0
        %v3602 = vpop.f32.mrb[0].mxu0
        %3603 = vdwg.mxu0
        %3604 = vmatprep.subr.bf16.mxu0 0
        %3605 = vmatpush1.bf16.msra.mxu0 %v3434
        %3606 = vmatprep.subr.bf16.mxu0 0
        %3607 = vmatpush1.bf16.msra.mxu0 0
        %3608 = vmatprep.subr.bf16.mxu0 0
        %3609 = vmatpush1.bf16.msra.mxu0 0
        %3610 = vmatprep.subr.bf16.mxu0 0
        %3611 = vmatpush1.bf16.msra.mxu0 0
        %3612 = vmatprep.subr.bf16.mxu0 0
        %3613 = vmatpush1.bf16.msra.mxu0 0
        %3614 = vmatprep.subr.bf16.mxu0 0
        %3615 = vmatpush1.bf16.msra.mxu0 0
        %3616 = vmatprep.subr.bf16.mxu0 0
        %3617 = vmatpush1.bf16.msra.mxu0 0
        %3618 = vmatprep.subr.bf16.mxu0 0
        %3619 = vmatpush1.bf16.msra.mxu0 0
        %3620 = vmatprep.subr.bf16.mxu0 0
        %3621 = vmatpush1.bf16.msra.mxu0 0
        %3622 = vmatprep.subr.bf16.mxu0 0
        %3623 = vmatpush1.bf16.msra.mxu0 0
        %3624 = vmatprep.subr.bf16.mxu0 0
        %3625 = vmatpush1.bf16.msra.mxu0 0
        %3626 = vmatprep.subr.bf16.mxu0 0
        %3627 = vmatpush1.bf16.msra.mxu0 0
        %3628 = vmatprep.subr.bf16.mxu0 0
        %3629 = vmatpush1.bf16.msra.mxu0 0
        %3630 = vmatprep.subr.bf16.mxu0 0
        %3631 = vmatpush1.bf16.msra.mxu0 0
        %3632 = vmatprep.subr.bf16.mxu0 0
        %3633 = vmatpush1.bf16.msra.mxu0 0
        %3634 = vmatprep.subr.bf16.mxu0 0
        %3635 = vmatpush1.bf16.msra.mxu0 0
        %3636 = vmatprep.mubr.bf16.mxu0 0
        %3637 = vmatmul.mubr.bf16.gmra.mrb[0].mxu0 %v3277
        %v3638 = vpop.f32.mrb[0].mxu0
        %v3639 = vadd.f32 0.0, %v3638
        %v3640 = vpop.f32.mrb[0].mxu0
        %v3641 = vpop.f32.mrb[0].mxu0
        %v3642 = vpop.f32.mrb[0].mxu0
        %3643 = vdwg.mxu0
        %v3644 = vpack.c.bf16 %v3639, %v3639
        %v3646 = vsel %vm3154, %v3644, 0
        %3648 = vmatprep.subr.bf16.mxu0 0
        %3649 = vmatpush1.bf16.msra.mxu0 %v3357
        %3650 = vmatprep.subr.bf16.mxu0 0
        %3651 = vmatpush1.bf16.msra.mxu0 %v3358
        %3652 = vmatprep.subr.bf16.mxu0 0
        %3653 = vmatpush1.bf16.msra.mxu0 %v3359
        %3654 = vmatprep.subr.bf16.mxu0 0
        %3655 = vmatpush1.bf16.msra.mxu0 %v3360
        %3656 = vmatprep.subr.bf16.mxu0 0
        %3657 = vmatpush1.bf16.msra.mxu0 %v3361
        %3658 = vmatprep.subr.bf16.mxu0 0
        %3659 = vmatpush1.bf16.msra.mxu0 %v3362
        %3660 = vmatprep.subr.bf16.mxu0 0
        %3661 = vmatpush1.bf16.msra.mxu0 0
        %3662 = vmatprep.subr.bf16.mxu0 0
        %3663 = vmatpush1.bf16.msra.mxu0 0
        %3664 = vmatprep.subr.bf16.mxu0 0
        %3665 = vmatpush1.bf16.msra.mxu0 0
        %3666 = vmatprep.subr.bf16.mxu0 0
        %3667 = vmatpush1.bf16.msra.mxu0 0
        %3668 = vmatprep.subr.bf16.mxu0 0
        %3669 = vmatpush1.bf16.msra.mxu0 0
        %3670 = vmatprep.subr.bf16.mxu0 0
        %3671 = vmatpush1.bf16.msra.mxu0 0
        %3672 = vmatprep.subr.bf16.mxu0 0
        %3673 = vmatpush1.bf16.msra.mxu0 0
        %3674 = vmatprep.subr.bf16.mxu0 0
        %3675 = vmatpush1.bf16.msra.mxu0 0
        %3676 = vmatprep.subr.bf16.mxu0 0
        %3677 = vmatpush1.bf16.msra.mxu0 0
        %3678 = vmatprep.subr.bf16.mxu0 0
        %3679 = vmatpush1.bf16.msra.mxu0 0
        %3680 = vmatprep.mubr.bf16.mxu0 0
        %3681 = vmatmul.mubr.bf16.gmra.mrb[0].mxu0 %v3646
        %v3682 = vpop.f32.mrb[0].mxu0
        %v3683 = vadd.f32 0.0, %v3682
        %v3684 = vpop.f32.mrb[0].mxu0
        %v3685 = vpop.f32.mrb[0].mxu0
        %v3686 = vpop.f32.mrb[0].mxu0
        %3687 = vdwg.mxu0
        %v3688 = vadd.f32 %v3599, %v3683
        %v3689 = vadd.f32 %v3688, %v3418
        %v3690 = vmax.f32 %v3689, 0.0
        %v3691 = vpack.c.bf16 %v3690, %v3690
        %3693 = vrot.lane.b32.xlu0 %v2163, 32
        %v3694 = vpop.permute.xlu0 %3693
        %3696 = vrot.lane.b32.xlu0 %v2439, 64
        %v3697 = vpop.permute.xlu0 %3696
        %v3700 = vsel %vm2998, %v1887, %v3694
        %v3702 = vsel %vm3001, %v3700, %v3697
        %v3703 = vsel %vm3006, %v3702, 0
        %3705 = vmatprep.subr.bf16.mxu0 0
        %3706 = vmatpush1.bf16.msra.mxu0 %v3703
        %3707 = vmatprep.subr.bf16.mxu0 0
        %3708 = vmatpush1.bf16.msra.mxu0 0
        %3709 = vmatprep.subr.bf16.mxu0 0
        %3710 = vmatpush1.bf16.msra.mxu0 0
        %3711 = vmatprep.subr.bf16.mxu0 0
        %3712 = vmatpush1.bf16.msra.mxu0 0
        %3713 = vmatprep.subr.bf16.mxu0 0
        %3714 = vmatpush1.bf16.msra.mxu0 0
        %3715 = vmatprep.subr.bf16.mxu0 0
        %3716 = vmatpush1.bf16.msra.mxu0 0
        %3717 = vmatprep.subr.bf16.mxu0 0
        %3718 = vmatpush1.bf16.msra.mxu0 0
        %3719 = vmatprep.subr.bf16.mxu0 0
        %3720 = vmatpush1.bf16.msra.mxu0 0
        %3721 = vmatprep.subr.bf16.mxu0 0
        %3722 = vmatpush1.bf16.msra.mxu0 0
        %3723 = vmatprep.subr.bf16.mxu0 0
        %3724 = vmatpush1.bf16.msra.mxu0 0
        %3725 = vmatprep.subr.bf16.mxu0 0
        %3726 = vmatpush1.bf16.msra.mxu0 0
        %3727 = vmatprep.subr.bf16.mxu0 0
        %3728 = vmatpush1.bf16.msra.mxu0 0
        %3729 = vmatprep.subr.bf16.mxu0 0
        %3730 = vmatpush1.bf16.msra.mxu0 0
        %3731 = vmatprep.subr.bf16.mxu0 0
        %3732 = vmatpush1.bf16.msra.mxu0 0
        %3733 = vmatprep.subr.bf16.mxu0 0
        %3734 = vmatpush1.bf16.msra.mxu0 0
        %3735 = vmatprep.subr.bf16.mxu0 0
        %3736 = vmatpush1.bf16.msra.mxu0 0
        %3737 = vmatprep.mubr.bf16.mxu0 0
        %3738 = vmatmul.mubr.bf16.gmra.mrb[0].mxu0 %v3004
        %v3739 = vpop.f32.mrb[0].mxu0
        %v3740 = vadd.f32 0.0, %v3739
        %v3741 = vpop.f32.mrb[0].mxu0
        %v3742 = vpop.f32.mrb[0].mxu0
        %v3743 = vpop.f32.mrb[0].mxu0
        %3744 = vdwg.mxu0
        %v3745 = vpack.c.bf16 %v3740, %v3740
        %3746 = vmatprep.subr.bf16.mxu0 0
        %3747 = vmatpush1.bf16.msra.mxu0 %v3703
        %3748 = vmatprep.subr.bf16.mxu0 0
        %3749 = vmatpush1.bf16.msra.mxu0 0
        %3750 = vmatprep.subr.bf16.mxu0 0
        %3751 = vmatpush1.bf16.msra.mxu0 0
        %3752 = vmatprep.subr.bf16.mxu0 0
        %3753 = vmatpush1.bf16.msra.mxu0 0
        %3754 = vmatprep.subr.bf16.mxu0 0
        %3755 = vmatpush1.bf16.msra.mxu0 0
        %3756 = vmatprep.subr.bf16.mxu0 0
        %3757 = vmatpush1.bf16.msra.mxu0 0
        %3758 = vmatprep.subr.bf16.mxu0 0
        %3759 = vmatpush1.bf16.msra.mxu0 0
        %3760 = vmatprep.subr.bf16.mxu0 0
        %3761 = vmatpush1.bf16.msra.mxu0 0
        %3762 = vmatprep.subr.bf16.mxu0 0
        %3763 = vmatpush1.bf16.msra.mxu0 0
        %3764 = vmatprep.subr.bf16.mxu0 0
        %3765 = vmatpush1.bf16.msra.mxu0 0
        %3766 = vmatprep.subr.bf16.mxu0 0
        %3767 = vmatpush1.bf16.msra.mxu0 0
        %3768 = vmatprep.subr.bf16.mxu0 0
        %3769 = vmatpush1.bf16.msra.mxu0 0
        %3770 = vmatprep.subr.bf16.mxu0 0
        %3771 = vmatpush1.bf16.msra.mxu0 0
        %3772 = vmatprep.subr.bf16.mxu0 0
        %3773 = vmatpush1.bf16.msra.mxu0 0
        %3774 = vmatprep.subr.bf16.mxu0 0
        %3775 = vmatpush1.bf16.msra.mxu0 0
        %3776 = vmatprep.subr.bf16.mxu0 0
        %3777 = vmatpush1.bf16.msra.mxu0 0
        %3778 = vmatprep.mubr.bf16.mxu0 0
        %3779 = vmatmul.mubr.bf16.gmra.mrb[0].mxu0 %v3062
        %v3780 = vpop.f32.mrb[0].mxu0
        %v3781 = vadd.f32 0.0, %v3780
        %v3782 = vpop.f32.mrb[0].mxu0
        %v3783 = vpop.f32.mrb[0].mxu0
        %v3784 = vpop.f32.mrb[0].mxu0
        %3785 = vdwg.mxu0
        %v3786 = vpack.c.bf16 %v3781, %v3781
        %v3788 = vsel %vm3154, %v3786, 0
        %3790 = vmatprep.subr.bf16.mxu0 0
        %3791 = vmatpush1.bf16.msra.mxu0 %v3142
        %3792 = vmatprep.subr.bf16.mxu0 0
        %3793 = vmatpush1.bf16.msra.mxu0 %v3143
        %3794 = vmatprep.subr.bf16.mxu0 0
        %3795 = vmatpush1.bf16.msra.mxu0 %v3144
        %3796 = vmatprep.subr.bf16.mxu0 0
        %3797 = vmatpush1.bf16.msra.mxu0 %v3145
        %3798 = vmatprep.subr.bf16.mxu0 0
        %3799 = vmatpush1.bf16.msra.mxu0 %v3146
        %3800 = vmatprep.subr.bf16.mxu0 0
        %3801 = vmatpush1.bf16.msra.mxu0 %v3147
        %3802 = vmatprep.subr.bf16.mxu0 0
        %3803 = vmatpush1.bf16.msra.mxu0 0
        %3804 = vmatprep.subr.bf16.mxu0 0
        %3805 = vmatpush1.bf16.msra.mxu0 0
        %3806 = vmatprep.subr.bf16.mxu0 0
        %3807 = vmatpush1.bf16.msra.mxu0 0
        %3808 = vmatprep.subr.bf16.mxu0 0
        %3809 = vmatpush1.bf16.msra.mxu0 0
        %3810 = vmatprep.subr.bf16.mxu0 0
        %3811 = vmatpush1.bf16.msra.mxu0 0
        %3812 = vmatprep.subr.bf16.mxu0 0
        %3813 = vmatpush1.bf16.msra.mxu0 0
        %3814 = vmatprep.subr.bf16.mxu0 0
        %3815 = vmatpush1.bf16.msra.mxu0 0
        %3816 = vmatprep.subr.bf16.mxu0 0
        %3817 = vmatpush1.bf16.msra.mxu0 0
        %3818 = vmatprep.subr.bf16.mxu0 0
        %3819 = vmatpush1.bf16.msra.mxu0 0
        %3820 = vmatprep.subr.bf16.mxu0 0
        %3821 = vmatpush1.bf16.msra.mxu0 0
        %3822 = vmatprep.mubr.bf16.mxu0 0
        %3823 = vmatmul.mubr.bf16.gmra.mrb[0].mxu0 %v3788
        %v3824 = vpop.f32.mrb[0].mxu0
        %v3825 = vadd.f32 0.0, %v3824
        %v3826 = vpop.f32.mrb[0].mxu0
        %v3827 = vpop.f32.mrb[0].mxu0
        %v3828 = vpop.f32.mrb[0].mxu0
        %3829 = vdwg.mxu0
        %v3831 = vsel %vm3154, %v3745, 0
        %3833 = vmatprep.subr.bf16.mxu0 0
        %3834 = vmatpush1.bf16.msra.mxu0 %v3222
        %3835 = vmatprep.subr.bf16.mxu0 0
        %3836 = vmatpush1.bf16.msra.mxu0 %v3223
        %3837 = vmatprep.subr.bf16.mxu0 0
        %3838 = vmatpush1.bf16.msra.mxu0 %v3224
        %3839 = vmatprep.subr.bf16.mxu0 0
        %3840 = vmatpush1.bf16.msra.mxu0 %v3225
        %3841 = vmatprep.subr.bf16.mxu0 0
        %3842 = vmatpush1.bf16.msra.mxu0 %v3226
        %3843 = vmatprep.subr.bf16.mxu0 0
        %3844 = vmatpush1.bf16.msra.mxu0 %v3227
        %3845 = vmatprep.subr.bf16.mxu0 0
        %3846 = vmatpush1.bf16.msra.mxu0 0
        %3847 = vmatprep.subr.bf16.mxu0 0
        %3848 = vmatpush1.bf16.msra.mxu0 0
        %3849 = vmatprep.subr.bf16.mxu0 0
        %3850 = vmatpush1.bf16.msra.mxu0 0
        %3851 = vmatprep.subr.bf16.mxu0 0
        %3852 = vmatpush1.bf16.msra.mxu0 0
        %3853 = vmatprep.subr.bf16.mxu0 0
        %3854 = vmatpush1.bf16.msra.mxu0 0
        %3855 = vmatprep.subr.bf16.mxu0 0
        %3856 = vmatpush1.bf16.msra.mxu0 0
        %3857 = vmatprep.subr.bf16.mxu0 0
        %3858 = vmatpush1.bf16.msra.mxu0 0
        %3859 = vmatprep.subr.bf16.mxu0 0
        %3860 = vmatpush1.bf16.msra.mxu0 0
        %3861 = vmatprep.subr.bf16.mxu0 0
        %3862 = vmatpush1.bf16.msra.mxu0 0
        %3863 = vmatprep.subr.bf16.mxu0 0
        %3864 = vmatpush1.bf16.msra.mxu0 0
        %3865 = vmatprep.mubr.bf16.mxu0 0
        %3866 = vmatmul.mubr.bf16.gmra.mrb[0].mxu0 %v3831
        %v3867 = vpop.f32.mrb[0].mxu0
        %v3868 = vadd.f32 %v3825, %v3867
        %v3869 = vpop.f32.mrb[0].mxu0
        %v3870 = vpop.f32.mrb[0].mxu0
        %v3871 = vpop.f32.mrb[0].mxu0
        %3872 = vdwg.mxu0
        %3873 = vmatprep.subr.bf16.mxu0 0
        %3874 = vmatpush1.bf16.msra.mxu0 %v3703
        %3875 = vmatprep.subr.bf16.mxu0 0
        %3876 = vmatpush1.bf16.msra.mxu0 0
        %3877 = vmatprep.subr.bf16.mxu0 0
        %3878 = vmatpush1.bf16.msra.mxu0 0
        %3879 = vmatprep.subr.bf16.mxu0 0
        %3880 = vmatpush1.bf16.msra.mxu0 0
        %3881 = vmatprep.subr.bf16.mxu0 0
        %3882 = vmatpush1.bf16.msra.mxu0 0
        %3883 = vmatprep.subr.bf16.mxu0 0
        %3884 = vmatpush1.bf16.msra.mxu0 0
        %3885 = vmatprep.subr.bf16.mxu0 0
        %3886 = vmatpush1.bf16.msra.mxu0 0
        %3887 = vmatprep.subr.bf16.mxu0 0
        %3888 = vmatpush1.bf16.msra.mxu0 0
        %3889 = vmatprep.subr.bf16.mxu0 0
        %3890 = vmatpush1.bf16.msra.mxu0 0
        %3891 = vmatprep.subr.bf16.mxu0 0
        %3892 = vmatpush1.bf16.msra.mxu0 0
        %3893 = vmatprep.subr.bf16.mxu0 0
        %3894 = vmatpush1.bf16.msra.mxu0 0
        %3895 = vmatprep.subr.bf16.mxu0 0
        %3896 = vmatpush1.bf16.msra.mxu0 0
        %3897 = vmatprep.subr.bf16.mxu0 0
        %3898 = vmatpush1.bf16.msra.mxu0 0
        %3899 = vmatprep.subr.bf16.mxu0 0
        %3900 = vmatpush1.bf16.msra.mxu0 0
        %3901 = vmatprep.subr.bf16.mxu0 0
        %3902 = vmatpush1.bf16.msra.mxu0 0
        %3903 = vmatprep.subr.bf16.mxu0 0
        %3904 = vmatpush1.bf16.msra.mxu0 0
        %3905 = vmatprep.mubr.bf16.mxu0 0
        %3906 = vmatmul.mubr.bf16.gmra.mrb[0].mxu0 %v3277
        %v3907 = vpop.f32.mrb[0].mxu0
        %v3908 = vadd.f32 0.0, %v3907
        %v3909 = vpop.f32.mrb[0].mxu0
        %v3910 = vpop.f32.mrb[0].mxu0
        %v3911 = vpop.f32.mrb[0].mxu0
        %3912 = vdwg.mxu0
        %v3913 = vpack.c.bf16 %v3908, %v3908
        %v3915 = vsel %vm3154, %v3913, 0
        %3917 = vmatprep.subr.bf16.mxu0 0
        %3918 = vmatpush1.bf16.msra.mxu0 %v3357
        %3919 = vmatprep.subr.bf16.mxu0 0
        %3920 = vmatpush1.bf16.msra.mxu0 %v3358
        %3921 = vmatprep.subr.bf16.mxu0 0
        %3922 = vmatpush1.bf16.msra.mxu0 %v3359
        %3923 = vmatprep.subr.bf16.mxu0 0
        %3924 = vmatpush1.bf16.msra.mxu0 %v3360
        %3925 = vmatprep.subr.bf16.mxu0 0
        %3926 = vmatpush1.bf16.msra.mxu0 %v3361
        %3927 = vmatprep.subr.bf16.mxu0 0
        %3928 = vmatpush1.bf16.msra.mxu0 %v3362
        %3929 = vmatprep.subr.bf16.mxu0 0
        %3930 = vmatpush1.bf16.msra.mxu0 0
        %3931 = vmatprep.subr.bf16.mxu0 0
        %3932 = vmatpush1.bf16.msra.mxu0 0
        %3933 = vmatprep.subr.bf16.mxu0 0
        %3934 = vmatpush1.bf16.msra.mxu0 0
        %3935 = vmatprep.subr.bf16.mxu0 0
        %3936 = vmatpush1.bf16.msra.mxu0 0
        %3937 = vmatprep.subr.bf16.mxu0 0
        %3938 = vmatpush1.bf16.msra.mxu0 0
        %3939 = vmatprep.subr.bf16.mxu0 0
        %3940 = vmatpush1.bf16.msra.mxu0 0
        %3941 = vmatprep.subr.bf16.mxu0 0
        %3942 = vmatpush1.bf16.msra.mxu0 0
        %3943 = vmatprep.subr.bf16.mxu0 0
        %3944 = vmatpush1.bf16.msra.mxu0 0
        %3945 = vmatprep.subr.bf16.mxu0 0
        %3946 = vmatpush1.bf16.msra.mxu0 0
        %3947 = vmatprep.subr.bf16.mxu0 0
        %3948 = vmatpush1.bf16.msra.mxu0 0
        %3949 = vmatprep.mubr.bf16.mxu0 0
        %3950 = vmatmul.mubr.bf16.gmra.mrb[0].mxu0 %v3915
        %v3951 = vpop.f32.mrb[0].mxu0
        %v3952 = vadd.f32 0.0, %v3951
        %v3953 = vpop.f32.mrb[0].mxu0
        %v3954 = vpop.f32.mrb[0].mxu0
        %v3955 = vpop.f32.mrb[0].mxu0
        %3956 = vdwg.mxu0
        %v3957 = vadd.f32 %v3868, %v3952
        %v3958 = vadd.f32 %v3957, %v3418
        %v3959 = vmax.f32 %v3958, 0.0
        %v3960 = vpack.c.bf16 %v3959, %v3959
        %3962 = vrot.lane.b32.xlu0 %v2715, 32
        %v3963 = vpop.permute.xlu0 %3962
        %3965 = vrot.lane.b32.xlu0 %v2991, 64
        %v3966 = vpop.permute.xlu0 %3965
        %v3969 = vsel %vm2998, %v2439, %v3963
        %v3971 = vsel %vm3001, %v3969, %v3966
        %v3972 = vsel %vm3006, %v3971, 0
        %3974 = vmatprep.subr.bf16.mxu0 0
        %3975 = vmatpush1.bf16.msra.mxu0 %v3972
        %3976 = vmatprep.subr.bf16.mxu0 0
        %3977 = vmatpush1.bf16.msra.mxu0 0
        %3978 = vmatprep.subr.bf16.mxu0 0
        %3979 = vmatpush1.bf16.msra.mxu0 0
        %3980 = vmatprep.subr.bf16.mxu0 0
        %3981 = vmatpush1.bf16.msra.mxu0 0
        %3982 = vmatprep.subr.bf16.mxu0 0
        %3983 = vmatpush1.bf16.msra.mxu0 0
        %3984 = vmatprep.subr.bf16.mxu0 0
        %3985 = vmatpush1.bf16.msra.mxu0 0
        %3986 = vmatprep.subr.bf16.mxu0 0
        %3987 = vmatpush1.bf16.msra.mxu0 0
        %3988 = vmatprep.subr.bf16.mxu0 0
        %3989 = vmatpush1.bf16.msra.mxu0 0
        %3990 = vmatprep.subr.bf16.mxu0 0
        %3991 = vmatpush1.bf16.msra.mxu0 0
        %3992 = vmatprep.subr.bf16.mxu0 0
        %3993 = vmatpush1.bf16.msra.mxu0 0
        %3994 = vmatprep.subr.bf16.mxu0 0
        %3995 = vmatpush1.bf16.msra.mxu0 0
        %3996 = vmatprep.subr.bf16.mxu0 0
        %3997 = vmatpush1.bf16.msra.mxu0 0
        %3998 = vmatprep.subr.bf16.mxu0 0
        %3999 = vmatpush1.bf16.msra.mxu0 0
        %4000 = vmatprep.subr.bf16.mxu0 0
        %4001 = vmatpush1.bf16.msra.mxu0 0
        %4002 = vmatprep.subr.bf16.mxu0 0
        %4003 = vmatpush1.bf16.msra.mxu0 0
        %4004 = vmatprep.subr.bf16.mxu0 0
        %4005 = vmatpush1.bf16.msra.mxu0 0
        %4006 = vmatprep.mubr.bf16.mxu0 0
        %4007 = vmatmul.mubr.bf16.gmra.mrb[0].mxu0 %v3004
        %v4008 = vpop.f32.mrb[0].mxu0
        %v4009 = vadd.f32 0.0, %v4008
        %v4010 = vpop.f32.mrb[0].mxu0
        %v4011 = vpop.f32.mrb[0].mxu0
        %v4012 = vpop.f32.mrb[0].mxu0
        %4013 = vdwg.mxu0
        %v4014 = vpack.c.bf16 %v4009, %v4009
        %4015 = vmatprep.subr.bf16.mxu0 0
        %4016 = vmatpush1.bf16.msra.mxu0 %v3972
        %4017 = vmatprep.subr.bf16.mxu0 0
        %4018 = vmatpush1.bf16.msra.mxu0 0
        %4019 = vmatprep.subr.bf16.mxu0 0
        %4020 = vmatpush1.bf16.msra.mxu0 0
        %4021 = vmatprep.subr.bf16.mxu0 0
        %4022 = vmatpush1.bf16.msra.mxu0 0
        %4023 = vmatprep.subr.bf16.mxu0 0
        %4024 = vmatpush1.bf16.msra.mxu0 0
        %4025 = vmatprep.subr.bf16.mxu0 0
        %4026 = vmatpush1.bf16.msra.mxu0 0
        %4027 = vmatprep.subr.bf16.mxu0 0
        %4028 = vmatpush1.bf16.msra.mxu0 0
        %4029 = vmatprep.subr.bf16.mxu0 0
        %4030 = vmatpush1.bf16.msra.mxu0 0
        %4031 = vmatprep.subr.bf16.mxu0 0
        %4032 = vmatpush1.bf16.msra.mxu0 0
        %4033 = vmatprep.subr.bf16.mxu0 0
        %4034 = vmatpush1.bf16.msra.mxu0 0
        %4035 = vmatprep.subr.bf16.mxu0 0
        %4036 = vmatpush1.bf16.msra.mxu0 0
        %4037 = vmatprep.subr.bf16.mxu0 0
        %4038 = vmatpush1.bf16.msra.mxu0 0
        %4039 = vmatprep.subr.bf16.mxu0 0
        %4040 = vmatpush1.bf16.msra.mxu0 0
        %4041 = vmatprep.subr.bf16.mxu0 0
        %4042 = vmatpush1.bf16.msra.mxu0 0
        %4043 = vmatprep.subr.bf16.mxu0 0
        %4044 = vmatpush1.bf16.msra.mxu0 0
        %4045 = vmatprep.subr.bf16.mxu0 0
        %4046 = vmatpush1.bf16.msra.mxu0 0
        %4047 = vmatprep.mubr.bf16.mxu0 0
        %4048 = vmatmul.mubr.bf16.gmra.mrb[0].mxu0 %v3062
        %v4049 = vpop.f32.mrb[0].mxu0
        %v4050 = vadd.f32 0.0, %v4049
        %v4051 = vpop.f32.mrb[0].mxu0
        %v4052 = vpop.f32.mrb[0].mxu0
        %v4053 = vpop.f32.mrb[0].mxu0
        %4054 = vdwg.mxu0
        %v4055 = vpack.c.bf16 %v4050, %v4050
        %v4057 = vsel %vm3154, %v4055, 0
        %4059 = vmatprep.subr.bf16.mxu0 0
        %4060 = vmatpush1.bf16.msra.mxu0 %v3142
        %4061 = vmatprep.subr.bf16.mxu0 0
        %4062 = vmatpush1.bf16.msra.mxu0 %v3143
        %4063 = vmatprep.subr.bf16.mxu0 0
        %4064 = vmatpush1.bf16.msra.mxu0 %v3144
        %4065 = vmatprep.subr.bf16.mxu0 0
        %4066 = vmatpush1.bf16.msra.mxu0 %v3145
        %4067 = vmatprep.subr.bf16.mxu0 0
        %4068 = vmatpush1.bf16.msra.mxu0 %v3146
        %4069 = vmatprep.subr.bf16.mxu0 0
        %4070 = vmatpush1.bf16.msra.mxu0 %v3147
        %4071 = vmatprep.subr.bf16.mxu0 0
        %4072 = vmatpush1.bf16.msra.mxu0 0
        %4073 = vmatprep.subr.bf16.mxu0 0
        %4074 = vmatpush1.bf16.msra.mxu0 0
        %4075 = vmatprep.subr.bf16.mxu0 0
        %4076 = vmatpush1.bf16.msra.mxu0 0
        %4077 = vmatprep.subr.bf16.mxu0 0
        %4078 = vmatpush1.bf16.msra.mxu0 0
        %4079 = vmatprep.subr.bf16.mxu0 0
        %4080 = vmatpush1.bf16.msra.mxu0 0
        %4081 = vmatprep.subr.bf16.mxu0 0
        %4082 = vmatpush1.bf16.msra.mxu0 0
        %4083 = vmatprep.subr.bf16.mxu0 0
        %4084 = vmatpush1.bf16.msra.mxu0 0
        %4085 = vmatprep.subr.bf16.mxu0 0
        %4086 = vmatpush1.bf16.msra.mxu0 0
        %4087 = vmatprep.subr.bf16.mxu0 0
        %4088 = vmatpush1.bf16.msra.mxu0 0
        %4089 = vmatprep.subr.bf16.mxu0 0
        %4090 = vmatpush1.bf16.msra.mxu0 0
        %4091 = vmatprep.mubr.bf16.mxu0 0
        %4092 = vmatmul.mubr.bf16.gmra.mrb[0].mxu0 %v4057
        %v4093 = vpop.f32.mrb[0].mxu0
        %v4094 = vadd.f32 0.0, %v4093
        %v4095 = vpop.f32.mrb[0].mxu0
        %v4096 = vpop.f32.mrb[0].mxu0
        %v4097 = vpop.f32.mrb[0].mxu0
        %4098 = vdwg.mxu0
        %v4100 = vsel %vm3154, %v4014, 0
        %4102 = vmatprep.subr.bf16.mxu0 0
        %4103 = vmatpush1.bf16.msra.mxu0 %v3222
        %4104 = vmatprep.subr.bf16.mxu0 0
        %4105 = vmatpush1.bf16.msra.mxu0 %v3223
        %4106 = vmatprep.subr.bf16.mxu0 0
        %4107 = vmatpush1.bf16.msra.mxu0 %v3224
        %4108 = vmatprep.subr.bf16.mxu0 0
        %4109 = vmatpush1.bf16.msra.mxu0 %v3225
        %4110 = vmatprep.subr.bf16.mxu0 0
        %4111 = vmatpush1.bf16.msra.mxu0 %v3226
        %4112 = vmatprep.subr.bf16.mxu0 0
        %4113 = vmatpush1.bf16.msra.mxu0 %v3227
        %4114 = vmatprep.subr.bf16.mxu0 0
        %4115 = vmatpush1.bf16.msra.mxu0 0
        %4116 = vmatprep.subr.bf16.mxu0 0
        %4117 = vmatpush1.bf16.msra.mxu0 0
        %4118 = vmatprep.subr.bf16.mxu0 0
        %4119 = vmatpush1.bf16.msra.mxu0 0
        %4120 = vmatprep.subr.bf16.mxu0 0
        %4121 = vmatpush1.bf16.msra.mxu0 0
        %4122 = vmatprep.subr.bf16.mxu0 0
        %4123 = vmatpush1.bf16.msra.mxu0 0
        %4124 = vmatprep.subr.bf16.mxu0 0
        %4125 = vmatpush1.bf16.msra.mxu0 0
        %4126 = vmatprep.subr.bf16.mxu0 0
        %4127 = vmatpush1.bf16.msra.mxu0 0
        %4128 = vmatprep.subr.bf16.mxu0 0
        %4129 = vmatpush1.bf16.msra.mxu0 0
        %4130 = vmatprep.subr.bf16.mxu0 0
        %4131 = vmatpush1.bf16.msra.mxu0 0
        %4132 = vmatprep.subr.bf16.mxu0 0
        %4133 = vmatpush1.bf16.msra.mxu0 0
        %4134 = vmatprep.mubr.bf16.mxu0 0
        %4135 = vmatmul.mubr.bf16.gmra.mrb[0].mxu0 %v4100
        %v4136 = vpop.f32.mrb[0].mxu0
        %v4137 = vadd.f32 %v4094, %v4136
        %v4138 = vpop.f32.mrb[0].mxu0
        %v4139 = vpop.f32.mrb[0].mxu0
        %v4140 = vpop.f32.mrb[0].mxu0
        %4141 = vdwg.mxu0
        %4142 = vmatprep.subr.bf16.mxu0 0
        %4143 = vmatpush1.bf16.msra.mxu0 %v3972
        %4144 = vmatprep.subr.bf16.mxu0 0
        %4145 = vmatpush1.bf16.msra.mxu0 0
        %4146 = vmatprep.subr.bf16.mxu0 0
        %4147 = vmatpush1.bf16.msra.mxu0 0
        %4148 = vmatprep.subr.bf16.mxu0 0
        %4149 = vmatpush1.bf16.msra.mxu0 0
        %4150 = vmatprep.subr.bf16.mxu0 0
        %4151 = vmatpush1.bf16.msra.mxu0 0
        %4152 = vmatprep.subr.bf16.mxu0 0
        %4153 = vmatpush1.bf16.msra.mxu0 0
        %4154 = vmatprep.subr.bf16.mxu0 0
        %4155 = vmatpush1.bf16.msra.mxu0 0
        %4156 = vmatprep.subr.bf16.mxu0 0
        %4157 = vmatpush1.bf16.msra.mxu0 0
        %4158 = vmatprep.subr.bf16.mxu0 0
        %4159 = vmatpush1.bf16.msra.mxu0 0
        %4160 = vmatprep.subr.bf16.mxu0 0
        %4161 = vmatpush1.bf16.msra.mxu0 0
        %4162 = vmatprep.subr.bf16.mxu0 0
        %4163 = vmatpush1.bf16.msra.mxu0 0
        %4164 = vmatprep.subr.bf16.mxu0 0
        %4165 = vmatpush1.bf16.msra.mxu0 0
        %4166 = vmatprep.subr.bf16.mxu0 0
        %4167 = vmatpush1.bf16.msra.mxu0 0
        %4168 = vmatprep.subr.bf16.mxu0 0
        %4169 = vmatpush1.bf16.msra.mxu0 0
        %4170 = vmatprep.subr.bf16.mxu0 0
        %4171 = vmatpush1.bf16.msra.mxu0 0
        %4172 = vmatprep.subr.bf16.mxu0 0
        %4173 = vmatpush1.bf16.msra.mxu0 0
        %4174 = vmatprep.mubr.bf16.mxu0 0
        %4175 = vmatmul.mubr.bf16.gmra.mrb[0].mxu0 %v3277
        %v4176 = vpop.f32.mrb[0].mxu0
        %v4177 = vadd.f32 0.0, %v4176
        %v4178 = vpop.f32.mrb[0].mxu0
        %v4179 = vpop.f32.mrb[0].mxu0
        %v4180 = vpop.f32.mrb[0].mxu0
        %4181 = vdwg.mxu0
        %v4182 = vpack.c.bf16 %v4177, %v4177
        %v4184 = vsel %vm3154, %v4182, 0
        %4186 = vmatprep.subr.bf16.mxu0 0
        %4187 = vmatpush1.bf16.msra.mxu0 %v3357
        %4188 = vmatprep.subr.bf16.mxu0 0
        %4189 = vmatpush1.bf16.msra.mxu0 %v3358
        %4190 = vmatprep.subr.bf16.mxu0 0
        %4191 = vmatpush1.bf16.msra.mxu0 %v3359
        %4192 = vmatprep.subr.bf16.mxu0 0
        %4193 = vmatpush1.bf16.msra.mxu0 %v3360
        %4194 = vmatprep.subr.bf16.mxu0 0
        %4195 = vmatpush1.bf16.msra.mxu0 %v3361
        %4196 = vmatprep.subr.bf16.mxu0 0
        %4197 = vmatpush1.bf16.msra.mxu0 %v3362
        %4198 = vmatprep.subr.bf16.mxu0 0
        %4199 = vmatpush1.bf16.msra.mxu0 0
        %4200 = vmatprep.subr.bf16.mxu0 0
        %4201 = vmatpush1.bf16.msra.mxu0 0
        %4202 = vmatprep.subr.bf16.mxu0 0
        %4203 = vmatpush1.bf16.msra.mxu0 0
        %4204 = vmatprep.subr.bf16.mxu0 0
        %4205 = vmatpush1.bf16.msra.mxu0 0
        %4206 = vmatprep.subr.bf16.mxu0 0
        %4207 = vmatpush1.bf16.msra.mxu0 0
        %4208 = vmatprep.subr.bf16.mxu0 0
        %4209 = vmatpush1.bf16.msra.mxu0 0
        %4210 = vmatprep.subr.bf16.mxu0 0
        %4211 = vmatpush1.bf16.msra.mxu0 0
        %4212 = vmatprep.subr.bf16.mxu0 0
        %4213 = vmatpush1.bf16.msra.mxu0 0
        %4214 = vmatprep.subr.bf16.mxu0 0
        %4215 = vmatpush1.bf16.msra.mxu0 0
        %4216 = vmatprep.subr.bf16.mxu0 0
        %4217 = vmatpush1.bf16.msra.mxu0 0
        %4218 = vmatprep.mubr.bf16.mxu0 0
        %4219 = vmatmul.mubr.bf16.gmra.mrb[0].mxu0 %v4184
        %v4220 = vpop.f32.mrb[0].mxu0
        %v4221 = vadd.f32 0.0, %v4220
        %v4222 = vpop.f32.mrb[0].mxu0
        %v4223 = vpop.f32.mrb[0].mxu0
        %v4224 = vpop.f32.mrb[0].mxu0
        %4225 = vdwg.mxu0
        %v4226 = vadd.f32 %v4137, %v4221
        %v4227 = vadd.f32 %v4226, %v3418
        %v4228 = vmax.f32 %v4227, 0.0
        %v4229 = vpack.c.bf16 %v4228, %v4228
        %4231 = vrot.lane.b32.xlu0 %v3422, 64
        %v4232 = vpop.permute.xlu0 %4231
        %v4234 = vsel %vm3001, 0, %v4232
        %v4235 = vsel %vm745, %v723, 0
        %vm4237 = vcmask 1041408
        %v4238 = vsel %vm4237, %v4234, 0
        %v4241 = vsel %vm4237, %v3691, 0
        %4243 = vmatprep.subr.bf16.mxu0 %v4241
        %4244 = vmatpush1.bf16.msra.mxu0 %v4238
        %4245 = vmatprep.subr.bf16.mxu0 0
        %4246 = vmatpush1.bf16.msra.mxu0 0
        %4247 = vmatprep.subr.bf16.mxu0 0
        %4248 = vmatpush1.bf16.msra.mxu0 0
        %4249 = vmatprep.subr.bf16.mxu0 0
        %4250 = vmatpush1.bf16.msra.mxu0 0
        %4251 = vmatprep.subr.bf16.mxu0 0
        %4252 = vmatpush1.bf16.msra.mxu0 0
        %4253 = vmatprep.subr.bf16.mxu0 0
        %4254 = vmatpush1.bf16.msra.mxu0 0
        %4255 = vmatprep.subr.bf16.mxu0 0
        %4256 = vmatpush1.bf16.msra.mxu0 0
        %4257 = vmatprep.subr.bf16.mxu0 0
        %4258 = vmatpush1.bf16.msra.mxu0 0
        %4259 = vmatprep.subr.bf16.mxu0 0
        %4260 = vmatpush1.bf16.msra.mxu0 0
        %4261 = vmatprep.subr.bf16.mxu0 0
        %4262 = vmatpush1.bf16.msra.mxu0 0
        %4263 = vmatprep.subr.bf16.mxu0 0
        %4264 = vmatpush1.bf16.msra.mxu0 0
        %4265 = vmatprep.subr.bf16.mxu0 0
        %4266 = vmatpush1.bf16.msra.mxu0 0
        %4267 = vmatprep.subr.bf16.mxu0 0
        %4268 = vmatpush1.bf16.msra.mxu0 0
        %4269 = vmatprep.subr.bf16.mxu0 0
        %4270 = vmatpush1.bf16.msra.mxu0 0
        %4271 = vmatprep.subr.bf16.mxu0 0
        %4272 = vmatpush1.bf16.msra.mxu0 0
        %4273 = vmatprep.subr.bf16.mxu0 0
        %4274 = vmatpush1.bf16.msra.mxu0 0
        %4275 = vmatprep.mubr.bf16.mxu0 0
        %4276 = vmatmul.mubr.bf16.gmra.mrb[0].mxu0 %v4235
        %v4277 = vpop.f32.mrb[0].mxu0
        %v4278 = vadd.f32 0.0, %v4277
        %v4279 = vpop.f32.mrb[0].mxu0
        %v4280 = vadd.f32 0.0, %v4279
        %v4281 = vpop.f32.mrb[0].mxu0
        %v4282 = vpop.f32.mrb[0].mxu0
        %4283 = vdwg.mxu0
        %v4284 = vpack.c.bf16 %v4278, %v4278
        %v4285 = vpack.c.bf16 %v4280, %v4280
        %v4286 = vld [vmem:[%s5] sm:$0xf]
        %v4287 = vld [vmem:[%s5 + $0x4] sm:$0xf]
        %v4288 = vld [vmem:[%s5 + $0x8] sm:$0xf]
        %v4289 = vld [vmem:[%s5 + $0xc] sm:$0xf]
        %v4290 = vld [vmem:[%s5 + $0x10] sm:$0xf]
        %v4291 = vld [vmem:[%s5 + $0x14] sm:$0xf]
        %v4292 = vld [vmem:[%s5 + $0x18] sm:$0xf]
        %v4293 = vld [vmem:[%s5 + $0x1c] sm:$0xf]
        %v4294 = vld [vmem:[%s5 + $0x20] sm:$0xf]
        %v4295 = vld [vmem:[%s5 + $0x24] sm:$0xf]
        %v4296 = vld [vmem:[%s5 + $0x28] sm:$0xf]
        %v4297 = vld [vmem:[%s5 + $0x2c] sm:$0xf]
        %v4298 = vld [vmem:[%s5 + $0x30] sm:$0xf]
        %v4299 = vld [vmem:[%s5 + $0x34] sm:$0xf]
        %v4300 = vld [vmem:[%s5 + $0x38] sm:$0xf]
        %v4301 = vld [vmem:[%s5 + $0x3c] sm:$0xf]
        %v4302 = vld [vmem:[%s5 + $0x40] sm:$0xf]
        %v4303 = vld [vmem:[%s5 + $0x44] sm:$0xf]
        %v4304 = vld [vmem:[%s5 + $0x48] sm:$0xf]
        %v4305 = vld [vmem:[%s5 + $0x4c] sm:$0xf]
        %v4306 = vld [vmem:[%s5 + $0x50] sm:$0xf]
        %v4307 = vld [vmem:[%s5 + $0x54] sm:$0xf]
        %v4308 = vld [vmem:[%s5 + $0x58] sm:$0xf]
        %v4309 = vld [vmem:[%s5 + $0x5c] sm:$0xf]
        %v4310 = vsel %vm745, %v726, 0
        %4312 = vmatprep.subr.bf16.mxu0 %v4241
        %4313 = vmatpush1.bf16.msra.mxu0 %v4238
        %4314 = vmatprep.subr.bf16.mxu0 0
        %4315 = vmatpush1.bf16.msra.mxu0 0
        %4316 = vmatprep.subr.bf16.mxu0 0
        %4317 = vmatpush1.bf16.msra.mxu0 0
        %4318 = vmatprep.subr.bf16.mxu0 0
        %4319 = vmatpush1.bf16.msra.mxu0 0
        %4320 = vmatprep.subr.bf16.mxu0 0
        %4321 = vmatpush1.bf16.msra.mxu0 0
        %4322 = vmatprep.subr.bf16.mxu0 0
        %4323 = vmatpush1.bf16.msra.mxu0 0
        %4324 = vmatprep.subr.bf16.mxu0 0
        %4325 = vmatpush1.bf16.msra.mxu0 0
        %4326 = vmatprep.subr.bf16.mxu0 0
        %4327 = vmatpush1.bf16.msra.mxu0 0
        %4328 = vmatprep.subr.bf16.mxu0 0
        %4329 = vmatpush1.bf16.msra.mxu0 0
        %4330 = vmatprep.subr.bf16.mxu0 0
        %4331 = vmatpush1.bf16.msra.mxu0 0
        %4332 = vmatprep.subr.bf16.mxu0 0
        %4333 = vmatpush1.bf16.msra.mxu0 0
        %4334 = vmatprep.subr.bf16.mxu0 0
        %4335 = vmatpush1.bf16.msra.mxu0 0
        %4336 = vmatprep.subr.bf16.mxu0 0
        %4337 = vmatpush1.bf16.msra.mxu0 0
        %4338 = vmatprep.subr.bf16.mxu0 0
        %4339 = vmatpush1.bf16.msra.mxu0 0
        %4340 = vmatprep.subr.bf16.mxu0 0
        %4341 = vmatpush1.bf16.msra.mxu0 0
        %4342 = vmatprep.subr.bf16.mxu0 0
        %4343 = vmatpush1.bf16.msra.mxu0 0
        %4344 = vmatprep.mubr.bf16.mxu0 0
        %4345 = vmatmul.mubr.bf16.gmra.mrb[0].mxu0 %v4310
        %v4346 = vpop.f32.mrb[0].mxu0
        %v4347 = vadd.f32 0.0, %v4346
        %v4348 = vpop.f32.mrb[0].mxu0
        %v4349 = vadd.f32 0.0, %v4348
        %v4350 = vpop.f32.mrb[0].mxu0
        %v4351 = vpop.f32.mrb[0].mxu0
        %4352 = vdwg.mxu0
        %v4353 = vpack.c.bf16 %v4347, %v4347
        %v4354 = vpack.c.bf16 %v4349, %v4349
        %s4355 = scalar_lea.vmem %s5, 96
        %v4356 = vld [vmem:[%s4355] sm:$0xf]
        %v4357 = vld [vmem:[%s4355 + $0x4] sm:$0xf]
        %v4358 = vld [vmem:[%s4355 + $0x8] sm:$0xf]
        %v4359 = vld [vmem:[%s4355 + $0xc] sm:$0xf]
        %v4360 = vld [vmem:[%s4355 + $0x10] sm:$0xf]
        %v4361 = vld [vmem:[%s4355 + $0x14] sm:$0xf]
        %v4362 = vld [vmem:[%s4355 + $0x18] sm:$0xf]
        %v4363 = vld [vmem:[%s4355 + $0x1c] sm:$0xf]
        %v4364 = vld [vmem:[%s4355 + $0x20] sm:$0xf]
        %v4365 = vld [vmem:[%s4355 + $0x24] sm:$0xf]
        %v4366 = vld [vmem:[%s4355 + $0x28] sm:$0xf]
        %v4367 = vld [vmem:[%s4355 + $0x2c] sm:$0xf]
        %v4368 = vld [vmem:[%s4355 + $0x30] sm:$0xf]
        %v4369 = vld [vmem:[%s4355 + $0x34] sm:$0xf]
        %v4370 = vld [vmem:[%s4355 + $0x38] sm:$0xf]
        %v4371 = vld [vmem:[%s4355 + $0x3c] sm:$0xf]
        %v4372 = vld [vmem:[%s4355 + $0x40] sm:$0xf]
        %v4373 = vld [vmem:[%s4355 + $0x44] sm:$0xf]
        %v4374 = vld [vmem:[%s4355 + $0x48] sm:$0xf]
        %v4375 = vld [vmem:[%s4355 + $0x4c] sm:$0xf]
        %v4376 = vld [vmem:[%s4355 + $0x50] sm:$0xf]
        %v4377 = vld [vmem:[%s4355 + $0x54] sm:$0xf]
        %v4378 = vld [vmem:[%s4355 + $0x58] sm:$0xf]
        %v4379 = vld [vmem:[%s4355 + $0x5c] sm:$0xf]
        %v4404 = vunpack.c.l.b16 %v4356
        %v4405 = vunpack.c.l.b16 %v4357
        %v4406 = vunpack.c.l.b16 %v4358
        %v4407 = vunpack.c.l.b16 %v4359
        %v4408 = vunpack.c.l.b16 %v4360
        %v4409 = vunpack.c.l.b16 %v4361
        %v4410 = vunpack.c.l.b16 %v4362
        %v4411 = vunpack.c.l.b16 %v4363
        %v4412 = vunpack.c.l.b16 %v4364
        %v4413 = vunpack.c.l.b16 %v4365
        %v4414 = vunpack.c.l.b16 %v4366
        %v4415 = vunpack.c.l.b16 %v4367
        %v4416 = vunpack.c.l.b16 %v4368
        %v4417 = vunpack.c.l.b16 %v4369
        %v4418 = vunpack.c.l.b16 %v4370
        %v4419 = vunpack.c.l.b16 %v4371
        %v4420 = vunpack.c.l.b16 %v4372
        %v4421 = vunpack.c.l.b16 %v4373
        %v4422 = vunpack.c.l.b16 %v4374
        %v4423 = vunpack.c.l.b16 %v4375
        %v4424 = vunpack.c.l.b16 %v4376
        %v4425 = vunpack.c.l.b16 %v4377
        %v4426 = vunpack.c.l.b16 %v4378
        %v4427 = vunpack.c.l.b16 %v4379
        %v4428 = vpack.c.b16 %v4405, %v4404
        %v4429 = vpack.c.b16 %v4407, %v4406
        %v4430 = vpack.c.b16 %v4409, %v4408
        %v4431 = vpack.c.b16 %v4411, %v4410
        %v4432 = vpack.c.b16 %v4413, %v4412
        %v4433 = vpack.c.b16 %v4415, %v4414
        %v4434 = vpack.c.b16 %v4417, %v4416
        %v4435 = vpack.c.b16 %v4419, %v4418
        %v4436 = vpack.c.b16 %v4421, %v4420
        %v4437 = vpack.c.b16 %v4423, %v4422
        %v4438 = vpack.c.b16 %v4425, %v4424
        %v4439 = vpack.c.b16 %v4427, %v4426
        %v4453 = vsel %vm3001, %v4354, 0
        %4455 = vmatprep.subr.bf16.mxu0 0
        %4456 = vmatpush1.bf16.msra.mxu0 %v4428
        %4457 = vmatprep.subr.bf16.mxu0 0
        %4458 = vmatpush1.bf16.msra.mxu0 %v4429
        %4459 = vmatprep.subr.bf16.mxu0 0
        %4460 = vmatpush1.bf16.msra.mxu0 %v4430
        %4461 = vmatprep.subr.bf16.mxu0 0
        %4462 = vmatpush1.bf16.msra.mxu0 %v4431
        %4463 = vmatprep.subr.bf16.mxu0 0
        %4464 = vmatpush1.bf16.msra.mxu0 %v4432
        %4465 = vmatprep.subr.bf16.mxu0 0
        %4466 = vmatpush1.bf16.msra.mxu0 %v4433
        %4467 = vmatprep.subr.bf16.mxu0 0
        %4468 = vmatpush1.bf16.msra.mxu0 %v4434
        %4469 = vmatprep.subr.bf16.mxu0 0
        %4470 = vmatpush1.bf16.msra.mxu0 %v4435
        %4471 = vmatprep.subr.bf16.mxu0 0
        %4472 = vmatpush1.bf16.msra.mxu0 %v4436
        %4473 = vmatprep.subr.bf16.mxu0 0
        %4474 = vmatpush1.bf16.msra.mxu0 %v4437
        %4475 = vmatprep.subr.bf16.mxu0 0
        %4476 = vmatpush1.bf16.msra.mxu0 %v4438
        %4477 = vmatprep.subr.bf16.mxu0 0
        %4478 = vmatpush1.bf16.msra.mxu0 %v4439
        %4479 = vmatprep.subr.bf16.mxu0 0
        %4480 = vmatpush1.bf16.msra.mxu0 0
        %4481 = vmatprep.subr.bf16.mxu0 0
        %4482 = vmatpush1.bf16.msra.mxu0 0
        %4483 = vmatprep.subr.bf16.mxu0 0
        %4484 = vmatpush1.bf16.msra.mxu0 0
        %4485 = vmatprep.subr.bf16.mxu0 0
        %4486 = vmatpush1.bf16.msra.mxu0 0
        %4487 = vmatprep.mubr.bf16.mxu0 %v4453
        %4488 = vmatmul.mubr.bf16.gmra.mrb[0].mxu0 %v4353
        %v4489 = vpop.f32.mrb[0].mxu0
        %v4490 = vadd.f32 0.0, %v4489
        %v4491 = vpop.f32.mrb[0].mxu0
        %v4492 = vpop.f32.mrb[0].mxu0
        %v4493 = vpop.f32.mrb[0].mxu0
        %4494 = vdwg.mxu0
        %v4519 = vunpack.c.l.b16 %v4286
        %v4520 = vunpack.c.l.b16 %v4287
        %v4521 = vunpack.c.l.b16 %v4288
        %v4522 = vunpack.c.l.b16 %v4289
        %v4523 = vunpack.c.l.b16 %v4290
        %v4524 = vunpack.c.l.b16 %v4291
        %v4525 = vunpack.c.l.b16 %v4292
        %v4526 = vunpack.c.l.b16 %v4293
        %v4527 = vunpack.c.l.b16 %v4294
        %v4528 = vunpack.c.l.b16 %v4295
        %v4529 = vunpack.c.l.b16 %v4296
        %v4530 = vunpack.c.l.b16 %v4297
        %v4531 = vunpack.c.l.b16 %v4298
        %v4532 = vunpack.c.l.b16 %v4299
        %v4533 = vunpack.c.l.b16 %v4300
        %v4534 = vunpack.c.l.b16 %v4301
        %v4535 = vunpack.c.l.b16 %v4302
        %v4536 = vunpack.c.l.b16 %v4303
        %v4537 = vunpack.c.l.b16 %v4304
        %v4538 = vunpack.c.l.b16 %v4305
        %v4539 = vunpack.c.l.b16 %v4306
        %v4540 = vunpack.c.l.b16 %v4307
        %v4541 = vunpack.c.l.b16 %v4308
        %v4542 = vunpack.c.l.b16 %v4309
        %v4543 = vpack.c.b16 %v4520, %v4519
        %v4544 = vpack.c.b16 %v4522, %v4521
        %v4545 = vpack.c.b16 %v4524, %v4523
        %v4546 = vpack.c.b16 %v4526, %v4525
        %v4547 = vpack.c.b16 %v4528, %v4527
        %v4548 = vpack.c.b16 %v4530, %v4529
        %v4549 = vpack.c.b16 %v4532, %v4531
        %v4550 = vpack.c.b16 %v4534, %v4533
        %v4551 = vpack.c.b16 %v4536, %v4535
        %v4552 = vpack.c.b16 %v4538, %v4537
        %v4553 = vpack.c.b16 %v4540, %v4539
        %v4554 = vpack.c.b16 %v4542, %v4541
        %v4568 = vsel %vm3001, %v4285, 0
        %4570 = vmatprep.subr.bf16.mxu0 0
        %4571 = vmatpush1.bf16.msra.mxu0 %v4543
        %4572 = vmatprep.subr.bf16.mxu0 0
        %4573 = vmatpush1.bf16.msra.mxu0 %v4544
        %4574 = vmatprep.subr.bf16.mxu0 0
        %4575 = vmatpush1.bf16.msra.mxu0 %v4545
        %4576 = vmatprep.subr.bf16.mxu0 0
        %4577 = vmatpush1.bf16.msra.mxu0 %v4546
        %4578 = vmatprep.subr.bf16.mxu0 0
        %4579 = vmatpush1.bf16.msra.mxu0 %v4547
        %4580 = vmatprep.subr.bf16.mxu0 0
        %4581 = vmatpush1.bf16.msra.mxu0 %v4548
        %4582 = vmatprep.subr.bf16.mxu0 0
        %4583 = vmatpush1.bf16.msra.mxu0 %v4549
        %4584 = vmatprep.subr.bf16.mxu0 0
        %4585 = vmatpush1.bf16.msra.mxu0 %v4550
        %4586 = vmatprep.subr.bf16.mxu0 0
        %4587 = vmatpush1.bf16.msra.mxu0 %v4551
        %4588 = vmatprep.subr.bf16.mxu0 0
        %4589 = vmatpush1.bf16.msra.mxu0 %v4552
        %4590 = vmatprep.subr.bf16.mxu0 0
        %4591 = vmatpush1.bf16.msra.mxu0 %v4553
        %4592 = vmatprep.subr.bf16.mxu0 0
        %4593 = vmatpush1.bf16.msra.mxu0 %v4554
        %4594 = vmatprep.subr.bf16.mxu0 0
        %4595 = vmatpush1.bf16.msra.mxu0 0
        %4596 = vmatprep.subr.bf16.mxu0 0
        %4597 = vmatpush1.bf16.msra.mxu0 0
        %4598 = vmatprep.subr.bf16.mxu0 0
        %4599 = vmatpush1.bf16.msra.mxu0 0
        %4600 = vmatprep.subr.bf16.mxu0 0
        %4601 = vmatpush1.bf16.msra.mxu0 0
        %4602 = vmatprep.mubr.bf16.mxu0 %v4568
        %4603 = vmatmul.mubr.bf16.gmra.mrb[0].mxu0 %v4284
        %v4604 = vpop.f32.mrb[0].mxu0
        %v4605 = vadd.f32 %v4490, %v4604
        %v4606 = vpop.f32.mrb[0].mxu0
        %v4607 = vpop.f32.mrb[0].mxu0
        %v4608 = vpop.f32.mrb[0].mxu0
        %4609 = vdwg.mxu0
        %v4610 = vsel %vm745, %v730, 0
        %4612 = vmatprep.subr.bf16.mxu0 %v4241
        %4613 = vmatpush1.bf16.msra.mxu0 %v4238
        %4614 = vmatprep.subr.bf16.mxu0 0
        %4615 = vmatpush1.bf16.msra.mxu0 0
        %4616 = vmatprep.subr.bf16.mxu0 0
        %4617 = vmatpush1.bf16.msra.mxu0 0
        %4618 = vmatprep.subr.bf16.mxu0 0
        %4619 = vmatpush1.bf16.msra.mxu0 0
        %4620 = vmatprep.subr.bf16.mxu0 0
        %4621 = vmatpush1.bf16.msra.mxu0 0
        %4622 = vmatprep.subr.bf16.mxu0 0
        %4623 = vmatpush1.bf16.msra.mxu0 0
        %4624 = vmatprep.subr.bf16.mxu0 0
        %4625 = vmatpush1.bf16.msra.mxu0 0
        %4626 = vmatprep.subr.bf16.mxu0 0
        %4627 = vmatpush1.bf16.msra.mxu0 0
        %4628 = vmatprep.subr.bf16.mxu0 0
        %4629 = vmatpush1.bf16.msra.mxu0 0
        %4630 = vmatprep.subr.bf16.mxu0 0
        %4631 = vmatpush1.bf16.msra.mxu0 0
        %4632 = vmatprep.subr.bf16.mxu0 0
        %4633 = vmatpush1.bf16.msra.mxu0 0
        %4634 = vmatprep.subr.bf16.mxu0 0
        %4635 = vmatpush1.bf16.msra.mxu0 0
        %4636 = vmatprep.subr.bf16.mxu0 0
        %4637 = vmatpush1.bf16.msra.mxu0 0
        %4638 = vmatprep.subr.bf16.mxu0 0
        %4639 = vmatpush1.bf16.msra.mxu0 0
        %4640 = vmatprep.subr.bf16.mxu0 0
        %4641 = vmatpush1.bf16.msra.mxu0 0
        %4642 = vmatprep.subr.bf16.mxu0 0
        %4643 = vmatpush1.bf16.msra.mxu0 0
        %4644 = vmatprep.mubr.bf16.mxu0 0
        %4645 = vmatmul.mubr.bf16.gmra.mrb[0].mxu0 %v4610
        %v4646 = vpop.f32.mrb[0].mxu0
        %v4647 = vadd.f32 0.0, %v4646
        %v4648 = vpop.f32.mrb[0].mxu0
        %v4649 = vadd.f32 0.0, %v4648
        %v4650 = vpop.f32.mrb[0].mxu0
        %v4651 = vpop.f32.mrb[0].mxu0
        %4652 = vdwg.mxu0
        %v4653 = vpack.c.bf16 %v4647, %v4647
        %v4654 = vpack.c.bf16 %v4649, %v4649
        %s4655 = scalar_lea.vmem %s5, 192
        %v4656 = vld [vmem:[%s4655] sm:$0xf]
        %v4657 = vld [vmem:[%s4655 + $0x4] sm:$0xf]
        %v4658 = vld [vmem:[%s4655 + $0x8] sm:$0xf]
        %v4659 = vld [vmem:[%s4655 + $0xc] sm:$0xf]
        %v4660 = vld [vmem:[%s4655 + $0x10] sm:$0xf]
        %v4661 = vld [vmem:[%s4655 + $0x14] sm:$0xf]
        %v4662 = vld [vmem:[%s4655 + $0x18] sm:$0xf]
        %v4663 = vld [vmem:[%s4655 + $0x1c] sm:$0xf]
        %v4664 = vld [vmem:[%s4655 + $0x20] sm:$0xf]
        %v4665 = vld [vmem:[%s4655 + $0x24] sm:$0xf]
        %v4666 = vld [vmem:[%s4655 + $0x28] sm:$0xf]
        %v4667 = vld [vmem:[%s4655 + $0x2c] sm:$0xf]
        %v4668 = vld [vmem:[%s4655 + $0x30] sm:$0xf]
        %v4669 = vld [vmem:[%s4655 + $0x34] sm:$0xf]
        %v4670 = vld [vmem:[%s4655 + $0x38] sm:$0xf]
        %v4671 = vld [vmem:[%s4655 + $0x3c] sm:$0xf]
        %v4672 = vld [vmem:[%s4655 + $0x40] sm:$0xf]
        %v4673 = vld [vmem:[%s4655 + $0x44] sm:$0xf]
        %v4674 = vld [vmem:[%s4655 + $0x48] sm:$0xf]
        %v4675 = vld [vmem:[%s4655 + $0x4c] sm:$0xf]
        %v4676 = vld [vmem:[%s4655 + $0x50] sm:$0xf]
        %v4677 = vld [vmem:[%s4655 + $0x54] sm:$0xf]
        %v4678 = vld [vmem:[%s4655 + $0x58] sm:$0xf]
        %v4679 = vld [vmem:[%s4655 + $0x5c] sm:$0xf]
        %v4704 = vunpack.c.l.b16 %v4656
        %v4705 = vunpack.c.l.b16 %v4657
        %v4706 = vunpack.c.l.b16 %v4658
        %v4707 = vunpack.c.l.b16 %v4659
        %v4708 = vunpack.c.l.b16 %v4660
        %v4709 = vunpack.c.l.b16 %v4661
        %v4710 = vunpack.c.l.b16 %v4662
        %v4711 = vunpack.c.l.b16 %v4663
        %v4712 = vunpack.c.l.b16 %v4664
        %v4713 = vunpack.c.l.b16 %v4665
        %v4714 = vunpack.c.l.b16 %v4666
        %v4715 = vunpack.c.l.b16 %v4667
        %v4716 = vunpack.c.l.b16 %v4668
        %v4717 = vunpack.c.l.b16 %v4669
        %v4718 = vunpack.c.l.b16 %v4670
        %v4719 = vunpack.c.l.b16 %v4671
        %v4720 = vunpack.c.l.b16 %v4672
        %v4721 = vunpack.c.l.b16 %v4673
        %v4722 = vunpack.c.l.b16 %v4674
        %v4723 = vunpack.c.l.b16 %v4675
        %v4724 = vunpack.c.l.b16 %v4676
        %v4725 = vunpack.c.l.b16 %v4677
        %v4726 = vunpack.c.l.b16 %v4678
        %v4727 = vunpack.c.l.b16 %v4679
        %v4728 = vpack.c.b16 %v4705, %v4704
        %v4729 = vpack.c.b16 %v4707, %v4706
        %v4730 = vpack.c.b16 %v4709, %v4708
        %v4731 = vpack.c.b16 %v4711, %v4710
        %v4732 = vpack.c.b16 %v4713, %v4712
        %v4733 = vpack.c.b16 %v4715, %v4714
        %v4734 = vpack.c.b16 %v4717, %v4716
        %v4735 = vpack.c.b16 %v4719, %v4718
        %v4736 = vpack.c.b16 %v4721, %v4720
        %v4737 = vpack.c.b16 %v4723, %v4722
        %v4738 = vpack.c.b16 %v4725, %v4724
        %v4739 = vpack.c.b16 %v4727, %v4726
        %v4753 = vsel %vm3001, %v4654, 0
        %4755 = vmatprep.subr.bf16.mxu0 0
        %4756 = vmatpush1.bf16.msra.mxu0 %v4728
        %4757 = vmatprep.subr.bf16.mxu0 0
        %4758 = vmatpush1.bf16.msra.mxu0 %v4729
        %4759 = vmatprep.subr.bf16.mxu0 0
        %4760 = vmatpush1.bf16.msra.mxu0 %v4730
        %4761 = vmatprep.subr.bf16.mxu0 0
        %4762 = vmatpush1.bf16.msra.mxu0 %v4731
        %4763 = vmatprep.subr.bf16.mxu0 0
        %4764 = vmatpush1.bf16.msra.mxu0 %v4732
        %4765 = vmatprep.subr.bf16.mxu0 0
        %4766 = vmatpush1.bf16.msra.mxu0 %v4733
        %4767 = vmatprep.subr.bf16.mxu0 0
        %4768 = vmatpush1.bf16.msra.mxu0 %v4734
        %4769 = vmatprep.subr.bf16.mxu0 0
        %4770 = vmatpush1.bf16.msra.mxu0 %v4735
        %4771 = vmatprep.subr.bf16.mxu0 0
        %4772 = vmatpush1.bf16.msra.mxu0 %v4736
        %4773 = vmatprep.subr.bf16.mxu0 0
        %4774 = vmatpush1.bf16.msra.mxu0 %v4737
        %4775 = vmatprep.subr.bf16.mxu0 0
        %4776 = vmatpush1.bf16.msra.mxu0 %v4738
        %4777 = vmatprep.subr.bf16.mxu0 0
        %4778 = vmatpush1.bf16.msra.mxu0 %v4739
        %4779 = vmatprep.subr.bf16.mxu0 0
        %4780 = vmatpush1.bf16.msra.mxu0 0
        %4781 = vmatprep.subr.bf16.mxu0 0
        %4782 = vmatpush1.bf16.msra.mxu0 0
        %4783 = vmatprep.subr.bf16.mxu0 0
        %4784 = vmatpush1.bf16.msra.mxu0 0
        %4785 = vmatprep.subr.bf16.mxu0 0
        %4786 = vmatpush1.bf16.msra.mxu0 0
        %4787 = vmatprep.mubr.bf16.mxu0 %v4753
        %4788 = vmatmul.mubr.bf16.gmra.mrb[0].mxu0 %v4653
        %v4789 = vpop.f32.mrb[0].mxu0
        %v4790 = vadd.f32 0.0, %v4789
        %v4791 = vpop.f32.mrb[0].mxu0
        %v4792 = vpop.f32.mrb[0].mxu0
        %v4793 = vpop.f32.mrb[0].mxu0
        %4794 = vdwg.mxu0
        %v4795 = vadd.f32 %v4605, %v4790
        %v4796 = vld [vmem:[%s6] sm:$0x1]
        %v4798 = vlaneseq
        %v4799 = vshrl.u32 %v4798, 7
        %v4800 = vsub.s32 0, %v4799
        %v4801 = vrot.slane %v4796, %v4800
        %v4803 = vadd.f32 %v4795, %v4801
        %v4804 = vmax.f32 %v4803, 0.0
        %v4805 = vpack.c.bf16 %v4804, %v4804
        %4807 = vrot.lane.b32.xlu0 %v3960, 64
        %v4808 = vpop.permute.xlu0 %4807
        %v4810 = vsel %vm3001, %v3691, %v4808
        %v4811 = vsel %vm4237, %v4810, 0
        %v4814 = vsel %vm4237, %v4229, 0
        %4816 = vmatprep.subr.bf16.mxu0 %v4814
        %4817 = vmatpush1.bf16.msra.mxu0 %v4811
        %4818 = vmatprep.subr.bf16.mxu0 0
        %4819 = vmatpush1.bf16.msra.mxu0 0
        %4820 = vmatprep.subr.bf16.mxu0 0
        %4821 = vmatpush1.bf16.msra.mxu0 0
        %4822 = vmatprep.subr.bf16.mxu0 0
        %4823 = vmatpush1.bf16.msra.mxu0 0
        %4824 = vmatprep.subr.bf16.mxu0 0
        %4825 = vmatpush1.bf16.msra.mxu0 0
        %4826 = vmatprep.subr.bf16.mxu0 0
        %4827 = vmatpush1.bf16.msra.mxu0 0
        %4828 = vmatprep.subr.bf16.mxu0 0
        %4829 = vmatpush1.bf16.msra.mxu0 0
        %4830 = vmatprep.subr.bf16.mxu0 0
        %4831 = vmatpush1.bf16.msra.mxu0 0
        %4832 = vmatprep.subr.bf16.mxu0 0
        %4833 = vmatpush1.bf16.msra.mxu0 0
        %4834 = vmatprep.subr.bf16.mxu0 0
        %4835 = vmatpush1.bf16.msra.mxu0 0
        %4836 = vmatprep.subr.bf16.mxu0 0
        %4837 = vmatpush1.bf16.msra.mxu0 0
        %4838 = vmatprep.subr.bf16.mxu0 0
        %4839 = vmatpush1.bf16.msra.mxu0 0
        %4840 = vmatprep.subr.bf16.mxu0 0
        %4841 = vmatpush1.bf16.msra.mxu0 0
        %4842 = vmatprep.subr.bf16.mxu0 0
        %4843 = vmatpush1.bf16.msra.mxu0 0
        %4844 = vmatprep.subr.bf16.mxu0 0
        %4845 = vmatpush1.bf16.msra.mxu0 0
        %4846 = vmatprep.subr.bf16.mxu0 0
        %4847 = vmatpush1.bf16.msra.mxu0 0
        %4848 = vmatprep.mubr.bf16.mxu0 0
        %4849 = vmatmul.mubr.bf16.gmra.mrb[0].mxu0 %v4235
        %v4850 = vpop.f32.mrb[0].mxu0
        %v4851 = vadd.f32 0.0, %v4850
        %v4852 = vpop.f32.mrb[0].mxu0
        %v4853 = vadd.f32 0.0, %v4852
        %v4854 = vpop.f32.mrb[0].mxu0
        %v4855 = vpop.f32.mrb[0].mxu0
        %4856 = vdwg.mxu0
        %v4857 = vpack.c.bf16 %v4851, %v4851
        %v4858 = vpack.c.bf16 %v4853, %v4853
        %4859 = vmatprep.subr.bf16.mxu0 %v4814
        %4860 = vmatpush1.bf16.msra.mxu0 %v4811
        %4861 = vmatprep.subr.bf16.mxu0 0
        %4862 = vmatpush1.bf16.msra.mxu0 0
        %4863 = vmatprep.subr.bf16.mxu0 0
        %4864 = vmatpush1.bf16.msra.mxu0 0
        %4865 = vmatprep.subr.bf16.mxu0 0
        %4866 = vmatpush1.bf16.msra.mxu0 0
        %4867 = vmatprep.subr.bf16.mxu0 0
        %4868 = vmatpush1.bf16.msra.mxu0 0
        %4869 = vmatprep.subr.bf16.mxu0 0
        %4870 = vmatpush1.bf16.msra.mxu0 0
        %4871 = vmatprep.subr.bf16.mxu0 0
        %4872 = vmatpush1.bf16.msra.mxu0 0
        %4873 = vmatprep.subr.bf16.mxu0 0
        %4874 = vmatpush1.bf16.msra.mxu0 0
        %4875 = vmatprep.subr.bf16.mxu0 0
        %4876 = vmatpush1.bf16.msra.mxu0 0
        %4877 = vmatprep.subr.bf16.mxu0 0
        %4878 = vmatpush1.bf16.msra.mxu0 0
        %4879 = vmatprep.subr.bf16.mxu0 0
        %4880 = vmatpush1.bf16.msra.mxu0 0
        %4881 = vmatprep.subr.bf16.mxu0 0
        %4882 = vmatpush1.bf16.msra.mxu0 0
        %4883 = vmatprep.subr.bf16.mxu0 0
        %4884 = vmatpush1.bf16.msra.mxu0 0
        %4885 = vmatprep.subr.bf16.mxu0 0
        %4886 = vmatpush1.bf16.msra.mxu0 0
        %4887 = vmatprep.subr.bf16.mxu0 0
        %4888 = vmatpush1.bf16.msra.mxu0 0
        %4889 = vmatprep.subr.bf16.mxu0 0
        %4890 = vmatpush1.bf16.msra.mxu0 0
        %4891 = vmatprep.mubr.bf16.mxu0 0
        %4892 = vmatmul.mubr.bf16.gmra.mrb[0].mxu0 %v4310
        %v4893 = vpop.f32.mrb[0].mxu0
        %v4894 = vadd.f32 0.0, %v4893
        %v4895 = vpop.f32.mrb[0].mxu0
        %v4896 = vadd.f32 0.0, %v4895
        %v4897 = vpop.f32.mrb[0].mxu0
        %v4898 = vpop.f32.mrb[0].mxu0
        %4899 = vdwg.mxu0
        %v4900 = vpack.c.bf16 %v4894, %v4894
        %v4901 = vpack.c.bf16 %v4896, %v4896
        %v4903 = vsel %vm3001, %v4901, 0
        %4905 = vmatprep.subr.bf16.mxu0 0
        %4906 = vmatpush1.bf16.msra.mxu0 %v4428
        %4907 = vmatprep.subr.bf16.mxu0 0
        %4908 = vmatpush1.bf16.msra.mxu0 %v4429
        %4909 = vmatprep.subr.bf16.mxu0 0
        %4910 = vmatpush1.bf16.msra.mxu0 %v4430
        %4911 = vmatprep.subr.bf16.mxu0 0
        %4912 = vmatpush1.bf16.msra.mxu0 %v4431
        %4913 = vmatprep.subr.bf16.mxu0 0
        %4914 = vmatpush1.bf16.msra.mxu0 %v4432
        %4915 = vmatprep.subr.bf16.mxu0 0
        %4916 = vmatpush1.bf16.msra.mxu0 %v4433
        %4917 = vmatprep.subr.bf16.mxu0 0
        %4918 = vmatpush1.bf16.msra.mxu0 %v4434
        %4919 = vmatprep.subr.bf16.mxu0 0
        %4920 = vmatpush1.bf16.msra.mxu0 %v4435
        %4921 = vmatprep.subr.bf16.mxu0 0
        %4922 = vmatpush1.bf16.msra.mxu0 %v4436
        %4923 = vmatprep.subr.bf16.mxu0 0
        %4924 = vmatpush1.bf16.msra.mxu0 %v4437
        %4925 = vmatprep.subr.bf16.mxu0 0
        %4926 = vmatpush1.bf16.msra.mxu0 %v4438
        %4927 = vmatprep.subr.bf16.mxu0 0
        %4928 = vmatpush1.bf16.msra.mxu0 %v4439
        %4929 = vmatprep.subr.bf16.mxu0 0
        %4930 = vmatpush1.bf16.msra.mxu0 0
        %4931 = vmatprep.subr.bf16.mxu0 0
        %4932 = vmatpush1.bf16.msra.mxu0 0
        %4933 = vmatprep.subr.bf16.mxu0 0
        %4934 = vmatpush1.bf16.msra.mxu0 0
        %4935 = vmatprep.subr.bf16.mxu0 0
        %4936 = vmatpush1.bf16.msra.mxu0 0
        %4937 = vmatprep.mubr.bf16.mxu0 %v4903
        %4938 = vmatmul.mubr.bf16.gmra.mrb[0].mxu0 %v4900
        %v4939 = vpop.f32.mrb[0].mxu0
        %v4940 = vadd.f32 0.0, %v4939
        %v4941 = vpop.f32.mrb[0].mxu0
        %v4942 = vpop.f32.mrb[0].mxu0
        %v4943 = vpop.f32.mrb[0].mxu0
        %4944 = vdwg.mxu0
        %v4946 = vsel %vm3001, %v4858, 0
        %4948 = vmatprep.subr.bf16.mxu0 0
        %4949 = vmatpush1.bf16.msra.mxu0 %v4543
        %4950 = vmatprep.subr.bf16.mxu0 0
        %4951 = vmatpush1.bf16.msra.mxu0 %v4544
        %4952 = vmatprep.subr.bf16.mxu0 0
        %4953 = vmatpush1.bf16.msra.mxu0 %v4545
        %4954 = vmatprep.subr.bf16.mxu0 0
        %4955 = vmatpush1.bf16.msra.mxu0 %v4546
        %4956 = vmatprep.subr.bf16.mxu0 0
        %4957 = vmatpush1.bf16.msra.mxu0 %v4547
        %4958 = vmatprep.subr.bf16.mxu0 0
        %4959 = vmatpush1.bf16.msra.mxu0 %v4548
        %4960 = vmatprep.subr.bf16.mxu0 0
        %4961 = vmatpush1.bf16.msra.mxu0 %v4549
        %4962 = vmatprep.subr.bf16.mxu0 0
        %4963 = vmatpush1.bf16.msra.mxu0 %v4550
        %4964 = vmatprep.subr.bf16.mxu0 0
        %4965 = vmatpush1.bf16.msra.mxu0 %v4551
        %4966 = vmatprep.subr.bf16.mxu0 0
        %4967 = vmatpush1.bf16.msra.mxu0 %v4552
        %4968 = vmatprep.subr.bf16.mxu0 0
        %4969 = vmatpush1.bf16.msra.mxu0 %v4553
        %4970 = vmatprep.subr.bf16.mxu0 0
        %4971 = vmatpush1.bf16.msra.mxu0 %v4554
        %4972 = vmatprep.subr.bf16.mxu0 0
        %4973 = vmatpush1.bf16.msra.mxu0 0
        %4974 = vmatprep.subr.bf16.mxu0 0
        %4975 = vmatpush1.bf16.msra.mxu0 0
        %4976 = vmatprep.subr.bf16.mxu0 0
        %4977 = vmatpush1.bf16.msra.mxu0 0
        %4978 = vmatprep.subr.bf16.mxu0 0
        %4979 = vmatpush1.bf16.msra.mxu0 0
        %4980 = vmatprep.mubr.bf16.mxu0 %v4946
        %4981 = vmatmul.mubr.bf16.gmra.mrb[0].mxu0 %v4857
        %v4982 = vpop.f32.mrb[0].mxu0
        %v4983 = vadd.f32 %v4940, %v4982
        %v4984 = vpop.f32.mrb[0].mxu0
        %v4985 = vpop.f32.mrb[0].mxu0
        %v4986 = vpop.f32.mrb[0].mxu0
        %4987 = vdwg.mxu0
        %4988 = vmatprep.subr.bf16.mxu0 %v4814
        %4989 = vmatpush1.bf16.msra.mxu0 %v4811
        %4990 = vmatprep.subr.bf16.mxu0 0
        %4991 = vmatpush1.bf16.msra.mxu0 0
        %4992 = vmatprep.subr.bf16.mxu0 0
        %4993 = vmatpush1.bf16.msra.mxu0 0
        %4994 = vmatprep.subr.bf16.mxu0 0
        %4995 = vmatpush1.bf16.msra.mxu0 0
        %4996 = vmatprep.subr.bf16.mxu0 0
        %4997 = vmatpush1.bf16.msra.mxu0 0
        %4998 = vmatprep.subr.bf16.mxu0 0
        %4999 = vmatpush1.bf16.msra.mxu0 0
        %5000 = vmatprep.subr.bf16.mxu0 0
        %5001 = vmatpush1.bf16.msra.mxu0 0
        %5002 = vmatprep.subr.bf16.mxu0 0
        %5003 = vmatpush1.bf16.msra.mxu0 0
        %5004 = vmatprep.subr.bf16.mxu0 0
        %5005 = vmatpush1.bf16.msra.mxu0 0
        %5006 = vmatprep.subr.bf16.mxu0 0
        %5007 = vmatpush1.bf16.msra.mxu0 0
        %5008 = vmatprep.subr.bf16.mxu0 0
        %5009 = vmatpush1.bf16.msra.mxu0 0
        %5010 = vmatprep.subr.bf16.mxu0 0
        %5011 = vmatpush1.bf16.msra.mxu0 0
        %5012 = vmatprep.subr.bf16.mxu0 0
        %5013 = vmatpush1.bf16.msra.mxu0 0
        %5014 = vmatprep.subr.bf16.mxu0 0
        %5015 = vmatpush1.bf16.msra.mxu0 0
        %5016 = vmatprep.subr.bf16.mxu0 0
        %5017 = vmatpush1.bf16.msra.mxu0 0
        %5018 = vmatprep.subr.bf16.mxu0 0
        %5019 = vmatpush1.bf16.msra.mxu0 0
        %5020 = vmatprep.mubr.bf16.mxu0 0
        %5021 = vmatmul.mubr.bf16.gmra.mrb[0].mxu0 %v4610
        %v5022 = vpop.f32.mrb[0].mxu0
        %v5023 = vadd.f32 0.0, %v5022
        %v5024 = vpop.f32.mrb[0].mxu0
        %v5025 = vadd.f32 0.0, %v5024
        %v5026 = vpop.f32.mrb[0].mxu0
        %v5027 = vpop.f32.mrb[0].mxu0
        %5028 = vdwg.mxu0
        %v5029 = vpack.c.bf16 %v5023, %v5023
        %v5030 = vpack.c.bf16 %v5025, %v5025
        %v5032 = vsel %vm3001, %v5030, 0
        %5034 = vmatprep.subr.bf16.mxu0 0
        %5035 = vmatpush1.bf16.msra.mxu0 %v4728
        %5036 = vmatprep.subr.bf16.mxu0 0
        %5037 = vmatpush1.bf16.msra.mxu0 %v4729
        %5038 = vmatprep.subr.bf16.mxu0 0
        %5039 = vmatpush1.bf16.msra.mxu0 %v4730
        %5040 = vmatprep.subr.bf16.mxu0 0
        %5041 = vmatpush1.bf16.msra.mxu0 %v4731
        %5042 = vmatprep.subr.bf16.mxu0 0
        %5043 = vmatpush1.bf16.msra.mxu0 %v4732
        %5044 = vmatprep.subr.bf16.mxu0 0
        %5045 = vmatpush1.bf16.msra.mxu0 %v4733
        %5046 = vmatprep.subr.bf16.mxu0 0
        %5047 = vmatpush1.bf16.msra.mxu0 %v4734
        %5048 = vmatprep.subr.bf16.mxu0 0
        %5049 = vmatpush1.bf16.msra.mxu0 %v4735
        %5050 = vmatprep.subr.bf16.mxu0 0
        %5051 = vmatpush1.bf16.msra.mxu0 %v4736
        %5052 = vmatprep.subr.bf16.mxu0 0
        %5053 = vmatpush1.bf16.msra.mxu0 %v4737
        %5054 = vmatprep.subr.bf16.mxu0 0
        %5055 = vmatpush1.bf16.msra.mxu0 %v4738
        %5056 = vmatprep.subr.bf16.mxu0 0
        %5057 = vmatpush1.bf16.msra.mxu0 %v4739
        %5058 = vmatprep.subr.bf16.mxu0 0
        %5059 = vmatpush1.bf16.msra.mxu0 0
        %5060 = vmatprep.subr.bf16.mxu0 0
        %5061 = vmatpush1.bf16.msra.mxu0 0
        %5062 = vmatprep.subr.bf16.mxu0 0
        %5063 = vmatpush1.bf16.msra.mxu0 0
        %5064 = vmatprep.subr.bf16.mxu0 0
        %5065 = vmatpush1.bf16.msra.mxu0 0
        %5066 = vmatprep.mubr.bf16.mxu0 %v5032
        %5067 = vmatmul.mubr.bf16.gmra.mrb[0].mxu0 %v5029
        %v5068 = vpop.f32.mrb[0].mxu0
        %v5069 = vadd.f32 0.0, %v5068
        %v5070 = vpop.f32.mrb[0].mxu0
        %v5071 = vpop.f32.mrb[0].mxu0
        %v5072 = vpop.f32.mrb[0].mxu0
        %5073 = vdwg.mxu0
        %v5074 = vadd.f32 %v4983, %v5069
        %v5075 = vadd.f32 %v5074, %v4801
        %v5076 = vmax.f32 %v5075, 0.0
        %v5077 = vpack.c.bf16 %v5076, %v5076
        %v5078 = vadd.s32 %v716, 4294967295
        %vm5079 = vcmp.eq.s32.totalorder %v718, %v5078
        %v5080 = vsel %vm5079, 1.0, 0.0
        %v5081 = vpack.c.bf16 %v5080, %v5080
        %vm5082 = vcmp.eq.s32.totalorder %v718, %v716
        %v5083 = vsel %vm5082, 1.0, 0.0
        %v5084 = vpack.c.bf16 %v5083, %v5083
        %v5085 = vadd.s32 %v716, 1
        %vm5086 = vcmp.eq.s32.totalorder %v718, %v5085
        %v5087 = vsel %vm5086, 1.0, 0.0
        %v5088 = vpack.c.bf16 %v5087, %v5087
        %5090 = vrot.lane.b32.xlu0 %v4805, 64
        %v5091 = vpop.permute.xlu0 %5090
        %v5093 = vsel %vm3001, 0, %v5091
        %vm5094 = vcmask 15360
        %v5096 = vsel %vm5094, %v5081, 0
        %vm5098 = vcmask 1040384
        %v5099 = vsel %vm5098, %v5093, 0
        %v5102 = vsel %vm5098, %v5077, 0
        %5104 = vmatprep.subr.bf16.mxu0 %v5102
        %5105 = vmatpush1.bf16.msra.mxu0 %v5099
        %5106 = vmatprep.subr.bf16.mxu0 0
        %5107 = vmatpush1.bf16.msra.mxu0 0
        %5108 = vmatprep.subr.bf16.mxu0 0
        %5109 = vmatpush1.bf16.msra.mxu0 0
        %5110 = vmatprep.subr.bf16.mxu0 0
        %5111 = vmatpush1.bf16.msra.mxu0 0
        %5112 = vmatprep.subr.bf16.mxu0 0
        %5113 = vmatpush1.bf16.msra.mxu0 0
        %5114 = vmatprep.subr.bf16.mxu0 0
        %5115 = vmatpush1.bf16.msra.mxu0 0
        %5116 = vmatprep.subr.bf16.mxu0 0
        %5117 = vmatpush1.bf16.msra.mxu0 0
        %5118 = vmatprep.subr.bf16.mxu0 0
        %5119 = vmatpush1.bf16.msra.mxu0 0
        %5120 = vmatprep.subr.bf16.mxu0 0
        %5121 = vmatpush1.bf16.msra.mxu0 0
        %5122 = vmatprep.subr.bf16.mxu0 0
        %5123 = vmatpush1.bf16.msra.mxu0 0
        %5124 = vmatprep.subr.bf16.mxu0 0
        %5125 = vmatpush1.bf16.msra.mxu0 0
        %5126 = vmatprep.subr.bf16.mxu0 0
        %5127 = vmatpush1.bf16.msra.mxu0 0
        %5128 = vmatprep.subr.bf16.mxu0 0
        %5129 = vmatpush1.bf16.msra.mxu0 0
        %5130 = vmatprep.subr.bf16.mxu0 0
        %5131 = vmatpush1.bf16.msra.mxu0 0
        %5132 = vmatprep.subr.bf16.mxu0 0
        %5133 = vmatpush1.bf16.msra.mxu0 0
        %5134 = vmatprep.subr.bf16.mxu0 0
        %5135 = vmatpush1.bf16.msra.mxu0 0
        %5136 = vmatprep.mubr.bf16.mxu0 0
        %5137 = vmatmul.mubr.bf16.gmra.mrb[0].mxu0 %v5096
        %v5138 = vpop.f32.mrb[0].mxu0
        %v5139 = vadd.f32 0.0, %v5138
        %v5140 = vpop.f32.mrb[0].mxu0
        %v5141 = vadd.f32 0.0, %v5140
        %v5142 = vpop.f32.mrb[0].mxu0
        %v5143 = vpop.f32.mrb[0].mxu0
        %5144 = vdwg.mxu0
        %v5145 = vpack.c.bf16 %v5139, %v5139
        %v5146 = vpack.c.bf16 %v5141, %v5141
        %v5147 = vld [vmem:[%s7] sm:$0xf]
        %v5148 = vld [vmem:[%s7 + $0x4] sm:$0xf]
        %v5149 = vld [vmem:[%s7 + $0x8] sm:$0xf]
        %v5150 = vld [vmem:[%s7 + $0xc] sm:$0xf]
        %v5151 = vld [vmem:[%s7 + $0x10] sm:$0xf]
        %v5152 = vld [vmem:[%s7 + $0x14] sm:$0xf]
        %v5153 = vld [vmem:[%s7 + $0x18] sm:$0xf]
        %v5154 = vld [vmem:[%s7 + $0x1c] sm:$0xf]
        %v5155 = vld [vmem:[%s7 + $0x20] sm:$0xf]
        %v5156 = vld [vmem:[%s7 + $0x24] sm:$0xf]
        %v5157 = vld [vmem:[%s7 + $0x28] sm:$0xf]
        %v5158 = vld [vmem:[%s7 + $0x2c] sm:$0xf]
        %v5159 = vld [vmem:[%s7 + $0x30] sm:$0xf]
        %v5160 = vld [vmem:[%s7 + $0x34] sm:$0xf]
        %v5161 = vld [vmem:[%s7 + $0x38] sm:$0xf]
        %v5162 = vld [vmem:[%s7 + $0x3c] sm:$0xf]
        %v5163 = vld [vmem:[%s7 + $0x40] sm:$0xf]
        %v5164 = vld [vmem:[%s7 + $0x44] sm:$0xf]
        %v5165 = vld [vmem:[%s7 + $0x48] sm:$0xf]
        %v5166 = vld [vmem:[%s7 + $0x4c] sm:$0xf]
        %v5167 = vld [vmem:[%s7 + $0x50] sm:$0xf]
        %v5168 = vld [vmem:[%s7 + $0x54] sm:$0xf]
        %v5169 = vld [vmem:[%s7 + $0x58] sm:$0xf]
        %v5170 = vld [vmem:[%s7 + $0x5c] sm:$0xf]
        %v5172 = vsel %vm5094, %v5084, 0
        %5174 = vmatprep.subr.bf16.mxu0 %v5102
        %5175 = vmatpush1.bf16.msra.mxu0 %v5099
        %5176 = vmatprep.subr.bf16.mxu0 0
        %5177 = vmatpush1.bf16.msra.mxu0 0
        %5178 = vmatprep.subr.bf16.mxu0 0
        %5179 = vmatpush1.bf16.msra.mxu0 0
        %5180 = vmatprep.subr.bf16.mxu0 0
        %5181 = vmatpush1.bf16.msra.mxu0 0
        %5182 = vmatprep.subr.bf16.mxu0 0
        %5183 = vmatpush1.bf16.msra.mxu0 0
        %5184 = vmatprep.subr.bf16.mxu0 0
        %5185 = vmatpush1.bf16.msra.mxu0 0
        %5186 = vmatprep.subr.bf16.mxu0 0
        %5187 = vmatpush1.bf16.msra.mxu0 0
        %5188 = vmatprep.subr.bf16.mxu0 0
        %5189 = vmatpush1.bf16.msra.mxu0 0
        %5190 = vmatprep.subr.bf16.mxu0 0
        %5191 = vmatpush1.bf16.msra.mxu0 0
        %5192 = vmatprep.subr.bf16.mxu0 0
        %5193 = vmatpush1.bf16.msra.mxu0 0
        %5194 = vmatprep.subr.bf16.mxu0 0
        %5195 = vmatpush1.bf16.msra.mxu0 0
        %5196 = vmatprep.subr.bf16.mxu0 0
        %5197 = vmatpush1.bf16.msra.mxu0 0
        %5198 = vmatprep.subr.bf16.mxu0 0
        %5199 = vmatpush1.bf16.msra.mxu0 0
        %5200 = vmatprep.subr.bf16.mxu0 0
        %5201 = vmatpush1.bf16.msra.mxu0 0
        %5202 = vmatprep.subr.bf16.mxu0 0
        %5203 = vmatpush1.bf16.msra.mxu0 0
        %5204 = vmatprep.subr.bf16.mxu0 0
        %5205 = vmatpush1.bf16.msra.mxu0 0
        %5206 = vmatprep.mubr.bf16.mxu0 0
        %5207 = vmatmul.mubr.bf16.gmra.mrb[0].mxu0 %v5172
        %v5208 = vpop.f32.mrb[0].mxu0
        %v5209 = vadd.f32 0.0, %v5208
        %v5210 = vpop.f32.mrb[0].mxu0
        %v5211 = vadd.f32 0.0, %v5210
        %v5212 = vpop.f32.mrb[0].mxu0
        %v5213 = vpop.f32.mrb[0].mxu0
        %5214 = vdwg.mxu0
        %v5215 = vpack.c.bf16 %v5209, %v5209
        %v5216 = vpack.c.bf16 %v5211, %v5211
        %s5217 = scalar_lea.vmem %s7, 96
        %v5218 = vld [vmem:[%s5217] sm:$0xf]
        %v5219 = vld [vmem:[%s5217 + $0x4] sm:$0xf]
        %v5220 = vld [vmem:[%s5217 + $0x8] sm:$0xf]
        %v5221 = vld [vmem:[%s5217 + $0xc] sm:$0xf]
        %v5222 = vld [vmem:[%s5217 + $0x10] sm:$0xf]
        %v5223 = vld [vmem:[%s5217 + $0x14] sm:$0xf]
        %v5224 = vld [vmem:[%s5217 + $0x18] sm:$0xf]
        %v5225 = vld [vmem:[%s5217 + $0x1c] sm:$0xf]
        %v5226 = vld [vmem:[%s5217 + $0x20] sm:$0xf]
        %v5227 = vld [vmem:[%s5217 + $0x24] sm:$0xf]
        %v5228 = vld [vmem:[%s5217 + $0x28] sm:$0xf]
        %v5229 = vld [vmem:[%s5217 + $0x2c] sm:$0xf]
        %v5230 = vld [vmem:[%s5217 + $0x30] sm:$0xf]
        %v5231 = vld [vmem:[%s5217 + $0x34] sm:$0xf]
        %v5232 = vld [vmem:[%s5217 + $0x38] sm:$0xf]
        %v5233 = vld [vmem:[%s5217 + $0x3c] sm:$0xf]
        %v5234 = vld [vmem:[%s5217 + $0x40] sm:$0xf]
        %v5235 = vld [vmem:[%s5217 + $0x44] sm:$0xf]
        %v5236 = vld [vmem:[%s5217 + $0x48] sm:$0xf]
        %v5237 = vld [vmem:[%s5217 + $0x4c] sm:$0xf]
        %v5238 = vld [vmem:[%s5217 + $0x50] sm:$0xf]
        %v5239 = vld [vmem:[%s5217 + $0x54] sm:$0xf]
        %v5240 = vld [vmem:[%s5217 + $0x58] sm:$0xf]
        %v5241 = vld [vmem:[%s5217 + $0x5c] sm:$0xf]
        %v5266 = vunpack.c.l.b16 %v5218
        %v5267 = vunpack.c.l.b16 %v5219
        %v5268 = vunpack.c.l.b16 %v5220
        %v5269 = vunpack.c.l.b16 %v5221
        %v5270 = vunpack.c.l.b16 %v5222
        %v5271 = vunpack.c.l.b16 %v5223
        %v5272 = vunpack.c.l.b16 %v5224
        %v5273 = vunpack.c.l.b16 %v5225
        %v5274 = vunpack.c.l.b16 %v5226
        %v5275 = vunpack.c.l.b16 %v5227
        %v5276 = vunpack.c.l.b16 %v5228
        %v5277 = vunpack.c.l.b16 %v5229
        %v5278 = vunpack.c.l.b16 %v5230
        %v5279 = vunpack.c.l.b16 %v5231
        %v5280 = vunpack.c.l.b16 %v5232
        %v5281 = vunpack.c.l.b16 %v5233
        %v5282 = vunpack.c.l.b16 %v5234
        %v5283 = vunpack.c.l.b16 %v5235
        %v5284 = vunpack.c.l.b16 %v5236
        %v5285 = vunpack.c.l.b16 %v5237
        %v5286 = vunpack.c.l.b16 %v5238
        %v5287 = vunpack.c.l.b16 %v5239
        %v5288 = vunpack.c.l.b16 %v5240
        %v5289 = vunpack.c.l.b16 %v5241
        %v5290 = vpack.c.b16 %v5267, %v5266
        %v5291 = vpack.c.b16 %v5269, %v5268
        %v5292 = vpack.c.b16 %v5271, %v5270
        %v5293 = vpack.c.b16 %v5273, %v5272
        %v5294 = vpack.c.b16 %v5275, %v5274
        %v5295 = vpack.c.b16 %v5277, %v5276
        %v5296 = vpack.c.b16 %v5279, %v5278
        %v5297 = vpack.c.b16 %v5281, %v5280
        %v5298 = vpack.c.b16 %v5283, %v5282
        %v5299 = vpack.c.b16 %v5285, %v5284
        %v5300 = vpack.c.b16 %v5287, %v5286
        %v5301 = vpack.c.b16 %v5289, %v5288
        %v5315 = vsel %vm3001, %v5216, 0
        %5317 = vmatprep.subr.bf16.mxu0 0
        %5318 = vmatpush1.bf16.msra.mxu0 %v5290
        %5319 = vmatprep.subr.bf16.mxu0 0
        %5320 = vmatpush1.bf16.msra.mxu0 %v5291
        %5321 = vmatprep.subr.bf16.mxu0 0
        %5322 = vmatpush1.bf16.msra.mxu0 %v5292
        %5323 = vmatprep.subr.bf16.mxu0 0
        %5324 = vmatpush1.bf16.msra.mxu0 %v5293
        %5325 = vmatprep.subr.bf16.mxu0 0
        %5326 = vmatpush1.bf16.msra.mxu0 %v5294
        %5327 = vmatprep.subr.bf16.mxu0 0
        %5328 = vmatpush1.bf16.msra.mxu0 %v5295
        %5329 = vmatprep.subr.bf16.mxu0 0
        %5330 = vmatpush1.bf16.msra.mxu0 %v5296
        %5331 = vmatprep.subr.bf16.mxu0 0
        %5332 = vmatpush1.bf16.msra.mxu0 %v5297
        %5333 = vmatprep.subr.bf16.mxu0 0
        %5334 = vmatpush1.bf16.msra.mxu0 %v5298
        %5335 = vmatprep.subr.bf16.mxu0 0
        %5336 = vmatpush1.bf16.msra.mxu0 %v5299
        %5337 = vmatprep.subr.bf16.mxu0 0
        %5338 = vmatpush1.bf16.msra.mxu0 %v5300
        %5339 = vmatprep.subr.bf16.mxu0 0
        %5340 = vmatpush1.bf16.msra.mxu0 %v5301
        %5341 = vmatprep.subr.bf16.mxu0 0
        %5342 = vmatpush1.bf16.msra.mxu0 0
        %5343 = vmatprep.subr.bf16.mxu0 0
        %5344 = vmatpush1.bf16.msra.mxu0 0
        %5345 = vmatprep.subr.bf16.mxu0 0
        %5346 = vmatpush1.bf16.msra.mxu0 0
        %5347 = vmatprep.subr.bf16.mxu0 0
        %5348 = vmatpush1.bf16.msra.mxu0 0
        %5349 = vmatprep.mubr.bf16.mxu0 %v5315
        %5350 = vmatmul.mubr.bf16.gmra.mrb[0].mxu0 %v5215
        %v5351 = vpop.f32.mrb[0].mxu0
        %v5352 = vadd.f32 0.0, %v5351
        %v5353 = vpop.f32.mrb[0].mxu0
        %v5354 = vpop.f32.mrb[0].mxu0
        %v5355 = vpop.f32.mrb[0].mxu0
        %5356 = vdwg.mxu0
        %v5381 = vunpack.c.l.b16 %v5147
        %v5382 = vunpack.c.l.b16 %v5148
        %v5383 = vunpack.c.l.b16 %v5149
        %v5384 = vunpack.c.l.b16 %v5150
        %v5385 = vunpack.c.l.b16 %v5151
        %v5386 = vunpack.c.l.b16 %v5152
        %v5387 = vunpack.c.l.b16 %v5153
        %v5388 = vunpack.c.l.b16 %v5154
        %v5389 = vunpack.c.l.b16 %v5155
        %v5390 = vunpack.c.l.b16 %v5156
        %v5391 = vunpack.c.l.b16 %v5157
        %v5392 = vunpack.c.l.b16 %v5158
        %v5393 = vunpack.c.l.b16 %v5159
        %v5394 = vunpack.c.l.b16 %v5160
        %v5395 = vunpack.c.l.b16 %v5161
        %v5396 = vunpack.c.l.b16 %v5162
        %v5397 = vunpack.c.l.b16 %v5163
        %v5398 = vunpack.c.l.b16 %v5164
        %v5399 = vunpack.c.l.b16 %v5165
        %v5400 = vunpack.c.l.b16 %v5166
        %v5401 = vunpack.c.l.b16 %v5167
        %v5402 = vunpack.c.l.b16 %v5168
        %v5403 = vunpack.c.l.b16 %v5169
        %v5404 = vunpack.c.l.b16 %v5170
        %v5405 = vpack.c.b16 %v5382, %v5381
        %v5406 = vpack.c.b16 %v5384, %v5383
        %v5407 = vpack.c.b16 %v5386, %v5385
        %v5408 = vpack.c.b16 %v5388, %v5387
        %v5409 = vpack.c.b16 %v5390, %v5389
        %v5410 = vpack.c.b16 %v5392, %v5391
        %v5411 = vpack.c.b16 %v5394, %v5393
        %v5412 = vpack.c.b16 %v5396, %v5395
        %v5413 = vpack.c.b16 %v5398, %v5397
        %v5414 = vpack.c.b16 %v5400, %v5399
        %v5415 = vpack.c.b16 %v5402, %v5401
        %v5416 = vpack.c.b16 %v5404, %v5403
        %v5430 = vsel %vm3001, %v5146, 0
        %5432 = vmatprep.subr.bf16.mxu0 0
        %5433 = vmatpush1.bf16.msra.mxu0 %v5405
        %5434 = vmatprep.subr.bf16.mxu0 0
        %5435 = vmatpush1.bf16.msra.mxu0 %v5406
        %5436 = vmatprep.subr.bf16.mxu0 0
        %5437 = vmatpush1.bf16.msra.mxu0 %v5407
        %5438 = vmatprep.subr.bf16.mxu0 0
        %5439 = vmatpush1.bf16.msra.mxu0 %v5408
        %5440 = vmatprep.subr.bf16.mxu0 0
        %5441 = vmatpush1.bf16.msra.mxu0 %v5409
        %5442 = vmatprep.subr.bf16.mxu0 0
        %5443 = vmatpush1.bf16.msra.mxu0 %v5410
        %5444 = vmatprep.subr.bf16.mxu0 0
        %5445 = vmatpush1.bf16.msra.mxu0 %v5411
        %5446 = vmatprep.subr.bf16.mxu0 0
        %5447 = vmatpush1.bf16.msra.mxu0 %v5412
        %5448 = vmatprep.subr.bf16.mxu0 0
        %5449 = vmatpush1.bf16.msra.mxu0 %v5413
        %5450 = vmatprep.subr.bf16.mxu0 0
        %5451 = vmatpush1.bf16.msra.mxu0 %v5414
        %5452 = vmatprep.subr.bf16.mxu0 0
        %5453 = vmatpush1.bf16.msra.mxu0 %v5415
        %5454 = vmatprep.subr.bf16.mxu0 0
        %5455 = vmatpush1.bf16.msra.mxu0 %v5416
        %5456 = vmatprep.subr.bf16.mxu0 0
        %5457 = vmatpush1.bf16.msra.mxu0 0
        %5458 = vmatprep.subr.bf16.mxu0 0
        %5459 = vmatpush1.bf16.msra.mxu0 0
        %5460 = vmatprep.subr.bf16.mxu0 0
        %5461 = vmatpush1.bf16.msra.mxu0 0
        %5462 = vmatprep.subr.bf16.mxu0 0
        %5463 = vmatpush1.bf16.msra.mxu0 0
        %5464 = vmatprep.mubr.bf16.mxu0 %v5430
        %5465 = vmatmul.mubr.bf16.gmra.mrb[0].mxu0 %v5145
        %v5466 = vpop.f32.mrb[0].mxu0
        %v5467 = vadd.f32 %v5352, %v5466
        %v5468 = vpop.f32.mrb[0].mxu0
        %v5469 = vpop.f32.mrb[0].mxu0
        %v5470 = vpop.f32.mrb[0].mxu0
        %5471 = vdwg.mxu0
        %v5473 = vsel %vm5094, %v5088, 0
        %5475 = vmatprep.subr.bf16.mxu0 %v5102
        %5476 = vmatpush1.bf16.msra.mxu0 %v5099
        %5477 = vmatprep.subr.bf16.mxu0 0
        %5478 = vmatpush1.bf16.msra.mxu0 0
        %5479 = vmatprep.subr.bf16.mxu0 0
        %5480 = vmatpush1.bf16.msra.mxu0 0
        %5481 = vmatprep.subr.bf16.mxu0 0
        %5482 = vmatpush1.bf16.msra.mxu0 0
        %5483 = vmatprep.subr.bf16.mxu0 0
        %5484 = vmatpush1.bf16.msra.mxu0 0
        %5485 = vmatprep.subr.bf16.mxu0 0
        %5486 = vmatpush1.bf16.msra.mxu0 0
        %5487 = vmatprep.subr.bf16.mxu0 0
        %5488 = vmatpush1.bf16.msra.mxu0 0
        %5489 = vmatprep.subr.bf16.mxu0 0
        %5490 = vmatpush1.bf16.msra.mxu0 0
        %5491 = vmatprep.subr.bf16.mxu0 0
        %5492 = vmatpush1.bf16.msra.mxu0 0
        %5493 = vmatprep.subr.bf16.mxu0 0
        %5494 = vmatpush1.bf16.msra.mxu0 0
        %5495 = vmatprep.subr.bf16.mxu0 0
        %5496 = vmatpush1.bf16.msra.mxu0 0
        %5497 = vmatprep.subr.bf16.mxu0 0
        %5498 = vmatpush1.bf16.msra.mxu0 0
        %5499 = vmatprep.subr.bf16.mxu0 0
        %5500 = vmatpush1.bf16.msra.mxu0 0
        %5501 = vmatprep.subr.bf16.mxu0 0
        %5502 = vmatpush1.bf16.msra.mxu0 0
        %5503 = vmatprep.subr.bf16.mxu0 0
        %5504 = vmatpush1.bf16.msra.mxu0 0
        %5505 = vmatprep.subr.bf16.mxu0 0
        %5506 = vmatpush1.bf16.msra.mxu0 0
        %5507 = vmatprep.mubr.bf16.mxu0 0
        %5508 = vmatmul.mubr.bf16.gmra.mrb[0].mxu0 %v5473
        %v5509 = vpop.f32.mrb[0].mxu0
        %v5510 = vadd.f32 0.0, %v5509
        %v5511 = vpop.f32.mrb[0].mxu0
        %v5512 = vadd.f32 0.0, %v5511
        %v5513 = vpop.f32.mrb[0].mxu0
        %v5514 = vpop.f32.mrb[0].mxu0
        %5515 = vdwg.mxu0
        %v5516 = vpack.c.bf16 %v5510, %v5510
        %v5517 = vpack.c.bf16 %v5512, %v5512
        %s5518 = scalar_lea.vmem %s7, 192
        %v5519 = vld [vmem:[%s5518] sm:$0xf]
        %v5520 = vld [vmem:[%s5518 + $0x4] sm:$0xf]
        %v5521 = vld [vmem:[%s5518 + $0x8] sm:$0xf]
        %v5522 = vld [vmem:[%s5518 + $0xc] sm:$0xf]
        %v5523 = vld [vmem:[%s5518 + $0x10] sm:$0xf]
        %v5524 = vld [vmem:[%s5518 + $0x14] sm:$0xf]
        %v5525 = vld [vmem:[%s5518 + $0x18] sm:$0xf]
        %v5526 = vld [vmem:[%s5518 + $0x1c] sm:$0xf]
        %v5527 = vld [vmem:[%s5518 + $0x20] sm:$0xf]
        %v5528 = vld [vmem:[%s5518 + $0x24] sm:$0xf]
        %v5529 = vld [vmem:[%s5518 + $0x28] sm:$0xf]
        %v5530 = vld [vmem:[%s5518 + $0x2c] sm:$0xf]
        %v5531 = vld [vmem:[%s5518 + $0x30] sm:$0xf]
        %v5532 = vld [vmem:[%s5518 + $0x34] sm:$0xf]
        %v5533 = vld [vmem:[%s5518 + $0x38] sm:$0xf]
        %v5534 = vld [vmem:[%s5518 + $0x3c] sm:$0xf]
        %v5535 = vld [vmem:[%s5518 + $0x40] sm:$0xf]
        %v5536 = vld [vmem:[%s5518 + $0x44] sm:$0xf]
        %v5537 = vld [vmem:[%s5518 + $0x48] sm:$0xf]
        %v5538 = vld [vmem:[%s5518 + $0x4c] sm:$0xf]
        %v5539 = vld [vmem:[%s5518 + $0x50] sm:$0xf]
        %v5540 = vld [vmem:[%s5518 + $0x54] sm:$0xf]
        %v5541 = vld [vmem:[%s5518 + $0x58] sm:$0xf]
        %v5542 = vld [vmem:[%s5518 + $0x5c] sm:$0xf]
        %v5567 = vunpack.c.l.b16 %v5519
        %v5568 = vunpack.c.l.b16 %v5520
        %v5569 = vunpack.c.l.b16 %v5521
        %v5570 = vunpack.c.l.b16 %v5522
        %v5571 = vunpack.c.l.b16 %v5523
        %v5572 = vunpack.c.l.b16 %v5524
        %v5573 = vunpack.c.l.b16 %v5525
        %v5574 = vunpack.c.l.b16 %v5526
        %v5575 = vunpack.c.l.b16 %v5527
        %v5576 = vunpack.c.l.b16 %v5528
        %v5577 = vunpack.c.l.b16 %v5529
        %v5578 = vunpack.c.l.b16 %v5530
        %v5579 = vunpack.c.l.b16 %v5531
        %v5580 = vunpack.c.l.b16 %v5532
        %v5581 = vunpack.c.l.b16 %v5533
        %v5582 = vunpack.c.l.b16 %v5534
        %v5583 = vunpack.c.l.b16 %v5535
        %v5584 = vunpack.c.l.b16 %v5536
        %v5585 = vunpack.c.l.b16 %v5537
        %v5586 = vunpack.c.l.b16 %v5538
        %v5587 = vunpack.c.l.b16 %v5539
        %v5588 = vunpack.c.l.b16 %v5540
        %v5589 = vunpack.c.l.b16 %v5541
        %v5590 = vunpack.c.l.b16 %v5542
        %v5591 = vpack.c.b16 %v5568, %v5567
        %v5592 = vpack.c.b16 %v5570, %v5569
        %v5593 = vpack.c.b16 %v5572, %v5571
        %v5594 = vpack.c.b16 %v5574, %v5573
        %v5595 = vpack.c.b16 %v5576, %v5575
        %v5596 = vpack.c.b16 %v5578, %v5577
        %v5597 = vpack.c.b16 %v5580, %v5579
        %v5598 = vpack.c.b16 %v5582, %v5581
        %v5599 = vpack.c.b16 %v5584, %v5583
        %v5600 = vpack.c.b16 %v5586, %v5585
        %v5601 = vpack.c.b16 %v5588, %v5587
        %v5602 = vpack.c.b16 %v5590, %v5589
        %v5616 = vsel %vm3001, %v5517, 0
        %5618 = vmatprep.subr.bf16.mxu0 0
        %5619 = vmatpush1.bf16.msra.mxu0 %v5591
        %5620 = vmatprep.subr.bf16.mxu0 0
        %5621 = vmatpush1.bf16.msra.mxu0 %v5592
        %5622 = vmatprep.subr.bf16.mxu0 0
        %5623 = vmatpush1.bf16.msra.mxu0 %v5593
        %5624 = vmatprep.subr.bf16.mxu0 0
        %5625 = vmatpush1.bf16.msra.mxu0 %v5594
        %5626 = vmatprep.subr.bf16.mxu0 0
        %5627 = vmatpush1.bf16.msra.mxu0 %v5595
        %5628 = vmatprep.subr.bf16.mxu0 0
        %5629 = vmatpush1.bf16.msra.mxu0 %v5596
        %5630 = vmatprep.subr.bf16.mxu0 0
        %5631 = vmatpush1.bf16.msra.mxu0 %v5597
        %5632 = vmatprep.subr.bf16.mxu0 0
        %5633 = vmatpush1.bf16.msra.mxu0 %v5598
        %5634 = vmatprep.subr.bf16.mxu0 0
        %5635 = vmatpush1.bf16.msra.mxu0 %v5599
        %5636 = vmatprep.subr.bf16.mxu0 0
        %5637 = vmatpush1.bf16.msra.mxu0 %v5600
        %5638 = vmatprep.subr.bf16.mxu0 0
        %5639 = vmatpush1.bf16.msra.mxu0 %v5601
        %5640 = vmatprep.subr.bf16.mxu0 0
        %5641 = vmatpush1.bf16.msra.mxu0 %v5602
        %5642 = vmatprep.subr.bf16.mxu0 0
        %5643 = vmatpush1.bf16.msra.mxu0 0
        %5644 = vmatprep.subr.bf16.mxu0 0
        %5645 = vmatpush1.bf16.msra.mxu0 0
        %5646 = vmatprep.subr.bf16.mxu0 0
        %5647 = vmatpush1.bf16.msra.mxu0 0
        %5648 = vmatprep.subr.bf16.mxu0 0
        %5649 = vmatpush1.bf16.msra.mxu0 0
        %5650 = vmatprep.mubr.bf16.mxu0 %v5616
        %5651 = vmatmul.mubr.bf16.gmra.mrb[0].mxu0 %v5516
        %v5652 = vpop.f32.mrb[0].mxu0
        %v5653 = vadd.f32 0.0, %v5652
        %v5654 = vpop.f32.mrb[0].mxu0
        %v5655 = vpop.f32.mrb[0].mxu0
        %v5656 = vpop.f32.mrb[0].mxu0
        %5657 = vdwg.mxu0
        %v5658 = vadd.f32 %v5467, %v5653
        %v5659 = vld [vmem:[%s8] sm:$0x1]
        %v5661 = vlaneseq
        %v5662 = vshrl.u32 %v5661, 7
        %v5663 = vsub.s32 0, %v5662
        %v5664 = vrot.slane %v5659, %v5663
        %v5666 = vadd.f32 %v5658, %v5664
        %v5667 = vmax.f32 %v5666, 0.0
        %v5668 = vpack.c.bf16 %v5667, %v5667
        %5670 = vrot.lane.b32.xlu0 %v5077, 64
        %v5671 = vpop.permute.xlu0 %5670
        %v5674 = vsel %vm3001, %v4805, %v5671
        %v5675 = vsel %vm5098, %v5674, 0
        %v5677 = vsel %vm5098, 0, 0
        %5679 = vmatprep.subr.bf16.mxu0 %v5677
        %5680 = vmatpush1.bf16.msra.mxu0 %v5675
        %5681 = vmatprep.subr.bf16.mxu0 0
        %5682 = vmatpush1.bf16.msra.mxu0 0
        %5683 = vmatprep.subr.bf16.mxu0 0
        %5684 = vmatpush1.bf16.msra.mxu0 0
        %5685 = vmatprep.subr.bf16.mxu0 0
        %5686 = vmatpush1.bf16.msra.mxu0 0
        %5687 = vmatprep.subr.bf16.mxu0 0
        %5688 = vmatpush1.bf16.msra.mxu0 0
        %5689 = vmatprep.subr.bf16.mxu0 0
        %5690 = vmatpush1.bf16.msra.mxu0 0
        %5691 = vmatprep.subr.bf16.mxu0 0
        %5692 = vmatpush1.bf16.msra.mxu0 0
        %5693 = vmatprep.subr.bf16.mxu0 0
        %5694 = vmatpush1.bf16.msra.mxu0 0
        %5695 = vmatprep.subr.bf16.mxu0 0
        %5696 = vmatpush1.bf16.msra.mxu0 0
        %5697 = vmatprep.subr.bf16.mxu0 0
        %5698 = vmatpush1.bf16.msra.mxu0 0
        %5699 = vmatprep.subr.bf16.mxu0 0
        %5700 = vmatpush1.bf16.msra.mxu0 0
        %5701 = vmatprep.subr.bf16.mxu0 0
        %5702 = vmatpush1.bf16.msra.mxu0 0
        %5703 = vmatprep.subr.bf16.mxu0 0
        %5704 = vmatpush1.bf16.msra.mxu0 0
        %5705 = vmatprep.subr.bf16.mxu0 0
        %5706 = vmatpush1.bf16.msra.mxu0 0
        %5707 = vmatprep.subr.bf16.mxu0 0
        %5708 = vmatpush1.bf16.msra.mxu0 0
        %5709 = vmatprep.subr.bf16.mxu0 0
        %5710 = vmatpush1.bf16.msra.mxu0 0
        %5711 = vmatprep.mubr.bf16.mxu0 0
        %5712 = vmatmul.mubr.bf16.gmra.mrb[0].mxu0 %v5096
        %v5713 = vpop.f32.mrb[0].mxu0
        %v5714 = vadd.f32 0.0, %v5713
        %v5715 = vpop.f32.mrb[0].mxu0
        %v5716 = vadd.f32 0.0, %v5715
        %v5717 = vpop.f32.mrb[0].mxu0
        %v5718 = vpop.f32.mrb[0].mxu0
        %5719 = vdwg.mxu0
        %v5720 = vpack.c.bf16 %v5714, %v5714
        %v5721 = vpack.c.bf16 %v5716, %v5716
        %5722 = vmatprep.subr.bf16.mxu0 %v5677
        %5723 = vmatpush1.bf16.msra.mxu0 %v5675
        %5724 = vmatprep.subr.bf16.mxu0 0
        %5725 = vmatpush1.bf16.msra.mxu0 0
        %5726 = vmatprep.subr.bf16.mxu0 0
        %5727 = vmatpush1.bf16.msra.mxu0 0
        %5728 = vmatprep.subr.bf16.mxu0 0
        %5729 = vmatpush1.bf16.msra.mxu0 0
        %5730 = vmatprep.subr.bf16.mxu0 0
        %5731 = vmatpush1.bf16.msra.mxu0 0
        %5732 = vmatprep.subr.bf16.mxu0 0
        %5733 = vmatpush1.bf16.msra.mxu0 0
        %5734 = vmatprep.subr.bf16.mxu0 0
        %5735 = vmatpush1.bf16.msra.mxu0 0
        %5736 = vmatprep.subr.bf16.mxu0 0
        %5737 = vmatpush1.bf16.msra.mxu0 0
        %5738 = vmatprep.subr.bf16.mxu0 0
        %5739 = vmatpush1.bf16.msra.mxu0 0
        %5740 = vmatprep.subr.bf16.mxu0 0
        %5741 = vmatpush1.bf16.msra.mxu0 0
        %5742 = vmatprep.subr.bf16.mxu0 0
        %5743 = vmatpush1.bf16.msra.mxu0 0
        %5744 = vmatprep.subr.bf16.mxu0 0
        %5745 = vmatpush1.bf16.msra.mxu0 0
        %5746 = vmatprep.subr.bf16.mxu0 0
        %5747 = vmatpush1.bf16.msra.mxu0 0
        %5748 = vmatprep.subr.bf16.mxu0 0
        %5749 = vmatpush1.bf16.msra.mxu0 0
        %5750 = vmatprep.subr.bf16.mxu0 0
        %5751 = vmatpush1.bf16.msra.mxu0 0
        %5752 = vmatprep.subr.bf16.mxu0 0
        %5753 = vmatpush1.bf16.msra.mxu0 0
        %5754 = vmatprep.mubr.bf16.mxu0 0
        %5755 = vmatmul.mubr.bf16.gmra.mrb[0].mxu0 %v5172
        %v5756 = vpop.f32.mrb[0].mxu0
        %v5757 = vadd.f32 0.0, %v5756
        %v5758 = vpop.f32.mrb[0].mxu0
        %v5759 = vadd.f32 0.0, %v5758
        %v5760 = vpop.f32.mrb[0].mxu0
        %v5761 = vpop.f32.mrb[0].mxu0
        %5762 = vdwg.mxu0
        %v5763 = vpack.c.bf16 %v5757, %v5757
        %v5764 = vpack.c.bf16 %v5759, %v5759
        %v5766 = vsel %vm3001, %v5764, 0
        %5768 = vmatprep.subr.bf16.mxu0 0
        %5769 = vmatpush1.bf16.msra.mxu0 %v5290
        %5770 = vmatprep.subr.bf16.mxu0 0
        %5771 = vmatpush1.bf16.msra.mxu0 %v5291
        %5772 = vmatprep.subr.bf16.mxu0 0
        %5773 = vmatpush1.bf16.msra.mxu0 %v5292
        %5774 = vmatprep.subr.bf16.mxu0 0
        %5775 = vmatpush1.bf16.msra.mxu0 %v5293
        %5776 = vmatprep.subr.bf16.mxu0 0
        %5777 = vmatpush1.bf16.msra.mxu0 %v5294
        %5778 = vmatprep.subr.bf16.mxu0 0
        %5779 = vmatpush1.bf16.msra.mxu0 %v5295
        %5780 = vmatprep.subr.bf16.mxu0 0
        %5781 = vmatpush1.bf16.msra.mxu0 %v5296
        %5782 = vmatprep.subr.bf16.mxu0 0
        %5783 = vmatpush1.bf16.msra.mxu0 %v5297
        %5784 = vmatprep.subr.bf16.mxu0 0
        %5785 = vmatpush1.bf16.msra.mxu0 %v5298
        %5786 = vmatprep.subr.bf16.mxu0 0
        %5787 = vmatpush1.bf16.msra.mxu0 %v5299
        %5788 = vmatprep.subr.bf16.mxu0 0
        %5789 = vmatpush1.bf16.msra.mxu0 %v5300
        %5790 = vmatprep.subr.bf16.mxu0 0
        %5791 = vmatpush1.bf16.msra.mxu0 %v5301
        %5792 = vmatprep.subr.bf16.mxu0 0
        %5793 = vmatpush1.bf16.msra.mxu0 0
        %5794 = vmatprep.subr.bf16.mxu0 0
        %5795 = vmatpush1.bf16.msra.mxu0 0
        %5796 = vmatprep.subr.bf16.mxu0 0
        %5797 = vmatpush1.bf16.msra.mxu0 0
        %5798 = vmatprep.subr.bf16.mxu0 0
        %5799 = vmatpush1.bf16.msra.mxu0 0
        %5800 = vmatprep.mubr.bf16.mxu0 %v5766
        %5801 = vmatmul.mubr.bf16.gmra.mrb[0].mxu0 %v5763
        %v5802 = vpop.f32.mrb[0].mxu0
        %v5803 = vadd.f32 0.0, %v5802
        %v5804 = vpop.f32.mrb[0].mxu0
        %v5805 = vpop.f32.mrb[0].mxu0
        %v5806 = vpop.f32.mrb[0].mxu0
        %5807 = vdwg.mxu0
        %v5809 = vsel %vm3001, %v5721, 0
        %5811 = vmatprep.subr.bf16.mxu0 0
        %5812 = vmatpush1.bf16.msra.mxu0 %v5405
        %5813 = vmatprep.subr.bf16.mxu0 0
        %5814 = vmatpush1.bf16.msra.mxu0 %v5406
        %5815 = vmatprep.subr.bf16.mxu0 0
        %5816 = vmatpush1.bf16.msra.mxu0 %v5407
        %5817 = vmatprep.subr.bf16.mxu0 0
        %5818 = vmatpush1.bf16.msra.mxu0 %v5408
        %5819 = vmatprep.subr.bf16.mxu0 0
        %5820 = vmatpush1.bf16.msra.mxu0 %v5409
        %5821 = vmatprep.subr.bf16.mxu0 0
        %5822 = vmatpush1.bf16.msra.mxu0 %v5410
        %5823 = vmatprep.subr.bf16.mxu0 0
        %5824 = vmatpush1.bf16.msra.mxu0 %v5411
        %5825 = vmatprep.subr.bf16.mxu0 0
        %5826 = vmatpush1.bf16.msra.mxu0 %v5412
        %5827 = vmatprep.subr.bf16.mxu0 0
        %5828 = vmatpush1.bf16.msra.mxu0 %v5413
        %5829 = vmatprep.subr.bf16.mxu0 0
        %5830 = vmatpush1.bf16.msra.mxu0 %v5414
        %5831 = vmatprep.subr.bf16.mxu0 0
        %5832 = vmatpush1.bf16.msra.mxu0 %v5415
        %5833 = vmatprep.subr.bf16.mxu0 0
        %5834 = vmatpush1.bf16.msra.mxu0 %v5416
        %5835 = vmatprep.subr.bf16.mxu0 0
        %5836 = vmatpush1.bf16.msra.mxu0 0
        %5837 = vmatprep.subr.bf16.mxu0 0
        %5838 = vmatpush1.bf16.msra.mxu0 0
        %5839 = vmatprep.subr.bf16.mxu0 0
        %5840 = vmatpush1.bf16.msra.mxu0 0
        %5841 = vmatprep.subr.bf16.mxu0 0
        %5842 = vmatpush1.bf16.msra.mxu0 0
        %5843 = vmatprep.mubr.bf16.mxu0 %v5809
        %5844 = vmatmul.mubr.bf16.gmra.mrb[0].mxu0 %v5720
        %v5845 = vpop.f32.mrb[0].mxu0
        %v5846 = vadd.f32 %v5803, %v5845
        %v5847 = vpop.f32.mrb[0].mxu0
        %v5848 = vpop.f32.mrb[0].mxu0
        %v5849 = vpop.f32.mrb[0].mxu0
        %5850 = vdwg.mxu0
        %5851 = vmatprep.subr.bf16.mxu0 %v5677
        %5852 = vmatpush1.bf16.msra.mxu0 %v5675
        %5853 = vmatprep.subr.bf16.mxu0 0
        %5854 = vmatpush1.bf16.msra.mxu0 0
        %5855 = vmatprep.subr.bf16.mxu0 0
        %5856 = vmatpush1.bf16.msra.mxu0 0
        %5857 = vmatprep.subr.bf16.mxu0 0
        %5858 = vmatpush1.bf16.msra.mxu0 0
        %5859 = vmatprep.subr.bf16.mxu0 0
        %5860 = vmatpush1.bf16.msra.mxu0 0
        %5861 = vmatprep.subr.bf16.mxu0 0
        %5862 = vmatpush1.bf16.msra.mxu0 0
        %5863 = vmatprep.subr.bf16.mxu0 0
        %5864 = vmatpush1.bf16.msra.mxu0 0
        %5865 = vmatprep.subr.bf16.mxu0 0
        %5866 = vmatpush1.bf16.msra.mxu0 0
        %5867 = vmatprep.subr.bf16.mxu0 0
        %5868 = vmatpush1.bf16.msra.mxu0 0
        %5869 = vmatprep.subr.bf16.mxu0 0
        %5870 = vmatpush1.bf16.msra.mxu0 0
        %5871 = vmatprep.subr.bf16.mxu0 0
        %5872 = vmatpush1.bf16.msra.mxu0 0
        %5873 = vmatprep.subr.bf16.mxu0 0
        %5874 = vmatpush1.bf16.msra.mxu0 0
        %5875 = vmatprep.subr.bf16.mxu0 0
        %5876 = vmatpush1.bf16.msra.mxu0 0
        %5877 = vmatprep.subr.bf16.mxu0 0
        %5878 = vmatpush1.bf16.msra.mxu0 0
        %5879 = vmatprep.subr.bf16.mxu0 0
        %5880 = vmatpush1.bf16.msra.mxu0 0
        %5881 = vmatprep.subr.bf16.mxu0 0
        %5882 = vmatpush1.bf16.msra.mxu0 0
        %5883 = vmatprep.mubr.bf16.mxu0 0
        %5884 = vmatmul.mubr.bf16.gmra.mrb[0].mxu0 %v5473
        %v5885 = vpop.f32.mrb[0].mxu0
        %v5886 = vadd.f32 0.0, %v5885
        %v5887 = vpop.f32.mrb[0].mxu0
        %v5888 = vadd.f32 0.0, %v5887
        %v5889 = vpop.f32.mrb[0].mxu0
        %v5890 = vpop.f32.mrb[0].mxu0
        %5891 = vdwg.mxu0
        %v5892 = vpack.c.bf16 %v5886, %v5886
        %v5893 = vpack.c.bf16 %v5888, %v5888
        %v5895 = vsel %vm3001, %v5893, 0
        %5897 = vmatprep.subr.bf16.mxu0 0
        %5898 = vmatpush1.bf16.msra.mxu0 %v5591
        %5899 = vmatprep.subr.bf16.mxu0 0
        %5900 = vmatpush1.bf16.msra.mxu0 %v5592
        %5901 = vmatprep.subr.bf16.mxu0 0
        %5902 = vmatpush1.bf16.msra.mxu0 %v5593
        %5903 = vmatprep.subr.bf16.mxu0 0
        %5904 = vmatpush1.bf16.msra.mxu0 %v5594
        %5905 = vmatprep.subr.bf16.mxu0 0
        %5906 = vmatpush1.bf16.msra.mxu0 %v5595
        %5907 = vmatprep.subr.bf16.mxu0 0
        %5908 = vmatpush1.bf16.msra.mxu0 %v5596
        %5909 = vmatprep.subr.bf16.mxu0 0
        %5910 = vmatpush1.bf16.msra.mxu0 %v5597
        %5911 = vmatprep.subr.bf16.mxu0 0
        %5912 = vmatpush1.bf16.msra.mxu0 %v5598
        %5913 = vmatprep.subr.bf16.mxu0 0
        %5914 = vmatpush1.bf16.msra.mxu0 %v5599
        %5915 = vmatprep.subr.bf16.mxu0 0
        %5916 = vmatpush1.bf16.msra.mxu0 %v5600
        %5917 = vmatprep.subr.bf16.mxu0 0
        %5918 = vmatpush1.bf16.msra.mxu0 %v5601
        %5919 = vmatprep.subr.bf16.mxu0 0
        %5920 = vmatpush1.bf16.msra.mxu0 %v5602
        %5921 = vmatprep.subr.bf16.mxu0 0
        %5922 = vmatpush1.bf16.msra.mxu0 0
        %5923 = vmatprep.subr.bf16.mxu0 0
        %5924 = vmatpush1.bf16.msra.mxu0 0
        %5925 = vmatprep.subr.bf16.mxu0 0
        %5926 = vmatpush1.bf16.msra.mxu0 0
        %5927 = vmatprep.subr.bf16.mxu0 0
        %5928 = vmatpush1.bf16.msra.mxu0 0
        %5929 = vmatprep.mubr.bf16.mxu0 %v5895
        %5930 = vmatmul.mubr.bf16.gmra.mrb[0].mxu0 %v5892
        %v5931 = vpop.f32.mrb[0].mxu0
        %v5932 = vadd.f32 0.0, %v5931
        %v5933 = vpop.f32.mrb[0].mxu0
        %v5934 = vpop.f32.mrb[0].mxu0
        %v5935 = vpop.f32.mrb[0].mxu0
        %5936 = vdwg.mxu0
        %v5937 = vadd.f32 %v5846, %v5932
        %v5938 = vadd.f32 %v5937, %v5664
        %v5939 = vmax.f32 %v5938, 0.0
        %v5940 = vpack.c.bf16 %v5939, %v5939
        %v5942 = vshrl.u32 %v5668, 16
        %v5945 = vld [vmem:[%s9] sm:$0xff]
        %v5946 = vld [vmem:[%s9 + $0x8] sm:$0xff]
        %v5947 = vld [vmem:[%s9 + $0x10] sm:$0xff]
        %v5948 = vld [vmem:[%s9 + $0x18] sm:$0xff]
        %v5949 = vld [vmem:[%s9 + $0x20] sm:$0xff]
        %v5950 = vld [vmem:[%s9 + $0x28] sm:$0xff]
        %v5951 = vld [vmem:[%s9 + $0x30] sm:$0xff]
        %v5952 = vld [vmem:[%s9 + $0x38] sm:$0xff]
        %v5953 = vld [vmem:[%s9 + $0x40] sm:$0xff]
        %v5954 = vld [vmem:[%s9 + $0x48] sm:$0xff]
        %v5955 = vld [vmem:[%s9 + $0x50] sm:$0xff]
        %v5956 = vld [vmem:[%s9 + $0x58] sm:$0xff]
        %v5957 = vld [vmem:[%s9 + $0x60] sm:$0xff]
        %v5958 = vld [vmem:[%s9 + $0x68] sm:$0xff]
        %v5959 = vld [vmem:[%s9 + $0x70] sm:$0xff]
        %v5960 = vld [vmem:[%s9 + $0x78] sm:$0xff]
        %v5961 = vld [vmem:[%s9 + $0x80] sm:$0xff]
        %v5962 = vld [vmem:[%s9 + $0x88] sm:$0xff]
        %v5963 = vld [vmem:[%s9 + $0x90] sm:$0xff]
        %v5964 = vld [vmem:[%s9 + $0x98] sm:$0xff]
        %v5965 = vld [vmem:[%s9 + $0xa0] sm:$0xff]
        %v5966 = vld [vmem:[%s9 + $0xa8] sm:$0xff]
        %v5967 = vld [vmem:[%s9 + $0xb0] sm:$0xff]
        %v5968 = vld [vmem:[%s9 + $0xb8] sm:$0xff]
        %v5969 = vld [vmem:[%s9 + $0xc0] sm:$0xff]
        %v5970 = vld [vmem:[%s9 + $0xc8] sm:$0xff]
        %v5971 = vld [vmem:[%s9 + $0xd0] sm:$0xff]
        %v5972 = vld [vmem:[%s9 + $0xd8] sm:$0xff]
        %v5973 = vld [vmem:[%s9 + $0xe0] sm:$0xff]
        %v5974 = vld [vmem:[%s9 + $0xe8] sm:$0xff]
        %v5975 = vld [vmem:[%s9 + $0xf0] sm:$0xff]
        %v5976 = vld [vmem:[%s9 + $0xf8] sm:$0xff]
        %v5977 = vld [vmem:[%s9 + $0x100] sm:$0xff]
        %v5978 = vld [vmem:[%s9 + $0x108] sm:$0xff]
        %v5979 = vld [vmem:[%s9 + $0x110] sm:$0xff]
        %v5980 = vld [vmem:[%s9 + $0x118] sm:$0xff]
        %v5981 = vld [vmem:[%s9 + $0x120] sm:$0xff]
        %v5982 = vld [vmem:[%s9 + $0x128] sm:$0xff]
        %v5983 = vld [vmem:[%s9 + $0x130] sm:$0xff]
        %v5984 = vld [vmem:[%s9 + $0x138] sm:$0xff]
        %v5985 = vld [vmem:[%s9 + $0x140] sm:$0xff]
        %v5986 = vld [vmem:[%s9 + $0x148] sm:$0xff]
        %v5987 = vld [vmem:[%s9 + $0x150] sm:$0xff]
        %v5988 = vld [vmem:[%s9 + $0x158] sm:$0xff]
        %v5989 = vld [vmem:[%s9 + $0x160] sm:$0xff]
        %v5990 = vld [vmem:[%s9 + $0x168] sm:$0xff]
        %v5991 = vld [vmem:[%s9 + $0x170] sm:$0xff]
        %v5992 = vld [vmem:[%s9 + $0x178] sm:$0xff]
        %v5993 = vld [vmem:[%s9 + $0x180] sm:$0xff]
        %v5994 = vld [vmem:[%s9 + $0x188] sm:$0xff]
        %v5995 = vld [vmem:[%s9 + $0x190] sm:$0xff]
        %v5996 = vld [vmem:[%s9 + $0x198] sm:$0xff]
        %v5997 = vld [vmem:[%s9 + $0x1a0] sm:$0xff]
        %v5998 = vld [vmem:[%s9 + $0x1a8] sm:$0xff]
        %v5999 = vld [vmem:[%s9 + $0x1b0] sm:$0xff]
        %v6000 = vld [vmem:[%s9 + $0x1b8] sm:$0xff]
        %v6001 = vld [vmem:[%s9 + $0x1c0] sm:$0xff]
        %v6002 = vld [vmem:[%s9 + $0x1c8] sm:$0xff]
        %v6003 = vld [vmem:[%s9 + $0x1d0] sm:$0xff]
        %v6004 = vld [vmem:[%s9 + $0x1d8] sm:$0xff]
        %v6005 = vld [vmem:[%s9 + $0x1e0] sm:$0xff]
        %v6006 = vld [vmem:[%s9 + $0x1e8] sm:$0xff]
        %v6007 = vld [vmem:[%s9 + $0x1f0] sm:$0xff]
        %v6008 = vld [vmem:[%s9 + $0x1f8] sm:$0xff]
        %v6010 = vshrl.u32 %v5940, 16
        %s6013 = scalar_lea.vmem %s9, 512
        %v6014 = vld [vmem:[%s6013] sm:$0xff]
        %v6015 = vld [vmem:[%s6013 + $0x8] sm:$0xff]
        %v6016 = vld [vmem:[%s6013 + $0x10] sm:$0xff]
        %v6017 = vld [vmem:[%s6013 + $0x18] sm:$0xff]
        %v6018 = vld [vmem:[%s6013 + $0x20] sm:$0xff]
        %v6019 = vld [vmem:[%s6013 + $0x28] sm:$0xff]
        %v6020 = vld [vmem:[%s6013 + $0x30] sm:$0xff]
        %v6021 = vld [vmem:[%s6013 + $0x38] sm:$0xff]
        %v6022 = vld [vmem:[%s6013 + $0x40] sm:$0xff]
        %v6023 = vld [vmem:[%s6013 + $0x48] sm:$0xff]
        %v6024 = vld [vmem:[%s6013 + $0x50] sm:$0xff]
        %v6025 = vld [vmem:[%s6013 + $0x58] sm:$0xff]
        %v6026 = vld [vmem:[%s6013 + $0x60] sm:$0xff]
        %v6027 = vld [vmem:[%s6013 + $0x68] sm:$0xff]
        %v6028 = vld [vmem:[%s6013 + $0x70] sm:$0xff]
        %v6029 = vld [vmem:[%s6013 + $0x78] sm:$0xff]
        %v6030 = vld [vmem:[%s6013 + $0x80] sm:$0xff]
        %v6031 = vld [vmem:[%s6013 + $0x88] sm:$0xff]
        %v6032 = vld [vmem:[%s6013 + $0x90] sm:$0xff]
        %v6033 = vld [vmem:[%s6013 + $0x98] sm:$0xff]
        %v6034 = vld [vmem:[%s6013 + $0xa0] sm:$0xff]
        %v6035 = vld [vmem:[%s6013 + $0xa8] sm:$0xff]
        %v6036 = vld [vmem:[%s6013 + $0xb0] sm:$0xff]
        %v6037 = vld [vmem:[%s6013 + $0xb8] sm:$0xff]
        %v6038 = vld [vmem:[%s6013 + $0xc0] sm:$0xff]
        %v6039 = vld [vmem:[%s6013 + $0xc8] sm:$0xff]
        %v6040 = vld [vmem:[%s6013 + $0xd0] sm:$0xff]
        %v6041 = vld [vmem:[%s6013 + $0xd8] sm:$0xff]
        %v6042 = vld [vmem:[%s6013 + $0xe0] sm:$0xff]
        %v6043 = vld [vmem:[%s6013 + $0xe8] sm:$0xff]
        %v6044 = vld [vmem:[%s6013 + $0xf0] sm:$0xff]
        %v6045 = vld [vmem:[%s6013 + $0xf8] sm:$0xff]
        %v6046 = vld [vmem:[%s6013 + $0x100] sm:$0xff]
        %v6047 = vld [vmem:[%s6013 + $0x108] sm:$0xff]
        %v6048 = vld [vmem:[%s6013 + $0x110] sm:$0xff]
        %v6049 = vld [vmem:[%s6013 + $0x118] sm:$0xff]
        %v6050 = vld [vmem:[%s6013 + $0x120] sm:$0xff]
        %v6051 = vld [vmem:[%s6013 + $0x128] sm:$0xff]
        %v6052 = vld [vmem:[%s6013 + $0x130] sm:$0xff]
        %v6053 = vld [vmem:[%s6013 + $0x138] sm:$0xff]
        %v6054 = vld [vmem:[%s6013 + $0x140] sm:$0xff]
        %v6055 = vld [vmem:[%s6013 + $0x148] sm:$0xff]
        %v6056 = vld [vmem:[%s6013 + $0x150] sm:$0xff]
        %v6057 = vld [vmem:[%s6013 + $0x158] sm:$0xff]
        %v6058 = vld [vmem:[%s6013 + $0x160] sm:$0xff]
        %v6059 = vld [vmem:[%s6013 + $0x168] sm:$0xff]
        %v6060 = vld [vmem:[%s6013 + $0x170] sm:$0xff]
        %v6061 = vld [vmem:[%s6013 + $0x178] sm:$0xff]
        %v6062 = vld [vmem:[%s6013 + $0x180] sm:$0xff]
        %v6063 = vld [vmem:[%s6013 + $0x188] sm:$0xff]
        %v6064 = vld [vmem:[%s6013 + $0x190] sm:$0xff]
        %v6065 = vld [vmem:[%s6013 + $0x198] sm:$0xff]
        %v6066 = vld [vmem:[%s6013 + $0x1a0] sm:$0xff]
        %v6067 = vld [vmem:[%s6013 + $0x1a8] sm:$0xff]
        %v6068 = vld [vmem:[%s6013 + $0x1b0] sm:$0xff]
        %v6069 = vld [vmem:[%s6013 + $0x1b8] sm:$0xff]
        %v6070 = vld [vmem:[%s6013 + $0x1c0] sm:$0xff]
        %v6071 = vld [vmem:[%s6013 + $0x1c8] sm:$0xff]
        %v6072 = vld [vmem:[%s6013 + $0x1d0] sm:$0xff]
        %v6073 = vld [vmem:[%s6013 + $0x1d8] sm:$0xff]
        %v6074 = vld [vmem:[%s6013 + $0x1e0] sm:$0xff]
        %v6075 = vld [vmem:[%s6013 + $0x1e8] sm:$0xff]
        %v6076 = vld [vmem:[%s6013 + $0x1f0] sm:$0xff]
        %v6077 = vld [vmem:[%s6013 + $0x1f8] sm:$0xff]
        %v6142 = vunpack.c.l.b16 %v6014
        %v6143 = vunpack.c.h.b16 %v6014
        %v6144 = vunpack.c.l.b16 %v6015
        %v6145 = vunpack.c.h.b16 %v6015
        %v6146 = vunpack.c.l.b16 %v6016
        %v6147 = vunpack.c.h.b16 %v6016
        %v6148 = vunpack.c.l.b16 %v6017
        %v6149 = vunpack.c.h.b16 %v6017
        %v6150 = vunpack.c.l.b16 %v6018
        %v6151 = vunpack.c.h.b16 %v6018
        %v6152 = vunpack.c.l.b16 %v6019
        %v6153 = vunpack.c.h.b16 %v6019
        %v6154 = vunpack.c.l.b16 %v6020
        %v6155 = vunpack.c.h.b16 %v6020
        %v6156 = vunpack.c.l.b16 %v6021
        %v6157 = vunpack.c.h.b16 %v6021
        %v6158 = vunpack.c.l.b16 %v6022
        %v6159 = vunpack.c.h.b16 %v6022
        %v6160 = vunpack.c.l.b16 %v6023
        %v6161 = vunpack.c.h.b16 %v6023
        %v6162 = vunpack.c.l.b16 %v6024
        %v6163 = vunpack.c.h.b16 %v6024
        %v6164 = vunpack.c.l.b16 %v6025
        %v6165 = vunpack.c.h.b16 %v6025
        %v6166 = vunpack.c.l.b16 %v6026
        %v6167 = vunpack.c.h.b16 %v6026
        %v6168 = vunpack.c.l.b16 %v6027
        %v6169 = vunpack.c.h.b16 %v6027
        %v6170 = vunpack.c.l.b16 %v6028
        %v6171 = vunpack.c.h.b16 %v6028
        %v6172 = vunpack.c.l.b16 %v6029
        %v6173 = vunpack.c.h.b16 %v6029
        %v6174 = vunpack.c.l.b16 %v6030
        %v6175 = vunpack.c.h.b16 %v6030
        %v6176 = vunpack.c.l.b16 %v6031
        %v6177 = vunpack.c.h.b16 %v6031
        %v6178 = vunpack.c.l.b16 %v6032
        %v6179 = vunpack.c.h.b16 %v6032
        %v6180 = vunpack.c.l.b16 %v6033
        %v6181 = vunpack.c.h.b16 %v6033
        %v6182 = vunpack.c.l.b16 %v6034
        %v6183 = vunpack.c.h.b16 %v6034
        %v6184 = vunpack.c.l.b16 %v6035
        %v6185 = vunpack.c.h.b16 %v6035
        %v6186 = vunpack.c.l.b16 %v6036
        %v6187 = vunpack.c.h.b16 %v6036
        %v6188 = vunpack.c.l.b16 %v6037
        %v6189 = vunpack.c.h.b16 %v6037
        %v6190 = vunpack.c.l.b16 %v6038
        %v6191 = vunpack.c.h.b16 %v6038
        %v6192 = vunpack.c.l.b16 %v6039
        %v6193 = vunpack.c.h.b16 %v6039
        %v6194 = vunpack.c.l.b16 %v6040
        %v6195 = vunpack.c.h.b16 %v6040
        %v6196 = vunpack.c.l.b16 %v6041
        %v6197 = vunpack.c.h.b16 %v6041
        %v6198 = vunpack.c.l.b16 %v6042
        %v6199 = vunpack.c.h.b16 %v6042
        %v6200 = vunpack.c.l.b16 %v6043
        %v6201 = vunpack.c.h.b16 %v6043
        %v6202 = vunpack.c.l.b16 %v6044
        %v6203 = vunpack.c.h.b16 %v6044
        %v6204 = vunpack.c.l.b16 %v6045
        %v6205 = vunpack.c.h.b16 %v6045
        %v6206 = vunpack.c.l.b16 %v6046
        %v6207 = vunpack.c.h.b16 %v6046
        %v6208 = vunpack.c.l.b16 %v6047
        %v6209 = vunpack.c.h.b16 %v6047
        %v6210 = vunpack.c.l.b16 %v6048
        %v6211 = vunpack.c.h.b16 %v6048
        %v6212 = vunpack.c.l.b16 %v6049
        %v6213 = vunpack.c.h.b16 %v6049
        %v6214 = vunpack.c.l.b16 %v6050
        %v6215 = vunpack.c.h.b16 %v6050
        %v6216 = vunpack.c.l.b16 %v6051
        %v6217 = vunpack.c.h.b16 %v6051
        %v6218 = vunpack.c.l.b16 %v6052
        %v6219 = vunpack.c.h.b16 %v6052
        %v6220 = vunpack.c.l.b16 %v6053
        %v6221 = vunpack.c.h.b16 %v6053
        %v6222 = vunpack.c.l.b16 %v6054
        %v6223 = vunpack.c.h.b16 %v6054
        %v6224 = vunpack.c.l.b16 %v6055
        %v6225 = vunpack.c.h.b16 %v6055
        %v6226 = vunpack.c.l.b16 %v6056
        %v6227 = vunpack.c.h.b16 %v6056
        %v6228 = vunpack.c.l.b16 %v6057
        %v6229 = vunpack.c.h.b16 %v6057
        %v6230 = vunpack.c.l.b16 %v6058
        %v6231 = vunpack.c.h.b16 %v6058
        %v6232 = vunpack.c.l.b16 %v6059
        %v6233 = vunpack.c.h.b16 %v6059
        %v6234 = vunpack.c.l.b16 %v6060
        %v6235 = vunpack.c.h.b16 %v6060
        %v6236 = vunpack.c.l.b16 %v6061
        %v6237 = vunpack.c.h.b16 %v6061
        %v6238 = vunpack.c.l.b16 %v6062
        %v6239 = vunpack.c.h.b16 %v6062
        %v6240 = vunpack.c.l.b16 %v6063
        %v6241 = vunpack.c.h.b16 %v6063
        %v6242 = vunpack.c.l.b16 %v6064
        %v6243 = vunpack.c.h.b16 %v6064
        %v6244 = vunpack.c.l.b16 %v6065
        %v6245 = vunpack.c.h.b16 %v6065
        %v6246 = vunpack.c.l.b16 %v6066
        %v6247 = vunpack.c.h.b16 %v6066
        %v6248 = vunpack.c.l.b16 %v6067
        %v6249 = vunpack.c.h.b16 %v6067
        %v6250 = vunpack.c.l.b16 %v6068
        %v6251 = vunpack.c.h.b16 %v6068
        %v6252 = vunpack.c.l.b16 %v6069
        %v6253 = vunpack.c.h.b16 %v6069
        %v6254 = vunpack.c.l.b16 %v6070
        %v6255 = vunpack.c.h.b16 %v6070
        %v6256 = vunpack.c.l.b16 %v6071
        %v6257 = vunpack.c.h.b16 %v6071
        %v6258 = vunpack.c.l.b16 %v6072
        %v6259 = vunpack.c.h.b16 %v6072
        %v6260 = vunpack.c.l.b16 %v6073
        %v6261 = vunpack.c.h.b16 %v6073
        %v6262 = vunpack.c.l.b16 %v6074
        %v6263 = vunpack.c.h.b16 %v6074
        %v6264 = vunpack.c.l.b16 %v6075
        %v6265 = vunpack.c.h.b16 %v6075
        %v6266 = vunpack.c.l.b16 %v6076
        %v6267 = vunpack.c.h.b16 %v6076
        %v6268 = vunpack.c.l.b16 %v6077
        %v6269 = vunpack.c.h.b16 %v6077
        %v6270 = vpack.c.b16 %v6146, %v6142
        %v6271 = vpack.c.b16 %v6147, %v6143
        %v6272 = vpack.c.b16 %v6148, %v6144
        %v6273 = vpack.c.b16 %v6149, %v6145
        %v6274 = vpack.c.b16 %v6154, %v6150
        %v6275 = vpack.c.b16 %v6155, %v6151
        %v6276 = vpack.c.b16 %v6156, %v6152
        %v6277 = vpack.c.b16 %v6157, %v6153
        %v6278 = vpack.c.b16 %v6162, %v6158
        %v6279 = vpack.c.b16 %v6163, %v6159
        %v6280 = vpack.c.b16 %v6164, %v6160
        %v6281 = vpack.c.b16 %v6165, %v6161
        %v6282 = vpack.c.b16 %v6170, %v6166
        %v6283 = vpack.c.b16 %v6171, %v6167
        %v6284 = vpack.c.b16 %v6172, %v6168
        %v6285 = vpack.c.b16 %v6173, %v6169
        %v6286 = vpack.c.b16 %v6178, %v6174
        %v6287 = vpack.c.b16 %v6179, %v6175
        %v6288 = vpack.c.b16 %v6180, %v6176
        %v6289 = vpack.c.b16 %v6181, %v6177
        %v6290 = vpack.c.b16 %v6186, %v6182
        %v6291 = vpack.c.b16 %v6187, %v6183
        %v6292 = vpack.c.b16 %v6188, %v6184
        %v6293 = vpack.c.b16 %v6189, %v6185
        %v6294 = vpack.c.b16 %v6194, %v6190
        %v6295 = vpack.c.b16 %v6195, %v6191
        %v6296 = vpack.c.b16 %v6196, %v6192
        %v6297 = vpack.c.b16 %v6197, %v6193
        %v6298 = vpack.c.b16 %v6202, %v6198
        %v6299 = vpack.c.b16 %v6203, %v6199
        %v6300 = vpack.c.b16 %v6204, %v6200
        %v6301 = vpack.c.b16 %v6205, %v6201
        %v6302 = vpack.c.b16 %v6210, %v6206
        %v6303 = vpack.c.b16 %v6211, %v6207
        %v6304 = vpack.c.b16 %v6212, %v6208
        %v6305 = vpack.c.b16 %v6213, %v6209
        %v6306 = vpack.c.b16 %v6218, %v6214
        %v6307 = vpack.c.b16 %v6219, %v6215
        %v6308 = vpack.c.b16 %v6220, %v6216
        %v6309 = vpack.c.b16 %v6221, %v6217
        %v6310 = vpack.c.b16 %v6226, %v6222
        %v6311 = vpack.c.b16 %v6227, %v6223
        %v6312 = vpack.c.b16 %v6228, %v6224
        %v6313 = vpack.c.b16 %v6229, %v6225
        %v6314 = vpack.c.b16 %v6234, %v6230
        %v6315 = vpack.c.b16 %v6235, %v6231
        %v6316 = vpack.c.b16 %v6236, %v6232
        %v6317 = vpack.c.b16 %v6237, %v6233
        %v6318 = vpack.c.b16 %v6242, %v6238
        %v6319 = vpack.c.b16 %v6243, %v6239
        %v6320 = vpack.c.b16 %v6244, %v6240
        %v6321 = vpack.c.b16 %v6245, %v6241
        %v6322 = vpack.c.b16 %v6250, %v6246
        %v6323 = vpack.c.b16 %v6251, %v6247
        %v6324 = vpack.c.b16 %v6252, %v6248
        %v6325 = vpack.c.b16 %v6253, %v6249
        %v6326 = vpack.c.b16 %v6258, %v6254
        %v6327 = vpack.c.b16 %v6259, %v6255
        %v6328 = vpack.c.b16 %v6260, %v6256
        %v6329 = vpack.c.b16 %v6261, %v6257
        %v6330 = vpack.c.b16 %v6266, %v6262
        %v6331 = vpack.c.b16 %v6267, %v6263
        %v6332 = vpack.c.b16 %v6268, %v6264
        %v6333 = vpack.c.b16 %v6269, %v6265
        %6398 = vmatprep.subr.bf16.mxu0 %v6271
        %6399 = vmatpush1.bf16.msra.mxu0 %v6270
        %6400 = vmatprep.subr.bf16.mxu0 %v6275
        %6401 = vmatpush1.bf16.msra.mxu0 %v6274
        %6402 = vmatprep.subr.bf16.mxu0 %v6279
        %6403 = vmatpush1.bf16.msra.mxu0 %v6278
        %6404 = vmatprep.subr.bf16.mxu0 %v6283
        %6405 = vmatpush1.bf16.msra.mxu0 %v6282
        %6406 = vmatprep.subr.bf16.mxu0 %v6287
        %6407 = vmatpush1.bf16.msra.mxu0 %v6286
        %6408 = vmatprep.subr.bf16.mxu0 %v6291
        %6409 = vmatpush1.bf16.msra.mxu0 %v6290
        %6410 = vmatprep.subr.bf16.mxu0 %v6295
        %6411 = vmatpush1.bf16.msra.mxu0 %v6294
        %6412 = vmatprep.subr.bf16.mxu0 %v6299
        %6413 = vmatpush1.bf16.msra.mxu0 %v6298
        %6414 = vmatprep.subr.bf16.mxu0 %v6303
        %6415 = vmatpush1.bf16.msra.mxu0 %v6302
        %6416 = vmatprep.subr.bf16.mxu0 %v6307
        %6417 = vmatpush1.bf16.msra.mxu0 %v6306
        %6418 = vmatprep.subr.bf16.mxu0 %v6311
        %6419 = vmatpush1.bf16.msra.mxu0 %v6310
        %6420 = vmatprep.subr.bf16.mxu0 %v6315
        %6421 = vmatpush1.bf16.msra.mxu0 %v6314
        %6422 = vmatprep.subr.bf16.mxu0 %v6319
        %6423 = vmatpush1.bf16.msra.mxu0 %v6318
        %6424 = vmatprep.subr.bf16.mxu0 %v6323
        %6425 = vmatpush1.bf16.msra.mxu0 %v6322
        %6426 = vmatprep.subr.bf16.mxu0 %v6327
        %6427 = vmatpush1.bf16.msra.mxu0 %v6326
        %6428 = vmatprep.subr.bf16.mxu0 %v6331
        %6429 = vmatpush1.bf16.msra.mxu0 %v6330
        %6430 = vmatprep.mubr.bf16.mxu0 %v6010
        %6431 = vmatmul.mubr.bf16.gmra.mrb[0].mxu0 %v5940
        %v6432 = vpop.f32.mrb[0].mxu0
        %v6433 = vadd.f32 0.0, %v6432
        %v6434 = vpop.f32.mrb[0].mxu0
        %v6435 = vadd.f32 0.0, %v6434
        %v6436 = vpop.f32.mrb[0].mxu0
        %v6437 = vpop.f32.mrb[0].mxu0
        %6438 = vdwg.mxu0
        %6439 = vmatprep.subr.bf16.mxu0 %v6273
        %6440 = vmatpush1.bf16.msra.mxu0 %v6272
        %6441 = vmatprep.subr.bf16.mxu0 %v6277
        %6442 = vmatpush1.bf16.msra.mxu0 %v6276
        %6443 = vmatprep.subr.bf16.mxu0 %v6281
        %6444 = vmatpush1.bf16.msra.mxu0 %v6280
        %6445 = vmatprep.subr.bf16.mxu0 %v6285
        %6446 = vmatpush1.bf16.msra.mxu0 %v6284
        %6447 = vmatprep.subr.bf16.mxu0 %v6289
        %6448 = vmatpush1.bf16.msra.mxu0 %v6288
        %6449 = vmatprep.subr.bf16.mxu0 %v6293
        %6450 = vmatpush1.bf16.msra.mxu0 %v6292
        %6451 = vmatprep.subr.bf16.mxu0 %v6297
        %6452 = vmatpush1.bf16.msra.mxu0 %v6296
        %6453 = vmatprep.subr.bf16.mxu0 %v6301
        %6454 = vmatpush1.bf16.msra.mxu0 %v6300
        %6455 = vmatprep.subr.bf16.mxu0 %v6305
        %6456 = vmatpush1.bf16.msra.mxu0 %v6304
        %6457 = vmatprep.subr.bf16.mxu0 %v6309
        %6458 = vmatpush1.bf16.msra.mxu0 %v6308
        %6459 = vmatprep.subr.bf16.mxu0 %v6313
        %6460 = vmatpush1.bf16.msra.mxu0 %v6312
        %6461 = vmatprep.subr.bf16.mxu0 %v6317
        %6462 = vmatpush1.bf16.msra.mxu0 %v6316
        %6463 = vmatprep.subr.bf16.mxu0 %v6321
        %6464 = vmatpush1.bf16.msra.mxu0 %v6320
        %6465 = vmatprep.subr.bf16.mxu0 %v6325
        %6466 = vmatpush1.bf16.msra.mxu0 %v6324
        %6467 = vmatprep.subr.bf16.mxu0 %v6329
        %6468 = vmatpush1.bf16.msra.mxu0 %v6328
        %6469 = vmatprep.subr.bf16.mxu0 %v6333
        %6470 = vmatpush1.bf16.msra.mxu0 %v6332
        %6471 = vmatprep.mubr.bf16.mxu0 %v6010
        %6472 = vmatmul.mubr.bf16.gmra.mrb[0].mxu0 %v5940
        %v6473 = vpop.f32.mrb[0].mxu0
        %v6474 = vadd.f32 0.0, %v6473
        %v6475 = vpop.f32.mrb[0].mxu0
        %v6476 = vadd.f32 0.0, %v6475
        %v6477 = vpop.f32.mrb[0].mxu0
        %v6478 = vpop.f32.mrb[0].mxu0
        %6479 = vdwg.mxu0
        %v6544 = vunpack.c.l.b16 %v5945
        %v6545 = vunpack.c.h.b16 %v5945
        %v6546 = vunpack.c.l.b16 %v5946
        %v6547 = vunpack.c.h.b16 %v5946
        %v6548 = vunpack.c.l.b16 %v5947
        %v6549 = vunpack.c.h.b16 %v5947
        %v6550 = vunpack.c.l.b16 %v5948
        %v6551 = vunpack.c.h.b16 %v5948
        %v6552 = vunpack.c.l.b16 %v5949
        %v6553 = vunpack.c.h.b16 %v5949
        %v6554 = vunpack.c.l.b16 %v5950
        %v6555 = vunpack.c.h.b16 %v5950
        %v6556 = vunpack.c.l.b16 %v5951
        %v6557 = vunpack.c.h.b16 %v5951
        %v6558 = vunpack.c.l.b16 %v5952
        %v6559 = vunpack.c.h.b16 %v5952
        %v6560 = vunpack.c.l.b16 %v5953
        %v6561 = vunpack.c.h.b16 %v5953
        %v6562 = vunpack.c.l.b16 %v5954
        %v6563 = vunpack.c.h.b16 %v5954
        %v6564 = vunpack.c.l.b16 %v5955
        %v6565 = vunpack.c.h.b16 %v5955
        %v6566 = vunpack.c.l.b16 %v5956
        %v6567 = vunpack.c.h.b16 %v5956
        %v6568 = vunpack.c.l.b16 %v5957
        %v6569 = vunpack.c.h.b16 %v5957
        %v6570 = vunpack.c.l.b16 %v5958
        %v6571 = vunpack.c.h.b16 %v5958
        %v6572 = vunpack.c.l.b16 %v5959
        %v6573 = vunpack.c.h.b16 %v5959
        %v6574 = vunpack.c.l.b16 %v5960
        %v6575 = vunpack.c.h.b16 %v5960
        %v6576 = vunpack.c.l.b16 %v5961
        %v6577 = vunpack.c.h.b16 %v5961
        %v6578 = vunpack.c.l.b16 %v5962
        %v6579 = vunpack.c.h.b16 %v5962
        %v6580 = vunpack.c.l.b16 %v5963
        %v6581 = vunpack.c.h.b16 %v5963
        %v6582 = vunpack.c.l.b16 %v5964
        %v6583 = vunpack.c.h.b16 %v5964
        %v6584 = vunpack.c.l.b16 %v5965
        %v6585 = vunpack.c.h.b16 %v5965
        %v6586 = vunpack.c.l.b16 %v5966
        %v6587 = vunpack.c.h.b16 %v5966
        %v6588 = vunpack.c.l.b16 %v5967
        %v6589 = vunpack.c.h.b16 %v5967
        %v6590 = vunpack.c.l.b16 %v5968
        %v6591 = vunpack.c.h.b16 %v5968
        %v6592 = vunpack.c.l.b16 %v5969
        %v6593 = vunpack.c.h.b16 %v5969
        %v6594 = vunpack.c.l.b16 %v5970
        %v6595 = vunpack.c.h.b16 %v5970
        %v6596 = vunpack.c.l.b16 %v5971
        %v6597 = vunpack.c.h.b16 %v5971
        %v6598 = vunpack.c.l.b16 %v5972
        %v6599 = vunpack.c.h.b16 %v5972
        %v6600 = vunpack.c.l.b16 %v5973
        %v6601 = vunpack.c.h.b16 %v5973
        %v6602 = vunpack.c.l.b16 %v5974
        %v6603 = vunpack.c.h.b16 %v5974
        %v6604 = vunpack.c.l.b16 %v5975
        %v6605 = vunpack.c.h.b16 %v5975
        %v6606 = vunpack.c.l.b16 %v5976
        %v6607 = vunpack.c.h.b16 %v5976
        %v6608 = vunpack.c.l.b16 %v5977
        %v6609 = vunpack.c.h.b16 %v5977
        %v6610 = vunpack.c.l.b16 %v5978
        %v6611 = vunpack.c.h.b16 %v5978
        %v6612 = vunpack.c.l.b16 %v5979
        %v6613 = vunpack.c.h.b16 %v5979
        %v6614 = vunpack.c.l.b16 %v5980
        %v6615 = vunpack.c.h.b16 %v5980
        %v6616 = vunpack.c.l.b16 %v5981
        %v6617 = vunpack.c.h.b16 %v5981
        %v6618 = vunpack.c.l.b16 %v5982
        %v6619 = vunpack.c.h.b16 %v5982
        %v6620 = vunpack.c.l.b16 %v5983
        %v6621 = vunpack.c.h.b16 %v5983
        %v6622 = vunpack.c.l.b16 %v5984
        %v6623 = vunpack.c.h.b16 %v5984
        %v6624 = vunpack.c.l.b16 %v5985
        %v6625 = vunpack.c.h.b16 %v5985
        %v6626 = vunpack.c.l.b16 %v5986
        %v6627 = vunpack.c.h.b16 %v5986
        %v6628 = vunpack.c.l.b16 %v5987
        %v6629 = vunpack.c.h.b16 %v5987
        %v6630 = vunpack.c.l.b16 %v5988
        %v6631 = vunpack.c.h.b16 %v5988
        %v6632 = vunpack.c.l.b16 %v5989
        %v6633 = vunpack.c.h.b16 %v5989
        %v6634 = vunpack.c.l.b16 %v5990
        %v6635 = vunpack.c.h.b16 %v5990
        %v6636 = vunpack.c.l.b16 %v5991
        %v6637 = vunpack.c.h.b16 %v5991
        %v6638 = vunpack.c.l.b16 %v5992
        %v6639 = vunpack.c.h.b16 %v5992
        %v6640 = vunpack.c.l.b16 %v5993
        %v6641 = vunpack.c.h.b16 %v5993
        %v6642 = vunpack.c.l.b16 %v5994
        %v6643 = vunpack.c.h.b16 %v5994
        %v6644 = vunpack.c.l.b16 %v5995
        %v6645 = vunpack.c.h.b16 %v5995
        %v6646 = vunpack.c.l.b16 %v5996
        %v6647 = vunpack.c.h.b16 %v5996
        %v6648 = vunpack.c.l.b16 %v5997
        %v6649 = vunpack.c.h.b16 %v5997
        %v6650 = vunpack.c.l.b16 %v5998
        %v6651 = vunpack.c.h.b16 %v5998
        %v6652 = vunpack.c.l.b16 %v5999
        %v6653 = vunpack.c.h.b16 %v5999
        %v6654 = vunpack.c.l.b16 %v6000
        %v6655 = vunpack.c.h.b16 %v6000
        %v6656 = vunpack.c.l.b16 %v6001
        %v6657 = vunpack.c.h.b16 %v6001
        %v6658 = vunpack.c.l.b16 %v6002
        %v6659 = vunpack.c.h.b16 %v6002
        %v6660 = vunpack.c.l.b16 %v6003
        %v6661 = vunpack.c.h.b16 %v6003
        %v6662 = vunpack.c.l.b16 %v6004
        %v6663 = vunpack.c.h.b16 %v6004
        %v6664 = vunpack.c.l.b16 %v6005
        %v6665 = vunpack.c.h.b16 %v6005
        %v6666 = vunpack.c.l.b16 %v6006
        %v6667 = vunpack.c.h.b16 %v6006
        %v6668 = vunpack.c.l.b16 %v6007
        %v6669 = vunpack.c.h.b16 %v6007
        %v6670 = vunpack.c.l.b16 %v6008
        %v6671 = vunpack.c.h.b16 %v6008
        %v6672 = vpack.c.b16 %v6548, %v6544
        %v6673 = vpack.c.b16 %v6549, %v6545
        %v6674 = vpack.c.b16 %v6550, %v6546
        %v6675 = vpack.c.b16 %v6551, %v6547
        %v6676 = vpack.c.b16 %v6556, %v6552
        %v6677 = vpack.c.b16 %v6557, %v6553
        %v6678 = vpack.c.b16 %v6558, %v6554
        %v6679 = vpack.c.b16 %v6559, %v6555
        %v6680 = vpack.c.b16 %v6564, %v6560
        %v6681 = vpack.c.b16 %v6565, %v6561
        %v6682 = vpack.c.b16 %v6566, %v6562
        %v6683 = vpack.c.b16 %v6567, %v6563
        %v6684 = vpack.c.b16 %v6572, %v6568
        %v6685 = vpack.c.b16 %v6573, %v6569
        %v6686 = vpack.c.b16 %v6574, %v6570
        %v6687 = vpack.c.b16 %v6575, %v6571
        %v6688 = vpack.c.b16 %v6580, %v6576
        %v6689 = vpack.c.b16 %v6581, %v6577
        %v6690 = vpack.c.b16 %v6582, %v6578
        %v6691 = vpack.c.b16 %v6583, %v6579
        %v6692 = vpack.c.b16 %v6588, %v6584
        %v6693 = vpack.c.b16 %v6589, %v6585
        %v6694 = vpack.c.b16 %v6590, %v6586
        %v6695 = vpack.c.b16 %v6591, %v6587
        %v6696 = vpack.c.b16 %v6596, %v6592
        %v6697 = vpack.c.b16 %v6597, %v6593
        %v6698 = vpack.c.b16 %v6598, %v6594
        %v6699 = vpack.c.b16 %v6599, %v6595
        %v6700 = vpack.c.b16 %v6604, %v6600
        %v6701 = vpack.c.b16 %v6605, %v6601
        %v6702 = vpack.c.b16 %v6606, %v6602
        %v6703 = vpack.c.b16 %v6607, %v6603
        %v6704 = vpack.c.b16 %v6612, %v6608
        %v6705 = vpack.c.b16 %v6613, %v6609
        %v6706 = vpack.c.b16 %v6614, %v6610
        %v6707 = vpack.c.b16 %v6615, %v6611
        %v6708 = vpack.c.b16 %v6620, %v6616
        %v6709 = vpack.c.b16 %v6621, %v6617
        %v6710 = vpack.c.b16 %v6622, %v6618
        %v6711 = vpack.c.b16 %v6623, %v6619
        %v6712 = vpack.c.b16 %v6628, %v6624
        %v6713 = vpack.c.b16 %v6629, %v6625
        %v6714 = vpack.c.b16 %v6630, %v6626
        %v6715 = vpack.c.b16 %v6631, %v6627
        %v6716 = vpack.c.b16 %v6636, %v6632
        %v6717 = vpack.c.b16 %v6637, %v6633
        %v6718 = vpack.c.b16 %v6638, %v6634
        %v6719 = vpack.c.b16 %v6639, %v6635
        %v6720 = vpack.c.b16 %v6644, %v6640
        %v6721 = vpack.c.b16 %v6645, %v6641
        %v6722 = vpack.c.b16 %v6646, %v6642
        %v6723 = vpack.c.b16 %v6647, %v6643
        %v6724 = vpack.c.b16 %v6652, %v6648
        %v6725 = vpack.c.b16 %v6653, %v6649
        %v6726 = vpack.c.b16 %v6654, %v6650
        %v6727 = vpack.c.b16 %v6655, %v6651
        %v6728 = vpack.c.b16 %v6660, %v6656
        %v6729 = vpack.c.b16 %v6661, %v6657
        %v6730 = vpack.c.b16 %v6662, %v6658
        %v6731 = vpack.c.b16 %v6663, %v6659
        %v6732 = vpack.c.b16 %v6668, %v6664
        %v6733 = vpack.c.b16 %v6669, %v6665
        %v6734 = vpack.c.b16 %v6670, %v6666
        %v6735 = vpack.c.b16 %v6671, %v6667
        %6800 = vmatprep.subr.bf16.mxu0 %v6673
        %6801 = vmatpush1.bf16.msra.mxu0 %v6672
        %6802 = vmatprep.subr.bf16.mxu0 %v6677
        %6803 = vmatpush1.bf16.msra.mxu0 %v6676
        %6804 = vmatprep.subr.bf16.mxu0 %v6681
        %6805 = vmatpush1.bf16.msra.mxu0 %v6680
        %6806 = vmatprep.subr.bf16.mxu0 %v6685
        %6807 = vmatpush1.bf16.msra.mxu0 %v6684
        %6808 = vmatprep.subr.bf16.mxu0 %v6689
        %6809 = vmatpush1.bf16.msra.mxu0 %v6688
        %6810 = vmatprep.subr.bf16.mxu0 %v6693
        %6811 = vmatpush1.bf16.msra.mxu0 %v6692
        %6812 = vmatprep.subr.bf16.mxu0 %v6697
        %6813 = vmatpush1.bf16.msra.mxu0 %v6696
        %6814 = vmatprep.subr.bf16.mxu0 %v6701
        %6815 = vmatpush1.bf16.msra.mxu0 %v6700
        %6816 = vmatprep.subr.bf16.mxu0 %v6705
        %6817 = vmatpush1.bf16.msra.mxu0 %v6704
        %6818 = vmatprep.subr.bf16.mxu0 %v6709
        %6819 = vmatpush1.bf16.msra.mxu0 %v6708
        %6820 = vmatprep.subr.bf16.mxu0 %v6713
        %6821 = vmatpush1.bf16.msra.mxu0 %v6712
        %6822 = vmatprep.subr.bf16.mxu0 %v6717
        %6823 = vmatpush1.bf16.msra.mxu0 %v6716
        %6824 = vmatprep.subr.bf16.mxu0 %v6721
        %6825 = vmatpush1.bf16.msra.mxu0 %v6720
        %6826 = vmatprep.subr.bf16.mxu0 %v6725
        %6827 = vmatpush1.bf16.msra.mxu0 %v6724
        %6828 = vmatprep.subr.bf16.mxu0 %v6729
        %6829 = vmatpush1.bf16.msra.mxu0 %v6728
        %6830 = vmatprep.subr.bf16.mxu0 %v6733
        %6831 = vmatpush1.bf16.msra.mxu0 %v6732
        %6832 = vmatprep.mubr.bf16.mxu0 %v5942
        %6833 = vmatmul.mubr.bf16.gmra.mrb[0].mxu0 %v5668
        %v6834 = vpop.f32.mrb[0].mxu0
        %v6835 = vadd.f32 %v6433, %v6834
        %v6836 = vpop.f32.mrb[0].mxu0
        %v6837 = vadd.f32 %v6435, %v6836
        %v6838 = vpop.f32.mrb[0].mxu0
        %v6839 = vpop.f32.mrb[0].mxu0
        %6840 = vdwg.mxu0
        %6841 = vmatprep.subr.bf16.mxu0 %v6675
        %6842 = vmatpush1.bf16.msra.mxu0 %v6674
        %6843 = vmatprep.subr.bf16.mxu0 %v6679
        %6844 = vmatpush1.bf16.msra.mxu0 %v6678
        %6845 = vmatprep.subr.bf16.mxu0 %v6683
        %6846 = vmatpush1.bf16.msra.mxu0 %v6682
        %6847 = vmatprep.subr.bf16.mxu0 %v6687
        %6848 = vmatpush1.bf16.msra.mxu0 %v6686
        %6849 = vmatprep.subr.bf16.mxu0 %v6691
        %6850 = vmatpush1.bf16.msra.mxu0 %v6690
        %6851 = vmatprep.subr.bf16.mxu0 %v6695
        %6852 = vmatpush1.bf16.msra.mxu0 %v6694
        %6853 = vmatprep.subr.bf16.mxu0 %v6699
        %6854 = vmatpush1.bf16.msra.mxu0 %v6698
        %6855 = vmatprep.subr.bf16.mxu0 %v6703
        %6856 = vmatpush1.bf16.msra.mxu0 %v6702
        %6857 = vmatprep.subr.bf16.mxu0 %v6707
        %6858 = vmatpush1.bf16.msra.mxu0 %v6706
        %6859 = vmatprep.subr.bf16.mxu0 %v6711
        %6860 = vmatpush1.bf16.msra.mxu0 %v6710
        %6861 = vmatprep.subr.bf16.mxu0 %v6715
        %6862 = vmatpush1.bf16.msra.mxu0 %v6714
        %6863 = vmatprep.subr.bf16.mxu0 %v6719
        %6864 = vmatpush1.bf16.msra.mxu0 %v6718
        %6865 = vmatprep.subr.bf16.mxu0 %v6723
        %6866 = vmatpush1.bf16.msra.mxu0 %v6722
        %6867 = vmatprep.subr.bf16.mxu0 %v6727
        %6868 = vmatpush1.bf16.msra.mxu0 %v6726
        %6869 = vmatprep.subr.bf16.mxu0 %v6731
        %6870 = vmatpush1.bf16.msra.mxu0 %v6730
        %6871 = vmatprep.subr.bf16.mxu0 %v6735
        %6872 = vmatpush1.bf16.msra.mxu0 %v6734
        %6873 = vmatprep.mubr.bf16.mxu0 %v5942
        %6874 = vmatmul.mubr.bf16.gmra.mrb[0].mxu0 %v5668
        %v6875 = vpop.f32.mrb[0].mxu0
        %v6876 = vadd.f32 %v6474, %v6875
        %v6877 = vpop.f32.mrb[0].mxu0
        %v6878 = vadd.f32 %v6476, %v6877
        %v6879 = vpop.f32.mrb[0].mxu0
        %v6880 = vpop.f32.mrb[0].mxu0
        %6881 = vdwg.mxu0
        %v6882 = vld [vmem:[%s10] sm:$0xf]
        %v6884 = vlaneseq
        %v6885 = vshrl.u32 %v6884, 7
        %v6886 = vsub.s32 0, %v6885
        %v6887 = vrot.slane %v6882, %v6886
        %v6888 = vlaneseq
        %v6889 = vshrl.u32 %v6888, 7
        %v6890 = vsub.s32 1, %v6889
        %v6891 = vrot.slane %v6882, %v6890
        %v6892 = vlaneseq
        %v6893 = vshrl.u32 %v6892, 7
        %v6894 = vsub.s32 2, %v6893
        %v6895 = vrot.slane %v6882, %v6894
        %v6896 = vlaneseq
        %v6897 = vshrl.u32 %v6896, 7
        %v6898 = vsub.s32 3, %v6897
        %v6899 = vrot.slane %v6882, %v6898
        %v6904 = vadd.f32 %v6835, %v6887
        %v6905 = vadd.f32 %v6837, %v6891
        %v6906 = vadd.f32 %v6876, %v6895
        %v6907 = vadd.f32 %v6878, %v6899
        %v6908 = vmax.f32 %v6904, 0.0
        %v6909 = vmax.f32 %v6905, 0.0
        %v6910 = vmax.f32 %v6906, 0.0
        %v6911 = vmax.f32 %v6907, 0.0
        %v6912 = vpack.c.bf16 %v6908, %v6908
        %v6913 = vpack.c.bf16 %v6909, %v6909
        %v6914 = vpack.c.bf16 %v6910, %v6910
        %v6915 = vpack.c.bf16 %v6911, %v6911
        %v6916 = vld [vmem:[#allocation3] sm:$0xff]
        %v6917 = vld [vmem:[#allocation3 + $0x8] sm:$0xff]
        %v6918 = vld [vmem:[#allocation3 + $0x10] sm:$0xff]
        %v6919 = vld [vmem:[#allocation3 + $0x18] sm:$0xff]
        %v6920 = vld [vmem:[#allocation3 + $0x20] sm:$0xff]
        %v6921 = vld [vmem:[#allocation3 + $0x28] sm:$0xff]
        %v6922 = vld [vmem:[#allocation3 + $0x30] sm:$0xff]
        %v6923 = vld [vmem:[#allocation3 + $0x38] sm:$0xff]
        %v6924 = vld [vmem:[#allocation3 + $0x40] sm:$0xff]
        %v6925 = vld [vmem:[#allocation3 + $0x48] sm:$0xff]
        %v6926 = vld [vmem:[#allocation3 + $0x50] sm:$0xff]
        %v6927 = vld [vmem:[#allocation3 + $0x58] sm:$0xff]
        %v6928 = vld [vmem:[#allocation3 + $0x60] sm:$0xff]
        %v6929 = vld [vmem:[#allocation3 + $0x68] sm:$0xff]
        %v6930 = vld [vmem:[#allocation3 + $0x70] sm:$0xff]
        %v6931 = vld [vmem:[#allocation3 + $0x78] sm:$0xff]
        %v6932 = vld [vmem:[#allocation3 + $0x80] sm:$0xff]
        %v6933 = vld [vmem:[#allocation3 + $0x88] sm:$0xff]
        %v6934 = vld [vmem:[#allocation3 + $0x90] sm:$0xff]
        %v6935 = vld [vmem:[#allocation3 + $0x98] sm:$0xff]
        %v6936 = vld [vmem:[#allocation3 + $0xa0] sm:$0xff]
        %v6937 = vld [vmem:[#allocation3 + $0xa8] sm:$0xff]
        %v6938 = vld [vmem:[#allocation3 + $0xb0] sm:$0xff]
        %v6939 = vld [vmem:[#allocation3 + $0xb8] sm:$0xff]
        %v6940 = vld [vmem:[#allocation3 + $0xc0] sm:$0xff]
        %v6941 = vld [vmem:[#allocation3 + $0xc8] sm:$0xff]
        %v6942 = vld [vmem:[#allocation3 + $0xd0] sm:$0xff]
        %v6943 = vld [vmem:[#allocation3 + $0xd8] sm:$0xff]
        %v6944 = vld [vmem:[#allocation3 + $0xe0] sm:$0xff]
        %v6945 = vld [vmem:[#allocation3 + $0xe8] sm:$0xff]
        %v6946 = vld [vmem:[#allocation3 + $0xf0] sm:$0xff]
        %v6947 = vld [vmem:[#allocation3 + $0xf8] sm:$0xff]
        %v6948 = vld [vmem:[#allocation3 + $0x100] sm:$0xff]
        %v6949 = vld [vmem:[#allocation3 + $0x108] sm:$0xff]
        %v6950 = vld [vmem:[#allocation3 + $0x110] sm:$0xff]
        %v6951 = vld [vmem:[#allocation3 + $0x118] sm:$0xff]
        %v6952 = vld [vmem:[#allocation3 + $0x120] sm:$0xff]
        %v6953 = vld [vmem:[#allocation3 + $0x128] sm:$0xff]
        %v6954 = vld [vmem:[#allocation3 + $0x130] sm:$0xff]
        %v6955 = vld [vmem:[#allocation3 + $0x138] sm:$0xff]
        %v6956 = vld [vmem:[#allocation3 + $0x140] sm:$0xff]
        %v6957 = vld [vmem:[#allocation3 + $0x148] sm:$0xff]
        %v6958 = vld [vmem:[#allocation3 + $0x150] sm:$0xff]
        %v6959 = vld [vmem:[#allocation3 + $0x158] sm:$0xff]
        %v6960 = vld [vmem:[#allocation3 + $0x160] sm:$0xff]
        %v6961 = vld [vmem:[#allocation3 + $0x168] sm:$0xff]
        %v6962 = vld [vmem:[#allocation3 + $0x170] sm:$0xff]
        %v6963 = vld [vmem:[#allocation3 + $0x178] sm:$0xff]
        %v6964 = vld [vmem:[#allocation3 + $0x180] sm:$0xff]
        %v6965 = vld [vmem:[#allocation3 + $0x188] sm:$0xff]
        %v6966 = vld [vmem:[#allocation3 + $0x190] sm:$0xff]
        %v6967 = vld [vmem:[#allocation3 + $0x198] sm:$0xff]
        %v6968 = vld [vmem:[#allocation3 + $0x1a0] sm:$0xff]
        %v6969 = vld [vmem:[#allocation3 + $0x1a8] sm:$0xff]
        %v6970 = vld [vmem:[#allocation3 + $0x1b0] sm:$0xff]
        %v6971 = vld [vmem:[#allocation3 + $0x1b8] sm:$0xff]
        %v6972 = vld [vmem:[#allocation3 + $0x1c0] sm:$0xff]
        %v6973 = vld [vmem:[#allocation3 + $0x1c8] sm:$0xff]
        %v6974 = vld [vmem:[#allocation3 + $0x1d0] sm:$0xff]
        %v6975 = vld [vmem:[#allocation3 + $0x1d8] sm:$0xff]
        %v6976 = vld [vmem:[#allocation3 + $0x1e0] sm:$0xff]
        %v6977 = vld [vmem:[#allocation3 + $0x1e8] sm:$0xff]
        %v6978 = vld [vmem:[#allocation3 + $0x1f0] sm:$0xff]
        %v6979 = vld [vmem:[#allocation3 + $0x1f8] sm:$0xff]
        %v6980 = vld [vmem:[#allocation3 + $0x200] sm:$0xff]
        %v6981 = vld [vmem:[#allocation3 + $0x208] sm:$0xff]
        %v6982 = vld [vmem:[#allocation3 + $0x210] sm:$0xff]
        %v6983 = vld [vmem:[#allocation3 + $0x218] sm:$0xff]
        %v6984 = vld [vmem:[#allocation3 + $0x220] sm:$0xff]
        %v6985 = vld [vmem:[#allocation3 + $0x228] sm:$0xff]
        %v6986 = vld [vmem:[#allocation3 + $0x230] sm:$0xff]
        %v6987 = vld [vmem:[#allocation3 + $0x238] sm:$0xff]
        %v6988 = vld [vmem:[#allocation3 + $0x240] sm:$0xff]
        %v6989 = vld [vmem:[#allocation3 + $0x248] sm:$0xff]
        %v6990 = vld [vmem:[#allocation3 + $0x250] sm:$0xff]
        %v6991 = vld [vmem:[#allocation3 + $0x258] sm:$0xff]
        %v6992 = vld [vmem:[#allocation3 + $0x260] sm:$0xff]
        %v6993 = vld [vmem:[#allocation3 + $0x268] sm:$0xff]
        %v6994 = vld [vmem:[#allocation3 + $0x270] sm:$0xff]
        %v6995 = vld [vmem:[#allocation3 + $0x278] sm:$0xff]
        %v6996 = vld [vmem:[#allocation3 + $0x280] sm:$0xff]
        %v6997 = vld [vmem:[#allocation3 + $0x288] sm:$0xff]
        %v6998 = vld [vmem:[#allocation3 + $0x290] sm:$0xff]
        %v6999 = vld [vmem:[#allocation3 + $0x298] sm:$0xff]
        %v7000 = vld [vmem:[#allocation3 + $0x2a0] sm:$0xff]
        %v7001 = vld [vmem:[#allocation3 + $0x2a8] sm:$0xff]
        %v7002 = vld [vmem:[#allocation3 + $0x2b0] sm:$0xff]
        %v7003 = vld [vmem:[#allocation3 + $0x2b8] sm:$0xff]
        %v7004 = vld [vmem:[#allocation3 + $0x2c0] sm:$0xff]
        %v7005 = vld [vmem:[#allocation3 + $0x2c8] sm:$0xff]
        %v7006 = vld [vmem:[#allocation3 + $0x2d0] sm:$0xff]
        %v7007 = vld [vmem:[#allocation3 + $0x2d8] sm:$0xff]
        %v7008 = vld [vmem:[#allocation3 + $0x2e0] sm:$0xff]
        %v7009 = vld [vmem:[#allocation3 + $0x2e8] sm:$0xff]
        %v7010 = vld [vmem:[#allocation3 + $0x2f0] sm:$0xff]
        %v7011 = vld [vmem:[#allocation3 + $0x2f8] sm:$0xff]
        %v7012 = vld [vmem:[#allocation3 + $0x300] sm:$0xff]
        %v7013 = vld [vmem:[#allocation3 + $0x308] sm:$0xff]
        %v7014 = vld [vmem:[#allocation3 + $0x310] sm:$0xff]
        %v7015 = vld [vmem:[#allocation3 + $0x318] sm:$0xff]
        %v7016 = vld [vmem:[#allocation3 + $0x320] sm:$0xff]
        %v7017 = vld [vmem:[#allocation3 + $0x328] sm:$0xff]
        %v7018 = vld [vmem:[#allocation3 + $0x330] sm:$0xff]
        %v7019 = vld [vmem:[#allocation3 + $0x338] sm:$0xff]
        %v7020 = vld [vmem:[#allocation3 + $0x340] sm:$0xff]
        %v7021 = vld [vmem:[#allocation3 + $0x348] sm:$0xff]
        %v7022 = vld [vmem:[#allocation3 + $0x350] sm:$0xff]
        %v7023 = vld [vmem:[#allocation3 + $0x358] sm:$0xff]
        %v7024 = vld [vmem:[#allocation3 + $0x360] sm:$0xff]
        %v7025 = vld [vmem:[#allocation3 + $0x368] sm:$0xff]
        %v7026 = vld [vmem:[#allocation3 + $0x370] sm:$0xff]
        %v7027 = vld [vmem:[#allocation3 + $0x378] sm:$0xff]
        %v7028 = vld [vmem:[#allocation3 + $0x380] sm:$0xff]
        %v7029 = vld [vmem:[#allocation3 + $0x388] sm:$0xff]
        %v7030 = vld [vmem:[#allocation3 + $0x390] sm:$0xff]
        %v7031 = vld [vmem:[#allocation3 + $0x398] sm:$0xff]
        %v7032 = vld [vmem:[#allocation3 + $0x3a0] sm:$0xff]
        %v7033 = vld [vmem:[#allocation3 + $0x3a8] sm:$0xff]
        %v7034 = vld [vmem:[#allocation3 + $0x3b0] sm:$0xff]
        %v7035 = vld [vmem:[#allocation3 + $0x3b8] sm:$0xff]
        %v7036 = vld [vmem:[#allocation3 + $0x3c0] sm:$0xff]
        %v7037 = vld [vmem:[#allocation3 + $0x3c8] sm:$0xff]
        %v7038 = vld [vmem:[#allocation3 + $0x3d0] sm:$0xff]
        %v7039 = vld [vmem:[#allocation3 + $0x3d8] sm:$0xff]
        %v7040 = vld [vmem:[#allocation3 + $0x3e0] sm:$0xff]
        %v7041 = vld [vmem:[#allocation3 + $0x3e8] sm:$0xff]
        %v7042 = vld [vmem:[#allocation3 + $0x3f0] sm:$0xff]
        %v7043 = vld [vmem:[#allocation3 + $0x3f8] sm:$0xff]
        %v7044 = vld [vmem:[%s12] sm:$0xf]
        %v7173 = vunpack.c.l.b16 %v6916
        %v7174 = vunpack.c.h.b16 %v6916
        %v7175 = vunpack.c.l.b16 %v6917
        %v7176 = vunpack.c.h.b16 %v6917
        %v7177 = vunpack.c.l.b16 %v6918
        %v7178 = vunpack.c.h.b16 %v6918
        %v7179 = vunpack.c.l.b16 %v6919
        %v7180 = vunpack.c.h.b16 %v6919
        %v7181 = vunpack.c.l.b16 %v6920
        %v7182 = vunpack.c.h.b16 %v6920
        %v7183 = vunpack.c.l.b16 %v6921
        %v7184 = vunpack.c.h.b16 %v6921
        %v7185 = vunpack.c.l.b16 %v6922
        %v7186 = vunpack.c.h.b16 %v6922
        %v7187 = vunpack.c.l.b16 %v6923
        %v7188 = vunpack.c.h.b16 %v6923
        %v7189 = vunpack.c.l.b16 %v6924
        %v7190 = vunpack.c.h.b16 %v6924
        %v7191 = vunpack.c.l.b16 %v6925
        %v7192 = vunpack.c.h.b16 %v6925
        %v7193 = vunpack.c.l.b16 %v6926
        %v7194 = vunpack.c.h.b16 %v6926
        %v7195 = vunpack.c.l.b16 %v6927
        %v7196 = vunpack.c.h.b16 %v6927
        %v7197 = vunpack.c.l.b16 %v6928
        %v7198 = vunpack.c.h.b16 %v6928
        %v7199 = vunpack.c.l.b16 %v6929
        %v7200 = vunpack.c.h.b16 %v6929
        %v7201 = vunpack.c.l.b16 %v6930
        %v7202 = vunpack.c.h.b16 %v6930
        %v7203 = vunpack.c.l.b16 %v6931
        %v7204 = vunpack.c.h.b16 %v6931
        %v7205 = vunpack.c.l.b16 %v6932
        %v7206 = vunpack.c.h.b16 %v6932
        %v7207 = vunpack.c.l.b16 %v6933
        %v7208 = vunpack.c.h.b16 %v6933
        %v7209 = vunpack.c.l.b16 %v6934
        %v7210 = vunpack.c.h.b16 %v6934
        %v7211 = vunpack.c.l.b16 %v6935
        %v7212 = vunpack.c.h.b16 %v6935
        %v7213 = vunpack.c.l.b16 %v6936
        %v7214 = vunpack.c.h.b16 %v6936
        %v7215 = vunpack.c.l.b16 %v6937
        %v7216 = vunpack.c.h.b16 %v6937
        %v7217 = vunpack.c.l.b16 %v6938
        %v7218 = vunpack.c.h.b16 %v6938
        %v7219 = vunpack.c.l.b16 %v6939
        %v7220 = vunpack.c.h.b16 %v6939
        %v7221 = vunpack.c.l.b16 %v6940
        %v7222 = vunpack.c.h.b16 %v6940
        %v7223 = vunpack.c.l.b16 %v6941
        %v7224 = vunpack.c.h.b16 %v6941
        %v7225 = vunpack.c.l.b16 %v6942
        %v7226 = vunpack.c.h.b16 %v6942
        %v7227 = vunpack.c.l.b16 %v6943
        %v7228 = vunpack.c.h.b16 %v6943
        %v7229 = vunpack.c.l.b16 %v6944
        %v7230 = vunpack.c.h.b16 %v6944
        %v7231 = vunpack.c.l.b16 %v6945
        %v7232 = vunpack.c.h.b16 %v6945
        %v7233 = vunpack.c.l.b16 %v6946
        %v7234 = vunpack.c.h.b16 %v6946
        %v7235 = vunpack.c.l.b16 %v6947
        %v7236 = vunpack.c.h.b16 %v6947
        %v7237 = vunpack.c.l.b16 %v6948
        %v7238 = vunpack.c.h.b16 %v6948
        %v7239 = vunpack.c.l.b16 %v6949
        %v7240 = vunpack.c.h.b16 %v6949
        %v7241 = vunpack.c.l.b16 %v6950
        %v7242 = vunpack.c.h.b16 %v6950
        %v7243 = vunpack.c.l.b16 %v6951
        %v7244 = vunpack.c.h.b16 %v6951
        %v7245 = vunpack.c.l.b16 %v6952
        %v7246 = vunpack.c.h.b16 %v6952
        %v7247 = vunpack.c.l.b16 %v6953
        %v7248 = vunpack.c.h.b16 %v6953
        %v7249 = vunpack.c.l.b16 %v6954
        %v7250 = vunpack.c.h.b16 %v6954
        %v7251 = vunpack.c.l.b16 %v6955
        %v7252 = vunpack.c.h.b16 %v6955
        %v7253 = vunpack.c.l.b16 %v6956
        %v7254 = vunpack.c.h.b16 %v6956
        %v7255 = vunpack.c.l.b16 %v6957
        %v7256 = vunpack.c.h.b16 %v6957
        %v7257 = vunpack.c.l.b16 %v6958
        %v7258 = vunpack.c.h.b16 %v6958
        %v7259 = vunpack.c.l.b16 %v6959
        %v7260 = vunpack.c.h.b16 %v6959
        %v7261 = vunpack.c.l.b16 %v6960
        %v7262 = vunpack.c.h.b16 %v6960
        %v7263 = vunpack.c.l.b16 %v6961
        %v7264 = vunpack.c.h.b16 %v6961
        %v7265 = vunpack.c.l.b16 %v6962
        %v7266 = vunpack.c.h.b16 %v6962
        %v7267 = vunpack.c.l.b16 %v6963
        %v7268 = vunpack.c.h.b16 %v6963
        %v7269 = vunpack.c.l.b16 %v6964
        %v7270 = vunpack.c.h.b16 %v6964
        %v7271 = vunpack.c.l.b16 %v6965
        %v7272 = vunpack.c.h.b16 %v6965
        %v7273 = vunpack.c.l.b16 %v6966
        %v7274 = vunpack.c.h.b16 %v6966
        %v7275 = vunpack.c.l.b16 %v6967
        %v7276 = vunpack.c.h.b16 %v6967
        %v7277 = vunpack.c.l.b16 %v6968
        %v7278 = vunpack.c.h.b16 %v6968
        %v7279 = vunpack.c.l.b16 %v6969
        %v7280 = vunpack.c.h.b16 %v6969
        %v7281 = vunpack.c.l.b16 %v6970
        %v7282 = vunpack.c.h.b16 %v6970
        %v7283 = vunpack.c.l.b16 %v6971
        %v7284 = vunpack.c.h.b16 %v6971
        %v7285 = vunpack.c.l.b16 %v6972
        %v7286 = vunpack.c.h.b16 %v6972
        %v7287 = vunpack.c.l.b16 %v6973
        %v7288 = vunpack.c.h.b16 %v6973
        %v7289 = vunpack.c.l.b16 %v6974
        %v7290 = vunpack.c.h.b16 %v6974
        %v7291 = vunpack.c.l.b16 %v6975
        %v7292 = vunpack.c.h.b16 %v6975
        %v7293 = vunpack.c.l.b16 %v6976
        %v7294 = vunpack.c.h.b16 %v6976
        %v7295 = vunpack.c.l.b16 %v6977
        %v7296 = vunpack.c.h.b16 %v6977
        %v7297 = vunpack.c.l.b16 %v6978
        %v7298 = vunpack.c.h.b16 %v6978
        %v7299 = vunpack.c.l.b16 %v6979
        %v7300 = vunpack.c.h.b16 %v6979
        %v7301 = vunpack.c.l.b16 %v6980
        %v7302 = vunpack.c.h.b16 %v6980
        %v7303 = vunpack.c.l.b16 %v6981
        %v7304 = vunpack.c.h.b16 %v6981
        %v7305 = vunpack.c.l.b16 %v6982
        %v7306 = vunpack.c.h.b16 %v6982
        %v7307 = vunpack.c.l.b16 %v6983
        %v7308 = vunpack.c.h.b16 %v6983
        %v7309 = vunpack.c.l.b16 %v6984
        %v7310 = vunpack.c.h.b16 %v6984
        %v7311 = vunpack.c.l.b16 %v6985
        %v7312 = vunpack.c.h.b16 %v6985
        %v7313 = vunpack.c.l.b16 %v6986
        %v7314 = vunpack.c.h.b16 %v6986
        %v7315 = vunpack.c.l.b16 %v6987
        %v7316 = vunpack.c.h.b16 %v6987
        %v7317 = vunpack.c.l.b16 %v6988
        %v7318 = vunpack.c.h.b16 %v6988
        %v7319 = vunpack.c.l.b16 %v6989
        %v7320 = vunpack.c.h.b16 %v6989
        %v7321 = vunpack.c.l.b16 %v6990
        %v7322 = vunpack.c.h.b16 %v6990
        %v7323 = vunpack.c.l.b16 %v6991
        %v7324 = vunpack.c.h.b16 %v6991
        %v7325 = vunpack.c.l.b16 %v6992
        %v7326 = vunpack.c.h.b16 %v6992
        %v7327 = vunpack.c.l.b16 %v6993
        %v7328 = vunpack.c.h.b16 %v6993
        %v7329 = vunpack.c.l.b16 %v6994
        %v7330 = vunpack.c.h.b16 %v6994
        %v7331 = vunpack.c.l.b16 %v6995
        %v7332 = vunpack.c.h.b16 %v6995
        %v7333 = vunpack.c.l.b16 %v6996
        %v7334 = vunpack.c.h.b16 %v6996
        %v7335 = vunpack.c.l.b16 %v6997
        %v7336 = vunpack.c.h.b16 %v6997
        %v7337 = vunpack.c.l.b16 %v6998
        %v7338 = vunpack.c.h.b16 %v6998
        %v7339 = vunpack.c.l.b16 %v6999
        %v7340 = vunpack.c.h.b16 %v6999
        %v7341 = vunpack.c.l.b16 %v7000
        %v7342 = vunpack.c.h.b16 %v7000
        %v7343 = vunpack.c.l.b16 %v7001
        %v7344 = vunpack.c.h.b16 %v7001
        %v7345 = vunpack.c.l.b16 %v7002
        %v7346 = vunpack.c.h.b16 %v7002
        %v7347 = vunpack.c.l.b16 %v7003
        %v7348 = vunpack.c.h.b16 %v7003
        %v7349 = vunpack.c.l.b16 %v7004
        %v7350 = vunpack.c.h.b16 %v7004
        %v7351 = vunpack.c.l.b16 %v7005
        %v7352 = vunpack.c.h.b16 %v7005
        %v7353 = vunpack.c.l.b16 %v7006
        %v7354 = vunpack.c.h.b16 %v7006
        %v7355 = vunpack.c.l.b16 %v7007
        %v7356 = vunpack.c.h.b16 %v7007
        %v7357 = vunpack.c.l.b16 %v7008
        %v7358 = vunpack.c.h.b16 %v7008
        %v7359 = vunpack.c.l.b16 %v7009
        %v7360 = vunpack.c.h.b16 %v7009
        %v7361 = vunpack.c.l.b16 %v7010
        %v7362 = vunpack.c.h.b16 %v7010
        %v7363 = vunpack.c.l.b16 %v7011
        %v7364 = vunpack.c.h.b16 %v7011
        %v7365 = vunpack.c.l.b16 %v7012
        %v7366 = vunpack.c.h.b16 %v7012
        %v7367 = vunpack.c.l.b16 %v7013
        %v7368 = vunpack.c.h.b16 %v7013
        %v7369 = vunpack.c.l.b16 %v7014
        %v7370 = vunpack.c.h.b16 %v7014
        %v7371 = vunpack.c.l.b16 %v7015
        %v7372 = vunpack.c.h.b16 %v7015
        %v7373 = vunpack.c.l.b16 %v7016
        %v7374 = vunpack.c.h.b16 %v7016
        %v7375 = vunpack.c.l.b16 %v7017
        %v7376 = vunpack.c.h.b16 %v7017
        %v7377 = vunpack.c.l.b16 %v7018
        %v7378 = vunpack.c.h.b16 %v7018
        %v7379 = vunpack.c.l.b16 %v7019
        %v7380 = vunpack.c.h.b16 %v7019
        %v7381 = vunpack.c.l.b16 %v7020
        %v7382 = vunpack.c.h.b16 %v7020
        %v7383 = vunpack.c.l.b16 %v7021
        %v7384 = vunpack.c.h.b16 %v7021
        %v7385 = vunpack.c.l.b16 %v7022
        %v7386 = vunpack.c.h.b16 %v7022
        %v7387 = vunpack.c.l.b16 %v7023
        %v7388 = vunpack.c.h.b16 %v7023
        %v7389 = vunpack.c.l.b16 %v7024
        %v7390 = vunpack.c.h.b16 %v7024
        %v7391 = vunpack.c.l.b16 %v7025
        %v7392 = vunpack.c.h.b16 %v7025
        %v7393 = vunpack.c.l.b16 %v7026
        %v7394 = vunpack.c.h.b16 %v7026
        %v7395 = vunpack.c.l.b16 %v7027
        %v7396 = vunpack.c.h.b16 %v7027
        %v7397 = vunpack.c.l.b16 %v7028
        %v7398 = vunpack.c.h.b16 %v7028
        %v7399 = vunpack.c.l.b16 %v7029
        %v7400 = vunpack.c.h.b16 %v7029
        %v7401 = vunpack.c.l.b16 %v7030
        %v7402 = vunpack.c.h.b16 %v7030
        %v7403 = vunpack.c.l.b16 %v7031
        %v7404 = vunpack.c.h.b16 %v7031
        %v7405 = vunpack.c.l.b16 %v7032
        %v7406 = vunpack.c.h.b16 %v7032
        %v7407 = vunpack.c.l.b16 %v7033
        %v7408 = vunpack.c.h.b16 %v7033
        %v7409 = vunpack.c.l.b16 %v7034
        %v7410 = vunpack.c.h.b16 %v7034
        %v7411 = vunpack.c.l.b16 %v7035
        %v7412 = vunpack.c.h.b16 %v7035
        %v7413 = vunpack.c.l.b16 %v7036
        %v7414 = vunpack.c.h.b16 %v7036
        %v7415 = vunpack.c.l.b16 %v7037
        %v7416 = vunpack.c.h.b16 %v7037
        %v7417 = vunpack.c.l.b16 %v7038
        %v7418 = vunpack.c.h.b16 %v7038
        %v7419 = vunpack.c.l.b16 %v7039
        %v7420 = vunpack.c.h.b16 %v7039
        %v7421 = vunpack.c.l.b16 %v7040
        %v7422 = vunpack.c.h.b16 %v7040
        %v7423 = vunpack.c.l.b16 %v7041
        %v7424 = vunpack.c.h.b16 %v7041
        %v7425 = vunpack.c.l.b16 %v7042
        %v7426 = vunpack.c.h.b16 %v7042
        %v7427 = vunpack.c.l.b16 %v7043
        %v7428 = vunpack.c.h.b16 %v7043
        %v7429 = vpack.c.b16 %v7177, %v7173
        %v7430 = vpack.c.b16 %v7178, %v7174
        %v7431 = vpack.c.b16 %v7179, %v7175
        %v7432 = vpack.c.b16 %v7180, %v7176
        %v7433 = vpack.c.b16 %v7185, %v7181
        %v7434 = vpack.c.b16 %v7186, %v7182
        %v7435 = vpack.c.b16 %v7187, %v7183
        %v7436 = vpack.c.b16 %v7188, %v7184
        %v7437 = vpack.c.b16 %v7193, %v7189
        %v7438 = vpack.c.b16 %v7194, %v7190
        %v7439 = vpack.c.b16 %v7195, %v7191
        %v7440 = vpack.c.b16 %v7196, %v7192
        %v7441 = vpack.c.b16 %v7201, %v7197
        %v7442 = vpack.c.b16 %v7202, %v7198
        %v7443 = vpack.c.b16 %v7203, %v7199
        %v7444 = vpack.c.b16 %v7204, %v7200
        %v7445 = vpack.c.b16 %v7209, %v7205
        %v7446 = vpack.c.b16 %v7210, %v7206
        %v7447 = vpack.c.b16 %v7211, %v7207
        %v7448 = vpack.c.b16 %v7212, %v7208
        %v7449 = vpack.c.b16 %v7217, %v7213
        %v7450 = vpack.c.b16 %v7218, %v7214
        %v7451 = vpack.c.b16 %v7219, %v7215
        %v7452 = vpack.c.b16 %v7220, %v7216
        %v7453 = vpack.c.b16 %v7225, %v7221
        %v7454 = vpack.c.b16 %v7226, %v7222
        %v7455 = vpack.c.b16 %v7227, %v7223
        %v7456 = vpack.c.b16 %v7228, %v7224
        %v7457 = vpack.c.b16 %v7233, %v7229
        %v7458 = vpack.c.b16 %v7234, %v7230
        %v7459 = vpack.c.b16 %v7235, %v7231
        %v7460 = vpack.c.b16 %v7236, %v7232
        %v7461 = vpack.c.b16 %v7241, %v7237
        %v7462 = vpack.c.b16 %v7242, %v7238
        %v7463 = vpack.c.b16 %v7243, %v7239
        %v7464 = vpack.c.b16 %v7244, %v7240
        %v7465 = vpack.c.b16 %v7249, %v7245
        %v7466 = vpack.c.b16 %v7250, %v7246
        %v7467 = vpack.c.b16 %v7251, %v7247
        %v7468 = vpack.c.b16 %v7252, %v7248
        %v7469 = vpack.c.b16 %v7257, %v7253
        %v7470 = vpack.c.b16 %v7258, %v7254
        %v7471 = vpack.c.b16 %v7259, %v7255
        %v7472 = vpack.c.b16 %v7260, %v7256
        %v7473 = vpack.c.b16 %v7265, %v7261
        %v7474 = vpack.c.b16 %v7266, %v7262
        %v7475 = vpack.c.b16 %v7267, %v7263
        %v7476 = vpack.c.b16 %v7268, %v7264
        %v7477 = vpack.c.b16 %v7273, %v7269
        %v7478 = vpack.c.b16 %v7274, %v7270
        %v7479 = vpack.c.b16 %v7275, %v7271
        %v7480 = vpack.c.b16 %v7276, %v7272
        %v7481 = vpack.c.b16 %v7281, %v7277
        %v7482 = vpack.c.b16 %v7282, %v7278
        %v7483 = vpack.c.b16 %v7283, %v7279
        %v7484 = vpack.c.b16 %v7284, %v7280
        %v7485 = vpack.c.b16 %v7289, %v7285
        %v7486 = vpack.c.b16 %v7290, %v7286
        %v7487 = vpack.c.b16 %v7291, %v7287
        %v7488 = vpack.c.b16 %v7292, %v7288
        %v7489 = vpack.c.b16 %v7297, %v7293
        %v7490 = vpack.c.b16 %v7298, %v7294
        %v7491 = vpack.c.b16 %v7299, %v7295
        %v7492 = vpack.c.b16 %v7300, %v7296
        %v7493 = vpack.c.b16 %v7305, %v7301
        %v7494 = vpack.c.b16 %v7306, %v7302
        %v7495 = vpack.c.b16 %v7307, %v7303
        %v7496 = vpack.c.b16 %v7308, %v7304
        %v7497 = vpack.c.b16 %v7313, %v7309
        %v7498 = vpack.c.b16 %v7314, %v7310
        %v7499 = vpack.c.b16 %v7315, %v7311
        %v7500 = vpack.c.b16 %v7316, %v7312
        %v7501 = vpack.c.b16 %v7321, %v7317
        %v7502 = vpack.c.b16 %v7322, %v7318
        %v7503 = vpack.c.b16 %v7323, %v7319
        %v7504 = vpack.c.b16 %v7324, %v7320
        %v7505 = vpack.c.b16 %v7329, %v7325
        %v7506 = vpack.c.b16 %v7330, %v7326
        %v7507 = vpack.c.b16 %v7331, %v7327
        %v7508 = vpack.c.b16 %v7332, %v7328
        %v7509 = vpack.c.b16 %v7337, %v7333
        %v7510 = vpack.c.b16 %v7338, %v7334
        %v7511 = vpack.c.b16 %v7339, %v7335
        %v7512 = vpack.c.b16 %v7340, %v7336
        %v7513 = vpack.c.b16 %v7345, %v7341
        %v7514 = vpack.c.b16 %v7346, %v7342
        %v7515 = vpack.c.b16 %v7347, %v7343
        %v7516 = vpack.c.b16 %v7348, %v7344
        %v7517 = vpack.c.b16 %v7353, %v7349
        %v7518 = vpack.c.b16 %v7354, %v7350
        %v7519 = vpack.c.b16 %v7355, %v7351
        %v7520 = vpack.c.b16 %v7356, %v7352
        %v7521 = vpack.c.b16 %v7361, %v7357
        %v7522 = vpack.c.b16 %v7362, %v7358
        %v7523 = vpack.c.b16 %v7363, %v7359
        %v7524 = vpack.c.b16 %v7364, %v7360
        %v7525 = vpack.c.b16 %v7369, %v7365
        %v7526 = vpack.c.b16 %v7370, %v7366
        %v7527 = vpack.c.b16 %v7371, %v7367
        %v7528 = vpack.c.b16 %v7372, %v7368
        %v7529 = vpack.c.b16 %v7377, %v7373
        %v7530 = vpack.c.b16 %v7378, %v7374
        %v7531 = vpack.c.b16 %v7379, %v7375
        %v7532 = vpack.c.b16 %v7380, %v7376
        %v7533 = vpack.c.b16 %v7385, %v7381
        %v7534 = vpack.c.b16 %v7386, %v7382
        %v7535 = vpack.c.b16 %v7387, %v7383
        %v7536 = vpack.c.b16 %v7388, %v7384
        %v7537 = vpack.c.b16 %v7393, %v7389
        %v7538 = vpack.c.b16 %v7394, %v7390
        %v7539 = vpack.c.b16 %v7395, %v7391
        %v7540 = vpack.c.b16 %v7396, %v7392
        %v7541 = vpack.c.b16 %v7401, %v7397
        %v7542 = vpack.c.b16 %v7402, %v7398
        %v7543 = vpack.c.b16 %v7403, %v7399
        %v7544 = vpack.c.b16 %v7404, %v7400
        %v7545 = vpack.c.b16 %v7409, %v7405
        %v7546 = vpack.c.b16 %v7410, %v7406
        %v7547 = vpack.c.b16 %v7411, %v7407
        %v7548 = vpack.c.b16 %v7412, %v7408
        %v7549 = vpack.c.b16 %v7417, %v7413
        %v7550 = vpack.c.b16 %v7418, %v7414
        %v7551 = vpack.c.b16 %v7419, %v7415
        %v7552 = vpack.c.b16 %v7420, %v7416
        %v7553 = vpack.c.b16 %v7425, %v7421
        %v7554 = vpack.c.b16 %v7426, %v7422
        %v7555 = vpack.c.b16 %v7427, %v7423
        %v7556 = vpack.c.b16 %v7428, %v7424
        %v7686 = vlaneseq
        %v7687 = vshrl.u32 %v7686, 7
        %v7688 = vsub.s32 0, %v7687
        %v7689 = vrot.slane %v7044, %v7688
        %v7690 = vlaneseq
        %v7691 = vshrl.u32 %v7690, 7
        %v7692 = vsub.s32 1, %v7691
        %v7693 = vrot.slane %v7044, %v7692
        %v7694 = vlaneseq
        %v7695 = vshrl.u32 %v7694, 7
        %v7696 = vsub.s32 2, %v7695
        %v7697 = vrot.slane %v7044, %v7696
        %v7698 = vlaneseq
        %v7699 = vshrl.u32 %v7698, 7
        %v7700 = vsub.s32 3, %v7699
        %v7701 = vrot.slane %v7044, %v7700
        %7706 = vmatprep.subr.bf16.mxu0 %v7430
        %7707 = vmatpush1.bf16.msra.mxu0 %v7429
        %7708 = vmatprep.subr.bf16.mxu0 %v7434
        %7709 = vmatpush1.bf16.msra.mxu0 %v7433
        %7710 = vmatprep.subr.bf16.mxu0 %v7438
        %7711 = vmatpush1.bf16.msra.mxu0 %v7437
        %7712 = vmatprep.subr.bf16.mxu0 %v7442
        %7713 = vmatpush1.bf16.msra.mxu0 %v7441
        %7714 = vmatprep.subr.bf16.mxu0 %v7446
        %7715 = vmatpush1.bf16.msra.mxu0 %v7445
        %7716 = vmatprep.subr.bf16.mxu0 %v7450
        %7717 = vmatpush1.bf16.msra.mxu0 %v7449
        %7718 = vmatprep.subr.bf16.mxu0 %v7454
        %7719 = vmatpush1.bf16.msra.mxu0 %v7453
        %7720 = vmatprep.subr.bf16.mxu0 %v7458
        %7721 = vmatpush1.bf16.msra.mxu0 %v7457
        %7722 = vmatprep.subr.bf16.mxu0 %v7462
        %7723 = vmatpush1.bf16.msra.mxu0 %v7461
        %7724 = vmatprep.subr.bf16.mxu0 %v7466
        %7725 = vmatpush1.bf16.msra.mxu0 %v7465
        %7726 = vmatprep.subr.bf16.mxu0 %v7470
        %7727 = vmatpush1.bf16.msra.mxu0 %v7469
        %7728 = vmatprep.subr.bf16.mxu0 %v7474
        %7729 = vmatpush1.bf16.msra.mxu0 %v7473
        %7730 = vmatprep.subr.bf16.mxu0 %v7478
        %7731 = vmatpush1.bf16.msra.mxu0 %v7477
        %7732 = vmatprep.subr.bf16.mxu0 %v7482
        %7733 = vmatpush1.bf16.msra.mxu0 %v7481
        %7734 = vmatprep.subr.bf16.mxu0 %v7486
        %7735 = vmatpush1.bf16.msra.mxu0 %v7485
        %7736 = vmatprep.subr.bf16.mxu0 %v7490
        %7737 = vmatpush1.bf16.msra.mxu0 %v7489
        %7738 = vmatprep.mubr.bf16.mxu0 %v6913
        %7739 = vmatmul.mubr.bf16.gmra.mrb[0].mxu0 %v6912
        %v7740 = vpop.f32.mrb[0].mxu0
        %v7741 = vadd.f32 %v7689, %v7740
        %v7742 = vpop.f32.mrb[0].mxu0
        %v7743 = vadd.f32 %v7693, %v7742
        %v7744 = vpop.f32.mrb[0].mxu0
        %v7745 = vpop.f32.mrb[0].mxu0
        %7746 = vdwg.mxu0
        %7747 = vmatprep.subr.bf16.mxu0 %v7494
        %7748 = vmatpush1.bf16.msra.mxu0 %v7493
        %7749 = vmatprep.subr.bf16.mxu0 %v7498
        %7750 = vmatpush1.bf16.msra.mxu0 %v7497
        %7751 = vmatprep.subr.bf16.mxu0 %v7502
        %7752 = vmatpush1.bf16.msra.mxu0 %v7501
        %7753 = vmatprep.subr.bf16.mxu0 %v7506
        %7754 = vmatpush1.bf16.msra.mxu0 %v7505
        %7755 = vmatprep.subr.bf16.mxu0 %v7510
        %7756 = vmatpush1.bf16.msra.mxu0 %v7509
        %7757 = vmatprep.subr.bf16.mxu0 %v7514
        %7758 = vmatpush1.bf16.msra.mxu0 %v7513
        %7759 = vmatprep.subr.bf16.mxu0 %v7518
        %7760 = vmatpush1.bf16.msra.mxu0 %v7517
        %7761 = vmatprep.subr.bf16.mxu0 %v7522
        %7762 = vmatpush1.bf16.msra.mxu0 %v7521
        %7763 = vmatprep.subr.bf16.mxu0 %v7526
        %7764 = vmatpush1.bf16.msra.mxu0 %v7525
        %7765 = vmatprep.subr.bf16.mxu0 %v7530
        %7766 = vmatpush1.bf16.msra.mxu0 %v7529
        %7767 = vmatprep.subr.bf16.mxu0 %v7534
        %7768 = vmatpush1.bf16.msra.mxu0 %v7533
        %7769 = vmatprep.subr.bf16.mxu0 %v7538
        %7770 = vmatpush1.bf16.msra.mxu0 %v7537
        %7771 = vmatprep.subr.bf16.mxu0 %v7542
        %7772 = vmatpush1.bf16.msra.mxu0 %v7541
        %7773 = vmatprep.subr.bf16.mxu0 %v7546
        %7774 = vmatpush1.bf16.msra.mxu0 %v7545
        %7775 = vmatprep.subr.bf16.mxu0 %v7550
        %7776 = vmatpush1.bf16.msra.mxu0 %v7549
        %7777 = vmatprep.subr.bf16.mxu0 %v7554
        %7778 = vmatpush1.bf16.msra.mxu0 %v7553
        %7779 = vmatprep.mubr.bf16.mxu0 %v6915
        %7780 = vmatmul.mubr.bf16.gmra.mrb[0].mxu0 %v6914
        %v7781 = vpop.f32.mrb[0].mxu0
        %v7782 = vadd.f32 %v7741, %v7781
        %v7783 = vpop.f32.mrb[0].mxu0
        %v7784 = vadd.f32 %v7743, %v7783
        %v7785 = vpop.f32.mrb[0].mxu0
        %v7786 = vpop.f32.mrb[0].mxu0
        %7787 = vdwg.mxu0
        %7788 = vmatprep.subr.bf16.mxu0 %v7432
        %7789 = vmatpush1.bf16.msra.mxu0 %v7431
        %7790 = vmatprep.subr.bf16.mxu0 %v7436
        %7791 = vmatpush1.bf16.msra.mxu0 %v7435
        %7792 = vmatprep.subr.bf16.mxu0 %v7440
        %7793 = vmatpush1.bf16.msra.mxu0 %v7439
        %7794 = vmatprep.subr.bf16.mxu0 %v7444
        %7795 = vmatpush1.bf16.msra.mxu0 %v7443
        %7796 = vmatprep.subr.bf16.mxu0 %v7448
        %7797 = vmatpush1.bf16.msra.mxu0 %v7447
        %7798 = vmatprep.subr.bf16.mxu0 %v7452
        %7799 = vmatpush1.bf16.msra.mxu0 %v7451
        %7800 = vmatprep.subr.bf16.mxu0 %v7456
        %7801 = vmatpush1.bf16.msra.mxu0 %v7455
        %7802 = vmatprep.subr.bf16.mxu0 %v7460
        %7803 = vmatpush1.bf16.msra.mxu0 %v7459
        %7804 = vmatprep.subr.bf16.mxu0 %v7464
        %7805 = vmatpush1.bf16.msra.mxu0 %v7463
        %7806 = vmatprep.subr.bf16.mxu0 %v7468
        %7807 = vmatpush1.bf16.msra.mxu0 %v7467
        %7808 = vmatprep.subr.bf16.mxu0 %v7472
        %7809 = vmatpush1.bf16.msra.mxu0 %v7471
        %7810 = vmatprep.subr.bf16.mxu0 %v7476
        %7811 = vmatpush1.bf16.msra.mxu0 %v7475
        %7812 = vmatprep.subr.bf16.mxu0 %v7480
        %7813 = vmatpush1.bf16.msra.mxu0 %v7479
        %7814 = vmatprep.subr.bf16.mxu0 %v7484
        %7815 = vmatpush1.bf16.msra.mxu0 %v7483
        %7816 = vmatprep.subr.bf16.mxu0 %v7488
        %7817 = vmatpush1.bf16.msra.mxu0 %v7487
        %7818 = vmatprep.subr.bf16.mxu0 %v7492
        %7819 = vmatpush1.bf16.msra.mxu0 %v7491
        %7820 = vmatprep.mubr.bf16.mxu0 %v6913
        %7821 = vmatmul.mubr.bf16.gmra.mrb[0].mxu0 %v6912
        %v7822 = vpop.f32.mrb[0].mxu0
        %v7823 = vadd.f32 %v7697, %v7822
        %v7824 = vpop.f32.mrb[0].mxu0
        %v7825 = vadd.f32 %v7701, %v7824
        %v7826 = vpop.f32.mrb[0].mxu0
        %v7827 = vpop.f32.mrb[0].mxu0
        %7828 = vdwg.mxu0
        %7829 = vmatprep.subr.bf16.mxu0 %v7496
        %7830 = vmatpush1.bf16.msra.mxu0 %v7495
        %7831 = vmatprep.subr.bf16.mxu0 %v7500
        %7832 = vmatpush1.bf16.msra.mxu0 %v7499
        %7833 = vmatprep.subr.bf16.mxu0 %v7504
        %7834 = vmatpush1.bf16.msra.mxu0 %v7503
        %7835 = vmatprep.subr.bf16.mxu0 %v7508
        %7836 = vmatpush1.bf16.msra.mxu0 %v7507
        %7837 = vmatprep.subr.bf16.mxu0 %v7512
        %7838 = vmatpush1.bf16.msra.mxu0 %v7511
        %7839 = vmatprep.subr.bf16.mxu0 %v7516
        %7840 = vmatpush1.bf16.msra.mxu0 %v7515
        %7841 = vmatprep.subr.bf16.mxu0 %v7520
        %7842 = vmatpush1.bf16.msra.mxu0 %v7519
        %7843 = vmatprep.subr.bf16.mxu0 %v7524
        %7844 = vmatpush1.bf16.msra.mxu0 %v7523
        %7845 = vmatprep.subr.bf16.mxu0 %v7528
        %7846 = vmatpush1.bf16.msra.mxu0 %v7527
        %7847 = vmatprep.subr.bf16.mxu0 %v7532
        %7848 = vmatpush1.bf16.msra.mxu0 %v7531
        %7849 = vmatprep.subr.bf16.mxu0 %v7536
        %7850 = vmatpush1.bf16.msra.mxu0 %v7535
        %7851 = vmatprep.subr.bf16.mxu0 %v7540
        %7852 = vmatpush1.bf16.msra.mxu0 %v7539
        %7853 = vmatprep.subr.bf16.mxu0 %v7544
        %7854 = vmatpush1.bf16.msra.mxu0 %v7543
        %7855 = vmatprep.subr.bf16.mxu0 %v7548
        %7856 = vmatpush1.bf16.msra.mxu0 %v7547
        %7857 = vmatprep.subr.bf16.mxu0 %v7552
        %7858 = vmatpush1.bf16.msra.mxu0 %v7551
        %7859 = vmatprep.subr.bf16.mxu0 %v7556
        %7860 = vmatpush1.bf16.msra.mxu0 %v7555
        %7861 = vmatprep.mubr.bf16.mxu0 %v6915
        %7862 = vmatmul.mubr.bf16.gmra.mrb[0].mxu0 %v6914
        %v7863 = vpop.f32.mrb[0].mxu0
        %v7864 = vadd.f32 %v7823, %v7863
        %v7865 = vpop.f32.mrb[0].mxu0
        %v7866 = vadd.f32 %v7825, %v7865
        %v7867 = vpop.f32.mrb[0].mxu0
        %v7868 = vpop.f32.mrb[0].mxu0
        %7869 = vdwg.mxu0
        %v7870 = vmax.f32 %v7782, 0.0
        %v7871 = vmax.f32 %v7784, 0.0
        %v7872 = vmax.f32 %v7864, 0.0
        %v7873 = vmax.f32 %v7866, 0.0
        %v7874 = vpack.c.bf16 %v7870, %v7870
        %v7875 = vpack.c.bf16 %v7871, %v7871
        %v7876 = vpack.c.bf16 %v7872, %v7872
        %v7877 = vpack.c.bf16 %v7873, %v7873
        %v7878 = vld [vmem:[#allocation5] sm:$0xff]
        %v7879 = vld [vmem:[#allocation5 + $0x8] sm:$0xff]
        %v7880 = vld [vmem:[#allocation5 + $0x10] sm:$0xff]
        %v7881 = vld [vmem:[#allocation5 + $0x18] sm:$0xff]
        %v7882 = vld [vmem:[#allocation5 + $0x20] sm:$0xff]
        %v7883 = vld [vmem:[#allocation5 + $0x28] sm:$0xff]
        %v7884 = vld [vmem:[#allocation5 + $0x30] sm:$0xff]
        %v7885 = vld [vmem:[#allocation5 + $0x38] sm:$0xff]
        %v7886 = vld [vmem:[#allocation5 + $0x40] sm:$0xff]
        %v7887 = vld [vmem:[#allocation5 + $0x48] sm:$0xff]
        %v7888 = vld [vmem:[#allocation5 + $0x50] sm:$0xff]
        %v7889 = vld [vmem:[#allocation5 + $0x58] sm:$0xff]
        %v7890 = vld [vmem:[#allocation5 + $0x60] sm:$0xff]
        %v7891 = vld [vmem:[#allocation5 + $0x68] sm:$0xff]
        %v7892 = vld [vmem:[#allocation5 + $0x70] sm:$0xff]
        %v7893 = vld [vmem:[#allocation5 + $0x78] sm:$0xff]
        %v7894 = vld [vmem:[#allocation5 + $0x80] sm:$0xff]
        %v7895 = vld [vmem:[#allocation5 + $0x88] sm:$0xff]
        %v7896 = vld [vmem:[#allocation5 + $0x90] sm:$0xff]
        %v7897 = vld [vmem:[#allocation5 + $0x98] sm:$0xff]
        %v7898 = vld [vmem:[#allocation5 + $0xa0] sm:$0xff]
        %v7899 = vld [vmem:[#allocation5 + $0xa8] sm:$0xff]
        %v7900 = vld [vmem:[#allocation5 + $0xb0] sm:$0xff]
        %v7901 = vld [vmem:[#allocation5 + $0xb8] sm:$0xff]
        %v7902 = vld [vmem:[#allocation5 + $0xc0] sm:$0xff]
        %v7903 = vld [vmem:[#allocation5 + $0xc8] sm:$0xff]
        %v7904 = vld [vmem:[#allocation5 + $0xd0] sm:$0xff]
        %v7905 = vld [vmem:[#allocation5 + $0xd8] sm:$0xff]
        %v7906 = vld [vmem:[#allocation5 + $0xe0] sm:$0xff]
        %v7907 = vld [vmem:[#allocation5 + $0xe8] sm:$0xff]
        %v7908 = vld [vmem:[#allocation5 + $0xf0] sm:$0xff]
        %v7909 = vld [vmem:[#allocation5 + $0xf8] sm:$0xff]
        %v7910 = vld [vmem:[#allocation5 + $0x100] sm:$0xff]
        %v7911 = vld [vmem:[#allocation5 + $0x108] sm:$0xff]
        %v7912 = vld [vmem:[#allocation5 + $0x110] sm:$0xff]
        %v7913 = vld [vmem:[#allocation5 + $0x118] sm:$0xff]
        %v7914 = vld [vmem:[#allocation5 + $0x120] sm:$0xff]
        %v7915 = vld [vmem:[#allocation5 + $0x128] sm:$0xff]
        %v7916 = vld [vmem:[#allocation5 + $0x130] sm:$0xff]
        %v7917 = vld [vmem:[#allocation5 + $0x138] sm:$0xff]
        %v7918 = vld [vmem:[#allocation5 + $0x140] sm:$0xff]
        %v7919 = vld [vmem:[#allocation5 + $0x148] sm:$0xff]
        %v7920 = vld [vmem:[#allocation5 + $0x150] sm:$0xff]
        %v7921 = vld [vmem:[#allocation5 + $0x158] sm:$0xff]
        %v7922 = vld [vmem:[#allocation5 + $0x160] sm:$0xff]
        %v7923 = vld [vmem:[#allocation5 + $0x168] sm:$0xff]
        %v7924 = vld [vmem:[#allocation5 + $0x170] sm:$0xff]
        %v7925 = vld [vmem:[#allocation5 + $0x178] sm:$0xff]
        %v7926 = vld [vmem:[#allocation5 + $0x180] sm:$0xff]
        %v7927 = vld [vmem:[#allocation5 + $0x188] sm:$0xff]
        %v7928 = vld [vmem:[#allocation5 + $0x190] sm:$0xff]
        %v7929 = vld [vmem:[#allocation5 + $0x198] sm:$0xff]
        %v7930 = vld [vmem:[#allocation5 + $0x1a0] sm:$0xff]
        %v7931 = vld [vmem:[#allocation5 + $0x1a8] sm:$0xff]
        %v7932 = vld [vmem:[#allocation5 + $0x1b0] sm:$0xff]
        %v7933 = vld [vmem:[#allocation5 + $0x1b8] sm:$0xff]
        %v7934 = vld [vmem:[#allocation5 + $0x1c0] sm:$0xff]
        %v7935 = vld [vmem:[#allocation5 + $0x1c8] sm:$0xff]
        %v7936 = vld [vmem:[#allocation5 + $0x1d0] sm:$0xff]
        %v7937 = vld [vmem:[#allocation5 + $0x1d8] sm:$0xff]
        %v7938 = vld [vmem:[#allocation5 + $0x1e0] sm:$0xff]
        %v7939 = vld [vmem:[#allocation5 + $0x1e8] sm:$0xff]
        %v7940 = vld [vmem:[#allocation5 + $0x1f0] sm:$0xff]
        %v7941 = vld [vmem:[#allocation5 + $0x1f8] sm:$0xff]
        %v7942 = vld [vmem:[#allocation5 + $0x200] sm:$0xff]
        %v7943 = vld [vmem:[#allocation5 + $0x208] sm:$0xff]
        %v7944 = vld [vmem:[#allocation5 + $0x210] sm:$0xff]
        %v7945 = vld [vmem:[#allocation5 + $0x218] sm:$0xff]
        %v7946 = vld [vmem:[#allocation5 + $0x220] sm:$0xff]
        %v7947 = vld [vmem:[#allocation5 + $0x228] sm:$0xff]
        %v7948 = vld [vmem:[#allocation5 + $0x230] sm:$0xff]
        %v7949 = vld [vmem:[#allocation5 + $0x238] sm:$0xff]
        %v7950 = vld [vmem:[#allocation5 + $0x240] sm:$0xff]
        %v7951 = vld [vmem:[#allocation5 + $0x248] sm:$0xff]
        %v7952 = vld [vmem:[#allocation5 + $0x250] sm:$0xff]
        %v7953 = vld [vmem:[#allocation5 + $0x258] sm:$0xff]
        %v7954 = vld [vmem:[#allocation5 + $0x260] sm:$0xff]
        %v7955 = vld [vmem:[#allocation5 + $0x268] sm:$0xff]
        %v7956 = vld [vmem:[#allocation5 + $0x270] sm:$0xff]
        %v7957 = vld [vmem:[#allocation5 + $0x278] sm:$0xff]
        %v7958 = vld [vmem:[#allocation5 + $0x280] sm:$0xff]
        %v7959 = vld [vmem:[#allocation5 + $0x288] sm:$0xff]
        %v7960 = vld [vmem:[#allocation5 + $0x290] sm:$0xff]
        %v7961 = vld [vmem:[#allocation5 + $0x298] sm:$0xff]
        %v7962 = vld [vmem:[#allocation5 + $0x2a0] sm:$0xff]
        %v7963 = vld [vmem:[#allocation5 + $0x2a8] sm:$0xff]
        %v7964 = vld [vmem:[#allocation5 + $0x2b0] sm:$0xff]
        %v7965 = vld [vmem:[#allocation5 + $0x2b8] sm:$0xff]
        %v7966 = vld [vmem:[#allocation5 + $0x2c0] sm:$0xff]
        %v7967 = vld [vmem:[#allocation5 + $0x2c8] sm:$0xff]
        %v7968 = vld [vmem:[#allocation5 + $0x2d0] sm:$0xff]
        %v7969 = vld [vmem:[#allocation5 + $0x2d8] sm:$0xff]
        %v7970 = vld [vmem:[#allocation5 + $0x2e0] sm:$0xff]
        %v7971 = vld [vmem:[#allocation5 + $0x2e8] sm:$0xff]
        %v7972 = vld [vmem:[#allocation5 + $0x2f0] sm:$0xff]
        %v7973 = vld [vmem:[#allocation5 + $0x2f8] sm:$0xff]
        %v7974 = vld [vmem:[#allocation5 + $0x300] sm:$0xff]
        %v7975 = vld [vmem:[#allocation5 + $0x308] sm:$0xff]
        %v7976 = vld [vmem:[#allocation5 + $0x310] sm:$0xff]
        %v7977 = vld [vmem:[#allocation5 + $0x318] sm:$0xff]
        %v7978 = vld [vmem:[#allocation5 + $0x320] sm:$0xff]
        %v7979 = vld [vmem:[#allocation5 + $0x328] sm:$0xff]
        %v7980 = vld [vmem:[#allocation5 + $0x330] sm:$0xff]
        %v7981 = vld [vmem:[#allocation5 + $0x338] sm:$0xff]
        %v7982 = vld [vmem:[#allocation5 + $0x340] sm:$0xff]
        %v7983 = vld [vmem:[#allocation5 + $0x348] sm:$0xff]
        %v7984 = vld [vmem:[#allocation5 + $0x350] sm:$0xff]
        %v7985 = vld [vmem:[#allocation5 + $0x358] sm:$0xff]
        %v7986 = vld [vmem:[#allocation5 + $0x360] sm:$0xff]
        %v7987 = vld [vmem:[#allocation5 + $0x368] sm:$0xff]
        %v7988 = vld [vmem:[#allocation5 + $0x370] sm:$0xff]
        %v7989 = vld [vmem:[#allocation5 + $0x378] sm:$0xff]
        %v7990 = vld [vmem:[#allocation5 + $0x380] sm:$0xff]
        %v7991 = vld [vmem:[#allocation5 + $0x388] sm:$0xff]
        %v7992 = vld [vmem:[#allocation5 + $0x390] sm:$0xff]
        %v7993 = vld [vmem:[#allocation5 + $0x398] sm:$0xff]
        %v7994 = vld [vmem:[#allocation5 + $0x3a0] sm:$0xff]
        %v7995 = vld [vmem:[#allocation5 + $0x3a8] sm:$0xff]
        %v7996 = vld [vmem:[#allocation5 + $0x3b0] sm:$0xff]
        %v7997 = vld [vmem:[#allocation5 + $0x3b8] sm:$0xff]
        %v7998 = vld [vmem:[#allocation5 + $0x3c0] sm:$0xff]
        %v7999 = vld [vmem:[#allocation5 + $0x3c8] sm:$0xff]
        %v8000 = vld [vmem:[#allocation5 + $0x3d0] sm:$0xff]
        %v8001 = vld [vmem:[#allocation5 + $0x3d8] sm:$0xff]
        %v8002 = vld [vmem:[#allocation5 + $0x3e0] sm:$0xff]
        %v8003 = vld [vmem:[#allocation5 + $0x3e8] sm:$0xff]
        %v8004 = vld [vmem:[#allocation5 + $0x3f0] sm:$0xff]
        %v8005 = vld [vmem:[#allocation5 + $0x3f8] sm:$0xff]
        %v8006 = vld [vmem:[%s14] sm:$0xf]
        %v8135 = vunpack.c.l.b16 %v7878
        %v8136 = vunpack.c.h.b16 %v7878
        %v8137 = vunpack.c.l.b16 %v7879
        %v8138 = vunpack.c.h.b16 %v7879
        %v8139 = vunpack.c.l.b16 %v7880
        %v8140 = vunpack.c.h.b16 %v7880
        %v8141 = vunpack.c.l.b16 %v7881
        %v8142 = vunpack.c.h.b16 %v7881
        %v8143 = vunpack.c.l.b16 %v7882
        %v8144 = vunpack.c.h.b16 %v7882
        %v8145 = vunpack.c.l.b16 %v7883
        %v8146 = vunpack.c.h.b16 %v7883
        %v8147 = vunpack.c.l.b16 %v7884
        %v8148 = vunpack.c.h.b16 %v7884
        %v8149 = vunpack.c.l.b16 %v7885
        %v8150 = vunpack.c.h.b16 %v7885
        %v8151 = vunpack.c.l.b16 %v7886
        %v8152 = vunpack.c.h.b16 %v7886
        %v8153 = vunpack.c.l.b16 %v7887
        %v8154 = vunpack.c.h.b16 %v7887
        %v8155 = vunpack.c.l.b16 %v7888
        %v8156 = vunpack.c.h.b16 %v7888
        %v8157 = vunpack.c.l.b16 %v7889
        %v8158 = vunpack.c.h.b16 %v7889
        %v8159 = vunpack.c.l.b16 %v7890
        %v8160 = vunpack.c.h.b16 %v7890
        %v8161 = vunpack.c.l.b16 %v7891
        %v8162 = vunpack.c.h.b16 %v7891
        %v8163 = vunpack.c.l.b16 %v7892
        %v8164 = vunpack.c.h.b16 %v7892
        %v8165 = vunpack.c.l.b16 %v7893
        %v8166 = vunpack.c.h.b16 %v7893
        %v8167 = vunpack.c.l.b16 %v7894
        %v8168 = vunpack.c.h.b16 %v7894
        %v8169 = vunpack.c.l.b16 %v7895
        %v8170 = vunpack.c.h.b16 %v7895
        %v8171 = vunpack.c.l.b16 %v7896
        %v8172 = vunpack.c.h.b16 %v7896
        %v8173 = vunpack.c.l.b16 %v7897
        %v8174 = vunpack.c.h.b16 %v7897
        %v8175 = vunpack.c.l.b16 %v7898
        %v8176 = vunpack.c.h.b16 %v7898
        %v8177 = vunpack.c.l.b16 %v7899
        %v8178 = vunpack.c.h.b16 %v7899
        %v8179 = vunpack.c.l.b16 %v7900
        %v8180 = vunpack.c.h.b16 %v7900
        %v8181 = vunpack.c.l.b16 %v7901
        %v8182 = vunpack.c.h.b16 %v7901
        %v8183 = vunpack.c.l.b16 %v7902
        %v8184 = vunpack.c.h.b16 %v7902
        %v8185 = vunpack.c.l.b16 %v7903
        %v8186 = vunpack.c.h.b16 %v7903
        %v8187 = vunpack.c.l.b16 %v7904
        %v8188 = vunpack.c.h.b16 %v7904
        %v8189 = vunpack.c.l.b16 %v7905
        %v8190 = vunpack.c.h.b16 %v7905
        %v8191 = vunpack.c.l.b16 %v7906
        %v8192 = vunpack.c.h.b16 %v7906
        %v8193 = vunpack.c.l.b16 %v7907
        %v8194 = vunpack.c.h.b16 %v7907
        %v8195 = vunpack.c.l.b16 %v7908
        %v8196 = vunpack.c.h.b16 %v7908
        %v8197 = vunpack.c.l.b16 %v7909
        %v8198 = vunpack.c.h.b16 %v7909
        %v8199 = vunpack.c.l.b16 %v7910
        %v8200 = vunpack.c.h.b16 %v7910
        %v8201 = vunpack.c.l.b16 %v7911
        %v8202 = vunpack.c.h.b16 %v7911
        %v8203 = vunpack.c.l.b16 %v7912
        %v8204 = vunpack.c.h.b16 %v7912
        %v8205 = vunpack.c.l.b16 %v7913
        %v8206 = vunpack.c.h.b16 %v7913
        %v8207 = vunpack.c.l.b16 %v7914
        %v8208 = vunpack.c.h.b16 %v7914
        %v8209 = vunpack.c.l.b16 %v7915
        %v8210 = vunpack.c.h.b16 %v7915
        %v8211 = vunpack.c.l.b16 %v7916
        %v8212 = vunpack.c.h.b16 %v7916
        %v8213 = vunpack.c.l.b16 %v7917
        %v8214 = vunpack.c.h.b16 %v7917
        %v8215 = vunpack.c.l.b16 %v7918
        %v8216 = vunpack.c.h.b16 %v7918
        %v8217 = vunpack.c.l.b16 %v7919
        %v8218 = vunpack.c.h.b16 %v7919
        %v8219 = vunpack.c.l.b16 %v7920
        %v8220 = vunpack.c.h.b16 %v7920
        %v8221 = vunpack.c.l.b16 %v7921
        %v8222 = vunpack.c.h.b16 %v7921
        %v8223 = vunpack.c.l.b16 %v7922
        %v8224 = vunpack.c.h.b16 %v7922
        %v8225 = vunpack.c.l.b16 %v7923
        %v8226 = vunpack.c.h.b16 %v7923
        %v8227 = vunpack.c.l.b16 %v7924
        %v8228 = vunpack.c.h.b16 %v7924
        %v8229 = vunpack.c.l.b16 %v7925
        %v8230 = vunpack.c.h.b16 %v7925
        %v8231 = vunpack.c.l.b16 %v7926
        %v8232 = vunpack.c.h.b16 %v7926
        %v8233 = vunpack.c.l.b16 %v7927
        %v8234 = vunpack.c.h.b16 %v7927
        %v8235 = vunpack.c.l.b16 %v7928
        %v8236 = vunpack.c.h.b16 %v7928
        %v8237 = vunpack.c.l.b16 %v7929
        %v8238 = vunpack.c.h.b16 %v7929
        %v8239 = vunpack.c.l.b16 %v7930
        %v8240 = vunpack.c.h.b16 %v7930
        %v8241 = vunpack.c.l.b16 %v7931
        %v8242 = vunpack.c.h.b16 %v7931
        %v8243 = vunpack.c.l.b16 %v7932
        %v8244 = vunpack.c.h.b16 %v7932
        %v8245 = vunpack.c.l.b16 %v7933
        %v8246 = vunpack.c.h.b16 %v7933
        %v8247 = vunpack.c.l.b16 %v7934
        %v8248 = vunpack.c.h.b16 %v7934
        %v8249 = vunpack.c.l.b16 %v7935
        %v8250 = vunpack.c.h.b16 %v7935
        %v8251 = vunpack.c.l.b16 %v7936
        %v8252 = vunpack.c.h.b16 %v7936
        %v8253 = vunpack.c.l.b16 %v7937
        %v8254 = vunpack.c.h.b16 %v7937
        %v8255 = vunpack.c.l.b16 %v7938
        %v8256 = vunpack.c.h.b16 %v7938
        %v8257 = vunpack.c.l.b16 %v7939
        %v8258 = vunpack.c.h.b16 %v7939
        %v8259 = vunpack.c.l.b16 %v7940
        %v8260 = vunpack.c.h.b16 %v7940
        %v8261 = vunpack.c.l.b16 %v7941
        %v8262 = vunpack.c.h.b16 %v7941
        %v8263 = vunpack.c.l.b16 %v7942
        %v8264 = vunpack.c.h.b16 %v7942
        %v8265 = vunpack.c.l.b16 %v7943
        %v8266 = vunpack.c.h.b16 %v7943
        %v8267 = vunpack.c.l.b16 %v7944
        %v8268 = vunpack.c.h.b16 %v7944
        %v8269 = vunpack.c.l.b16 %v7945
        %v8270 = vunpack.c.h.b16 %v7945
        %v8271 = vunpack.c.l.b16 %v7946
        %v8272 = vunpack.c.h.b16 %v7946
        %v8273 = vunpack.c.l.b16 %v7947
        %v8274 = vunpack.c.h.b16 %v7947
        %v8275 = vunpack.c.l.b16 %v7948
        %v8276 = vunpack.c.h.b16 %v7948
        %v8277 = vunpack.c.l.b16 %v7949
        %v8278 = vunpack.c.h.b16 %v7949
        %v8279 = vunpack.c.l.b16 %v7950
        %v8280 = vunpack.c.h.b16 %v7950
        %v8281 = vunpack.c.l.b16 %v7951
        %v8282 = vunpack.c.h.b16 %v7951
        %v8283 = vunpack.c.l.b16 %v7952
        %v8284 = vunpack.c.h.b16 %v7952
        %v8285 = vunpack.c.l.b16 %v7953
        %v8286 = vunpack.c.h.b16 %v7953
        %v8287 = vunpack.c.l.b16 %v7954
        %v8288 = vunpack.c.h.b16 %v7954
        %v8289 = vunpack.c.l.b16 %v7955
        %v8290 = vunpack.c.h.b16 %v7955
        %v8291 = vunpack.c.l.b16 %v7956
        %v8292 = vunpack.c.h.b16 %v7956
        %v8293 = vunpack.c.l.b16 %v7957
        %v8294 = vunpack.c.h.b16 %v7957
        %v8295 = vunpack.c.l.b16 %v7958
        %v8296 = vunpack.c.h.b16 %v7958
        %v8297 = vunpack.c.l.b16 %v7959
        %v8298 = vunpack.c.h.b16 %v7959
        %v8299 = vunpack.c.l.b16 %v7960
        %v8300 = vunpack.c.h.b16 %v7960
        %v8301 = vunpack.c.l.b16 %v7961
        %v8302 = vunpack.c.h.b16 %v7961
        %v8303 = vunpack.c.l.b16 %v7962
        %v8304 = vunpack.c.h.b16 %v7962
        %v8305 = vunpack.c.l.b16 %v7963
        %v8306 = vunpack.c.h.b16 %v7963
        %v8307 = vunpack.c.l.b16 %v7964
        %v8308 = vunpack.c.h.b16 %v7964
        %v8309 = vunpack.c.l.b16 %v7965
        %v8310 = vunpack.c.h.b16 %v7965
        %v8311 = vunpack.c.l.b16 %v7966
        %v8312 = vunpack.c.h.b16 %v7966
        %v8313 = vunpack.c.l.b16 %v7967
        %v8314 = vunpack.c.h.b16 %v7967
        %v8315 = vunpack.c.l.b16 %v7968
        %v8316 = vunpack.c.h.b16 %v7968
        %v8317 = vunpack.c.l.b16 %v7969
        %v8318 = vunpack.c.h.b16 %v7969
        %v8319 = vunpack.c.l.b16 %v7970
        %v8320 = vunpack.c.h.b16 %v7970
        %v8321 = vunpack.c.l.b16 %v7971
        %v8322 = vunpack.c.h.b16 %v7971
        %v8323 = vunpack.c.l.b16 %v7972
        %v8324 = vunpack.c.h.b16 %v7972
        %v8325 = vunpack.c.l.b16 %v7973
        %v8326 = vunpack.c.h.b16 %v7973
        %v8327 = vunpack.c.l.b16 %v7974
        %v8328 = vunpack.c.h.b16 %v7974
        %v8329 = vunpack.c.l.b16 %v7975
        %v8330 = vunpack.c.h.b16 %v7975
        %v8331 = vunpack.c.l.b16 %v7976
        %v8332 = vunpack.c.h.b16 %v7976
        %v8333 = vunpack.c.l.b16 %v7977
        %v8334 = vunpack.c.h.b16 %v7977
        %v8335 = vunpack.c.l.b16 %v7978
        %v8336 = vunpack.c.h.b16 %v7978
        %v8337 = vunpack.c.l.b16 %v7979
        %v8338 = vunpack.c.h.b16 %v7979
        %v8339 = vunpack.c.l.b16 %v7980
        %v8340 = vunpack.c.h.b16 %v7980
        %v8341 = vunpack.c.l.b16 %v7981
        %v8342 = vunpack.c.h.b16 %v7981
        %v8343 = vunpack.c.l.b16 %v7982
        %v8344 = vunpack.c.h.b16 %v7982
        %v8345 = vunpack.c.l.b16 %v7983
        %v8346 = vunpack.c.h.b16 %v7983
        %v8347 = vunpack.c.l.b16 %v7984
        %v8348 = vunpack.c.h.b16 %v7984
        %v8349 = vunpack.c.l.b16 %v7985
        %v8350 = vunpack.c.h.b16 %v7985
        %v8351 = vunpack.c.l.b16 %v7986
        %v8352 = vunpack.c.h.b16 %v7986
        %v8353 = vunpack.c.l.b16 %v7987
        %v8354 = vunpack.c.h.b16 %v7987
        %v8355 = vunpack.c.l.b16 %v7988
        %v8356 = vunpack.c.h.b16 %v7988
        %v8357 = vunpack.c.l.b16 %v7989
        %v8358 = vunpack.c.h.b16 %v7989
        %v8359 = vunpack.c.l.b16 %v7990
        %v8360 = vunpack.c.h.b16 %v7990
        %v8361 = vunpack.c.l.b16 %v7991
        %v8362 = vunpack.c.h.b16 %v7991
        %v8363 = vunpack.c.l.b16 %v7992
        %v8364 = vunpack.c.h.b16 %v7992
        %v8365 = vunpack.c.l.b16 %v7993
        %v8366 = vunpack.c.h.b16 %v7993
        %v8367 = vunpack.c.l.b16 %v7994
        %v8368 = vunpack.c.h.b16 %v7994
        %v8369 = vunpack.c.l.b16 %v7995
        %v8370 = vunpack.c.h.b16 %v7995
        %v8371 = vunpack.c.l.b16 %v7996
        %v8372 = vunpack.c.h.b16 %v7996
        %v8373 = vunpack.c.l.b16 %v7997
        %v8374 = vunpack.c.h.b16 %v7997
        %v8375 = vunpack.c.l.b16 %v7998
        %v8376 = vunpack.c.h.b16 %v7998
        %v8377 = vunpack.c.l.b16 %v7999
        %v8378 = vunpack.c.h.b16 %v7999
        %v8379 = vunpack.c.l.b16 %v8000
        %v8380 = vunpack.c.h.b16 %v8000
        %v8381 = vunpack.c.l.b16 %v8001
        %v8382 = vunpack.c.h.b16 %v8001
        %v8383 = vunpack.c.l.b16 %v8002
        %v8384 = vunpack.c.h.b16 %v8002
        %v8385 = vunpack.c.l.b16 %v8003
        %v8386 = vunpack.c.h.b16 %v8003
        %v8387 = vunpack.c.l.b16 %v8004
        %v8388 = vunpack.c.h.b16 %v8004
        %v8389 = vunpack.c.l.b16 %v8005
        %v8390 = vunpack.c.h.b16 %v8005
        %v8391 = vpack.c.b16 %v8139, %v8135
        %v8392 = vpack.c.b16 %v8140, %v8136
        %v8393 = vpack.c.b16 %v8141, %v8137
        %v8394 = vpack.c.b16 %v8142, %v8138
        %v8395 = vpack.c.b16 %v8147, %v8143
        %v8396 = vpack.c.b16 %v8148, %v8144
        %v8397 = vpack.c.b16 %v8149, %v8145
        %v8398 = vpack.c.b16 %v8150, %v8146
        %v8399 = vpack.c.b16 %v8155, %v8151
        %v8400 = vpack.c.b16 %v8156, %v8152
        %v8401 = vpack.c.b16 %v8157, %v8153
        %v8402 = vpack.c.b16 %v8158, %v8154
        %v8403 = vpack.c.b16 %v8163, %v8159
        %v8404 = vpack.c.b16 %v8164, %v8160
        %v8405 = vpack.c.b16 %v8165, %v8161
        %v8406 = vpack.c.b16 %v8166, %v8162
        %v8407 = vpack.c.b16 %v8171, %v8167
        %v8408 = vpack.c.b16 %v8172, %v8168
        %v8409 = vpack.c.b16 %v8173, %v8169
        %v8410 = vpack.c.b16 %v8174, %v8170
        %v8411 = vpack.c.b16 %v8179, %v8175
        %v8412 = vpack.c.b16 %v8180, %v8176
        %v8413 = vpack.c.b16 %v8181, %v8177
        %v8414 = vpack.c.b16 %v8182, %v8178
        %v8415 = vpack.c.b16 %v8187, %v8183
        %v8416 = vpack.c.b16 %v8188, %v8184
        %v8417 = vpack.c.b16 %v8189, %v8185
        %v8418 = vpack.c.b16 %v8190, %v8186
        %v8419 = vpack.c.b16 %v8195, %v8191
        %v8420 = vpack.c.b16 %v8196, %v8192
        %v8421 = vpack.c.b16 %v8197, %v8193
        %v8422 = vpack.c.b16 %v8198, %v8194
        %v8423 = vpack.c.b16 %v8203, %v8199
        %v8424 = vpack.c.b16 %v8204, %v8200
        %v8425 = vpack.c.b16 %v8205, %v8201
        %v8426 = vpack.c.b16 %v8206, %v8202
        %v8427 = vpack.c.b16 %v8211, %v8207
        %v8428 = vpack.c.b16 %v8212, %v8208
        %v8429 = vpack.c.b16 %v8213, %v8209
        %v8430 = vpack.c.b16 %v8214, %v8210
        %v8431 = vpack.c.b16 %v8219, %v8215
        %v8432 = vpack.c.b16 %v8220, %v8216
        %v8433 = vpack.c.b16 %v8221, %v8217
        %v8434 = vpack.c.b16 %v8222, %v8218
        %v8435 = vpack.c.b16 %v8227, %v8223
        %v8436 = vpack.c.b16 %v8228, %v8224
        %v8437 = vpack.c.b16 %v8229, %v8225
        %v8438 = vpack.c.b16 %v8230, %v8226
        %v8439 = vpack.c.b16 %v8235, %v8231
        %v8440 = vpack.c.b16 %v8236, %v8232
        %v8441 = vpack.c.b16 %v8237, %v8233
        %v8442 = vpack.c.b16 %v8238, %v8234
        %v8443 = vpack.c.b16 %v8243, %v8239
        %v8444 = vpack.c.b16 %v8244, %v8240
        %v8445 = vpack.c.b16 %v8245, %v8241
        %v8446 = vpack.c.b16 %v8246, %v8242
        %v8447 = vpack.c.b16 %v8251, %v8247
        %v8448 = vpack.c.b16 %v8252, %v8248
        %v8449 = vpack.c.b16 %v8253, %v8249
        %v8450 = vpack.c.b16 %v8254, %v8250
        %v8451 = vpack.c.b16 %v8259, %v8255
        %v8452 = vpack.c.b16 %v8260, %v8256
        %v8453 = vpack.c.b16 %v8261, %v8257
        %v8454 = vpack.c.b16 %v8262, %v8258
        %v8455 = vpack.c.b16 %v8267, %v8263
        %v8456 = vpack.c.b16 %v8268, %v8264
        %v8457 = vpack.c.b16 %v8269, %v8265
        %v8458 = vpack.c.b16 %v8270, %v8266
        %v8459 = vpack.c.b16 %v8275, %v8271
        %v8460 = vpack.c.b16 %v8276, %v8272
        %v8461 = vpack.c.b16 %v8277, %v8273
        %v8462 = vpack.c.b16 %v8278, %v8274
        %v8463 = vpack.c.b16 %v8283, %v8279
        %v8464 = vpack.c.b16 %v8284, %v8280
        %v8465 = vpack.c.b16 %v8285, %v8281
        %v8466 = vpack.c.b16 %v8286, %v8282
        %v8467 = vpack.c.b16 %v8291, %v8287
        %v8468 = vpack.c.b16 %v8292, %v8288
        %v8469 = vpack.c.b16 %v8293, %v8289
        %v8470 = vpack.c.b16 %v8294, %v8290
        %v8471 = vpack.c.b16 %v8299, %v8295
        %v8472 = vpack.c.b16 %v8300, %v8296
        %v8473 = vpack.c.b16 %v8301, %v8297
        %v8474 = vpack.c.b16 %v8302, %v8298
        %v8475 = vpack.c.b16 %v8307, %v8303
        %v8476 = vpack.c.b16 %v8308, %v8304
        %v8477 = vpack.c.b16 %v8309, %v8305
        %v8478 = vpack.c.b16 %v8310, %v8306
        %v8479 = vpack.c.b16 %v8315, %v8311
        %v8480 = vpack.c.b16 %v8316, %v8312
        %v8481 = vpack.c.b16 %v8317, %v8313
        %v8482 = vpack.c.b16 %v8318, %v8314
        %v8483 = vpack.c.b16 %v8323, %v8319
        %v8484 = vpack.c.b16 %v8324, %v8320
        %v8485 = vpack.c.b16 %v8325, %v8321
        %v8486 = vpack.c.b16 %v8326, %v8322
        %v8487 = vpack.c.b16 %v8331, %v8327
        %v8488 = vpack.c.b16 %v8332, %v8328
        %v8489 = vpack.c.b16 %v8333, %v8329
        %v8490 = vpack.c.b16 %v8334, %v8330
        %v8491 = vpack.c.b16 %v8339, %v8335
        %v8492 = vpack.c.b16 %v8340, %v8336
        %v8493 = vpack.c.b16 %v8341, %v8337
        %v8494 = vpack.c.b16 %v8342, %v8338
        %v8495 = vpack.c.b16 %v8347, %v8343
        %v8496 = vpack.c.b16 %v8348, %v8344
        %v8497 = vpack.c.b16 %v8349, %v8345
        %v8498 = vpack.c.b16 %v8350, %v8346
        %v8499 = vpack.c.b16 %v8355, %v8351
        %v8500 = vpack.c.b16 %v8356, %v8352
        %v8501 = vpack.c.b16 %v8357, %v8353
        %v8502 = vpack.c.b16 %v8358, %v8354
        %v8503 = vpack.c.b16 %v8363, %v8359
        %v8504 = vpack.c.b16 %v8364, %v8360
        %v8505 = vpack.c.b16 %v8365, %v8361
        %v8506 = vpack.c.b16 %v8366, %v8362
        %v8507 = vpack.c.b16 %v8371, %v8367
        %v8508 = vpack.c.b16 %v8372, %v8368
        %v8509 = vpack.c.b16 %v8373, %v8369
        %v8510 = vpack.c.b16 %v8374, %v8370
        %v8511 = vpack.c.b16 %v8379, %v8375
        %v8512 = vpack.c.b16 %v8380, %v8376
        %v8513 = vpack.c.b16 %v8381, %v8377
        %v8514 = vpack.c.b16 %v8382, %v8378
        %v8515 = vpack.c.b16 %v8387, %v8383
        %v8516 = vpack.c.b16 %v8388, %v8384
        %v8517 = vpack.c.b16 %v8389, %v8385
        %v8518 = vpack.c.b16 %v8390, %v8386
        %v8648 = vlaneseq
        %v8649 = vshrl.u32 %v8648, 7
        %v8650 = vsub.s32 0, %v8649
        %v8651 = vrot.slane %v8006, %v8650
        %v8652 = vlaneseq
        %v8653 = vshrl.u32 %v8652, 7
        %v8654 = vsub.s32 1, %v8653
        %v8655 = vrot.slane %v8006, %v8654
        %v8656 = vlaneseq
        %v8657 = vshrl.u32 %v8656, 7
        %v8658 = vsub.s32 2, %v8657
        %v8659 = vrot.slane %v8006, %v8658
        %v8660 = vlaneseq
        %v8661 = vshrl.u32 %v8660, 7
        %v8662 = vsub.s32 3, %v8661
        %v8663 = vrot.slane %v8006, %v8662
        %8668 = vmatprep.subr.bf16.mxu0 %v8392
        %8669 = vmatpush1.bf16.msra.mxu0 %v8391
        %8670 = vmatprep.subr.bf16.mxu0 %v8396
        %8671 = vmatpush1.bf16.msra.mxu0 %v8395
        %8672 = vmatprep.subr.bf16.mxu0 %v8400
        %8673 = vmatpush1.bf16.msra.mxu0 %v8399
        %8674 = vmatprep.subr.bf16.mxu0 %v8404
        %8675 = vmatpush1.bf16.msra.mxu0 %v8403
        %8676 = vmatprep.subr.bf16.mxu0 %v8408
        %8677 = vmatpush1.bf16.msra.mxu0 %v8407
        %8678 = vmatprep.subr.bf16.mxu0 %v8412
        %8679 = vmatpush1.bf16.msra.mxu0 %v8411
        %8680 = vmatprep.subr.bf16.mxu0 %v8416
        %8681 = vmatpush1.bf16.msra.mxu0 %v8415
        %8682 = vmatprep.subr.bf16.mxu0 %v8420
        %8683 = vmatpush1.bf16.msra.mxu0 %v8419
        %8684 = vmatprep.subr.bf16.mxu0 %v8424
        %8685 = vmatpush1.bf16.msra.mxu0 %v8423
        %8686 = vmatprep.subr.bf16.mxu0 %v8428
        %8687 = vmatpush1.bf16.msra.mxu0 %v8427
        %8688 = vmatprep.subr.bf16.mxu0 %v8432
        %8689 = vmatpush1.bf16.msra.mxu0 %v8431
        %8690 = vmatprep.subr.bf16.mxu0 %v8436
        %8691 = vmatpush1.bf16.msra.mxu0 %v8435
        %8692 = vmatprep.subr.bf16.mxu0 %v8440
        %8693 = vmatpush1.bf16.msra.mxu0 %v8439
        %8694 = vmatprep.subr.bf16.mxu0 %v8444
        %8695 = vmatpush1.bf16.msra.mxu0 %v8443
        %8696 = vmatprep.subr.bf16.mxu0 %v8448
        %8697 = vmatpush1.bf16.msra.mxu0 %v8447
        %8698 = vmatprep.subr.bf16.mxu0 %v8452
        %8699 = vmatpush1.bf16.msra.mxu0 %v8451
        %8700 = vmatprep.mubr.bf16.mxu0 %v6913
        %8701 = vmatmul.mubr.bf16.gmra.mrb[0].mxu0 %v6912
        %v8702 = vpop.f32.mrb[0].mxu0
        %v8703 = vadd.f32 %v8651, %v8702
        %v8704 = vpop.f32.mrb[0].mxu0
        %v8705 = vadd.f32 %v8655, %v8704
        %v8706 = vpop.f32.mrb[0].mxu0
        %v8707 = vpop.f32.mrb[0].mxu0
        %8708 = vdwg.mxu0
        %8709 = vmatprep.subr.bf16.mxu0 %v8456
        %8710 = vmatpush1.bf16.msra.mxu0 %v8455
        %8711 = vmatprep.subr.bf16.mxu0 %v8460
        %8712 = vmatpush1.bf16.msra.mxu0 %v8459
        %8713 = vmatprep.subr.bf16.mxu0 %v8464
        %8714 = vmatpush1.bf16.msra.mxu0 %v8463
        %8715 = vmatprep.subr.bf16.mxu0 %v8468
        %8716 = vmatpush1.bf16.msra.mxu0 %v8467
        %8717 = vmatprep.subr.bf16.mxu0 %v8472
        %8718 = vmatpush1.bf16.msra.mxu0 %v8471
        %8719 = vmatprep.subr.bf16.mxu0 %v8476
        %8720 = vmatpush1.bf16.msra.mxu0 %v8475
        %8721 = vmatprep.subr.bf16.mxu0 %v8480
        %8722 = vmatpush1.bf16.msra.mxu0 %v8479
        %8723 = vmatprep.subr.bf16.mxu0 %v8484
        %8724 = vmatpush1.bf16.msra.mxu0 %v8483
        %8725 = vmatprep.subr.bf16.mxu0 %v8488
        %8726 = vmatpush1.bf16.msra.mxu0 %v8487
        %8727 = vmatprep.subr.bf16.mxu0 %v8492
        %8728 = vmatpush1.bf16.msra.mxu0 %v8491
        %8729 = vmatprep.subr.bf16.mxu0 %v8496
        %8730 = vmatpush1.bf16.msra.mxu0 %v8495
        %8731 = vmatprep.subr.bf16.mxu0 %v8500
        %8732 = vmatpush1.bf16.msra.mxu0 %v8499
        %8733 = vmatprep.subr.bf16.mxu0 %v8504
        %8734 = vmatpush1.bf16.msra.mxu0 %v8503
        %8735 = vmatprep.subr.bf16.mxu0 %v8508
        %8736 = vmatpush1.bf16.msra.mxu0 %v8507
        %8737 = vmatprep.subr.bf16.mxu0 %v8512
        %8738 = vmatpush1.bf16.msra.mxu0 %v8511
        %8739 = vmatprep.subr.bf16.mxu0 %v8516
        %8740 = vmatpush1.bf16.msra.mxu0 %v8515
        %8741 = vmatprep.mubr.bf16.mxu0 %v6915
        %8742 = vmatmul.mubr.bf16.gmra.mrb[0].mxu0 %v6914
        %v8743 = vpop.f32.mrb[0].mxu0
        %v8744 = vadd.f32 %v8703, %v8743
        %v8745 = vpop.f32.mrb[0].mxu0
        %v8746 = vadd.f32 %v8705, %v8745
        %v8747 = vpop.f32.mrb[0].mxu0
        %v8748 = vpop.f32.mrb[0].mxu0
        %8749 = vdwg.mxu0
        %8750 = vmatprep.subr.bf16.mxu0 %v8394
        %8751 = vmatpush1.bf16.msra.mxu0 %v8393
        %8752 = vmatprep.subr.bf16.mxu0 %v8398
        %8753 = vmatpush1.bf16.msra.mxu0 %v8397
        %8754 = vmatprep.subr.bf16.mxu0 %v8402
        %8755 = vmatpush1.bf16.msra.mxu0 %v8401
        %8756 = vmatprep.subr.bf16.mxu0 %v8406
        %8757 = vmatpush1.bf16.msra.mxu0 %v8405
        %8758 = vmatprep.subr.bf16.mxu0 %v8410
        %8759 = vmatpush1.bf16.msra.mxu0 %v8409
        %8760 = vmatprep.subr.bf16.mxu0 %v8414
        %8761 = vmatpush1.bf16.msra.mxu0 %v8413
        %8762 = vmatprep.subr.bf16.mxu0 %v8418
        %8763 = vmatpush1.bf16.msra.mxu0 %v8417
        %8764 = vmatprep.subr.bf16.mxu0 %v8422
        %8765 = vmatpush1.bf16.msra.mxu0 %v8421
        %8766 = vmatprep.subr.bf16.mxu0 %v8426
        %8767 = vmatpush1.bf16.msra.mxu0 %v8425
        %8768 = vmatprep.subr.bf16.mxu0 %v8430
        %8769 = vmatpush1.bf16.msra.mxu0 %v8429
        %8770 = vmatprep.subr.bf16.mxu0 %v8434
        %8771 = vmatpush1.bf16.msra.mxu0 %v8433
        %8772 = vmatprep.subr.bf16.mxu0 %v8438
        %8773 = vmatpush1.bf16.msra.mxu0 %v8437
        %8774 = vmatprep.subr.bf16.mxu0 %v8442
        %8775 = vmatpush1.bf16.msra.mxu0 %v8441
        %8776 = vmatprep.subr.bf16.mxu0 %v8446
        %8777 = vmatpush1.bf16.msra.mxu0 %v8445
        %8778 = vmatprep.subr.bf16.mxu0 %v8450
        %8779 = vmatpush1.bf16.msra.mxu0 %v8449
        %8780 = vmatprep.subr.bf16.mxu0 %v8454
        %8781 = vmatpush1.bf16.msra.mxu0 %v8453
        %8782 = vmatprep.mubr.bf16.mxu0 %v6913
        %8783 = vmatmul.mubr.bf16.gmra.mrb[0].mxu0 %v6912
        %v8784 = vpop.f32.mrb[0].mxu0
        %v8785 = vadd.f32 %v8659, %v8784
        %v8786 = vpop.f32.mrb[0].mxu0
        %v8787 = vadd.f32 %v8663, %v8786
        %v8788 = vpop.f32.mrb[0].mxu0
        %v8789 = vpop.f32.mrb[0].mxu0
        %8790 = vdwg.mxu0
        %8791 = vmatprep.subr.bf16.mxu0 %v8458
        %8792 = vmatpush1.bf16.msra.mxu0 %v8457
        %8793 = vmatprep.subr.bf16.mxu0 %v8462
        %8794 = vmatpush1.bf16.msra.mxu0 %v8461
        %8795 = vmatprep.subr.bf16.mxu0 %v8466
        %8796 = vmatpush1.bf16.msra.mxu0 %v8465
        %8797 = vmatprep.subr.bf16.mxu0 %v8470
        %8798 = vmatpush1.bf16.msra.mxu0 %v8469
        %8799 = vmatprep.subr.bf16.mxu0 %v8474
        %8800 = vmatpush1.bf16.msra.mxu0 %v8473
        %8801 = vmatprep.subr.bf16.mxu0 %v8478
        %8802 = vmatpush1.bf16.msra.mxu0 %v8477
        %8803 = vmatprep.subr.bf16.mxu0 %v8482
        %8804 = vmatpush1.bf16.msra.mxu0 %v8481
        %8805 = vmatprep.subr.bf16.mxu0 %v8486
        %8806 = vmatpush1.bf16.msra.mxu0 %v8485
        %8807 = vmatprep.subr.bf16.mxu0 %v8490
        %8808 = vmatpush1.bf16.msra.mxu0 %v8489
        %8809 = vmatprep.subr.bf16.mxu0 %v8494
        %8810 = vmatpush1.bf16.msra.mxu0 %v8493
        %8811 = vmatprep.subr.bf16.mxu0 %v8498
        %8812 = vmatpush1.bf16.msra.mxu0 %v8497
        %8813 = vmatprep.subr.bf16.mxu0 %v8502
        %8814 = vmatpush1.bf16.msra.mxu0 %v8501
        %8815 = vmatprep.subr.bf16.mxu0 %v8506
        %8816 = vmatpush1.bf16.msra.mxu0 %v8505
        %8817 = vmatprep.subr.bf16.mxu0 %v8510
        %8818 = vmatpush1.bf16.msra.mxu0 %v8509
        %8819 = vmatprep.subr.bf16.mxu0 %v8514
        %8820 = vmatpush1.bf16.msra.mxu0 %v8513
        %8821 = vmatprep.subr.bf16.mxu0 %v8518
        %8822 = vmatpush1.bf16.msra.mxu0 %v8517
        %8823 = vmatprep.mubr.bf16.mxu0 %v6915
        %8824 = vmatmul.mubr.bf16.gmra.mrb[0].mxu0 %v6914
        %v8825 = vpop.f32.mrb[0].mxu0
        %v8826 = vadd.f32 %v8785, %v8825
        %v8827 = vpop.f32.mrb[0].mxu0
        %v8828 = vadd.f32 %v8787, %v8827
        %v8829 = vpop.f32.mrb[0].mxu0
        %v8830 = vpop.f32.mrb[0].mxu0
        %8831 = vdwg.mxu0
        %v8832 = vmax.f32 %v8744, 0.0
        %v8833 = vmax.f32 %v8746, 0.0
        %v8834 = vmax.f32 %v8826, 0.0
        %v8835 = vmax.f32 %v8828, 0.0
        %v8836 = vpack.c.bf16 %v8832, %v8832
        %v8837 = vpack.c.bf16 %v8833, %v8833
        %v8838 = vpack.c.bf16 %v8834, %v8834
        %v8839 = vpack.c.bf16 %v8835, %v8835
        %v8840 = vld [vmem:[%s15] sm:$0xf]
        %v8841 = vld [vmem:[%s15 + $0x4] sm:$0xf]
        %v8842 = vld [vmem:[%s15 + $0x8] sm:$0xf]
        %v8843 = vld [vmem:[%s15 + $0xc] sm:$0xf]
        %v8844 = vld [vmem:[%s15 + $0x10] sm:$0xf]
        %v8845 = vld [vmem:[%s15 + $0x14] sm:$0xf]
        %v8846 = vld [vmem:[%s15 + $0x18] sm:$0xf]
        %v8847 = vld [vmem:[%s15 + $0x1c] sm:$0xf]
        %v8848 = vld [vmem:[%s15 + $0x20] sm:$0xf]
        %v8849 = vld [vmem:[%s15 + $0x24] sm:$0xf]
        %v8850 = vld [vmem:[%s15 + $0x28] sm:$0xf]
        %v8851 = vld [vmem:[%s15 + $0x2c] sm:$0xf]
        %v8852 = vld [vmem:[%s15 + $0x30] sm:$0xf]
        %v8853 = vld [vmem:[%s15 + $0x34] sm:$0xf]
        %v8854 = vld [vmem:[%s15 + $0x38] sm:$0xf]
        %v8855 = vld [vmem:[%s15 + $0x3c] sm:$0xf]
        %v8856 = vld [vmem:[%s15 + $0x40] sm:$0xf]
        %v8857 = vld [vmem:[%s15 + $0x44] sm:$0xf]
        %v8858 = vld [vmem:[%s15 + $0x48] sm:$0xf]
        %v8859 = vld [vmem:[%s15 + $0x4c] sm:$0xf]
        %v8860 = vld [vmem:[%s15 + $0x50] sm:$0xf]
        %v8861 = vld [vmem:[%s15 + $0x54] sm:$0xf]
        %v8862 = vld [vmem:[%s15 + $0x58] sm:$0xf]
        %v8863 = vld [vmem:[%s15 + $0x5c] sm:$0xf]
        %v8864 = vld [vmem:[%s15 + $0x60] sm:$0xf]
        %v8865 = vld [vmem:[%s15 + $0x64] sm:$0xf]
        %v8866 = vld [vmem:[%s15 + $0x68] sm:$0xf]
        %v8867 = vld [vmem:[%s15 + $0x6c] sm:$0xf]
        %v8868 = vld [vmem:[%s15 + $0x70] sm:$0xf]
        %v8869 = vld [vmem:[%s15 + $0x74] sm:$0xf]
        %v8870 = vld [vmem:[%s15 + $0x78] sm:$0xf]
        %v8871 = vld [vmem:[%s15 + $0x7c] sm:$0xf]
        %v8872 = vld [vmem:[%s15 + $0x80] sm:$0xf]
        %v8873 = vld [vmem:[%s15 + $0x84] sm:$0xf]
        %v8874 = vld [vmem:[%s15 + $0x88] sm:$0xf]
        %v8875 = vld [vmem:[%s15 + $0x8c] sm:$0xf]
        %v8876 = vld [vmem:[%s15 + $0x90] sm:$0xf]
        %v8877 = vld [vmem:[%s15 + $0x94] sm:$0xf]
        %v8878 = vld [vmem:[%s15 + $0x98] sm:$0xf]
        %v8879 = vld [vmem:[%s15 + $0x9c] sm:$0xf]
        %v8880 = vld [vmem:[%s15 + $0xa0] sm:$0xf]
        %v8881 = vld [vmem:[%s15 + $0xa4] sm:$0xf]
        %v8882 = vld [vmem:[%s15 + $0xa8] sm:$0xf]
        %v8883 = vld [vmem:[%s15 + $0xac] sm:$0xf]
        %v8884 = vld [vmem:[%s15 + $0xb0] sm:$0xf]
        %v8885 = vld [vmem:[%s15 + $0xb4] sm:$0xf]
        %v8886 = vld [vmem:[%s15 + $0xb8] sm:$0xf]
        %v8887 = vld [vmem:[%s15 + $0xbc] sm:$0xf]
        %v8888 = vld [vmem:[%s15 + $0xc0] sm:$0xf]
        %v8889 = vld [vmem:[%s15 + $0xc4] sm:$0xf]
        %v8890 = vld [vmem:[%s15 + $0xc8] sm:$0xf]
        %v8891 = vld [vmem:[%s15 + $0xcc] sm:$0xf]
        %v8892 = vld [vmem:[%s15 + $0xd0] sm:$0xf]
        %v8893 = vld [vmem:[%s15 + $0xd4] sm:$0xf]
        %v8894 = vld [vmem:[%s15 + $0xd8] sm:$0xf]
        %v8895 = vld [vmem:[%s15 + $0xdc] sm:$0xf]
        %v8896 = vld [vmem:[%s15 + $0xe0] sm:$0xf]
        %v8897 = vld [vmem:[%s15 + $0xe4] sm:$0xf]
        %v8898 = vld [vmem:[%s15 + $0xe8] sm:$0xf]
        %v8899 = vld [vmem:[%s15 + $0xec] sm:$0xf]
        %v8900 = vld [vmem:[%s15 + $0xf0] sm:$0xf]
        %v8901 = vld [vmem:[%s15 + $0xf4] sm:$0xf]
        %v8902 = vld [vmem:[%s15 + $0xf8] sm:$0xf]
        %v8903 = vld [vmem:[%s15 + $0xfc] sm:$0xf]
        %v8904 = vld [vmem:[#allocation2] sm:$0x1]
        %v8969 = vunpack.c.l.b16 %v8840
        %v8970 = vunpack.c.l.b16 %v8841
        %v8971 = vunpack.c.l.b16 %v8842
        %v8972 = vunpack.c.l.b16 %v8843
        %v8973 = vunpack.c.l.b16 %v8844
        %v8974 = vunpack.c.l.b16 %v8845
        %v8975 = vunpack.c.l.b16 %v8846
        %v8976 = vunpack.c.l.b16 %v8847
        %v8977 = vunpack.c.l.b16 %v8848
        %v8978 = vunpack.c.l.b16 %v8849
        %v8979 = vunpack.c.l.b16 %v8850
        %v8980 = vunpack.c.l.b16 %v8851
        %v8981 = vunpack.c.l.b16 %v8852
        %v8982 = vunpack.c.l.b16 %v8853
        %v8983 = vunpack.c.l.b16 %v8854
        %v8984 = vunpack.c.l.b16 %v8855
        %v8985 = vunpack.c.l.b16 %v8856
        %v8986 = vunpack.c.l.b16 %v8857
        %v8987 = vunpack.c.l.b16 %v8858
        %v8988 = vunpack.c.l.b16 %v8859
        %v8989 = vunpack.c.l.b16 %v8860
        %v8990 = vunpack.c.l.b16 %v8861
        %v8991 = vunpack.c.l.b16 %v8862
        %v8992 = vunpack.c.l.b16 %v8863
        %v8993 = vunpack.c.l.b16 %v8864
        %v8994 = vunpack.c.l.b16 %v8865
        %v8995 = vunpack.c.l.b16 %v8866
        %v8996 = vunpack.c.l.b16 %v8867
        %v8997 = vunpack.c.l.b16 %v8868
        %v8998 = vunpack.c.l.b16 %v8869
        %v8999 = vunpack.c.l.b16 %v8870
        %v9000 = vunpack.c.l.b16 %v8871
        %v9001 = vunpack.c.l.b16 %v8872
        %v9002 = vunpack.c.l.b16 %v8873
        %v9003 = vunpack.c.l.b16 %v8874
        %v9004 = vunpack.c.l.b16 %v8875
        %v9005 = vunpack.c.l.b16 %v8876
        %v9006 = vunpack.c.l.b16 %v8877
        %v9007 = vunpack.c.l.b16 %v8878
        %v9008 = vunpack.c.l.b16 %v8879
        %v9009 = vunpack.c.l.b16 %v8880
        %v9010 = vunpack.c.l.b16 %v8881
        %v9011 = vunpack.c.l.b16 %v8882
        %v9012 = vunpack.c.l.b16 %v8883
        %v9013 = vunpack.c.l.b16 %v8884
        %v9014 = vunpack.c.l.b16 %v8885
        %v9015 = vunpack.c.l.b16 %v8886
        %v9016 = vunpack.c.l.b16 %v8887
        %v9017 = vunpack.c.l.b16 %v8888
        %v9018 = vunpack.c.l.b16 %v8889
        %v9019 = vunpack.c.l.b16 %v8890
        %v9020 = vunpack.c.l.b16 %v8891
        %v9021 = vunpack.c.l.b16 %v8892
        %v9022 = vunpack.c.l.b16 %v8893
        %v9023 = vunpack.c.l.b16 %v8894
        %v9024 = vunpack.c.l.b16 %v8895
        %v9025 = vunpack.c.l.b16 %v8896
        %v9026 = vunpack.c.l.b16 %v8897
        %v9027 = vunpack.c.l.b16 %v8898
        %v9028 = vunpack.c.l.b16 %v8899
        %v9029 = vunpack.c.l.b16 %v8900
        %v9030 = vunpack.c.l.b16 %v8901
        %v9031 = vunpack.c.l.b16 %v8902
        %v9032 = vunpack.c.l.b16 %v8903
        %v9033 = vpack.c.b16 %v8970, %v8969
        %v9034 = vpack.c.b16 %v8972, %v8971
        %v9035 = vpack.c.b16 %v8974, %v8973
        %v9036 = vpack.c.b16 %v8976, %v8975
        %v9037 = vpack.c.b16 %v8978, %v8977
        %v9038 = vpack.c.b16 %v8980, %v8979
        %v9039 = vpack.c.b16 %v8982, %v8981
        %v9040 = vpack.c.b16 %v8984, %v8983
        %v9041 = vpack.c.b16 %v8986, %v8985
        %v9042 = vpack.c.b16 %v8988, %v8987
        %v9043 = vpack.c.b16 %v8990, %v8989
        %v9044 = vpack.c.b16 %v8992, %v8991
        %v9045 = vpack.c.b16 %v8994, %v8993
        %v9046 = vpack.c.b16 %v8996, %v8995
        %v9047 = vpack.c.b16 %v8998, %v8997
        %v9048 = vpack.c.b16 %v9000, %v8999
        %v9049 = vpack.c.b16 %v9002, %v9001
        %v9050 = vpack.c.b16 %v9004, %v9003
        %v9051 = vpack.c.b16 %v9006, %v9005
        %v9052 = vpack.c.b16 %v9008, %v9007
        %v9053 = vpack.c.b16 %v9010, %v9009
        %v9054 = vpack.c.b16 %v9012, %v9011
        %v9055 = vpack.c.b16 %v9014, %v9013
        %v9056 = vpack.c.b16 %v9016, %v9015
        %v9057 = vpack.c.b16 %v9018, %v9017
        %v9058 = vpack.c.b16 %v9020, %v9019
        %v9059 = vpack.c.b16 %v9022, %v9021
        %v9060 = vpack.c.b16 %v9024, %v9023
        %v9061 = vpack.c.b16 %v9026, %v9025
        %v9062 = vpack.c.b16 %v9028, %v9027
        %v9063 = vpack.c.b16 %v9030, %v9029
        %v9064 = vpack.c.b16 %v9032, %v9031
        %9097 = vmatprep.subr.bf16.mxu0 0
        %9098 = vmatpush1.bf16.msra.mxu0 %v9033
        %9099 = vmatprep.subr.bf16.mxu0 0
        %9100 = vmatpush1.bf16.msra.mxu0 %v9034
        %9101 = vmatprep.subr.bf16.mxu0 0
        %9102 = vmatpush1.bf16.msra.mxu0 %v9035
        %9103 = vmatprep.subr.bf16.mxu0 0
        %9104 = vmatpush1.bf16.msra.mxu0 %v9036
        %9105 = vmatprep.subr.bf16.mxu0 0
        %9106 = vmatpush1.bf16.msra.mxu0 %v9037
        %9107 = vmatprep.subr.bf16.mxu0 0
        %9108 = vmatpush1.bf16.msra.mxu0 %v9038
        %9109 = vmatprep.subr.bf16.mxu0 0
        %9110 = vmatpush1.bf16.msra.mxu0 %v9039
        %9111 = vmatprep.subr.bf16.mxu0 0
        %9112 = vmatpush1.bf16.msra.mxu0 %v9040
        %9113 = vmatprep.subr.bf16.mxu0 0
        %9114 = vmatpush1.bf16.msra.mxu0 %v9041
        %9115 = vmatprep.subr.bf16.mxu0 0
        %9116 = vmatpush1.bf16.msra.mxu0 %v9042
        %9117 = vmatprep.subr.bf16.mxu0 0
        %9118 = vmatpush1.bf16.msra.mxu0 %v9043
        %9119 = vmatprep.subr.bf16.mxu0 0
        %9120 = vmatpush1.bf16.msra.mxu0 %v9044
        %9121 = vmatprep.subr.bf16.mxu0 0
        %9122 = vmatpush1.bf16.msra.mxu0 %v9045
        %9123 = vmatprep.subr.bf16.mxu0 0
        %9124 = vmatpush1.bf16.msra.mxu0 %v9046
        %9125 = vmatprep.subr.bf16.mxu0 0
        %9126 = vmatpush1.bf16.msra.mxu0 %v9047
        %9127 = vmatprep.subr.bf16.mxu0 0
        %9128 = vmatpush1.bf16.msra.mxu0 %v9048
        %9129 = vmatprep.mubr.bf16.mxu0 %v7875
        %9130 = vmatmul.mubr.bf16.gmra.mrb[0].mxu0 %v7874
        %v9131 = vpop.f32.mrb[0].mxu0
        %v9132 = vadd.f32 %v8904, %v9131
        %v9133 = vpop.f32.mrb[0].mxu0
        %v9134 = vpop.f32.mrb[0].mxu0
        %v9135 = vpop.f32.mrb[0].mxu0
        %9136 = vdwg.mxu0
        %9137 = vmatprep.subr.bf16.mxu0 0
        %9138 = vmatpush1.bf16.msra.mxu0 %v9049
        %9139 = vmatprep.subr.bf16.mxu0 0
        %9140 = vmatpush1.bf16.msra.mxu0 %v9050
        %9141 = vmatprep.subr.bf16.mxu0 0
        %9142 = vmatpush1.bf16.msra.mxu0 %v9051
        %9143 = vmatprep.subr.bf16.mxu0 0
        %9144 = vmatpush1.bf16.msra.mxu0 %v9052
        %9145 = vmatprep.subr.bf16.mxu0 0
        %9146 = vmatpush1.bf16.msra.mxu0 %v9053
        %9147 = vmatprep.subr.bf16.mxu0 0
        %9148 = vmatpush1.bf16.msra.mxu0 %v9054
        %9149 = vmatprep.subr.bf16.mxu0 0
        %9150 = vmatpush1.bf16.msra.mxu0 %v9055
        %9151 = vmatprep.subr.bf16.mxu0 0
        %9152 = vmatpush1.bf16.msra.mxu0 %v9056
        %9153 = vmatprep.subr.bf16.mxu0 0
        %9154 = vmatpush1.bf16.msra.mxu0 %v9057
        %9155 = vmatprep.subr.bf16.mxu0 0
        %9156 = vmatpush1.bf16.msra.mxu0 %v9058
        %9157 = vmatprep.subr.bf16.mxu0 0
        %9158 = vmatpush1.bf16.msra.mxu0 %v9059
        %9159 = vmatprep.subr.bf16.mxu0 0
        %9160 = vmatpush1.bf16.msra.mxu0 %v9060
        %9161 = vmatprep.subr.bf16.mxu0 0
        %9162 = vmatpush1.bf16.msra.mxu0 %v9061
        %9163 = vmatprep.subr.bf16.mxu0 0
        %9164 = vmatpush1.bf16.msra.mxu0 %v9062
        %9165 = vmatprep.subr.bf16.mxu0 0
        %9166 = vmatpush1.bf16.msra.mxu0 %v9063
        %9167 = vmatprep.subr.bf16.mxu0 0
        %9168 = vmatpush1.bf16.msra.mxu0 %v9064
        %9169 = vmatprep.mubr.bf16.mxu0 %v7877
        %9170 = vmatmul.mubr.bf16.gmra.mrb[0].mxu0 %v7876
        %v9171 = vpop.f32.mrb[0].mxu0
        %v9172 = vadd.f32 %v9132, %v9171
        %v9173 = vpop.f32.mrb[0].mxu0
        %v9174 = vpop.f32.mrb[0].mxu0
        %v9175 = vpop.f32.mrb[0].mxu0
        %9176 = vdwg.mxu0
        %v9177 = vld [vmem:[%s17] sm:$0xf]
        %v9178 = vld [vmem:[%s17 + $0x4] sm:$0xf]
        %v9179 = vld [vmem:[%s17 + $0x8] sm:$0xf]
        %v9180 = vld [vmem:[%s17 + $0xc] sm:$0xf]
        %v9181 = vld [vmem:[%s17 + $0x10] sm:$0xf]
        %v9182 = vld [vmem:[%s17 + $0x14] sm:$0xf]
        %v9183 = vld [vmem:[%s17 + $0x18] sm:$0xf]
        %v9184 = vld [vmem:[%s17 + $0x1c] sm:$0xf]
        %v9185 = vld [vmem:[%s17 + $0x20] sm:$0xf]
        %v9186 = vld [vmem:[%s17 + $0x24] sm:$0xf]
        %v9187 = vld [vmem:[%s17 + $0x28] sm:$0xf]
        %v9188 = vld [vmem:[%s17 + $0x2c] sm:$0xf]
        %v9189 = vld [vmem:[%s17 + $0x30] sm:$0xf]
        %v9190 = vld [vmem:[%s17 + $0x34] sm:$0xf]
        %v9191 = vld [vmem:[%s17 + $0x38] sm:$0xf]
        %v9192 = vld [vmem:[%s17 + $0x3c] sm:$0xf]
        %v9193 = vld [vmem:[%s17 + $0x40] sm:$0xf]
        %v9194 = vld [vmem:[%s17 + $0x44] sm:$0xf]
        %v9195 = vld [vmem:[%s17 + $0x48] sm:$0xf]
        %v9196 = vld [vmem:[%s17 + $0x4c] sm:$0xf]
        %v9197 = vld [vmem:[%s17 + $0x50] sm:$0xf]
        %v9198 = vld [vmem:[%s17 + $0x54] sm:$0xf]
        %v9199 = vld [vmem:[%s17 + $0x58] sm:$0xf]
        %v9200 = vld [vmem:[%s17 + $0x5c] sm:$0xf]
        %v9201 = vld [vmem:[%s17 + $0x60] sm:$0xf]
        %v9202 = vld [vmem:[%s17 + $0x64] sm:$0xf]
        %v9203 = vld [vmem:[%s17 + $0x68] sm:$0xf]
        %v9204 = vld [vmem:[%s17 + $0x6c] sm:$0xf]
        %v9205 = vld [vmem:[%s17 + $0x70] sm:$0xf]
        %v9206 = vld [vmem:[%s17 + $0x74] sm:$0xf]
        %v9207 = vld [vmem:[%s17 + $0x78] sm:$0xf]
        %v9208 = vld [vmem:[%s17 + $0x7c] sm:$0xf]
        %v9209 = vld [vmem:[%s17 + $0x80] sm:$0xf]
        %v9210 = vld [vmem:[%s17 + $0x84] sm:$0xf]
        %v9211 = vld [vmem:[%s17 + $0x88] sm:$0xf]
        %v9212 = vld [vmem:[%s17 + $0x8c] sm:$0xf]
        %v9213 = vld [vmem:[%s17 + $0x90] sm:$0xf]
        %v9214 = vld [vmem:[%s17 + $0x94] sm:$0xf]
        %v9215 = vld [vmem:[%s17 + $0x98] sm:$0xf]
        %v9216 = vld [vmem:[%s17 + $0x9c] sm:$0xf]
        %v9217 = vld [vmem:[%s17 + $0xa0] sm:$0xf]
        %v9218 = vld [vmem:[%s17 + $0xa4] sm:$0xf]
        %v9219 = vld [vmem:[%s17 + $0xa8] sm:$0xf]
        %v9220 = vld [vmem:[%s17 + $0xac] sm:$0xf]
        %v9221 = vld [vmem:[%s17 + $0xb0] sm:$0xf]
        %v9222 = vld [vmem:[%s17 + $0xb4] sm:$0xf]
        %v9223 = vld [vmem:[%s17 + $0xb8] sm:$0xf]
        %v9224 = vld [vmem:[%s17 + $0xbc] sm:$0xf]
        %v9225 = vld [vmem:[%s17 + $0xc0] sm:$0xf]
        %v9226 = vld [vmem:[%s17 + $0xc4] sm:$0xf]
        %v9227 = vld [vmem:[%s17 + $0xc8] sm:$0xf]
        %v9228 = vld [vmem:[%s17 + $0xcc] sm:$0xf]
        %v9229 = vld [vmem:[%s17 + $0xd0] sm:$0xf]
        %v9230 = vld [vmem:[%s17 + $0xd4] sm:$0xf]
        %v9231 = vld [vmem:[%s17 + $0xd8] sm:$0xf]
        %v9232 = vld [vmem:[%s17 + $0xdc] sm:$0xf]
        %v9233 = vld [vmem:[%s17 + $0xe0] sm:$0xf]
        %v9234 = vld [vmem:[%s17 + $0xe4] sm:$0xf]
        %v9235 = vld [vmem:[%s17 + $0xe8] sm:$0xf]
        %v9236 = vld [vmem:[%s17 + $0xec] sm:$0xf]
        %v9237 = vld [vmem:[%s17 + $0xf0] sm:$0xf]
        %v9238 = vld [vmem:[%s17 + $0xf4] sm:$0xf]
        %v9239 = vld [vmem:[%s17 + $0xf8] sm:$0xf]
        %v9240 = vld [vmem:[%s17 + $0xfc] sm:$0xf]
        %v9241 = vld [vmem:[%s18] sm:$0x1]
        %v9306 = vunpack.c.l.b16 %v9177
        %v9307 = vunpack.c.l.b16 %v9178
        %v9308 = vunpack.c.l.b16 %v9179
        %v9309 = vunpack.c.l.b16 %v9180
        %v9310 = vunpack.c.l.b16 %v9181
        %v9311 = vunpack.c.l.b16 %v9182
        %v9312 = vunpack.c.l.b16 %v9183
        %v9313 = vunpack.c.l.b16 %v9184
        %v9314 = vunpack.c.l.b16 %v9185
        %v9315 = vunpack.c.l.b16 %v9186
        %v9316 = vunpack.c.l.b16 %v9187
        %v9317 = vunpack.c.l.b16 %v9188
        %v9318 = vunpack.c.l.b16 %v9189
        %v9319 = vunpack.c.l.b16 %v9190
        %v9320 = vunpack.c.l.b16 %v9191
        %v9321 = vunpack.c.l.b16 %v9192
        %v9322 = vunpack.c.l.b16 %v9193
        %v9323 = vunpack.c.l.b16 %v9194
        %v9324 = vunpack.c.l.b16 %v9195
        %v9325 = vunpack.c.l.b16 %v9196
        %v9326 = vunpack.c.l.b16 %v9197
        %v9327 = vunpack.c.l.b16 %v9198
        %v9328 = vunpack.c.l.b16 %v9199
        %v9329 = vunpack.c.l.b16 %v9200
        %v9330 = vunpack.c.l.b16 %v9201
        %v9331 = vunpack.c.l.b16 %v9202
        %v9332 = vunpack.c.l.b16 %v9203
        %v9333 = vunpack.c.l.b16 %v9204
        %v9334 = vunpack.c.l.b16 %v9205
        %v9335 = vunpack.c.l.b16 %v9206
        %v9336 = vunpack.c.l.b16 %v9207
        %v9337 = vunpack.c.l.b16 %v9208
        %v9338 = vunpack.c.l.b16 %v9209
        %v9339 = vunpack.c.l.b16 %v9210
        %v9340 = vunpack.c.l.b16 %v9211
        %v9341 = vunpack.c.l.b16 %v9212
        %v9342 = vunpack.c.l.b16 %v9213
        %v9343 = vunpack.c.l.b16 %v9214
        %v9344 = vunpack.c.l.b16 %v9215
        %v9345 = vunpack.c.l.b16 %v9216
        %v9346 = vunpack.c.l.b16 %v9217
        %v9347 = vunpack.c.l.b16 %v9218
        %v9348 = vunpack.c.l.b16 %v9219
        %v9349 = vunpack.c.l.b16 %v9220
        %v9350 = vunpack.c.l.b16 %v9221
        %v9351 = vunpack.c.l.b16 %v9222
        %v9352 = vunpack.c.l.b16 %v9223
        %v9353 = vunpack.c.l.b16 %v9224
        %v9354 = vunpack.c.l.b16 %v9225
        %v9355 = vunpack.c.l.b16 %v9226
        %v9356 = vunpack.c.l.b16 %v9227
        %v9357 = vunpack.c.l.b16 %v9228
        %v9358 = vunpack.c.l.b16 %v9229
        %v9359 = vunpack.c.l.b16 %v9230
        %v9360 = vunpack.c.l.b16 %v9231
        %v9361 = vunpack.c.l.b16 %v9232
        %v9362 = vunpack.c.l.b16 %v9233
        %v9363 = vunpack.c.l.b16 %v9234
        %v9364 = vunpack.c.l.b16 %v9235
        %v9365 = vunpack.c.l.b16 %v9236
        %v9366 = vunpack.c.l.b16 %v9237
        %v9367 = vunpack.c.l.b16 %v9238
        %v9368 = vunpack.c.l.b16 %v9239
        %v9369 = vunpack.c.l.b16 %v9240
        %v9370 = vpack.c.b16 %v9307, %v9306
        %v9371 = vpack.c.b16 %v9309, %v9308
        %v9372 = vpack.c.b16 %v9311, %v9310
        %v9373 = vpack.c.b16 %v9313, %v9312
        %v9374 = vpack.c.b16 %v9315, %v9314
        %v9375 = vpack.c.b16 %v9317, %v9316
        %v9376 = vpack.c.b16 %v9319, %v9318
        %v9377 = vpack.c.b16 %v9321, %v9320
        %v9378 = vpack.c.b16 %v9323, %v9322
        %v9379 = vpack.c.b16 %v9325, %v9324
        %v9380 = vpack.c.b16 %v9327, %v9326
        %v9381 = vpack.c.b16 %v9329, %v9328
        %v9382 = vpack.c.b16 %v9331, %v9330
        %v9383 = vpack.c.b16 %v9333, %v9332
        %v9384 = vpack.c.b16 %v9335, %v9334
        %v9385 = vpack.c.b16 %v9337, %v9336
        %v9386 = vpack.c.b16 %v9339, %v9338
        %v9387 = vpack.c.b16 %v9341, %v9340
        %v9388 = vpack.c.b16 %v9343, %v9342
        %v9389 = vpack.c.b16 %v9345, %v9344
        %v9390 = vpack.c.b16 %v9347, %v9346
        %v9391 = vpack.c.b16 %v9349, %v9348
        %v9392 = vpack.c.b16 %v9351, %v9350
        %v9393 = vpack.c.b16 %v9353, %v9352
        %v9394 = vpack.c.b16 %v9355, %v9354
        %v9395 = vpack.c.b16 %v9357, %v9356
        %v9396 = vpack.c.b16 %v9359, %v9358
        %v9397 = vpack.c.b16 %v9361, %v9360
        %v9398 = vpack.c.b16 %v9363, %v9362
        %v9399 = vpack.c.b16 %v9365, %v9364
        %v9400 = vpack.c.b16 %v9367, %v9366
        %v9401 = vpack.c.b16 %v9369, %v9368
        %9434 = vmatprep.subr.bf16.mxu0 0
        %9435 = vmatpush1.bf16.msra.mxu0 %v9370
        %9436 = vmatprep.subr.bf16.mxu0 0
        %9437 = vmatpush1.bf16.msra.mxu0 %v9371
        %9438 = vmatprep.subr.bf16.mxu0 0
        %9439 = vmatpush1.bf16.msra.mxu0 %v9372
        %9440 = vmatprep.subr.bf16.mxu0 0
        %9441 = vmatpush1.bf16.msra.mxu0 %v9373
        %9442 = vmatprep.subr.bf16.mxu0 0
        %9443 = vmatpush1.bf16.msra.mxu0 %v9374
        %9444 = vmatprep.subr.bf16.mxu0 0
        %9445 = vmatpush1.bf16.msra.mxu0 %v9375
        %9446 = vmatprep.subr.bf16.mxu0 0
        %9447 = vmatpush1.bf16.msra.mxu0 %v9376
        %9448 = vmatprep.subr.bf16.mxu0 0
        %9449 = vmatpush1.bf16.msra.mxu0 %v9377
        %9450 = vmatprep.subr.bf16.mxu0 0
        %9451 = vmatpush1.bf16.msra.mxu0 %v9378
        %9452 = vmatprep.subr.bf16.mxu0 0
        %9453 = vmatpush1.bf16.msra.mxu0 %v9379
        %9454 = vmatprep.subr.bf16.mxu0 0
        %9455 = vmatpush1.bf16.msra.mxu0 %v9380
        %9456 = vmatprep.subr.bf16.mxu0 0
        %9457 = vmatpush1.bf16.msra.mxu0 %v9381
        %9458 = vmatprep.subr.bf16.mxu0 0
        %9459 = vmatpush1.bf16.msra.mxu0 %v9382
        %9460 = vmatprep.subr.bf16.mxu0 0
        %9461 = vmatpush1.bf16.msra.mxu0 %v9383
        %9462 = vmatprep.subr.bf16.mxu0 0
        %9463 = vmatpush1.bf16.msra.mxu0 %v9384
        %9464 = vmatprep.subr.bf16.mxu0 0
        %9465 = vmatpush1.bf16.msra.mxu0 %v9385
        %9466 = vmatprep.mubr.bf16.mxu0 %v8837
        %9467 = vmatmul.mubr.bf16.gmra.mrb[0].mxu0 %v8836
        %v9468 = vpop.f32.mrb[0].mxu0
        %v9469 = vadd.f32 %v9241, %v9468
        %v9470 = vpop.f32.mrb[0].mxu0
        %v9471 = vpop.f32.mrb[0].mxu0
        %v9472 = vpop.f32.mrb[0].mxu0
        %9473 = vdwg.mxu0
        %9474 = vmatprep.subr.bf16.mxu0 0
        %9475 = vmatpush1.bf16.msra.mxu0 %v9386
        %9476 = vmatprep.subr.bf16.mxu0 0
        %9477 = vmatpush1.bf16.msra.mxu0 %v9387
        %9478 = vmatprep.subr.bf16.mxu0 0
        %9479 = vmatpush1.bf16.msra.mxu0 %v9388
        %9480 = vmatprep.subr.bf16.mxu0 0
        %9481 = vmatpush1.bf16.msra.mxu0 %v9389
        %9482 = vmatprep.subr.bf16.mxu0 0
        %9483 = vmatpush1.bf16.msra.mxu0 %v9390
        %9484 = vmatprep.subr.bf16.mxu0 0
        %9485 = vmatpush1.bf16.msra.mxu0 %v9391
        %9486 = vmatprep.subr.bf16.mxu0 0
        %9487 = vmatpush1.bf16.msra.mxu0 %v9392
        %9488 = vmatprep.subr.bf16.mxu0 0
        %9489 = vmatpush1.bf16.msra.mxu0 %v9393
        %9490 = vmatprep.subr.bf16.mxu0 0
        %9491 = vmatpush1.bf16.msra.mxu0 %v9394
        %9492 = vmatprep.subr.bf16.mxu0 0
        %9493 = vmatpush1.bf16.msra.mxu0 %v9395
        %9494 = vmatprep.subr.bf16.mxu0 0
        %9495 = vmatpush1.bf16.msra.mxu0 %v9396
        %9496 = vmatprep.subr.bf16.mxu0 0
        %9497 = vmatpush1.bf16.msra.mxu0 %v9397
        %9498 = vmatprep.subr.bf16.mxu0 0
        %9499 = vmatpush1.bf16.msra.mxu0 %v9398
        %9500 = vmatprep.subr.bf16.mxu0 0
        %9501 = vmatpush1.bf16.msra.mxu0 %v9399
        %9502 = vmatprep.subr.bf16.mxu0 0
        %9503 = vmatpush1.bf16.msra.mxu0 %v9400
        %9504 = vmatprep.subr.bf16.mxu0 0
        %9505 = vmatpush1.bf16.msra.mxu0 %v9401
        %9506 = vmatprep.mubr.bf16.mxu0 %v8839
        %9507 = vmatmul.mubr.bf16.gmra.mrb[0].mxu0 %v8838
        %v9508 = vpop.f32.mrb[0].mxu0
        %v9509 = vadd.f32 %v9469, %v9508
        %v9510 = vpop.f32.mrb[0].mxu0
        %v9511 = vpop.f32.mrb[0].mxu0
        %v9512 = vpop.f32.mrb[0].mxu0
        %9513 = vdwg.mxu0
        %vm9514 = vcmask 40960
        %v9515 = vsel %vm9514, %v9509, -inf
        %9516 = vmax.xlane.f32.xlu0 %v9515
        %v9517 = vpop.xlane.xlu0 %9516
        %v9518 = vsub.f32 %v9509, %v9517
        %v9519 = vmul.f32 %v9518, 1.442695
        %v9520 = vpow.pop %v9519
        %v9521 = vsel %vm9514, %v9520, 0.0
        %9522 = vadd.xlane.f32.xlu0 %v9521
        %v9523 = vpop.xlane.xlu0 %9522
        %v9524 = vrcp.pop %v9523
        %v9525 = vmul.f32 %v9520, %v9524
        %vm9526 = vcmask 0
        %9527 = vst.msk [vmem:[%s663] sm:$0x1] %vm9526, %v9172
        %9528 = vst.msk [vmem:[%s666] sm:$0x1] %vm9514, %v9525
        %p9529 = scmp.lt.s32.totalorder %s36, 1
        %s9530 = scalar_select %p9529, %s36, 1
        %s9531 = scalar_lea.vmem %s19, %s9530
        %p9532 = scmp.lt.s32.totalorder %s36, 1
        %s9533 = scalar_select %p9532, %s36, 1
        %s9534 = scalar_lea.vmem %s20, %s9533
        // Predicated region
        $region105: #{ppo_atari_forward.1} parent=95 // pred_check
          %p9535 = pneg %p458
        $region106: #{ppo_atari_forward.1} parent=95 // pred_check_branch
          %9537 = sbr.rel (%p9535) target = $region108
        $region107: #{ppo_atari_forward.1} parent=95 // pred_region
          _
        $region108: #{ppo_atari_forward.1} parent=95 // pred_fallthru
          _
        // Predicated region
        $region109: #{ppo_atari_forward.1} parent=95 // pred_check
          %p9538 = pneg %p484
        $region110: #{ppo_atari_forward.1} parent=95 // pred_check_branch
          %9540 = sbr.rel (%p9538) target = $region112
        $region111: #{ppo_atari_forward.1} parent=95 // pred_region
          _
        $region112: #{ppo_atari_forward.1} parent=95 // pred_fallthru
          _
      $region96: #{ppo_atari_forward.1} parent=5 // pred_fallthru
        _
      %p9541 = scmp.le.s32.totalorder 2, %s31
      // Predicated region
      $region113: #{ppo_atari_forward.1} parent=5 // pred_check
        %p9542 = pneg %p9541
      $region114: #{ppo_atari_forward.1} parent=5 // pred_check_branch
        %9544 = sbr.rel (%p9542) target = $region116
      $region115: #{ppo_atari_forward.1} parent=5 // pred_region
        %s9545 = ssub.s32 %s31, 2
        // Predicated region
        $region117: #{ppo_atari_forward.1} parent=115 // pred_check
          %p9546 = pneg %p464
        $region118: #{ppo_atari_forward.1} parent=115 // pred_check_branch
          %9548 = sbr.rel (%p9546) target = $region120
        $region119: #{ppo_atari_forward.1} parent=115 // pred_region
          %p9549 = scmp.lt.s32.totalorder %s37, 1
          %s9550 = scalar_select %p9549, %s37, 1
          %s9551 = scalar_lea.vmem %s19, %s9550
        $region120: #{ppo_atari_forward.1} parent=115 // pred_fallthru
          _
        // Predicated region
        $region121: #{ppo_atari_forward.1} parent=115 // pred_check
          %p9552 = pneg %p490
        $region122: #{ppo_atari_forward.1} parent=115 // pred_check_branch
          %9554 = sbr.rel (%p9552) target = $region124
        $region123: #{ppo_atari_forward.1} parent=115 // pred_region
          %p9555 = scmp.lt.s32.totalorder %s37, 1
          %s9556 = scalar_select %p9555, %s37, 1
          %s9557 = scalar_lea.vmem %s20, %s9556
        $region124: #{ppo_atari_forward.1} parent=115 // pred_fallthru
          _
      $region116: #{ppo_atari_forward.1} parent=5 // pred_fallthru
        _
    $region6: #{ppo_atari_forward.1} parent=1 // loop_footer
      %s35 = sadd.s32 1, %s31
    $region7: #{ppo_atari_forward.1} parent=1 // loop_footer_branch
      %30 = sbr.rel target = $region3
    $region8: #{ppo_atari_forward.1} parent=1 // loop_exit
      _
    %9558 = vsyncpa [#allocation4], 1
    %s9559 = scalar_lea.sflag [#allocation4], 1
    %9560 = vsyncpa %s9559, 1
    %9561 = vsyncpa [#allocation6], 1

</llo_original>
